<compile_context>
chip_gen: v7x
topology: tpu7x:2x2x1
jax: 0.10.0
libtpu: 0.0.40
codegen_flags: <defaults>
</compile_context>

<pallas_src>
import math
from functools import partial

import jax
import jax.numpy as jnp
from jax.experimental import pallas as pl


# ---------------------------------------------------------------------------
# Static architecture config (NOT part of the traced params pytree)
# ---------------------------------------------------------------------------
ARCH = (
    # (planes, num_blocks, stride_of_first_block)  == layers=[1, 1, 1]
    (64, 1, 1),
    (128, 1, 2),
    (256, 1, 2),
)
BN_EPS = 1e-5


# ---------------------------------------------------------------------------
# Pallas kernels
# ---------------------------------------------------------------------------
def _conv_bn_act_kernel(*refs, relu, has_residual, eps):
    """Fused (im2col-matmul) conv + training-mode BN + optional residual + optional ReLU.

    refs = (patches, w, gamma, beta[, residual], out)
      patches : (M, K)  bf16   im2col matrix (M = N*Ho*Wo, K = Cin*KH*KW)
      w       : (K, C)  bf16   flattened conv weight
      gamma   : (1, C)  f32
      beta    : (1, C)  f32
      residual: (M, C)  f32    (only if has_residual)
      out     : (M, C)  f32
    """
    if has_residual:
        p_ref, w_ref, g_ref, b_ref, r_ref, o_ref = refs
    else:
        p_ref, w_ref, g_ref, b_ref, o_ref = refs

    # MXU matmul, f32 accumulation. Whole conv output lives in one VMEM block,
    # so batch statistics can be computed right here (no extra HBM round trips).
    out = jnp.dot(p_ref[...], w_ref[...], preferred_element_type=jnp.float32)

    mean = jnp.mean(out, axis=0, keepdims=True)               # (1, C)
    centered = out - mean
    var = jnp.mean(centered * centered, axis=0, keepdims=True)  # biased, as in PyTorch
    scale = g_ref[...] * jax.lax.rsqrt(var + eps)

    y = centered * scale + b_ref[...]
    if has_residual:
        y = y + r_ref[...]
    if relu:
        y = jnp.maximum(y, 0.0)
    o_ref[...] = y


def _maxpool_kernel(e00_ref, e01_ref, e10_ref, e11_ref, o_ref, *, Ho, Wo):
    """MaxPool2d(3, stride=2, padding=1) from 4 stride-2 phase tensors.

    Each phase has layout (Hs, Ws, N, C) so all in-kernel slices are on leading
    (untiled) dims with unit stride. pooled[i,j] = max over the 9 phase offsets.
    """
    def win(ref, di, dj):
        return ref[di:di + Ho, dj:dj + Wo, :, :]

    m = win(e00_ref, 0, 0)
    for ref, di, dj in ((e00_ref, 0, 1), (e00_ref, 1, 0), (e00_ref, 1, 1),
                        (e01_ref, 0, 0), (e01_ref, 1, 0),
                        (e10_ref, 0, 0), (e10_ref, 0, 1),
                        (e11_ref, 0, 0)):
        m = jnp.maximum(m, win(ref, di, dj))
    o_ref[...] = m


# ---------------------------------------------------------------------------
# Wrappers around pallas_call
# ---------------------------------------------------------------------------
def conv_bn_act(x_nhwc, w_mat, gamma, beta, *, khw, stride, padding,
                residual=None, relu=True, eps=BN_EPS):
    """Conv2d(no bias) + BatchNorm2d(train) [+ residual] [+ ReLU] as one Pallas call.

    x_nhwc : (N, H, W, Cin) f32
    w_mat  : (Cin*khw*khw, Cout) bf16 (pre-flattened in make_params, K-order = (cin, kh, kw))
    gamma, beta : (1, Cout) f32
    residual    : optional (N, Ho, Wo, Cout) f32
    """
    N, H, W, Cin = x_nhwc.shape
    Cout = w_mat.shape[1]
    Ho = (H + 2 * padding - khw) // stride + 1
    Wo = (W + 2 * padding - khw) // stride + 1
    M = N * Ho * Wo
    K = Cin * khw * khw
    assert w_mat.shape[0] == K

    xp = x_nhwc.astype(jnp.bfloat16)
    if padding:
        xp = jnp.pad(xp, ((0, 0), (padding, padding), (padding, padding), (0, 0)))

    # im2col with static strides; ordering (cin, kh, kw) matches the weight flatten.
    cols = []
    for kh in range(khw):
        for kw in range(khw):
            cols.append(xp[:, kh:kh + stride * (Ho - 1) + 1:stride,
                           kw:kw + stride * (Wo - 1) + 1:stride, :])
    patches = jnp.stack(cols, axis=-1).reshape(M, K)          # (M, K) bf16

    has_res = residual is not None
    args = [patches, w_mat, gamma, beta]
    if has_res:
        args.append(residual.reshape(M, Cout).astype(jnp.float32))

    out = pl.pallas_call(
        partial(_conv_bn_act_kernel, relu=relu, has_residual=has_res, eps=eps),
        out_shape=jax.ShapeDtypeStruct((M, Cout), jnp.float32),
    )(*args)
    return out.reshape(N, Ho, Wo, Cout)


def maxpool3x3_s2_p1(x_nhwc):
    """MaxPool2d(kernel=3, stride=2, padding=1), NHWC f32."""
    N, H, W, C = x_nhwc.shape
    Ho = (H + 2 - 3) // 2 + 1
    Wo = (W + 2 - 3) // 2 + 1

    big_neg = float(jnp.finfo(jnp.float32).min)
    xp = jnp.pad(x_nhwc, ((0, 0), (1, 1), (1, 1), (0, 0)), constant_values=big_neg)
    xt = jnp.transpose(xp, (1, 2, 0, 3))           # (Hp, Wp, N, C): offsets on leading dims

    # 4 stride-2 phases: total bytes == padded input (no 9x HBM amplification).
    e00 = xt[0::2, 0::2]
    e01 = xt[0::2, 1::2]
    e10 = xt[1::2, 0::2]
    e11 = xt[1::2, 1::2]

    out = pl.pallas_call(
        partial(_maxpool_kernel, Ho=Ho, Wo=Wo),
        out_shape=jax.ShapeDtypeStruct((Ho, Wo, N, C), x_nhwc.dtype),
    )(e00, e01, e10, e11)
    return jnp.transpose(out, (2, 0, 1, 3))        # back to (N, Ho, Wo, C)


# ---------------------------------------------------------------------------
# Model: parameters + forward
# ---------------------------------------------------------------------------
def _kaiming_conv(key, shape):
    """kaiming_normal_(mode='fan_out', nonlinearity='relu') for conv weights."""
    cout, cin, kh, kw = shape
    std = math.sqrt(2.0 / (cout * kh * kw))
    return std * jax.random.normal(key, shape, dtype=jnp.float32)


def _conv_weight_mat(key, cout, cin, khw):
    """Pre-flattened, bf16 weight matrix (Cin*KH*KW, Cout), K-order (cin, kh, kw)."""
    w = _kaiming_conv(key, (cout, cin, khw, khw))
    return w.reshape(cout, cin * khw * khw).T.astype(jnp.bfloat16)


def _bn_params(c):
    return jnp.ones((1, c), jnp.float32), jnp.zeros((1, c), jnp.float32)


def make_params(key):
    keys = iter(jax.random.split(key, 64))
    g1, b1 = _bn_params(64)
    params = {
        "conv1_w": _conv_weight_mat(next(keys), 64, 3, 7),
        "bn1_g": g1, "bn1_b": b1,
        "layers": [],
    }
    inplanes = 64
    for planes, nblocks, stride in ARCH:
        stage = []
        for b in range(nblocks):
            s = stride if b == 0 else 1
            bg1, bb1 = _bn_params(planes)
            bg2, bb2 = _bn_params(planes)
            blk = {
                "conv1_w": _conv_weight_mat(next(keys), planes, inplanes, 3),
                "bn1_g": bg1, "bn1_b": bb1,
                "conv2_w": _conv_weight_mat(next(keys), planes, planes, 3),
                "bn2_g": bg2, "bn2_b": bb2,
            }
            if s != 1 or inplanes != planes:       # BasicBlock.expansion == 1
                dg, db = _bn_params(planes)
                blk["ds_w"] = _conv_weight_mat(next(keys), planes, inplanes, 1)
                blk["ds_g"] = dg
                blk["ds_b"] = db
            stage.append(blk)
            inplanes = planes
        params["layers"].append(stage)
    return params


def basic_block(x, p, stride):
    out = conv_bn_act(x, p["conv1_w"], p["bn1_g"], p["bn1_b"],
                      khw=3, stride=stride, padding=1, relu=True)
    if "ds_w" in p:
        identity = conv_bn_act(x, p["ds_w"], p["ds_g"], p["ds_b"],
                               khw=1, stride=stride, padding=0, relu=False)
    else:
        identity = x
    # conv2 + bn2 + residual add + relu fused in one Pallas kernel.
    out = conv_bn_act(out, p["conv2_w"], p["bn2_g"], p["bn2_b"],
                      khw=3, stride=1, padding=1, residual=identity, relu=True)
    return out


def resnet_comp_forward(x_nchw, params):
    x = jnp.transpose(x_nchw, (0, 2, 3, 1))        # NCHW -> NHWC
    x = conv_bn_act(x, params["conv1_w"], params["bn1_g"], params["bn1_b"],
                    khw=7, stride=2, padding=3, relu=True)
    x = maxpool3x3_s2_p1(x)
    for (planes, nblocks, stride0), stage in zip(ARCH, params["layers"]):
        for bidx, blk in enumerate(stage):
            s = stride0 if bidx == 0 else 1        # static Python int (bug fix)
            x = basic_block(x, blk, s)
    return jnp.transpose(x, (0, 3, 1, 2))          # NHWC -> NCHW
    # TODO(synk): avgpool / comp_fc / comp_layer exist in __init__ but are unused in
    # forward(), so they are intentionally not implemented.


# ---------------------------------------------------------------------------
if __name__ == "__main__":
    key = jax.random.PRNGKey(0)
    k_params, k_input = jax.random.split(key)

    params = make_params(k_params)

    # NCHW input, 3 channels as required by conv1.
    x = jax.random.normal(k_input, (2, 3, 32, 32), dtype=jnp.float32)

    fwd = jax.jit(resnet_comp_forward)
    out = jax.block_until_ready(fwd(x, params))

    assert out.shape == (2, 256, 2, 2), out.shape
    assert bool(jnp.all(jnp.isfinite(out)))
    print("KERNEL_OK")
</pallas_src>

<mosaic_0001>
module attributes {stable_mosaic.version = 11 : i64} {
  func.func @_conv_bn_act_kernel(%arg0: memref<512x147xbf16, #tpu.memory_space<vmem>>, %arg1: memref<147x64xbf16, #tpu.memory_space<vmem>>, %arg2: memref<1x64xf32, #tpu.memory_space<vmem>>, %arg3: memref<1x64xf32, #tpu.memory_space<vmem>>, %arg4: memref<512x64xf32, #tpu.memory_space<vmem>>) attributes {dimension_semantics = [], scalar_prefetch = 0 : i64, scratch_operands = 0 : i64, tpu.core_type = #tpu.core_type<tc>} {
    %c0 = arith.constant 0 : index
    %c0_0 = arith.constant 0 : index
    %0 = vector.load %arg0[%c0, %c0_0] : memref<512x147xbf16, #tpu.memory_space<vmem>>, vector<512x147xbf16>
    %c0_1 = arith.constant 0 : index
    %c0_2 = arith.constant 0 : index
    %1 = vector.load %arg1[%c0_1, %c0_2] : memref<147x64xbf16, #tpu.memory_space<vmem>>, vector<147x64xbf16>
    %cst = arith.constant dense<0.000000e+00> : vector<512x64xf32>
    %2 = tpu.matmul %0, %1, %cst {dimension_numbers = #tpu.dot_dimension_numbers<[1], [0], [0], [1], [0, 0, 1, 1], [], []>} : vector<512x147xbf16>, vector<147x64xbf16>, vector<512x64xf32> -> vector<512x64xf32>
    %cst_3 = arith.constant dense<0.000000e+00> : vector<64xf32>
    %3 = vector.multi_reduction <add>, %2, %cst_3 [0] : vector<512x64xf32> to vector<64xf32>
    %4 = vector.shape_cast %3 : vector<64xf32> to vector<1x64xf32>
    %cst_4 = arith.constant 5.120000e+02 : f32
    %5 = vector.broadcast %cst_4 : f32 to vector<1x64xf32>
    %6 = arith.divf %4, %5 : vector<1x64xf32>
    %7 = vector.broadcast %6 : vector<1x64xf32> to vector<512x64xf32>
    %8 = arith.subf %2, %7 : vector<512x64xf32>
    %9 = arith.mulf %8, %8 : vector<512x64xf32>
    %cst_5 = arith.constant dense<0.000000e+00> : vector<64xf32>
    %10 = vector.multi_reduction <add>, %9, %cst_5 [0] : vector<512x64xf32> to vector<64xf32>
    %11 = vector.shape_cast %10 : vector<64xf32> to vector<1x64xf32>
    %cst_6 = arith.constant 5.120000e+02 : f32
    %12 = vector.broadcast %cst_6 : f32 to vector<1x64xf32>
    %13 = arith.divf %11, %12 : vector<1x64xf32>
    %c0_7 = arith.constant 0 : index
    %c0_8 = arith.constant 0 : index
    %14 = vector.load %arg2[%c0_7, %c0_8] : memref<1x64xf32, #tpu.memory_space<vmem>>, vector<1x64xf32>
    %cst_9 = arith.constant 9.99999974E-6 : f32
    %15 = vector.broadcast %cst_9 : f32 to vector<1x64xf32>
    %16 = arith.addf %13, %15 : vector<1x64xf32>
    %17 = math.rsqrt %16 : vector<1x64xf32>
    %18 = arith.mulf %14, %17 : vector<1x64xf32>
    %19 = vector.broadcast %18 : vector<1x64xf32> to vector<512x64xf32>
    %20 = arith.mulf %8, %19 : vector<512x64xf32>
    %c0_10 = arith.constant 0 : index
    %c0_11 = arith.constant 0 : index
    %21 = vector.load %arg3[%c0_10, %c0_11] : memref<1x64xf32, #tpu.memory_space<vmem>>, vector<1x64xf32>
    %22 = vector.broadcast %21 : vector<1x64xf32> to vector<512x64xf32>
    %23 = arith.addf %20, %22 : vector<512x64xf32>
    %cst_12 = arith.constant 0.000000e+00 : f32
    %24 = vector.broadcast %cst_12 : f32 to vector<512x64xf32>
    %25 = arith.maximumf %23, %24 : vector<512x64xf32>
    %c0_13 = arith.constant 0 : index
    %c0_14 = arith.constant 0 : index
    %26 = vector.load %arg4[%c0_13, %c0_14] : memref<512x64xf32, #tpu.memory_space<vmem>>, vector<512x64xf32>
    tpu.vector_store %arg4[%c0_13, %c0_14], %25 {strides = array<i32>} : memref<512x64xf32, #tpu.memory_space<vmem>>, vector<512x64xf32>,
    return
  }
}

module attributes {stable_mosaic.version = 11 : i64} {
  func.func @_maxpool_kernel(%arg0: memref<9x9x2x64xf32, #tpu.memory_space<vmem>>, %arg1: memref<9x9x2x64xf32, #tpu.memory_space<vmem>>, %arg2: memref<9x9x2x64xf32, #tpu.memory_space<vmem>>, %arg3: memref<9x9x2x64xf32, #tpu.memory_space<vmem>>, %arg4: memref<8x8x2x64xf32, #tpu.memory_space<vmem>>) attributes {dimension_semantics = [], scalar_prefetch = 0 : i64, scratch_operands = 0 : i64, tpu.core_type = #tpu.core_type<tc>} {
    %c0 = arith.constant 0 : index
    %c0_0 = arith.constant 0 : index
    %c0_1 = arith.constant 0 : index
    %c0_2 = arith.constant 0 : index
    %0 = vector.load %arg0[%c0, %c0_0, %c0_1, %c0_2] : memref<9x9x2x64xf32, #tpu.memory_space<vmem>>, vector<8x8x2x64xf32>
    %c0_3 = arith.constant 0 : index
    %c1 = arith.constant 1 : index
    %c0_4 = arith.constant 0 : index
    %c0_5 = arith.constant 0 : index
    %1 = vector.load %arg0[%c0_3, %c1, %c0_4, %c0_5] : memref<9x9x2x64xf32, #tpu.memory_space<vmem>>, vector<8x8x2x64xf32>
    %2 = arith.maximumf %0, %1 : vector<8x8x2x64xf32>
    %c1_6 = arith.constant 1 : index
    %c0_7 = arith.constant 0 : index
    %c0_8 = arith.constant 0 : index
    %c0_9 = arith.constant 0 : index
    %3 = vector.load %arg0[%c1_6, %c0_7, %c0_8, %c0_9] : memref<9x9x2x64xf32, #tpu.memory_space<vmem>>, vector<8x8x2x64xf32>
    %4 = arith.maximumf %2, %3 : vector<8x8x2x64xf32>
    %c1_10 = arith.constant 1 : index
    %c1_11 = arith.constant 1 : index
    %c0_12 = arith.constant 0 : index
    %c0_13 = arith.constant 0 : index
    %5 = vector.load %arg0[%c1_10, %c1_11, %c0_12, %c0_13] : memref<9x9x2x64xf32, #tpu.memory_space<vmem>>, vector<8x8x2x64xf32>
    %6 = arith.maximumf %4, %5 : vector<8x8x2x64xf32>
    %c0_14 = arith.constant 0 : index
    %c0_15 = arith.constant 0 : index
    %c0_16 = arith.constant 0 : index
    %c0_17 = arith.constant 0 : index
    %7 = vector.load %arg1[%c0_14, %c0_15, %c0_16, %c0_17] : memref<9x9x2x64xf32, #tpu.memory_space<vmem>>, vector<8x8x2x64xf32>
    %8 = arith.maximumf %6, %7 : vector<8x8x2x64xf32>
    %c1_18 = arith.constant 1 : index
    %c0_19 = arith.constant 0 : index
    %c0_20 = arith.constant 0 : index
    %c0_21 = arith.constant 0 : index
    %9 = vector.load %arg1[%c1_18, %c0_19, %c0_20, %c0_21] : memref<9x9x2x64xf32, #tpu.memory_space<vmem>>, vector<8x8x2x64xf32>
    %10 = arith.maximumf %8, %9 : vector<8x8x2x64xf32>
    %c0_22 = arith.constant 0 : index
    %c0_23 = arith.constant 0 : index
    %c0_24 = arith.constant 0 : index
    %c0_25 = arith.constant 0 : index
    %11 = vector.load %arg2[%c0_22, %c0_23, %c0_24, %c0_25] : memref<9x9x2x64xf32, #tpu.memory_space<vmem>>, vector<8x8x2x64xf32>
    %12 = arith.maximumf %10, %11 : vector<8x8x2x64xf32>
    %c0_26 = arith.constant 0 : index
    %c1_27 = arith.constant 1 : index
    %c0_28 = arith.constant 0 : index
    %c0_29 = arith.constant 0 : index
    %13 = vector.load %arg2[%c0_26, %c1_27, %c0_28, %c0_29] : memref<9x9x2x64xf32, #tpu.memory_space<vmem>>, vector<8x8x2x64xf32>
    %14 = arith.maximumf %12, %13 : vector<8x8x2x64xf32>
    %c0_30 = arith.constant 0 : index
    %c0_31 = arith.constant 0 : index
    %c0_32 = arith.constant 0 : index
    %c0_33 = arith.constant 0 : index
    %15 = vector.load %arg3[%c0_30, %c0_31, %c0_32, %c0_33] : memref<9x9x2x64xf32, #tpu.memory_space<vmem>>, vector<8x8x2x64xf32>
    %16 = arith.maximumf %14, %15 : vector<8x8x2x64xf32>
    %c0_34 = arith.constant 0 : index
    %c0_35 = arith.constant 0 : index
    %c0_36 = arith.constant 0 : index
    %c0_37 = arith.constant 0 : index
    %17 = vector.load %arg4[%c0_34, %c0_35, %c0_36, %c0_37] : memref<8x8x2x64xf32, #tpu.memory_space<vmem>>, vector<8x8x2x64xf32>
    tpu.vector_store %arg4[%c0_34, %c0_35, %c0_36, %c0_37], %16 {strides = array<i32>} : memref<8x8x2x64xf32, #tpu.memory_space<vmem>>, vector<8x8x2x64xf32>,
    return
  }
}

module attributes {stable_mosaic.version = 11 : i64} {
  func.func @_conv_bn_act_kernel(%arg0: memref<128x576xbf16, #tpu.memory_space<vmem>>, %arg1: memref<576x64xbf16, #tpu.memory_space<vmem>>, %arg2: memref<1x64xf32, #tpu.memory_space<vmem>>, %arg3: memref<1x64xf32, #tpu.memory_space<vmem>>, %arg4: memref<128x64xf32, #tpu.memory_space<vmem>>) attributes {dimension_semantics = [], scalar_prefetch = 0 : i64, scratch_operands = 0 : i64, tpu.core_type = #tpu.core_type<tc>} {
    %c0 = arith.constant 0 : index
    %c0_0 = arith.constant 0 : index
    %0 = vector.load %arg0[%c0, %c0_0] : memref<128x576xbf16, #tpu.memory_space<vmem>>, vector<128x576xbf16>
    %c0_1 = arith.constant 0 : index
    %c0_2 = arith.constant 0 : index
    %1 = vector.load %arg1[%c0_1, %c0_2] : memref<576x64xbf16, #tpu.memory_space<vmem>>, vector<576x64xbf16>
    %cst = arith.constant dense<0.000000e+00> : vector<128x64xf32>
    %2 = tpu.matmul %0, %1, %cst {dimension_numbers = #tpu.dot_dimension_numbers<[1], [0], [0], [1], [0, 0, 1, 1], [], []>} : vector<128x576xbf16>, vector<576x64xbf16>, vector<128x64xf32> -> vector<128x64xf32>
    %cst_3 = arith.constant dense<0.000000e+00> : vector<64xf32>
    %3 = vector.multi_reduction <add>, %2, %cst_3 [0] : vector<128x64xf32> to vector<64xf32>
    %4 = vector.shape_cast %3 : vector<64xf32> to vector<1x64xf32>
    %cst_4 = arith.constant 1.280000e+02 : f32
    %5 = vector.broadcast %cst_4 : f32 to vector<1x64xf32>
    %6 = arith.divf %4, %5 : vector<1x64xf32>
    %7 = vector.broadcast %6 : vector<1x64xf32> to vector<128x64xf32>
    %8 = arith.subf %2, %7 : vector<128x64xf32>
    %9 = arith.mulf %8, %8 : vector<128x64xf32>
    %cst_5 = arith.constant dense<0.000000e+00> : vector<64xf32>
    %10 = vector.multi_reduction <add>, %9, %cst_5 [0] : vector<128x64xf32> to vector<64xf32>
    %11 = vector.shape_cast %10 : vector<64xf32> to vector<1x64xf32>
    %cst_6 = arith.constant 1.280000e+02 : f32
    %12 = vector.broadcast %cst_6 : f32 to vector<1x64xf32>
    %13 = arith.divf %11, %12 : vector<1x64xf32>
    %c0_7 = arith.constant 0 : index
    %c0_8 = arith.constant 0 : index
    %14 = vector.load %arg2[%c0_7, %c0_8] : memref<1x64xf32, #tpu.memory_space<vmem>>, vector<1x64xf32>
    %cst_9 = arith.constant 9.99999974E-6 : f32
    %15 = vector.broadcast %cst_9 : f32 to vector<1x64xf32>
    %16 = arith.addf %13, %15 : vector<1x64xf32>
    %17 = math.rsqrt %16 : vector<1x64xf32>
    %18 = arith.mulf %14, %17 : vector<1x64xf32>
    %19 = vector.broadcast %18 : vector<1x64xf32> to vector<128x64xf32>
    %20 = arith.mulf %8, %19 : vector<128x64xf32>
    %c0_10 = arith.constant 0 : index
    %c0_11 = arith.constant 0 : index
    %21 = vector.load %arg3[%c0_10, %c0_11] : memref<1x64xf32, #tpu.memory_space<vmem>>, vector<1x64xf32>
    %22 = vector.broadcast %21 : vector<1x64xf32> to vector<128x64xf32>
    %23 = arith.addf %20, %22 : vector<128x64xf32>
    %cst_12 = arith.constant 0.000000e+00 : f32
    %24 = vector.broadcast %cst_12 : f32 to vector<128x64xf32>
    %25 = arith.maximumf %23, %24 : vector<128x64xf32>
    %c0_13 = arith.constant 0 : index
    %c0_14 = arith.constant 0 : index
    %26 = vector.load %arg4[%c0_13, %c0_14] : memref<128x64xf32, #tpu.memory_space<vmem>>, vector<128x64xf32>
    tpu.vector_store %arg4[%c0_13, %c0_14], %25 {strides = array<i32>} : memref<128x64xf32, #tpu.memory_space<vmem>>, vector<128x64xf32>,
    return
  }
}

module attributes {stable_mosaic.version = 11 : i64} {
  func.func @_conv_bn_act_kernel(%arg0: memref<128x576xbf16, #tpu.memory_space<vmem>>, %arg1: memref<576x64xbf16, #tpu.memory_space<vmem>>, %arg2: memref<1x64xf32, #tpu.memory_space<vmem>>, %arg3: memref<1x64xf32, #tpu.memory_space<vmem>>, %arg4: memref<128x64xf32, #tpu.memory_space<vmem>>, %arg5: memref<128x64xf32, #tpu.memory_space<vmem>>) attributes {dimension_semantics = [], scalar_prefetch = 0 : i64, scratch_operands = 0 : i64, tpu.core_type = #tpu.core_type<tc>} {
    %c0 = arith.constant 0 : index
    %c0_0 = arith.constant 0 : index
    %0 = vector.load %arg0[%c0, %c0_0] : memref<128x576xbf16, #tpu.memory_space<vmem>>, vector<128x576xbf16>
    %c0_1 = arith.constant 0 : index
    %c0_2 = arith.constant 0 : index
    %1 = vector.load %arg1[%c0_1, %c0_2] : memref<576x64xbf16, #tpu.memory_space<vmem>>, vector<576x64xbf16>
    %cst = arith.constant dense<0.000000e+00> : vector<128x64xf32>
    %2 = tpu.matmul %0, %1, %cst {dimension_numbers = #tpu.dot_dimension_numbers<[1], [0], [0], [1], [0, 0, 1, 1], [], []>} : vector<128x576xbf16>, vector<576x64xbf16>, vector<128x64xf32> -> vector<128x64xf32>
    %cst_3 = arith.constant dense<0.000000e+00> : vector<64xf32>
    %3 = vector.multi_reduction <add>, %2, %cst_3 [0] : vector<128x64xf32> to vector<64xf32>
    %4 = vector.shape_cast %3 : vector<64xf32> to vector<1x64xf32>
    %cst_4 = arith.constant 1.280000e+02 : f32
    %5 = vector.broadcast %cst_4 : f32 to vector<1x64xf32>
    %6 = arith.divf %4, %5 : vector<1x64xf32>
    %7 = vector.broadcast %6 : vector<1x64xf32> to vector<128x64xf32>
    %8 = arith.subf %2, %7 : vector<128x64xf32>
    %9 = arith.mulf %8, %8 : vector<128x64xf32>
    %cst_5 = arith.constant dense<0.000000e+00> : vector<64xf32>
    %10 = vector.multi_reduction <add>, %9, %cst_5 [0] : vector<128x64xf32> to vector<64xf32>
    %11 = vector.shape_cast %10 : vector<64xf32> to vector<1x64xf32>
    %cst_6 = arith.constant 1.280000e+02 : f32
    %12 = vector.broadcast %cst_6 : f32 to vector<1x64xf32>
    %13 = arith.divf %11, %12 : vector<1x64xf32>
    %c0_7 = arith.constant 0 : index
    %c0_8 = arith.constant 0 : index
    %14 = vector.load %arg2[%c0_7, %c0_8] : memref<1x64xf32, #tpu.memory_space<vmem>>, vector<1x64xf32>
    %cst_9 = arith.constant 9.99999974E-6 : f32
    %15 = vector.broadcast %cst_9 : f32 to vector<1x64xf32>
    %16 = arith.addf %13, %15 : vector<1x64xf32>
    %17 = math.rsqrt %16 : vector<1x64xf32>
    %18 = arith.mulf %14, %17 : vector<1x64xf32>
    %19 = vector.broadcast %18 : vector<1x64xf32> to vector<128x64xf32>
    %20 = arith.mulf %8, %19 : vector<128x64xf32>
    %c0_10 = arith.constant 0 : index
    %c0_11 = arith.constant 0 : index
    %21 = vector.load %arg3[%c0_10, %c0_11] : memref<1x64xf32, #tpu.memory_space<vmem>>, vector<1x64xf32>
    %22 = vector.broadcast %21 : vector<1x64xf32> to vector<128x64xf32>
    %23 = arith.addf %20, %22 : vector<128x64xf32>
    %c0_12 = arith.constant 0 : index
    %c0_13 = arith.constant 0 : index
    %24 = vector.load %arg4[%c0_12, %c0_13] : memref<128x64xf32, #tpu.memory_space<vmem>>, vector<128x64xf32>
    %25 = arith.addf %23, %24 : vector<128x64xf32>
    %cst_14 = arith.constant 0.000000e+00 : f32
    %26 = vector.broadcast %cst_14 : f32 to vector<128x64xf32>
    %27 = arith.maximumf %25, %26 : vector<128x64xf32>
    %c0_15 = arith.constant 0 : index
    %c0_16 = arith.constant 0 : index
    %28 = vector.load %arg5[%c0_15, %c0_16] : memref<128x64xf32, #tpu.memory_space<vmem>>, vector<128x64xf32>
    tpu.vector_store %arg5[%c0_15, %c0_16], %27 {strides = array<i32>} : memref<128x64xf32, #tpu.memory_space<vmem>>, vector<128x64xf32>,
    return
  }
}

module attributes {stable_mosaic.version = 11 : i64} {
  func.func @_conv_bn_act_kernel(%arg0: memref<32x576xbf16, #tpu.memory_space<vmem>>, %arg1: memref<576x128xbf16, #tpu.memory_space<vmem>>, %arg2: memref<1x128xf32, #tpu.memory_space<vmem>>, %arg3: memref<1x128xf32, #tpu.memory_space<vmem>>, %arg4: memref<32x128xf32, #tpu.memory_space<vmem>>) attributes {dimension_semantics = [], scalar_prefetch = 0 : i64, scratch_operands = 0 : i64, tpu.core_type = #tpu.core_type<tc>} {
    %c0 = arith.constant 0 : index
    %c0_0 = arith.constant 0 : index
    %0 = vector.load %arg0[%c0, %c0_0] : memref<32x576xbf16, #tpu.memory_space<vmem>>, vector<32x576xbf16>
    %c0_1 = arith.constant 0 : index
    %c0_2 = arith.constant 0 : index
    %1 = vector.load %arg1[%c0_1, %c0_2] : memref<576x128xbf16, #tpu.memory_space<vmem>>, vector<576x128xbf16>
    %cst = arith.constant dense<0.000000e+00> : vector<32x128xf32>
    %2 = tpu.matmul %0, %1, %cst {dimension_numbers = #tpu.dot_dimension_numbers<[1], [0], [0], [1], [0, 0, 1, 1], [], []>} : vector<32x576xbf16>, vector<576x128xbf16>, vector<32x128xf32> -> vector<32x128xf32>
    %cst_3 = arith.constant dense<0.000000e+00> : vector<128xf32>
    %3 = vector.multi_reduction <add>, %2, %cst_3 [0] : vector<32x128xf32> to vector<128xf32>
    %4 = vector.shape_cast %3 : vector<128xf32> to vector<1x128xf32>
    %cst_4 = arith.constant 3.200000e+01 : f32
    %5 = vector.broadcast %cst_4 : f32 to vector<1x128xf32>
    %6 = arith.divf %4, %5 : vector<1x128xf32>
    %7 = vector.broadcast %6 : vector<1x128xf32> to vector<32x128xf32>
    %8 = arith.subf %2, %7 : vector<32x128xf32>
    %9 = arith.mulf %8, %8 : vector<32x128xf32>
    %cst_5 = arith.constant dense<0.000000e+00> : vector<128xf32>
    %10 = vector.multi_reduction <add>, %9, %cst_5 [0] : vector<32x128xf32> to vector<128xf32>
    %11 = vector.shape_cast %10 : vector<128xf32> to vector<1x128xf32>
    %cst_6 = arith.constant 3.200000e+01 : f32
    %12 = vector.broadcast %cst_6 : f32 to vector<1x128xf32>
    %13 = arith.divf %11, %12 : vector<1x128xf32>
    %c0_7 = arith.constant 0 : index
    %c0_8 = arith.constant 0 : index
    %14 = vector.load %arg2[%c0_7, %c0_8] : memref<1x128xf32, #tpu.memory_space<vmem>>, vector<1x128xf32>
    %cst_9 = arith.constant 9.99999974E-6 : f32
    %15 = vector.broadcast %cst_9 : f32 to vector<1x128xf32>
    %16 = arith.addf %13, %15 : vector<1x128xf32>
    %17 = math.rsqrt %16 : vector<1x128xf32>
    %18 = arith.mulf %14, %17 : vector<1x128xf32>
    %19 = vector.broadcast %18 : vector<1x128xf32> to vector<32x128xf32>
    %20 = arith.mulf %8, %19 : vector<32x128xf32>
    %c0_10 = arith.constant 0 : index
    %c0_11 = arith.constant 0 : index
    %21 = vector.load %arg3[%c0_10, %c0_11] : memref<1x128xf32, #tpu.memory_space<vmem>>, vector<1x128xf32>
    %22 = vector.broadcast %21 : vector<1x128xf32> to vector<32x128xf32>
    %23 = arith.addf %20, %22 : vector<32x128xf32>
    %cst_12 = arith.constant 0.000000e+00 : f32
    %24 = vector.broadcast %cst_12 : f32 to vector<32x128xf32>
    %25 = arith.maximumf %23, %24 : vector<32x128xf32>
    %c0_13 = arith.constant 0 : index
    %c0_14 = arith.constant 0 : index
    %26 = vector.load %arg4[%c0_13, %c0_14] : memref<32x128xf32, #tpu.memory_space<vmem>>, vector<32x128xf32>
    tpu.vector_store %arg4[%c0_13, %c0_14], %25 {strides = array<i32>} : memref<32x128xf32, #tpu.memory_space<vmem>>, vector<32x128xf32>,
    return
  }
}

module attributes {stable_mosaic.version = 11 : i64} {
  func.func @_conv_bn_act_kernel(%arg0: memref<32x64xbf16, #tpu.memory_space<vmem>>, %arg1: memref<64x128xbf16, #tpu.memory_space<vmem>>, %arg2: memref<1x128xf32, #tpu.memory_space<vmem>>, %arg3: memref<1x128xf32, #tpu.memory_space<vmem>>, %arg4: memref<32x128xf32, #tpu.memory_space<vmem>>) attributes {dimension_semantics = [], scalar_prefetch = 0 : i64, scratch_operands = 0 : i64, tpu.core_type = #tpu.core_type<tc>} {
    %c0 = arith.constant 0 : index
    %c0_0 = arith.constant 0 : index
    %0 = vector.load %arg0[%c0, %c0_0] : memref<32x64xbf16, #tpu.memory_space<vmem>>, vector<32x64xbf16>
    %c0_1 = arith.constant 0 : index
    %c0_2 = arith.constant 0 : index
    %1 = vector.load %arg1[%c0_1, %c0_2] : memref<64x128xbf16, #tpu.memory_space<vmem>>, vector<64x128xbf16>
    %cst = arith.constant dense<0.000000e+00> : vector<32x128xf32>
    %2 = tpu.matmul %0, %1, %cst {dimension_numbers = #tpu.dot_dimension_numbers<[1], [0], [0], [1], [0, 0, 1, 1], [], []>} : vector<32x64xbf16>, vector<64x128xbf16>, vector<32x128xf32> -> vector<32x128xf32>
    %cst_3 = arith.constant dense<0.000000e+00> : vector<128xf32>
    %3 = vector.multi_reduction <add>, %2, %cst_3 [0] : vector<32x128xf32> to vector<128xf32>
    %4 = vector.shape_cast %3 : vector<128xf32> to vector<1x128xf32>
    %cst_4 = arith.constant 3.200000e+01 : f32
    %5 = vector.broadcast %cst_4 : f32 to vector<1x128xf32>
    %6 = arith.divf %4, %5 : vector<1x128xf32>
    %7 = vector.broadcast %6 : vector<1x128xf32> to vector<32x128xf32>
    %8 = arith.subf %2, %7 : vector<32x128xf32>
    %9 = arith.mulf %8, %8 : vector<32x128xf32>
    %cst_5 = arith.constant dense<0.000000e+00> : vector<128xf32>
    %10 = vector.multi_reduction <add>, %9, %cst_5 [0] : vector<32x128xf32> to vector<128xf32>
    %11 = vector.shape_cast %10 : vector<128xf32> to vector<1x128xf32>
    %cst_6 = arith.constant 3.200000e+01 : f32
    %12 = vector.broadcast %cst_6 : f32 to vector<1x128xf32>
    %13 = arith.divf %11, %12 : vector<1x128xf32>
    %c0_7 = arith.constant 0 : index
    %c0_8 = arith.constant 0 : index
    %14 = vector.load %arg2[%c0_7, %c0_8] : memref<1x128xf32, #tpu.memory_space<vmem>>, vector<1x128xf32>
    %cst_9 = arith.constant 9.99999974E-6 : f32
    %15 = vector.broadcast %cst_9 : f32 to vector<1x128xf32>
    %16 = arith.addf %13, %15 : vector<1x128xf32>
    %17 = math.rsqrt %16 : vector<1x128xf32>
    %18 = arith.mulf %14, %17 : vector<1x128xf32>
    %19 = vector.broadcast %18 : vector<1x128xf32> to vector<32x128xf32>
    %20 = arith.mulf %8, %19 : vector<32x128xf32>
    %c0_10 = arith.constant 0 : index
    %c0_11 = arith.constant 0 : index
    %21 = vector.load %arg3[%c0_10, %c0_11] : memref<1x128xf32, #tpu.memory_space<vmem>>, vector<1x128xf32>
    %22 = vector.broadcast %21 : vector<1x128xf32> to vector<32x128xf32>
    %23 = arith.addf %20, %22 : vector<32x128xf32>
    %c0_12 = arith.constant 0 : index
    %c0_13 = arith.constant 0 : index
    %24 = vector.load %arg4[%c0_12, %c0_13] : memref<32x128xf32, #tpu.memory_space<vmem>>, vector<32x128xf32>
    tpu.vector_store %arg4[%c0_12, %c0_13], %23 {strides = array<i32>} : memref<32x128xf32, #tpu.memory_space<vmem>>, vector<32x128xf32>,
    return
  }
}

module attributes {stable_mosaic.version = 11 : i64} {
  func.func @_conv_bn_act_kernel(%arg0: memref<32x1152xbf16, #tpu.memory_space<vmem>>, %arg1: memref<1152x128xbf16, #tpu.memory_space<vmem>>, %arg2: memref<1x128xf32, #tpu.memory_space<vmem>>, %arg3: memref<1x128xf32, #tpu.memory_space<vmem>>, %arg4: memref<32x128xf32, #tpu.memory_space<vmem>>, %arg5: memref<32x128xf32, #tpu.memory_space<vmem>>) attributes {dimension_semantics = [], scalar_prefetch = 0 : i64, scratch_operands = 0 : i64, tpu.core_type = #tpu.core_type<tc>} {
    %c0 = arith.constant 0 : index
    %c0_0 = arith.constant 0 : index
    %0 = vector.load %arg0[%c0, %c0_0] : memref<32x1152xbf16, #tpu.memory_space<vmem>>, vector<32x1152xbf16>
    %c0_1 = arith.constant 0 : index
    %c0_2 = arith.constant 0 : index
    %1 = vector.load %arg1[%c0_1, %c0_2] : memref<1152x128xbf16, #tpu.memory_space<vmem>>, vector<1152x128xbf16>
    %cst = arith.constant dense<0.000000e+00> : vector<32x128xf32>
    %2 = tpu.matmul %0, %1, %cst {dimension_numbers = #tpu.dot_dimension_numbers<[1], [0], [0], [1], [0, 0, 1, 1], [], []>} : vector<32x1152xbf16>, vector<1152x128xbf16>, vector<32x128xf32> -> vector<32x128xf32>
    %cst_3 = arith.constant dense<0.000000e+00> : vector<128xf32>
    %3 = vector.multi_reduction <add>, %2, %cst_3 [0] : vector<32x128xf32> to vector<128xf32>
    %4 = vector.shape_cast %3 : vector<128xf32> to vector<1x128xf32>
    %cst_4 = arith.constant 3.200000e+01 : f32
    %5 = vector.broadcast %cst_4 : f32 to vector<1x128xf32>
    %6 = arith.divf %4, %5 : vector<1x128xf32>
    %7 = vector.broadcast %6 : vector<1x128xf32> to vector<32x128xf32>
    %8 = arith.subf %2, %7 : vector<32x128xf32>
    %9 = arith.mulf %8, %8 : vector<32x128xf32>
    %cst_5 = arith.constant dense<0.000000e+00> : vector<128xf32>
    %10 = vector.multi_reduction <add>, %9, %cst_5 [0] : vector<32x128xf32> to vector<128xf32>
    %11 = vector.shape_cast %10 : vector<128xf32> to vector<1x128xf32>
    %cst_6 = arith.constant 3.200000e+01 : f32
    %12 = vector.broadcast %cst_6 : f32 to vector<1x128xf32>
    %13 = arith.divf %11, %12 : vector<1x128xf32>
    %c0_7 = arith.constant 0 : index
    %c0_8 = arith.constant 0 : index
    %14 = vector.load %arg2[%c0_7, %c0_8] : memref<1x128xf32, #tpu.memory_space<vmem>>, vector<1x128xf32>
    %cst_9 = arith.constant 9.99999974E-6 : f32
    %15 = vector.broadcast %cst_9 : f32 to vector<1x128xf32>
    %16 = arith.addf %13, %15 : vector<1x128xf32>
    %17 = math.rsqrt %16 : vector<1x128xf32>
    %18 = arith.mulf %14, %17 : vector<1x128xf32>
    %19 = vector.broadcast %18 : vector<1x128xf32> to vector<32x128xf32>
    %20 = arith.mulf %8, %19 : vector<32x128xf32>
    %c0_10 = arith.constant 0 : index
    %c0_11 = arith.constant 0 : index
    %21 = vector.load %arg3[%c0_10, %c0_11] : memref<1x128xf32, #tpu.memory_space<vmem>>, vector<1x128xf32>
    %22 = vector.broadcast %21 : vector<1x128xf32> to vector<32x128xf32>
    %23 = arith.addf %20, %22 : vector<32x128xf32>
    %c0_12 = arith.constant 0 : index
    %c0_13 = arith.constant 0 : index
    %24 = vector.load %arg4[%c0_12, %c0_13] : memref<32x128xf32, #tpu.memory_space<vmem>>, vector<32x128xf32>
    %25 = arith.addf %23, %24 : vector<32x128xf32>
    %cst_14 = arith.constant 0.000000e+00 : f32
    %26 = vector.broadcast %cst_14 : f32 to vector<32x128xf32>
    %27 = arith.maximumf %25, %26 : vector<32x128xf32>
    %c0_15 = arith.constant 0 : index
    %c0_16 = arith.constant 0 : index
    %28 = vector.load %arg5[%c0_15, %c0_16] : memref<32x128xf32, #tpu.memory_space<vmem>>, vector<32x128xf32>
    tpu.vector_store %arg5[%c0_15, %c0_16], %27 {strides = array<i32>} : memref<32x128xf32, #tpu.memory_space<vmem>>, vector<32x128xf32>,
    return
  }
}

module attributes {stable_mosaic.version = 11 : i64} {
  func.func @_conv_bn_act_kernel(%arg0: memref<8x1152xbf16, #tpu.memory_space<vmem>>, %arg1: memref<1152x256xbf16, #tpu.memory_space<vmem>>, %arg2: memref<1x256xf32, #tpu.memory_space<vmem>>, %arg3: memref<1x256xf32, #tpu.memory_space<vmem>>, %arg4: memref<8x256xf32, #tpu.memory_space<vmem>>) attributes {dimension_semantics = [], scalar_prefetch = 0 : i64, scratch_operands = 0 : i64, tpu.core_type = #tpu.core_type<tc>} {
    %c0 = arith.constant 0 : index
    %c0_0 = arith.constant 0 : index
    %0 = vector.load %arg0[%c0, %c0_0] : memref<8x1152xbf16, #tpu.memory_space<vmem>>, vector<8x1152xbf16>
    %c0_1 = arith.constant 0 : index
    %c0_2 = arith.constant 0 : index
    %1 = vector.load %arg1[%c0_1, %c0_2] : memref<1152x256xbf16, #tpu.memory_space<vmem>>, vector<1152x256xbf16>
    %cst = arith.constant dense<0.000000e+00> : vector<8x256xf32>
    %2 = tpu.matmul %0, %1, %cst {dimension_numbers = #tpu.dot_dimension_numbers<[1], [0], [0], [1], [0, 0, 1, 1], [], []>} : vector<8x1152xbf16>, vector<1152x256xbf16>, vector<8x256xf32> -> vector<8x256xf32>
    %cst_3 = arith.constant dense<0.000000e+00> : vector<256xf32>
    %3 = vector.multi_reduction <add>, %2, %cst_3 [0] : vector<8x256xf32> to vector<256xf32>
    %4 = vector.shape_cast %3 : vector<256xf32> to vector<1x256xf32>
    %cst_4 = arith.constant 8.000000e+00 : f32
    %5 = vector.broadcast %cst_4 : f32 to vector<1x256xf32>
    %6 = arith.divf %4, %5 : vector<1x256xf32>
    %7 = vector.broadcast %6 : vector<1x256xf32> to vector<8x256xf32>
    %8 = arith.subf %2, %7 : vector<8x256xf32>
    %9 = arith.mulf %8, %8 : vector<8x256xf32>
    %cst_5 = arith.constant dense<0.000000e+00> : vector<256xf32>
    %10 = vector.multi_reduction <add>, %9, %cst_5 [0] : vector<8x256xf32> to vector<256xf32>
    %11 = vector.shape_cast %10 : vector<256xf32> to vector<1x256xf32>
    %cst_6 = arith.constant 8.000000e+00 : f32
    %12 = vector.broadcast %cst_6 : f32 to vector<1x256xf32>
    %13 = arith.divf %11, %12 : vector<1x256xf32>
    %c0_7 = arith.constant 0 : index
    %c0_8 = arith.constant 0 : index
    %14 = vector.load %arg2[%c0_7, %c0_8] : memref<1x256xf32, #tpu.memory_space<vmem>>, vector<1x256xf32>
    %cst_9 = arith.constant 9.99999974E-6 : f32
    %15 = vector.broadcast %cst_9 : f32 to vector<1x256xf32>
    %16 = arith.addf %13, %15 : vector<1x256xf32>
    %17 = math.rsqrt %16 : vector<1x256xf32>
    %18 = arith.mulf %14, %17 : vector<1x256xf32>
    %19 = vector.broadcast %18 : vector<1x256xf32> to vector<8x256xf32>
    %20 = arith.mulf %8, %19 : vector<8x256xf32>
    %c0_10 = arith.constant 0 : index
    %c0_11 = arith.constant 0 : index
    %21 = vector.load %arg3[%c0_10, %c0_11] : memref<1x256xf32, #tpu.memory_space<vmem>>, vector<1x256xf32>
    %22 = vector.broadcast %21 : vector<1x256xf32> to vector<8x256xf32>
    %23 = arith.addf %20, %22 : vector<8x256xf32>
    %cst_12 = arith.constant 0.000000e+00 : f32
    %24 = vector.broadcast %cst_12 : f32 to vector<8x256xf32>
    %25 = arith.maximumf %23, %24 : vector<8x256xf32>
    %c0_13 = arith.constant 0 : index
    %c0_14 = arith.constant 0 : index
    %26 = vector.load %arg4[%c0_13, %c0_14] : memref<8x256xf32, #tpu.memory_space<vmem>>, vector<8x256xf32>
    tpu.vector_store %arg4[%c0_13, %c0_14], %25 {strides = array<i32>} : memref<8x256xf32, #tpu.memory_space<vmem>>, vector<8x256xf32>,
    return
  }
}

module attributes {stable_mosaic.version = 11 : i64} {
  func.func @_conv_bn_act_kernel(%arg0: memref<8x128xbf16, #tpu.memory_space<vmem>>, %arg1: memref<128x256xbf16, #tpu.memory_space<vmem>>, %arg2: memref<1x256xf32, #tpu.memory_space<vmem>>, %arg3: memref<1x256xf32, #tpu.memory_space<vmem>>, %arg4: memref<8x256xf32, #tpu.memory_space<vmem>>) attributes {dimension_semantics = [], scalar_prefetch = 0 : i64, scratch_operands = 0 : i64, tpu.core_type = #tpu.core_type<tc>} {
    %c0 = arith.constant 0 : index
    %c0_0 = arith.constant 0 : index
    %0 = vector.load %arg0[%c0, %c0_0] : memref<8x128xbf16, #tpu.memory_space<vmem>>, vector<8x128xbf16>
    %c0_1 = arith.constant 0 : index
    %c0_2 = arith.constant 0 : index
    %1 = vector.load %arg1[%c0_1, %c0_2] : memref<128x256xbf16, #tpu.memory_space<vmem>>, vector<128x256xbf16>
    %cst = arith.constant dense<0.000000e+00> : vector<8x256xf32>
    %2 = tpu.matmul %0, %1, %cst {dimension_numbers = #tpu.dot_dimension_numbers<[1], [0], [0], [1], [0, 0, 1, 1], [], []>} : vector<8x128xbf16>, vector<128x256xbf16>, vector<8x256xf32> -> vector<8x256xf32>
    %cst_3 = arith.constant dense<0.000000e+00> : vector<256xf32>
    %3 = vector.multi_reduction <add>, %2, %cst_3 [0] : vector<8x256xf32> to vector<256xf32>
    %4 = vector.shape_cast %3 : vector<256xf32> to vector<1x256xf32>
    %cst_4 = arith.constant 8.000000e+00 : f32
    %5 = vector.broadcast %cst_4 : f32 to vector<1x256xf32>
    %6 = arith.divf %4, %5 : vector<1x256xf32>
    %7 = vector.broadcast %6 : vector<1x256xf32> to vector<8x256xf32>
    %8 = arith.subf %2, %7 : vector<8x256xf32>
    %9 = arith.mulf %8, %8 : vector<8x256xf32>
    %cst_5 = arith.constant dense<0.000000e+00> : vector<256xf32>
    %10 = vector.multi_reduction <add>, %9, %cst_5 [0] : vector<8x256xf32> to vector<256xf32>
    %11 = vector.shape_cast %10 : vector<256xf32> to vector<1x256xf32>
    %cst_6 = arith.constant 8.000000e+00 : f32
    %12 = vector.broadcast %cst_6 : f32 to vector<1x256xf32>
    %13 = arith.divf %11, %12 : vector<1x256xf32>
    %c0_7 = arith.constant 0 : index
    %c0_8 = arith.constant 0 : index
    %14 = vector.load %arg2[%c0_7, %c0_8] : memref<1x256xf32, #tpu.memory_space<vmem>>, vector<1x256xf32>
    %cst_9 = arith.constant 9.99999974E-6 : f32
    %15 = vector.broadcast %cst_9 : f32 to vector<1x256xf32>
    %16 = arith.addf %13, %15 : vector<1x256xf32>
    %17 = math.rsqrt %16 : vector<1x256xf32>
    %18 = arith.mulf %14, %17 : vector<1x256xf32>
    %19 = vector.broadcast %18 : vector<1x256xf32> to vector<8x256xf32>
    %20 = arith.mulf %8, %19 : vector<8x256xf32>
    %c0_10 = arith.constant 0 : index
    %c0_11 = arith.constant 0 : index
    %21 = vector.load %arg3[%c0_10, %c0_11] : memref<1x256xf32, #tpu.memory_space<vmem>>, vector<1x256xf32>
    %22 = vector.broadcast %21 : vector<1x256xf32> to vector<8x256xf32>
    %23 = arith.addf %20, %22 : vector<8x256xf32>
    %c0_12 = arith.constant 0 : index
    %c0_13 = arith.constant 0 : index
    %24 = vector.load %arg4[%c0_12, %c0_13] : memref<8x256xf32, #tpu.memory_space<vmem>>, vector<8x256xf32>
    tpu.vector_store %arg4[%c0_12, %c0_13], %23 {strides = array<i32>} : memref<8x256xf32, #tpu.memory_space<vmem>>, vector<8x256xf32>,
    return
  }
}

module attributes {stable_mosaic.version = 11 : i64} {
  func.func @_conv_bn_act_kernel(%arg0: memref<8x2304xbf16, #tpu.memory_space<vmem>>, %arg1: memref<2304x256xbf16, #tpu.memory_space<vmem>>, %arg2: memref<1x256xf32, #tpu.memory_space<vmem>>, %arg3: memref<1x256xf32, #tpu.memory_space<vmem>>, %arg4: memref<8x256xf32, #tpu.memory_space<vmem>>, %arg5: memref<8x256xf32, #tpu.memory_space<vmem>>) attributes {dimension_semantics = [], scalar_prefetch = 0 : i64, scratch_operands = 0 : i64, tpu.core_type = #tpu.core_type<tc>} {
    %c0 = arith.constant 0 : index
    %c0_0 = arith.constant 0 : index
    %0 = vector.load %arg0[%c0, %c0_0] : memref<8x2304xbf16, #tpu.memory_space<vmem>>, vector<8x2304xbf16>
    %c0_1 = arith.constant 0 : index
    %c0_2 = arith.constant 0 : index
    %1 = vector.load %arg1[%c0_1, %c0_2] : memref<2304x256xbf16, #tpu.memory_space<vmem>>, vector<2304x256xbf16>
    %cst = arith.constant dense<0.000000e+00> : vector<8x256xf32>
    %2 = tpu.matmul %0, %1, %cst {dimension_numbers = #tpu.dot_dimension_numbers<[1], [0], [0], [1], [0, 0, 1, 1], [], []>} : vector<8x2304xbf16>, vector<2304x256xbf16>, vector<8x256xf32> -> vector<8x256xf32>
    %cst_3 = arith.constant dense<0.000000e+00> : vector<256xf32>
    %3 = vector.multi_reduction <add>, %2, %cst_3 [0] : vector<8x256xf32> to vector<256xf32>
    %4 = vector.shape_cast %3 : vector<256xf32> to vector<1x256xf32>
    %cst_4 = arith.constant 8.000000e+00 : f32
    %5 = vector.broadcast %cst_4 : f32 to vector<1x256xf32>
    %6 = arith.divf %4, %5 : vector<1x256xf32>
    %7 = vector.broadcast %6 : vector<1x256xf32> to vector<8x256xf32>
    %8 = arith.subf %2, %7 : vector<8x256xf32>
    %9 = arith.mulf %8, %8 : vector<8x256xf32>
    %cst_5 = arith.constant dense<0.000000e+00> : vector<256xf32>
    %10 = vector.multi_reduction <add>, %9, %cst_5 [0] : vector<8x256xf32> to vector<256xf32>
    %11 = vector.shape_cast %10 : vector<256xf32> to vector<1x256xf32>
    %cst_6 = arith.constant 8.000000e+00 : f32
    %12 = vector.broadcast %cst_6 : f32 to vector<1x256xf32>
    %13 = arith.divf %11, %12 : vector<1x256xf32>
    %c0_7 = arith.constant 0 : index
    %c0_8 = arith.constant 0 : index
    %14 = vector.load %arg2[%c0_7, %c0_8] : memref<1x256xf32, #tpu.memory_space<vmem>>, vector<1x256xf32>
    %cst_9 = arith.constant 9.99999974E-6 : f32
    %15 = vector.broadcast %cst_9 : f32 to vector<1x256xf32>
    %16 = arith.addf %13, %15 : vector<1x256xf32>
    %17 = math.rsqrt %16 : vector<1x256xf32>
    %18 = arith.mulf %14, %17 : vector<1x256xf32>
    %19 = vector.broadcast %18 : vector<1x256xf32> to vector<8x256xf32>
    %20 = arith.mulf %8, %19 : vector<8x256xf32>
    %c0_10 = arith.constant 0 : index
    %c0_11 = arith.constant 0 : index
    %21 = vector.load %arg3[%c0_10, %c0_11] : memref<1x256xf32, #tpu.memory_space<vmem>>, vector<1x256xf32>
    %22 = vector.broadcast %21 : vector<1x256xf32> to vector<8x256xf32>
    %23 = arith.addf %20, %22 : vector<8x256xf32>
    %c0_12 = arith.constant 0 : index
    %c0_13 = arith.constant 0 : index
    %24 = vector.load %arg4[%c0_12, %c0_13] : memref<8x256xf32, #tpu.memory_space<vmem>>, vector<8x256xf32>
    %25 = arith.addf %23, %24 : vector<8x256xf32>
    %cst_14 = arith.constant 0.000000e+00 : f32
    %26 = vector.broadcast %cst_14 : f32 to vector<8x256xf32>
    %27 = arith.maximumf %25, %26 : vector<8x256xf32>
    %c0_15 = arith.constant 0 : index
    %c0_16 = arith.constant 0 : index
    %28 = vector.load %arg5[%c0_15, %c0_16] : memref<8x256xf32, #tpu.memory_space<vmem>>, vector<8x256xf32>
    tpu.vector_store %arg5[%c0_15, %c0_16], %27 {strides = array<i32>} : memref<8x256xf32, #tpu.memory_space<vmem>>, vector<8x256xf32>,
    return
  }
}

</mosaic_0001>

<llo_original>
// kernel: resnet_comp_forward.10
$region0: #{resnet_comp_forward.10}
  #allocation0 [shape = 'u32[]', space=smem, size = 0x4, offset = 0x4, fixed_abs, tag = 'smem constant byte address 0x4 - core index']
  #allocation1 [shape = 'u32[144,128]{1,0:T(1,128)}', space=vmem, size = 0x12000, scoped, tag = 'internal scratch']
  %s0 = inlined_call_operand.vmem [shape: bf16[512,147], index: 0, kind: input, shape index: {}]
  %s1 = inlined_call_operand.vmem [shape: bf16[147,64], index: 1, kind: input, shape index: {}]
  %s2 = inlined_call_operand.vmem [shape: f32[1,64], index: 2, kind: input, shape index: {}]
  %s3 = inlined_call_operand.vmem [shape: f32[1,64], index: 3, kind: input, shape index: {}]
  %s4 = inlined_call_operand.vmem [shape: f32[512,64], index: 4, kind: output, shape index: {}]
  %s5 = sld [smem:[#allocation0]]
  $region26: #{resnet_comp_forward.10} parent=0
    _
  %s7 = ssub.s32 1, %s5
  %s8 = scalar_select 0, %s7, %s5
  // Predicated region
  $region2: #{resnet_comp_forward.10} parent=0 // pred_check
    _
  $region3: #{resnet_comp_forward.10} parent=0 // pred_check_branch
    %10 = sbr.rel (0) target = $region5
  $region4: #{resnet_comp_forward.10} parent=0 // pred_region
    _
  $region5: #{resnet_comp_forward.10} parent=0 // pred_fallthru
    _
  // Predicated region
  $region6: #{resnet_comp_forward.10} parent=0 // pred_check
    _
  $region7: #{resnet_comp_forward.10} parent=0 // pred_check_branch
    %12 = sbr.rel (0) target = $region9
  $region8: #{resnet_comp_forward.10} parent=0 // pred_region
    _
  $region9: #{resnet_comp_forward.10} parent=0 // pred_fallthru
    _
  // Predicated region
  $region10: #{resnet_comp_forward.10} parent=0 // pred_check
    _
  $region11: #{resnet_comp_forward.10} parent=0 // pred_check_branch
    %14 = sbr.rel (0) target = $region13
  $region12: #{resnet_comp_forward.10} parent=0 // pred_region
    _
  $region13: #{resnet_comp_forward.10} parent=0 // pred_fallthru
    _
  // Predicated region
  $region14: #{resnet_comp_forward.10} parent=0 // pred_check
    _
  $region15: #{resnet_comp_forward.10} parent=0 // pred_check_branch
    %16 = sbr.rel (0) target = $region17
  $region16: #{resnet_comp_forward.10} parent=0 // pred_region
    _
  $region17: #{resnet_comp_forward.10} parent=0 // pred_fallthru
    _
  %v18 = vld [vmem:[%s0] sm:$0xff]
  %v19 = vld [vmem:[%s0 + $0x8] sm:$0xff]
  %v20 = vld [vmem:[%s0 + $0x10] sm:$0xff]
  %v21 = vld [vmem:[%s0 + $0x18] sm:$0xff]
  %v22 = vld [vmem:[%s0 + $0x20] sm:$0xff]
  %v23 = vld [vmem:[%s0 + $0x28] sm:$0xff]
  %v24 = vld [vmem:[%s0 + $0x30] sm:$0xff]
  %v25 = vld [vmem:[%s0 + $0x38] sm:$0xff]
  %v26 = vld [vmem:[%s0 + $0x40] sm:$0xff]
  %v27 = vld [vmem:[%s0 + $0x48] sm:$0xff]
  %v28 = vld [vmem:[%s0 + $0x50] sm:$0xff]
  %v29 = vld [vmem:[%s0 + $0x58] sm:$0xff]
  %v30 = vld [vmem:[%s0 + $0x60] sm:$0xff]
  %v31 = vld [vmem:[%s0 + $0x68] sm:$0xff]
  %v32 = vld [vmem:[%s0 + $0x70] sm:$0xff]
  %v33 = vld [vmem:[%s0 + $0x78] sm:$0xff]
  %v34 = vld [vmem:[%s0 + $0x80] sm:$0xff]
  %v35 = vld [vmem:[%s0 + $0x88] sm:$0xff]
  %v36 = vld [vmem:[%s0 + $0x90] sm:$0xff]
  %v37 = vld [vmem:[%s0 + $0x98] sm:$0xff]
  %v38 = vld [vmem:[%s0 + $0xa0] sm:$0xff]
  %v39 = vld [vmem:[%s0 + $0xa8] sm:$0xff]
  %v40 = vld [vmem:[%s0 + $0xb0] sm:$0xff]
  %v41 = vld [vmem:[%s0 + $0xb8] sm:$0xff]
  %v42 = vld [vmem:[%s0 + $0xc0] sm:$0xff]
  %v43 = vld [vmem:[%s0 + $0xc8] sm:$0xff]
  %v44 = vld [vmem:[%s0 + $0xd0] sm:$0xff]
  %v45 = vld [vmem:[%s0 + $0xd8] sm:$0xff]
  %v46 = vld [vmem:[%s0 + $0xe0] sm:$0xff]
  %v47 = vld [vmem:[%s0 + $0xe8] sm:$0xff]
  %v48 = vld [vmem:[%s0 + $0xf0] sm:$0xff]
  %v49 = vld [vmem:[%s0 + $0xf8] sm:$0xff]
  %v50 = vld [vmem:[%s0 + $0x100] sm:$0xff]
  %v51 = vld [vmem:[%s0 + $0x108] sm:$0xff]
  %v52 = vld [vmem:[%s0 + $0x110] sm:$0xff]
  %v53 = vld [vmem:[%s0 + $0x118] sm:$0xff]
  %v54 = vld [vmem:[%s0 + $0x120] sm:$0xff]
  %v55 = vld [vmem:[%s0 + $0x128] sm:$0xff]
  %v56 = vld [vmem:[%s0 + $0x130] sm:$0xff]
  %v57 = vld [vmem:[%s0 + $0x138] sm:$0xff]
  %v58 = vld [vmem:[%s0 + $0x140] sm:$0xff]
  %v59 = vld [vmem:[%s0 + $0x148] sm:$0xff]
  %v60 = vld [vmem:[%s0 + $0x150] sm:$0xff]
  %v61 = vld [vmem:[%s0 + $0x158] sm:$0xff]
  %v62 = vld [vmem:[%s0 + $0x160] sm:$0xff]
  %v63 = vld [vmem:[%s0 + $0x168] sm:$0xff]
  %v64 = vld [vmem:[%s0 + $0x170] sm:$0xff]
  %v65 = vld [vmem:[%s0 + $0x178] sm:$0xff]
  %v66 = vld [vmem:[%s0 + $0x180] sm:$0xff]
  %v67 = vld [vmem:[%s0 + $0x188] sm:$0xff]
  %v68 = vld [vmem:[%s0 + $0x190] sm:$0xff]
  %v69 = vld [vmem:[%s0 + $0x198] sm:$0xff]
  %v70 = vld [vmem:[%s0 + $0x1a0] sm:$0xff]
  %v71 = vld [vmem:[%s0 + $0x1a8] sm:$0xff]
  %v72 = vld [vmem:[%s0 + $0x1b0] sm:$0xff]
  %v73 = vld [vmem:[%s0 + $0x1b8] sm:$0xff]
  %v74 = vld [vmem:[%s0 + $0x1c0] sm:$0xff]
  %v75 = vld [vmem:[%s0 + $0x1c8] sm:$0xff]
  %v76 = vld [vmem:[%s0 + $0x1d0] sm:$0xff]
  %v77 = vld [vmem:[%s0 + $0x1d8] sm:$0xff]
  %v78 = vld [vmem:[%s0 + $0x1e0] sm:$0xff]
  %v79 = vld [vmem:[%s0 + $0x1e8] sm:$0xff]
  %v80 = vld [vmem:[%s0 + $0x1f0] sm:$0xff]
  %v81 = vld [vmem:[%s0 + $0x1f8] sm:$0xff]
  %v82 = vld [vmem:[%s1] sm:$0xf]
  %v83 = vld [vmem:[%s1 + $0x4] sm:$0xf]
  %v84 = vld [vmem:[%s1 + $0x8] sm:$0xf]
  %v85 = vld [vmem:[%s1 + $0xc] sm:$0xf]
  %v86 = vld [vmem:[%s1 + $0x10] sm:$0xf]
  %v87 = vld [vmem:[%s1 + $0x14] sm:$0xf]
  %v88 = vld [vmem:[%s1 + $0x18] sm:$0xf]
  %v89 = vld [vmem:[%s1 + $0x1c] sm:$0xf]
  %v90 = vld [vmem:[%s1 + $0x20] sm:$0xf]
  %v91 = vld [vmem:[%s1 + $0x24] sm:$0xf]
  %v92 = vld [vmem:[%s1 + $0x28] sm:$0xf]
  %v93 = vld [vmem:[%s1 + $0x2c] sm:$0xf]
  %v94 = vld [vmem:[%s1 + $0x30] sm:$0xf]
  %v95 = vld [vmem:[%s1 + $0x34] sm:$0xf]
  %v96 = vld [vmem:[%s1 + $0x38] sm:$0xf]
  %v97 = vld [vmem:[%s1 + $0x3c] sm:$0xf]
  %v98 = vld [vmem:[%s1 + $0x40] sm:$0xf]
  %v99 = vld [vmem:[%s1 + $0x44] sm:$0xf]
  %v100 = vld [vmem:[%s1 + $0x48] sm:$0x3]
  %v165 = vunpack.c.l.b16 %v18
  %v166 = vunpack.c.h.b16 %v18
  %v167 = vunpack.c.l.b16 %v19
  %v168 = vunpack.c.h.b16 %v19
  %v169 = vunpack.c.l.b16 %v20
  %v170 = vunpack.c.h.b16 %v20
  %v171 = vunpack.c.l.b16 %v21
  %v172 = vunpack.c.h.b16 %v21
  %v173 = vunpack.c.l.b16 %v22
  %v174 = vunpack.c.h.b16 %v22
  %v175 = vunpack.c.l.b16 %v23
  %v176 = vunpack.c.h.b16 %v23
  %v177 = vunpack.c.l.b16 %v24
  %v178 = vunpack.c.h.b16 %v24
  %v179 = vunpack.c.l.b16 %v25
  %v180 = vunpack.c.h.b16 %v25
  %v181 = vunpack.c.l.b16 %v26
  %v182 = vunpack.c.h.b16 %v26
  %v183 = vunpack.c.l.b16 %v27
  %v184 = vunpack.c.h.b16 %v27
  %v185 = vunpack.c.l.b16 %v28
  %v186 = vunpack.c.h.b16 %v28
  %v187 = vunpack.c.l.b16 %v29
  %v188 = vunpack.c.h.b16 %v29
  %v189 = vunpack.c.l.b16 %v30
  %v190 = vunpack.c.h.b16 %v30
  %v191 = vunpack.c.l.b16 %v31
  %v192 = vunpack.c.h.b16 %v31
  %v193 = vunpack.c.l.b16 %v32
  %v194 = vunpack.c.h.b16 %v32
  %v195 = vunpack.c.l.b16 %v33
  %v196 = vunpack.c.h.b16 %v33
  %v197 = vunpack.c.l.b16 %v34
  %v198 = vunpack.c.h.b16 %v34
  %v199 = vunpack.c.l.b16 %v35
  %v200 = vunpack.c.h.b16 %v35
  %v201 = vunpack.c.l.b16 %v36
  %v202 = vunpack.c.h.b16 %v36
  %v203 = vunpack.c.l.b16 %v37
  %v204 = vunpack.c.h.b16 %v37
  %v205 = vunpack.c.l.b16 %v38
  %v206 = vunpack.c.h.b16 %v38
  %v207 = vunpack.c.l.b16 %v39
  %v208 = vunpack.c.h.b16 %v39
  %v209 = vunpack.c.l.b16 %v40
  %v210 = vunpack.c.h.b16 %v40
  %v211 = vunpack.c.l.b16 %v41
  %v212 = vunpack.c.h.b16 %v41
  %v213 = vunpack.c.l.b16 %v42
  %v214 = vunpack.c.h.b16 %v42
  %v215 = vunpack.c.l.b16 %v43
  %v216 = vunpack.c.h.b16 %v43
  %v217 = vunpack.c.l.b16 %v44
  %v218 = vunpack.c.h.b16 %v44
  %v219 = vunpack.c.l.b16 %v45
  %v220 = vunpack.c.h.b16 %v45
  %v221 = vunpack.c.l.b16 %v46
  %v222 = vunpack.c.h.b16 %v46
  %v223 = vunpack.c.l.b16 %v47
  %v224 = vunpack.c.h.b16 %v47
  %v225 = vunpack.c.l.b16 %v48
  %v226 = vunpack.c.h.b16 %v48
  %v227 = vunpack.c.l.b16 %v49
  %v228 = vunpack.c.h.b16 %v49
  %v229 = vunpack.c.l.b16 %v50
  %v230 = vunpack.c.h.b16 %v50
  %v231 = vunpack.c.l.b16 %v51
  %v232 = vunpack.c.h.b16 %v51
  %v233 = vunpack.c.l.b16 %v52
  %v234 = vunpack.c.h.b16 %v52
  %v235 = vunpack.c.l.b16 %v53
  %v236 = vunpack.c.h.b16 %v53
  %v237 = vunpack.c.l.b16 %v54
  %v238 = vunpack.c.h.b16 %v54
  %v239 = vunpack.c.l.b16 %v55
  %v240 = vunpack.c.h.b16 %v55
  %v241 = vunpack.c.l.b16 %v56
  %v242 = vunpack.c.h.b16 %v56
  %v243 = vunpack.c.l.b16 %v57
  %v244 = vunpack.c.h.b16 %v57
  %v245 = vunpack.c.l.b16 %v58
  %v246 = vunpack.c.h.b16 %v58
  %v247 = vunpack.c.l.b16 %v59
  %v248 = vunpack.c.h.b16 %v59
  %v249 = vunpack.c.l.b16 %v60
  %v250 = vunpack.c.h.b16 %v60
  %v251 = vunpack.c.l.b16 %v61
  %v252 = vunpack.c.h.b16 %v61
  %v253 = vunpack.c.l.b16 %v62
  %v254 = vunpack.c.h.b16 %v62
  %v255 = vunpack.c.l.b16 %v63
  %v256 = vunpack.c.h.b16 %v63
  %v257 = vunpack.c.l.b16 %v64
  %v258 = vunpack.c.h.b16 %v64
  %v259 = vunpack.c.l.b16 %v65
  %v260 = vunpack.c.h.b16 %v65
  %v261 = vunpack.c.l.b16 %v66
  %v262 = vunpack.c.h.b16 %v66
  %v263 = vunpack.c.l.b16 %v67
  %v264 = vunpack.c.h.b16 %v67
  %v265 = vunpack.c.l.b16 %v68
  %v266 = vunpack.c.h.b16 %v68
  %v267 = vunpack.c.l.b16 %v69
  %v268 = vunpack.c.h.b16 %v69
  %v269 = vunpack.c.l.b16 %v70
  %v270 = vunpack.c.h.b16 %v70
  %v271 = vunpack.c.l.b16 %v71
  %v272 = vunpack.c.h.b16 %v71
  %v273 = vunpack.c.l.b16 %v72
  %v274 = vunpack.c.h.b16 %v72
  %v275 = vunpack.c.l.b16 %v73
  %v276 = vunpack.c.h.b16 %v73
  %v277 = vunpack.c.l.b16 %v74
  %v278 = vunpack.c.h.b16 %v74
  %v279 = vunpack.c.l.b16 %v75
  %v280 = vunpack.c.h.b16 %v75
  %v281 = vunpack.c.l.b16 %v76
  %v282 = vunpack.c.h.b16 %v76
  %v283 = vunpack.c.l.b16 %v77
  %v284 = vunpack.c.h.b16 %v77
  %v285 = vunpack.c.l.b16 %v78
  %v286 = vunpack.c.h.b16 %v78
  %v287 = vunpack.c.l.b16 %v79
  %v288 = vunpack.c.h.b16 %v79
  %v289 = vunpack.c.l.b16 %v80
  %v290 = vunpack.c.h.b16 %v80
  %v291 = vunpack.c.l.b16 %v81
  %v292 = vunpack.c.h.b16 %v81
  %v293 = vpack.c.b16 %v167, %v165
  %v294 = vpack.c.b16 %v168, %v166
  %v295 = vpack.c.b16 %v171, %v169
  %v296 = vpack.c.b16 %v172, %v170
  %v297 = vpack.c.b16 %v175, %v173
  %v298 = vpack.c.b16 %v176, %v174
  %v299 = vpack.c.b16 %v179, %v177
  %v300 = vpack.c.b16 %v180, %v178
  %v301 = vpack.c.b16 %v183, %v181
  %v302 = vpack.c.b16 %v184, %v182
  %v303 = vpack.c.b16 %v187, %v185
  %v304 = vpack.c.b16 %v188, %v186
  %v305 = vpack.c.b16 %v191, %v189
  %v306 = vpack.c.b16 %v192, %v190
  %v307 = vpack.c.b16 %v195, %v193
  %v308 = vpack.c.b16 %v196, %v194
  %v309 = vpack.c.b16 %v199, %v197
  %v310 = vpack.c.b16 %v200, %v198
  %v311 = vpack.c.b16 %v203, %v201
  %v312 = vpack.c.b16 %v204, %v202
  %v313 = vpack.c.b16 %v207, %v205
  %v314 = vpack.c.b16 %v208, %v206
  %v315 = vpack.c.b16 %v211, %v209
  %v316 = vpack.c.b16 %v212, %v210
  %v317 = vpack.c.b16 %v215, %v213
  %v318 = vpack.c.b16 %v216, %v214
  %v319 = vpack.c.b16 %v219, %v217
  %v320 = vpack.c.b16 %v220, %v218
  %v321 = vpack.c.b16 %v223, %v221
  %v322 = vpack.c.b16 %v224, %v222
  %v323 = vpack.c.b16 %v227, %v225
  %v324 = vpack.c.b16 %v228, %v226
  %v325 = vpack.c.b16 %v231, %v229
  %v326 = vpack.c.b16 %v232, %v230
  %v327 = vpack.c.b16 %v235, %v233
  %v328 = vpack.c.b16 %v236, %v234
  %v329 = vpack.c.b16 %v239, %v237
  %v330 = vpack.c.b16 %v240, %v238
  %v331 = vpack.c.b16 %v243, %v241
  %v332 = vpack.c.b16 %v244, %v242
  %v333 = vpack.c.b16 %v247, %v245
  %v334 = vpack.c.b16 %v248, %v246
  %v335 = vpack.c.b16 %v251, %v249
  %v336 = vpack.c.b16 %v252, %v250
  %v337 = vpack.c.b16 %v255, %v253
  %v338 = vpack.c.b16 %v256, %v254
  %v339 = vpack.c.b16 %v259, %v257
  %v340 = vpack.c.b16 %v260, %v258
  %v341 = vpack.c.b16 %v263, %v261
  %v342 = vpack.c.b16 %v264, %v262
  %v343 = vpack.c.b16 %v267, %v265
  %v344 = vpack.c.b16 %v268, %v266
  %v345 = vpack.c.b16 %v271, %v269
  %v346 = vpack.c.b16 %v272, %v270
  %v347 = vpack.c.b16 %v275, %v273
  %v348 = vpack.c.b16 %v276, %v274
  %v349 = vpack.c.b16 %v279, %v277
  %v350 = vpack.c.b16 %v280, %v278
  %v351 = vpack.c.b16 %v283, %v281
  %v352 = vpack.c.b16 %v284, %v282
  %v353 = vpack.c.b16 %v287, %v285
  %v354 = vpack.c.b16 %v288, %v286
  %v355 = vpack.c.b16 %v291, %v289
  %v356 = vpack.c.b16 %v292, %v290
  %v408 = vunpack.c.l.b16 %v82
  %v409 = vunpack.c.l.b16 %v83
  %v410 = vunpack.c.l.b16 %v84
  %v411 = vunpack.c.l.b16 %v85
  %v412 = vunpack.c.l.b16 %v86
  %v413 = vunpack.c.l.b16 %v87
  %v414 = vunpack.c.l.b16 %v88
  %v415 = vunpack.c.l.b16 %v89
  %v416 = vunpack.c.l.b16 %v90
  %v417 = vunpack.c.l.b16 %v91
  %v418 = vunpack.c.l.b16 %v92
  %v419 = vunpack.c.l.b16 %v93
  %v420 = vunpack.c.l.b16 %v94
  %v421 = vunpack.c.l.b16 %v95
  %v422 = vunpack.c.l.b16 %v96
  %v423 = vunpack.c.l.b16 %v97
  %v424 = vunpack.c.l.b16 %v98
  %v425 = vunpack.c.l.b16 %v99
  %v426 = vunpack.c.l.b16 %v100
  %v427 = vpack.c.b16 %v409, %v408
  %v428 = vpack.c.b16 %v411, %v410
  %v429 = vpack.c.b16 %v413, %v412
  %v430 = vpack.c.b16 %v415, %v414
  %v431 = vpack.c.b16 %v417, %v416
  %v432 = vpack.c.b16 %v419, %v418
  %v433 = vpack.c.b16 %v421, %v420
  %v434 = vpack.c.b16 %v423, %v422
  %v435 = vpack.c.b16 %v425, %v424
  %v436 = vpack.c.b16 %v426, %v426
  %vm446 = vcmask 154624
  %v448 = vsel %vm446, %v294, 0
  %v451 = vsel %vm446, %v296, 0
  %v454 = vsel %vm446, %v298, 0
  %v457 = vsel %vm446, %v300, 0
  %v460 = vsel %vm446, %v302, 0
  %v463 = vsel %vm446, %v304, 0
  %v466 = vsel %vm446, %v306, 0
  %v469 = vsel %vm446, %v308, 0
  %v472 = vsel %vm446, %v310, 0
  %v475 = vsel %vm446, %v312, 0
  %v478 = vsel %vm446, %v314, 0
  %v481 = vsel %vm446, %v316, 0
  %v484 = vsel %vm446, %v318, 0
  %v487 = vsel %vm446, %v320, 0
  %v490 = vsel %vm446, %v322, 0
  %v493 = vsel %vm446, %v324, 0
  %v496 = vsel %vm446, %v326, 0
  %v499 = vsel %vm446, %v328, 0
  %v502 = vsel %vm446, %v330, 0
  %v505 = vsel %vm446, %v332, 0
  %v508 = vsel %vm446, %v334, 0
  %v511 = vsel %vm446, %v336, 0
  %v514 = vsel %vm446, %v338, 0
  %v517 = vsel %vm446, %v340, 0
  %v520 = vsel %vm446, %v342, 0
  %v523 = vsel %vm446, %v344, 0
  %v526 = vsel %vm446, %v346, 0
  %v529 = vsel %vm446, %v348, 0
  %v532 = vsel %vm446, %v350, 0
  %v535 = vsel %vm446, %v352, 0
  %v538 = vsel %vm446, %v354, 0
  %v541 = vsel %vm446, %v356, 0
  %vm543 = vcmask 1040384
  %vm544 = vcmask 1041408
  %v545 = vsel %vm543, 4294967295, 65535
  %v546 = vsel %vm544, %v545, 0
  %v548 = vand.u32 %v436, %v546
  %550 = vmatprep.subr.bf16.mxu0 0
  %551 = vmatpush1.bf16.msra.mxu0 %v427
  %552 = vmatprep.subr.bf16.mxu0 0
  %553 = vmatpush1.bf16.msra.mxu0 %v428
  %554 = vmatprep.subr.bf16.mxu0 0
  %555 = vmatpush1.bf16.msra.mxu0 %v429
  %556 = vmatprep.subr.bf16.mxu0 0
  %557 = vmatpush1.bf16.msra.mxu0 %v430
  %558 = vmatprep.subr.bf16.mxu0 0
  %559 = vmatpush1.bf16.msra.mxu0 %v431
  %560 = vmatprep.subr.bf16.mxu0 0
  %561 = vmatpush1.bf16.msra.mxu0 %v432
  %562 = vmatprep.subr.bf16.mxu0 0
  %563 = vmatpush1.bf16.msra.mxu0 %v433
  %564 = vmatprep.subr.bf16.mxu0 0
  %565 = vmatpush1.bf16.msra.mxu0 %v434
  %566 = vmatprep.subr.bf16.mxu0 0
  %567 = vmatpush1.bf16.msra.mxu0 %v435
  %568 = vmatprep.subr.bf16.mxu0 0
  %569 = vmatpush1.bf16.msra.mxu0 %v548
  %570 = vmatprep.subr.bf16.mxu0 0
  %571 = vmatpush1.bf16.msra.mxu0 0
  %572 = vmatprep.subr.bf16.mxu0 0
  %573 = vmatpush1.bf16.msra.mxu0 0
  %574 = vmatprep.subr.bf16.mxu0 0
  %575 = vmatpush1.bf16.msra.mxu0 0
  %576 = vmatprep.subr.bf16.mxu0 0
  %577 = vmatpush1.bf16.msra.mxu0 0
  %578 = vmatprep.subr.bf16.mxu0 0
  %579 = vmatpush1.bf16.msra.mxu0 0
  %580 = vmatprep.subr.bf16.mxu0 0
  %581 = vmatpush1.bf16.msra.mxu0 0
  %582 = vmatprep.mubr.bf16.mxu0 %v448
  %583 = vmatmul.mubr.bf16.gmra.mrb[0].mxu0 %v293
  %v584 = vpop.f32.mrb[0].mxu0
  %v585 = vadd.f32 0.0, %v584
  %v586 = vpop.f32.mrb[0].mxu0
  %v587 = vpop.f32.mrb[0].mxu0
  %v588 = vadd.f32 0.0, %v587
  %v589 = vpop.f32.mrb[0].mxu0
  %590 = vmatprep.mubr.bf16.mxu0 %v451
  %591 = vmatmul.mubr.bf16.gmra.mrb[0].mxu0 %v295
  %v592 = vpop.f32.mrb[0].mxu0
  %v593 = vadd.f32 0.0, %v592
  %v594 = vpop.f32.mrb[0].mxu0
  %v595 = vpop.f32.mrb[0].mxu0
  %v596 = vadd.f32 0.0, %v595
  %v597 = vpop.f32.mrb[0].mxu0
  %598 = vmatprep.mubr.bf16.mxu0 %v454
  %599 = vmatmul.mubr.bf16.gmra.mrb[0].mxu0 %v297
  %v600 = vpop.f32.mrb[0].mxu0
  %v601 = vadd.f32 0.0, %v600
  %v602 = vpop.f32.mrb[0].mxu0
  %v603 = vpop.f32.mrb[0].mxu0
  %v604 = vadd.f32 0.0, %v603
  %v605 = vpop.f32.mrb[0].mxu0
  %606 = vmatprep.mubr.bf16.mxu0 %v457
  %607 = vmatmul.mubr.bf16.gmra.mrb[0].mxu0 %v299
  %v608 = vpop.f32.mrb[0].mxu0
  %v609 = vadd.f32 0.0, %v608
  %v610 = vpop.f32.mrb[0].mxu0
  %v611 = vpop.f32.mrb[0].mxu0
  %v612 = vadd.f32 0.0, %v611
  %v613 = vpop.f32.mrb[0].mxu0
  %614 = vmatprep.mubr.bf16.mxu0 %v460
  %615 = vmatmul.mubr.bf16.gmra.mrb[0].mxu0 %v301
  %v616 = vpop.f32.mrb[0].mxu0
  %v617 = vadd.f32 0.0, %v616
  %v618 = vpop.f32.mrb[0].mxu0
  %v619 = vpop.f32.mrb[0].mxu0
  %v620 = vadd.f32 0.0, %v619
  %v621 = vpop.f32.mrb[0].mxu0
  %622 = vmatprep.mubr.bf16.mxu0 %v463
  %623 = vmatmul.mubr.bf16.gmra.mrb[0].mxu0 %v303
  %v624 = vpop.f32.mrb[0].mxu0
  %v625 = vadd.f32 0.0, %v624
  %v626 = vpop.f32.mrb[0].mxu0
  %v627 = vpop.f32.mrb[0].mxu0
  %v628 = vadd.f32 0.0, %v627
  %v629 = vpop.f32.mrb[0].mxu0
  %630 = vmatprep.mubr.bf16.mxu0 %v466
  %631 = vmatmul.mubr.bf16.gmra.mrb[0].mxu0 %v305
  %v632 = vpop.f32.mrb[0].mxu0
  %v633 = vadd.f32 0.0, %v632
  %v634 = vpop.f32.mrb[0].mxu0
  %v635 = vpop.f32.mrb[0].mxu0
  %v636 = vadd.f32 0.0, %v635
  %v637 = vpop.f32.mrb[0].mxu0
  %638 = vmatprep.mubr.bf16.mxu0 %v469
  %639 = vmatmul.mubr.bf16.gmra.mrb[0].mxu0 %v307
  %v640 = vpop.f32.mrb[0].mxu0
  %v641 = vadd.f32 0.0, %v640
  %v642 = vpop.f32.mrb[0].mxu0
  %v643 = vpop.f32.mrb[0].mxu0
  %v644 = vadd.f32 0.0, %v643
  %v645 = vpop.f32.mrb[0].mxu0
  %646 = vmatprep.mubr.bf16.mxu0 %v472
  %647 = vmatmul.mubr.bf16.gmra.mrb[0].mxu0 %v309
  %v648 = vpop.f32.mrb[0].mxu0
  %v649 = vadd.f32 0.0, %v648
  %v650 = vpop.f32.mrb[0].mxu0
  %v651 = vpop.f32.mrb[0].mxu0
  %v652 = vadd.f32 0.0, %v651
  %v653 = vpop.f32.mrb[0].mxu0
  %654 = vmatprep.mubr.bf16.mxu0 %v475
  %655 = vmatmul.mubr.bf16.gmra.mrb[0].mxu0 %v311
  %v656 = vpop.f32.mrb[0].mxu0
  %v657 = vadd.f32 0.0, %v656
  %v658 = vpop.f32.mrb[0].mxu0
  %v659 = vpop.f32.mrb[0].mxu0
  %v660 = vadd.f32 0.0, %v659
  %v661 = vpop.f32.mrb[0].mxu0
  %662 = vmatprep.mubr.bf16.mxu0 %v478
  %663 = vmatmul.mubr.bf16.gmra.mrb[0].mxu0 %v313
  %v664 = vpop.f32.mrb[0].mxu0
  %v665 = vadd.f32 0.0, %v664
  %v666 = vpop.f32.mrb[0].mxu0
  %v667 = vpop.f32.mrb[0].mxu0
  %v668 = vadd.f32 0.0, %v667
  %v669 = vpop.f32.mrb[0].mxu0
  %670 = vmatprep.mubr.bf16.mxu0 %v481
  %671 = vmatmul.mubr.bf16.gmra.mrb[0].mxu0 %v315
  %v672 = vpop.f32.mrb[0].mxu0
  %v673 = vadd.f32 0.0, %v672
  %v674 = vpop.f32.mrb[0].mxu0
  %v675 = vpop.f32.mrb[0].mxu0
  %v676 = vadd.f32 0.0, %v675
  %v677 = vpop.f32.mrb[0].mxu0
  %678 = vmatprep.mubr.bf16.mxu0 %v484
  %679 = vmatmul.mubr.bf16.gmra.mrb[0].mxu0 %v317
  %v680 = vpop.f32.mrb[0].mxu0
  %v681 = vadd.f32 0.0, %v680
  %v682 = vpop.f32.mrb[0].mxu0
  %v683 = vpop.f32.mrb[0].mxu0
  %v684 = vadd.f32 0.0, %v683
  %v685 = vpop.f32.mrb[0].mxu0
  %686 = vmatprep.mubr.bf16.mxu0 %v487
  %687 = vmatmul.mubr.bf16.gmra.mrb[0].mxu0 %v319
  %v688 = vpop.f32.mrb[0].mxu0
  %v689 = vadd.f32 0.0, %v688
  %v690 = vpop.f32.mrb[0].mxu0
  %v691 = vpop.f32.mrb[0].mxu0
  %v692 = vadd.f32 0.0, %v691
  %v693 = vpop.f32.mrb[0].mxu0
  %694 = vmatprep.mubr.bf16.mxu0 %v490
  %695 = vmatmul.mubr.bf16.gmra.mrb[0].mxu0 %v321
  %v696 = vpop.f32.mrb[0].mxu0
  %v697 = vadd.f32 0.0, %v696
  %v698 = vpop.f32.mrb[0].mxu0
  %v699 = vpop.f32.mrb[0].mxu0
  %v700 = vadd.f32 0.0, %v699
  %v701 = vpop.f32.mrb[0].mxu0
  %702 = vmatprep.mubr.bf16.mxu0 %v493
  %703 = vmatmul.mubr.bf16.gmra.mrb[0].mxu0 %v323
  %v704 = vpop.f32.mrb[0].mxu0
  %v705 = vadd.f32 0.0, %v704
  %v706 = vpop.f32.mrb[0].mxu0
  %v707 = vpop.f32.mrb[0].mxu0
  %v708 = vadd.f32 0.0, %v707
  %v709 = vpop.f32.mrb[0].mxu0
  %710 = vmatprep.mubr.bf16.mxu0 %v496
  %711 = vmatmul.mubr.bf16.gmra.mrb[0].mxu0 %v325
  %v712 = vpop.f32.mrb[0].mxu0
  %v713 = vadd.f32 0.0, %v712
  %v714 = vpop.f32.mrb[0].mxu0
  %v715 = vpop.f32.mrb[0].mxu0
  %v716 = vadd.f32 0.0, %v715
  %v717 = vpop.f32.mrb[0].mxu0
  %718 = vmatprep.mubr.bf16.mxu0 %v499
  %719 = vmatmul.mubr.bf16.gmra.mrb[0].mxu0 %v327
  %v720 = vpop.f32.mrb[0].mxu0
  %v721 = vadd.f32 0.0, %v720
  %v722 = vpop.f32.mrb[0].mxu0
  %v723 = vpop.f32.mrb[0].mxu0
  %v724 = vadd.f32 0.0, %v723
  %v725 = vpop.f32.mrb[0].mxu0
  %726 = vmatprep.mubr.bf16.mxu0 %v502
  %727 = vmatmul.mubr.bf16.gmra.mrb[0].mxu0 %v329
  %v728 = vpop.f32.mrb[0].mxu0
  %v729 = vadd.f32 0.0, %v728
  %v730 = vpop.f32.mrb[0].mxu0
  %v731 = vpop.f32.mrb[0].mxu0
  %v732 = vadd.f32 0.0, %v731
  %v733 = vpop.f32.mrb[0].mxu0
  %734 = vmatprep.mubr.bf16.mxu0 %v505
  %735 = vmatmul.mubr.bf16.gmra.mrb[0].mxu0 %v331
  %v736 = vpop.f32.mrb[0].mxu0
  %v737 = vadd.f32 0.0, %v736
  %v738 = vpop.f32.mrb[0].mxu0
  %v739 = vpop.f32.mrb[0].mxu0
  %v740 = vadd.f32 0.0, %v739
  %v741 = vpop.f32.mrb[0].mxu0
  %742 = vmatprep.mubr.bf16.mxu0 %v508
  %743 = vmatmul.mubr.bf16.gmra.mrb[0].mxu0 %v333
  %v744 = vpop.f32.mrb[0].mxu0
  %v745 = vadd.f32 0.0, %v744
  %v746 = vpop.f32.mrb[0].mxu0
  %v747 = vpop.f32.mrb[0].mxu0
  %v748 = vadd.f32 0.0, %v747
  %v749 = vpop.f32.mrb[0].mxu0
  %750 = vmatprep.mubr.bf16.mxu0 %v511
  %751 = vmatmul.mubr.bf16.gmra.mrb[0].mxu0 %v335
  %v752 = vpop.f32.mrb[0].mxu0
  %v753 = vadd.f32 0.0, %v752
  %v754 = vpop.f32.mrb[0].mxu0
  %v755 = vpop.f32.mrb[0].mxu0
  %v756 = vadd.f32 0.0, %v755
  %v757 = vpop.f32.mrb[0].mxu0
  %758 = vmatprep.mubr.bf16.mxu0 %v514
  %759 = vmatmul.mubr.bf16.gmra.mrb[0].mxu0 %v337
  %v760 = vpop.f32.mrb[0].mxu0
  %v761 = vadd.f32 0.0, %v760
  %v762 = vpop.f32.mrb[0].mxu0
  %v763 = vpop.f32.mrb[0].mxu0
  %v764 = vadd.f32 0.0, %v763
  %v765 = vpop.f32.mrb[0].mxu0
  %766 = vmatprep.mubr.bf16.mxu0 %v517
  %767 = vmatmul.mubr.bf16.gmra.mrb[0].mxu0 %v339
  %v768 = vpop.f32.mrb[0].mxu0
  %v769 = vadd.f32 0.0, %v768
  %v770 = vpop.f32.mrb[0].mxu0
  %v771 = vpop.f32.mrb[0].mxu0
  %v772 = vadd.f32 0.0, %v771
  %v773 = vpop.f32.mrb[0].mxu0
  %774 = vmatprep.mubr.bf16.mxu0 %v520
  %775 = vmatmul.mubr.bf16.gmra.mrb[0].mxu0 %v341
  %v776 = vpop.f32.mrb[0].mxu0
  %v777 = vadd.f32 0.0, %v776
  %v778 = vpop.f32.mrb[0].mxu0
  %v779 = vpop.f32.mrb[0].mxu0
  %v780 = vadd.f32 0.0, %v779
  %v781 = vpop.f32.mrb[0].mxu0
  %782 = vmatprep.mubr.bf16.mxu0 %v523
  %783 = vmatmul.mubr.bf16.gmra.mrb[0].mxu0 %v343
  %v784 = vpop.f32.mrb[0].mxu0
  %v785 = vadd.f32 0.0, %v784
  %v786 = vpop.f32.mrb[0].mxu0
  %v787 = vpop.f32.mrb[0].mxu0
  %v788 = vadd.f32 0.0, %v787
  %v789 = vpop.f32.mrb[0].mxu0
  %790 = vmatprep.mubr.bf16.mxu0 %v526
  %791 = vmatmul.mubr.bf16.gmra.mrb[0].mxu0 %v345
  %v792 = vpop.f32.mrb[0].mxu0
  %v793 = vadd.f32 0.0, %v792
  %v794 = vpop.f32.mrb[0].mxu0
  %v795 = vpop.f32.mrb[0].mxu0
  %v796 = vadd.f32 0.0, %v795
  %v797 = vpop.f32.mrb[0].mxu0
  %798 = vmatprep.mubr.bf16.mxu0 %v529
  %799 = vmatmul.mubr.bf16.gmra.mrb[0].mxu0 %v347
  %v800 = vpop.f32.mrb[0].mxu0
  %v801 = vadd.f32 0.0, %v800
  %v802 = vpop.f32.mrb[0].mxu0
  %v803 = vpop.f32.mrb[0].mxu0
  %v804 = vadd.f32 0.0, %v803
  %v805 = vpop.f32.mrb[0].mxu0
  %806 = vmatprep.mubr.bf16.mxu0 %v532
  %807 = vmatmul.mubr.bf16.gmra.mrb[0].mxu0 %v349
  %v808 = vpop.f32.mrb[0].mxu0
  %v809 = vadd.f32 0.0, %v808
  %v810 = vpop.f32.mrb[0].mxu0
  %v811 = vpop.f32.mrb[0].mxu0
  %v812 = vadd.f32 0.0, %v811
  %v813 = vpop.f32.mrb[0].mxu0
  %814 = vmatprep.mubr.bf16.mxu0 %v535
  %815 = vmatmul.mubr.bf16.gmra.mrb[0].mxu0 %v351
  %v816 = vpop.f32.mrb[0].mxu0
  %v817 = vadd.f32 0.0, %v816
  %v818 = vpop.f32.mrb[0].mxu0
  %v819 = vpop.f32.mrb[0].mxu0
  %v820 = vadd.f32 0.0, %v819
  %v821 = vpop.f32.mrb[0].mxu0
  %822 = vmatprep.mubr.bf16.mxu0 %v538
  %823 = vmatmul.mubr.bf16.gmra.mrb[0].mxu0 %v353
  %v824 = vpop.f32.mrb[0].mxu0
  %v825 = vadd.f32 0.0, %v824
  %v826 = vpop.f32.mrb[0].mxu0
  %v827 = vpop.f32.mrb[0].mxu0
  %v828 = vadd.f32 0.0, %v827
  %v829 = vpop.f32.mrb[0].mxu0
  %830 = vmatprep.mubr.bf16.mxu0 %v541
  %831 = vmatmul.mubr.bf16.gmra.mrb[0].mxu0 %v355
  %v832 = vpop.f32.mrb[0].mxu0
  %v833 = vadd.f32 0.0, %v832
  %v834 = vpop.f32.mrb[0].mxu0
  %v835 = vpop.f32.mrb[0].mxu0
  %v836 = vadd.f32 0.0, %v835
  %v837 = vpop.f32.mrb[0].mxu0
  %838 = vdwg.mxu0
  %vm839 = vcmask 523264
  %v840 = vsel %vm839, %v585, 0.0
  %v841 = vsel %vm839, %v588, 0.0
  %v842 = vadd.f32 %v840, %v841
  %v843 = vsel %vm839, %v593, 0.0
  %v844 = vadd.f32 %v842, %v843
  %v845 = vsel %vm839, %v596, 0.0
  %v846 = vadd.f32 %v844, %v845
  %v847 = vsel %vm839, %v601, 0.0
  %v848 = vadd.f32 %v846, %v847
  %v849 = vsel %vm839, %v604, 0.0
  %v850 = vadd.f32 %v848, %v849
  %v851 = vsel %vm839, %v609, 0.0
  %v852 = vadd.f32 %v850, %v851
  %v853 = vsel %vm839, %v612, 0.0
  %v854 = vadd.f32 %v852, %v853
  %v855 = vsel %vm839, %v617, 0.0
  %v856 = vadd.f32 %v854, %v855
  %v857 = vsel %vm839, %v620, 0.0
  %v858 = vadd.f32 %v856, %v857
  %v859 = vsel %vm839, %v625, 0.0
  %v860 = vadd.f32 %v858, %v859
  %v861 = vsel %vm839, %v628, 0.0
  %v862 = vadd.f32 %v860, %v861
  %v863 = vsel %vm839, %v633, 0.0
  %v864 = vadd.f32 %v862, %v863
  %v865 = vsel %vm839, %v636, 0.0
  %v866 = vadd.f32 %v864, %v865
  %v867 = vsel %vm839, %v641, 0.0
  %v868 = vadd.f32 %v866, %v867
  %v869 = vsel %vm839, %v644, 0.0
  %v870 = vadd.f32 %v868, %v869
  %v871 = vsel %vm839, %v649, 0.0
  %v872 = vadd.f32 %v870, %v871
  %v873 = vsel %vm839, %v652, 0.0
  %v874 = vadd.f32 %v872, %v873
  %v875 = vsel %vm839, %v657, 0.0
  %v876 = vadd.f32 %v874, %v875
  %v877 = vsel %vm839, %v660, 0.0
  %v878 = vadd.f32 %v876, %v877
  %v879 = vsel %vm839, %v665, 0.0
  %v880 = vadd.f32 %v878, %v879
  %v881 = vsel %vm839, %v668, 0.0
  %v882 = vadd.f32 %v880, %v881
  %v883 = vsel %vm839, %v673, 0.0
  %v884 = vadd.f32 %v882, %v883
  %v885 = vsel %vm839, %v676, 0.0
  %v886 = vadd.f32 %v884, %v885
  %v887 = vsel %vm839, %v681, 0.0
  %v888 = vadd.f32 %v886, %v887
  %v889 = vsel %vm839, %v684, 0.0
  %v890 = vadd.f32 %v888, %v889
  %v891 = vsel %vm839, %v689, 0.0
  %v892 = vadd.f32 %v890, %v891
  %v893 = vsel %vm839, %v692, 0.0
  %v894 = vadd.f32 %v892, %v893
  %v895 = vsel %vm839, %v697, 0.0
  %v896 = vadd.f32 %v894, %v895
  %v897 = vsel %vm839, %v700, 0.0
  %v898 = vadd.f32 %v896, %v897
  %v899 = vsel %vm839, %v705, 0.0
  %v900 = vadd.f32 %v898, %v899
  %v901 = vsel %vm839, %v708, 0.0
  %v902 = vadd.f32 %v900, %v901
  %v903 = vsel %vm839, %v713, 0.0
  %v904 = vadd.f32 %v902, %v903
  %v905 = vsel %vm839, %v716, 0.0
  %v906 = vadd.f32 %v904, %v905
  %v907 = vsel %vm839, %v721, 0.0
  %v908 = vadd.f32 %v906, %v907
  %v909 = vsel %vm839, %v724, 0.0
  %v910 = vadd.f32 %v908, %v909
  %v911 = vsel %vm839, %v729, 0.0
  %v912 = vadd.f32 %v910, %v911
  %v913 = vsel %vm839, %v732, 0.0
  %v914 = vadd.f32 %v912, %v913
  %v915 = vsel %vm839, %v737, 0.0
  %v916 = vadd.f32 %v914, %v915
  %v917 = vsel %vm839, %v740, 0.0
  %v918 = vadd.f32 %v916, %v917
  %v919 = vsel %vm839, %v745, 0.0
  %v920 = vadd.f32 %v918, %v919
  %v921 = vsel %vm839, %v748, 0.0
  %v922 = vadd.f32 %v920, %v921
  %v923 = vsel %vm839, %v753, 0.0
  %v924 = vadd.f32 %v922, %v923
  %v925 = vsel %vm839, %v756, 0.0
  %v926 = vadd.f32 %v924, %v925
  %v927 = vsel %vm839, %v761, 0.0
  %v928 = vadd.f32 %v926, %v927
  %v929 = vsel %vm839, %v764, 0.0
  %v930 = vadd.f32 %v928, %v929
  %v931 = vsel %vm839, %v769, 0.0
  %v932 = vadd.f32 %v930, %v931
  %v933 = vsel %vm839, %v772, 0.0
  %v934 = vadd.f32 %v932, %v933
  %v935 = vsel %vm839, %v777, 0.0
  %v936 = vadd.f32 %v934, %v935
  %v937 = vsel %vm839, %v780, 0.0
  %v938 = vadd.f32 %v936, %v937
  %v939 = vsel %vm839, %v785, 0.0
  %v940 = vadd.f32 %v938, %v939
  %v941 = vsel %vm839, %v788, 0.0
  %v942 = vadd.f32 %v940, %v941
  %v943 = vsel %vm839, %v793, 0.0
  %v944 = vadd.f32 %v942, %v943
  %v945 = vsel %vm839, %v796, 0.0
  %v946 = vadd.f32 %v944, %v945
  %v947 = vsel %vm839, %v801, 0.0
  %v948 = vadd.f32 %v946, %v947
  %v949 = vsel %vm839, %v804, 0.0
  %v950 = vadd.f32 %v948, %v949
  %v951 = vsel %vm839, %v809, 0.0
  %v952 = vadd.f32 %v950, %v951
  %v953 = vsel %vm839, %v812, 0.0
  %v954 = vadd.f32 %v952, %v953
  %v955 = vsel %vm839, %v817, 0.0
  %v956 = vadd.f32 %v954, %v955
  %v957 = vsel %vm839, %v820, 0.0
  %v958 = vadd.f32 %v956, %v957
  %v959 = vsel %vm839, %v825, 0.0
  %v960 = vadd.f32 %v958, %v959
  %v961 = vsel %vm839, %v828, 0.0
  %v962 = vadd.f32 %v960, %v961
  %v963 = vsel %vm839, %v833, 0.0
  %v964 = vadd.f32 %v962, %v963
  %v965 = vsel %vm839, %v836, 0.0
  %v966 = vadd.f32 %v964, %v965
  %v967 = vrot.slane %v966, 4
  %v968 = vadd.f32 %v966, %v967
  %v969 = vrot.slane %v968, 2
  %v970 = vadd.f32 %v968, %v969
  %v971 = vrot.slane %v970, 1
  %v972 = vadd.f32 %v970, %v971
  %v973 = vrcp.pop 512.0
  %v974 = vmul.f32 %v972, %v973
  %v975 = vsub.f32 %v585, %v974
  %v976 = vsub.f32 %v588, %v974
  %v977 = vsub.f32 %v593, %v974
  %v978 = vsub.f32 %v596, %v974
  %v979 = vsub.f32 %v601, %v974
  %v980 = vsub.f32 %v604, %v974
  %v981 = vsub.f32 %v609, %v974
  %v982 = vsub.f32 %v612, %v974
  %v983 = vsub.f32 %v617, %v974
  %v984 = vsub.f32 %v620, %v974
  %v985 = vsub.f32 %v625, %v974
  %v986 = vsub.f32 %v628, %v974
  %v987 = vsub.f32 %v633, %v974
  %v988 = vsub.f32 %v636, %v974
  %v989 = vsub.f32 %v641, %v974
  %v990 = vsub.f32 %v644, %v974
  %v991 = vsub.f32 %v649, %v974
  %v992 = vsub.f32 %v652, %v974
  %v993 = vsub.f32 %v657, %v974
  %v994 = vsub.f32 %v660, %v974
  %v995 = vsub.f32 %v665, %v974
  %v996 = vsub.f32 %v668, %v974
  %v997 = vsub.f32 %v673, %v974
  %v998 = vsub.f32 %v676, %v974
  %v999 = vsub.f32 %v681, %v974
  %v1000 = vsub.f32 %v684, %v974
  %v1001 = vsub.f32 %v689, %v974
  %v1002 = vsub.f32 %v692, %v974
  %v1003 = vsub.f32 %v697, %v974
  %v1004 = vsub.f32 %v700, %v974
  %v1005 = vsub.f32 %v705, %v974
  %v1006 = vsub.f32 %v708, %v974
  %v1007 = vsub.f32 %v713, %v974
  %v1008 = vsub.f32 %v716, %v974
  %v1009 = vsub.f32 %v721, %v974
  %v1010 = vsub.f32 %v724, %v974
  %v1011 = vsub.f32 %v729, %v974
  %v1012 = vsub.f32 %v732, %v974
  %v1013 = vsub.f32 %v737, %v974
  %v1014 = vsub.f32 %v740, %v974
  %v1015 = vsub.f32 %v745, %v974
  %v1016 = vsub.f32 %v748, %v974
  %v1017 = vsub.f32 %v753, %v974
  %v1018 = vsub.f32 %v756, %v974
  %v1019 = vsub.f32 %v761, %v974
  %v1020 = vsub.f32 %v764, %v974
  %v1021 = vsub.f32 %v769, %v974
  %v1022 = vsub.f32 %v772, %v974
  %v1023 = vsub.f32 %v777, %v974
  %v1024 = vsub.f32 %v780, %v974
  %v1025 = vsub.f32 %v785, %v974
  %v1026 = vsub.f32 %v788, %v974
  %v1027 = vsub.f32 %v793, %v974
  %v1028 = vsub.f32 %v796, %v974
  %v1029 = vsub.f32 %v801, %v974
  %v1030 = vsub.f32 %v804, %v974
  %v1031 = vsub.f32 %v809, %v974
  %v1032 = vsub.f32 %v812, %v974
  %v1033 = vsub.f32 %v817, %v974
  %v1034 = vsub.f32 %v820, %v974
  %v1035 = vsub.f32 %v825, %v974
  %v1036 = vsub.f32 %v828, %v974
  %v1037 = vsub.f32 %v833, %v974
  %v1038 = vsub.f32 %v836, %v974
  %v1039 = vmul.f32 %v975, %v975
  %v1040 = vmul.f32 %v976, %v976
  %v1041 = vmul.f32 %v977, %v977
  %v1042 = vmul.f32 %v978, %v978
  %v1043 = vmul.f32 %v979, %v979
  %v1044 = vmul.f32 %v980, %v980
  %v1045 = vmul.f32 %v981, %v981
  %v1046 = vmul.f32 %v982, %v982
  %v1047 = vmul.f32 %v983, %v983
  %v1048 = vmul.f32 %v984, %v984
  %v1049 = vmul.f32 %v985, %v985
  %v1050 = vmul.f32 %v986, %v986
  %v1051 = vmul.f32 %v987, %v987
  %v1052 = vmul.f32 %v988, %v988
  %v1053 = vmul.f32 %v989, %v989
  %v1054 = vmul.f32 %v990, %v990
  %v1055 = vmul.f32 %v991, %v991
  %v1056 = vmul.f32 %v992, %v992
  %v1057 = vmul.f32 %v993, %v993
  %v1058 = vmul.f32 %v994, %v994
  %v1059 = vmul.f32 %v995, %v995
  %v1060 = vmul.f32 %v996, %v996
  %v1061 = vmul.f32 %v997, %v997
  %v1062 = vmul.f32 %v998, %v998
  %v1063 = vmul.f32 %v999, %v999
  %v1064 = vmul.f32 %v1000, %v1000
  %v1065 = vmul.f32 %v1001, %v1001
  %v1066 = vmul.f32 %v1002, %v1002
  %v1067 = vmul.f32 %v1003, %v1003
  %v1068 = vmul.f32 %v1004, %v1004
  %v1069 = vmul.f32 %v1005, %v1005
  %v1070 = vmul.f32 %v1006, %v1006
  %v1071 = vmul.f32 %v1007, %v1007
  %v1072 = vmul.f32 %v1008, %v1008
  %v1073 = vmul.f32 %v1009, %v1009
  %v1074 = vmul.f32 %v1010, %v1010
  %v1075 = vmul.f32 %v1011, %v1011
  %v1076 = vmul.f32 %v1012, %v1012
  %v1077 = vmul.f32 %v1013, %v1013
  %v1078 = vmul.f32 %v1014, %v1014
  %v1079 = vmul.f32 %v1015, %v1015
  %v1080 = vmul.f32 %v1016, %v1016
  %v1081 = vmul.f32 %v1017, %v1017
  %v1082 = vmul.f32 %v1018, %v1018
  %v1083 = vmul.f32 %v1019, %v1019
  %v1084 = vmul.f32 %v1020, %v1020
  %v1085 = vmul.f32 %v1021, %v1021
  %v1086 = vmul.f32 %v1022, %v1022
  %v1087 = vmul.f32 %v1023, %v1023
  %v1088 = vmul.f32 %v1024, %v1024
  %v1089 = vmul.f32 %v1025, %v1025
  %v1090 = vmul.f32 %v1026, %v1026
  %v1091 = vmul.f32 %v1027, %v1027
  %v1092 = vmul.f32 %v1028, %v1028
  %v1093 = vmul.f32 %v1029, %v1029
  %v1094 = vmul.f32 %v1030, %v1030
  %v1095 = vmul.f32 %v1031, %v1031
  %v1096 = vmul.f32 %v1032, %v1032
  %v1097 = vmul.f32 %v1033, %v1033
  %v1098 = vmul.f32 %v1034, %v1034
  %v1099 = vmul.f32 %v1035, %v1035
  %v1100 = vmul.f32 %v1036, %v1036
  %v1101 = vmul.f32 %v1037, %v1037
  %v1102 = vmul.f32 %v1038, %v1038
  %v1103 = vsel %vm839, %v1039, 0.0
  %v1104 = vsel %vm839, %v1040, 0.0
  %v1105 = vadd.f32 %v1103, %v1104
  %v1106 = vsel %vm839, %v1041, 0.0
  %v1107 = vadd.f32 %v1105, %v1106
  %v1108 = vsel %vm839, %v1042, 0.0
  %v1109 = vadd.f32 %v1107, %v1108
  %v1110 = vsel %vm839, %v1043, 0.0
  %v1111 = vadd.f32 %v1109, %v1110
  %v1112 = vsel %vm839, %v1044, 0.0
  %v1113 = vadd.f32 %v1111, %v1112
  %v1114 = vsel %vm839, %v1045, 0.0
  %v1115 = vadd.f32 %v1113, %v1114
  %v1116 = vsel %vm839, %v1046, 0.0
  %v1117 = vadd.f32 %v1115, %v1116
  %v1118 = vsel %vm839, %v1047, 0.0
  %v1119 = vadd.f32 %v1117, %v1118
  %v1120 = vsel %vm839, %v1048, 0.0
  %v1121 = vadd.f32 %v1119, %v1120
  %v1122 = vsel %vm839, %v1049, 0.0
  %v1123 = vadd.f32 %v1121, %v1122
  %v1124 = vsel %vm839, %v1050, 0.0
  %v1125 = vadd.f32 %v1123, %v1124
  %v1126 = vsel %vm839, %v1051, 0.0
  %v1127 = vadd.f32 %v1125, %v1126
  %v1128 = vsel %vm839, %v1052, 0.0
  %v1129 = vadd.f32 %v1127, %v1128
  %v1130 = vsel %vm839, %v1053, 0.0
  %v1131 = vadd.f32 %v1129, %v1130
  %v1132 = vsel %vm839, %v1054, 0.0
  %v1133 = vadd.f32 %v1131, %v1132
  %v1134 = vsel %vm839, %v1055, 0.0
  %v1135 = vadd.f32 %v1133, %v1134
  %v1136 = vsel %vm839, %v1056, 0.0
  %v1137 = vadd.f32 %v1135, %v1136
  %v1138 = vsel %vm839, %v1057, 0.0
  %v1139 = vadd.f32 %v1137, %v1138
  %v1140 = vsel %vm839, %v1058, 0.0
  %v1141 = vadd.f32 %v1139, %v1140
  %v1142 = vsel %vm839, %v1059, 0.0
  %v1143 = vadd.f32 %v1141, %v1142
  %v1144 = vsel %vm839, %v1060, 0.0
  %v1145 = vadd.f32 %v1143, %v1144
  %v1146 = vsel %vm839, %v1061, 0.0
  %v1147 = vadd.f32 %v1145, %v1146
  %v1148 = vsel %vm839, %v1062, 0.0
  %v1149 = vadd.f32 %v1147, %v1148
  %v1150 = vsel %vm839, %v1063, 0.0
  %v1151 = vadd.f32 %v1149, %v1150
  %v1152 = vsel %vm839, %v1064, 0.0
  %v1153 = vadd.f32 %v1151, %v1152
  %v1154 = vsel %vm839, %v1065, 0.0
  %v1155 = vadd.f32 %v1153, %v1154
  %v1156 = vsel %vm839, %v1066, 0.0
  %v1157 = vadd.f32 %v1155, %v1156
  %v1158 = vsel %vm839, %v1067, 0.0
  %v1159 = vadd.f32 %v1157, %v1158
  %v1160 = vsel %vm839, %v1068, 0.0
  %v1161 = vadd.f32 %v1159, %v1160
  %v1162 = vsel %vm839, %v1069, 0.0
  %v1163 = vadd.f32 %v1161, %v1162
  %v1164 = vsel %vm839, %v1070, 0.0
  %v1165 = vadd.f32 %v1163, %v1164
  %v1166 = vsel %vm839, %v1071, 0.0
  %v1167 = vadd.f32 %v1165, %v1166
  %v1168 = vsel %vm839, %v1072, 0.0
  %v1169 = vadd.f32 %v1167, %v1168
  %v1170 = vsel %vm839, %v1073, 0.0
  %v1171 = vadd.f32 %v1169, %v1170
  %v1172 = vsel %vm839, %v1074, 0.0
  %v1173 = vadd.f32 %v1171, %v1172
  %v1174 = vsel %vm839, %v1075, 0.0
  %v1175 = vadd.f32 %v1173, %v1174
  %v1176 = vsel %vm839, %v1076, 0.0
  %v1177 = vadd.f32 %v1175, %v1176
  %v1178 = vsel %vm839, %v1077, 0.0
  %v1179 = vadd.f32 %v1177, %v1178
  %v1180 = vsel %vm839, %v1078, 0.0
  %v1181 = vadd.f32 %v1179, %v1180
  %v1182 = vsel %vm839, %v1079, 0.0
  %v1183 = vadd.f32 %v1181, %v1182
  %v1184 = vsel %vm839, %v1080, 0.0
  %v1185 = vadd.f32 %v1183, %v1184
  %v1186 = vsel %vm839, %v1081, 0.0
  %v1187 = vadd.f32 %v1185, %v1186
  %v1188 = vsel %vm839, %v1082, 0.0
  %v1189 = vadd.f32 %v1187, %v1188
  %v1190 = vsel %vm839, %v1083, 0.0
  %v1191 = vadd.f32 %v1189, %v1190
  %v1192 = vsel %vm839, %v1084, 0.0
  %v1193 = vadd.f32 %v1191, %v1192
  %v1194 = vsel %vm839, %v1085, 0.0
  %v1195 = vadd.f32 %v1193, %v1194
  %v1196 = vsel %vm839, %v1086, 0.0
  %v1197 = vadd.f32 %v1195, %v1196
  %v1198 = vsel %vm839, %v1087, 0.0
  %v1199 = vadd.f32 %v1197, %v1198
  %v1200 = vsel %vm839, %v1088, 0.0
  %v1201 = vadd.f32 %v1199, %v1200
  %v1202 = vsel %vm839, %v1089, 0.0
  %v1203 = vadd.f32 %v1201, %v1202
  %v1204 = vsel %vm839, %v1090, 0.0
  %v1205 = vadd.f32 %v1203, %v1204
  %v1206 = vsel %vm839, %v1091, 0.0
  %v1207 = vadd.f32 %v1205, %v1206
  %v1208 = vsel %vm839, %v1092, 0.0
  %v1209 = vadd.f32 %v1207, %v1208
  %v1210 = vsel %vm839, %v1093, 0.0
  %v1211 = vadd.f32 %v1209, %v1210
  %v1212 = vsel %vm839, %v1094, 0.0
  %v1213 = vadd.f32 %v1211, %v1212
  %v1214 = vsel %vm839, %v1095, 0.0
  %v1215 = vadd.f32 %v1213, %v1214
  %v1216 = vsel %vm839, %v1096, 0.0
  %v1217 = vadd.f32 %v1215, %v1216
  %v1218 = vsel %vm839, %v1097, 0.0
  %v1219 = vadd.f32 %v1217, %v1218
  %v1220 = vsel %vm839, %v1098, 0.0
  %v1221 = vadd.f32 %v1219, %v1220
  %v1222 = vsel %vm839, %v1099, 0.0
  %v1223 = vadd.f32 %v1221, %v1222
  %v1224 = vsel %vm839, %v1100, 0.0
  %v1225 = vadd.f32 %v1223, %v1224
  %v1226 = vsel %vm839, %v1101, 0.0
  %v1227 = vadd.f32 %v1225, %v1226
  %v1228 = vsel %vm839, %v1102, 0.0
  %v1229 = vadd.f32 %v1227, %v1228
  %v1230 = vrot.slane %v1229, 4
  %v1231 = vadd.f32 %v1229, %v1230
  %v1232 = vrot.slane %v1231, 2
  %v1233 = vadd.f32 %v1231, %v1232
  %v1234 = vrot.slane %v1233, 1
  %v1235 = vadd.f32 %v1233, %v1234
  %v1236 = vmul.f32 %v1235, %v973
  %v1237 = vld [vmem:[%s2] sm:$0x1]
  %v1238 = vadd.f32 %v1236, 1e-05
  %v1239 = vrsqrt.pop %v1238
  %v1240 = vmul.f32 %v1237, %v1239
  %v1242 = vlaneseq
  %v1243 = vshrl.u32 %v1242, 7
  %v1244 = vsub.s32 0, %v1243
  %v1245 = vrot.slane %v1240, %v1244
  %v1247 = vmul.f32 %v975, %v1245
  %v1248 = vmul.f32 %v976, %v1245
  %v1249 = vmul.f32 %v977, %v1245
  %v1250 = vmul.f32 %v978, %v1245
  %v1251 = vmul.f32 %v979, %v1245
  %v1252 = vmul.f32 %v980, %v1245
  %v1253 = vmul.f32 %v981, %v1245
  %v1254 = vmul.f32 %v982, %v1245
  %v1255 = vmul.f32 %v983, %v1245
  %v1256 = vmul.f32 %v984, %v1245
  %v1257 = vmul.f32 %v985, %v1245
  %v1258 = vmul.f32 %v986, %v1245
  %v1259 = vmul.f32 %v987, %v1245
  %v1260 = vmul.f32 %v988, %v1245
  %v1261 = vmul.f32 %v989, %v1245
  %v1262 = vmul.f32 %v990, %v1245
  %v1263 = vmul.f32 %v991, %v1245
  %v1264 = vmul.f32 %v992, %v1245
  %v1265 = vmul.f32 %v993, %v1245
  %v1266 = vmul.f32 %v994, %v1245
  %v1267 = vmul.f32 %v995, %v1245
  %v1268 = vmul.f32 %v996, %v1245
  %v1269 = vmul.f32 %v997, %v1245
  %v1270 = vmul.f32 %v998, %v1245
  %v1271 = vmul.f32 %v999, %v1245
  %v1272 = vmul.f32 %v1000, %v1245
  %v1273 = vmul.f32 %v1001, %v1245
  %v1274 = vmul.f32 %v1002, %v1245
  %v1275 = vmul.f32 %v1003, %v1245
  %v1276 = vmul.f32 %v1004, %v1245
  %v1277 = vmul.f32 %v1005, %v1245
  %v1278 = vmul.f32 %v1006, %v1245
  %v1279 = vmul.f32 %v1007, %v1245
  %v1280 = vmul.f32 %v1008, %v1245
  %v1281 = vmul.f32 %v1009, %v1245
  %v1282 = vmul.f32 %v1010, %v1245
  %v1283 = vmul.f32 %v1011, %v1245
  %v1284 = vmul.f32 %v1012, %v1245
  %v1285 = vmul.f32 %v1013, %v1245
  %v1286 = vmul.f32 %v1014, %v1245
  %v1287 = vmul.f32 %v1015, %v1245
  %v1288 = vmul.f32 %v1016, %v1245
  %v1289 = vmul.f32 %v1017, %v1245
  %v1290 = vmul.f32 %v1018, %v1245
  %v1291 = vmul.f32 %v1019, %v1245
  %v1292 = vmul.f32 %v1020, %v1245
  %v1293 = vmul.f32 %v1021, %v1245
  %v1294 = vmul.f32 %v1022, %v1245
  %v1295 = vmul.f32 %v1023, %v1245
  %v1296 = vmul.f32 %v1024, %v1245
  %v1297 = vmul.f32 %v1025, %v1245
  %v1298 = vmul.f32 %v1026, %v1245
  %v1299 = vmul.f32 %v1027, %v1245
  %v1300 = vmul.f32 %v1028, %v1245
  %v1301 = vmul.f32 %v1029, %v1245
  %v1302 = vmul.f32 %v1030, %v1245
  %v1303 = vmul.f32 %v1031, %v1245
  %v1304 = vmul.f32 %v1032, %v1245
  %v1305 = vmul.f32 %v1033, %v1245
  %v1306 = vmul.f32 %v1034, %v1245
  %v1307 = vmul.f32 %v1035, %v1245
  %v1308 = vmul.f32 %v1036, %v1245
  %v1309 = vmul.f32 %v1037, %v1245
  %v1310 = vmul.f32 %v1038, %v1245
  %v1311 = vld [vmem:[%s3] sm:$0x1]
  %v1313 = vlaneseq
  %v1314 = vshrl.u32 %v1313, 7
  %v1315 = vsub.s32 0, %v1314
  %v1316 = vrot.slane %v1311, %v1315
  %v1318 = vadd.f32 %v1247, %v1316
  %v1319 = vadd.f32 %v1248, %v1316
  %v1320 = vadd.f32 %v1249, %v1316
  %v1321 = vadd.f32 %v1250, %v1316
  %v1322 = vadd.f32 %v1251, %v1316
  %v1323 = vadd.f32 %v1252, %v1316
  %v1324 = vadd.f32 %v1253, %v1316
  %v1325 = vadd.f32 %v1254, %v1316
  %v1326 = vadd.f32 %v1255, %v1316
  %v1327 = vadd.f32 %v1256, %v1316
  %v1328 = vadd.f32 %v1257, %v1316
  %v1329 = vadd.f32 %v1258, %v1316
  %v1330 = vadd.f32 %v1259, %v1316
  %v1331 = vadd.f32 %v1260, %v1316
  %v1332 = vadd.f32 %v1261, %v1316
  %v1333 = vadd.f32 %v1262, %v1316
  %v1334 = vadd.f32 %v1263, %v1316
  %v1335 = vadd.f32 %v1264, %v1316
  %v1336 = vadd.f32 %v1265, %v1316
  %v1337 = vadd.f32 %v1266, %v1316
  %v1338 = vadd.f32 %v1267, %v1316
  %v1339 = vadd.f32 %v1268, %v1316
  %v1340 = vadd.f32 %v1269, %v1316
  %v1341 = vadd.f32 %v1270, %v1316
  %v1342 = vadd.f32 %v1271, %v1316
  %v1343 = vadd.f32 %v1272, %v1316
  %v1344 = vadd.f32 %v1273, %v1316
  %v1345 = vadd.f32 %v1274, %v1316
  %v1346 = vadd.f32 %v1275, %v1316
  %v1347 = vadd.f32 %v1276, %v1316
  %v1348 = vadd.f32 %v1277, %v1316
  %v1349 = vadd.f32 %v1278, %v1316
  %v1350 = vadd.f32 %v1279, %v1316
  %v1351 = vadd.f32 %v1280, %v1316
  %v1352 = vadd.f32 %v1281, %v1316
  %v1353 = vadd.f32 %v1282, %v1316
  %v1354 = vadd.f32 %v1283, %v1316
  %v1355 = vadd.f32 %v1284, %v1316
  %v1356 = vadd.f32 %v1285, %v1316
  %v1357 = vadd.f32 %v1286, %v1316
  %v1358 = vadd.f32 %v1287, %v1316
  %v1359 = vadd.f32 %v1288, %v1316
  %v1360 = vadd.f32 %v1289, %v1316
  %v1361 = vadd.f32 %v1290, %v1316
  %v1362 = vadd.f32 %v1291, %v1316
  %v1363 = vadd.f32 %v1292, %v1316
  %v1364 = vadd.f32 %v1293, %v1316
  %v1365 = vadd.f32 %v1294, %v1316
  %v1366 = vadd.f32 %v1295, %v1316
  %v1367 = vadd.f32 %v1296, %v1316
  %v1368 = vadd.f32 %v1297, %v1316
  %v1369 = vadd.f32 %v1298, %v1316
  %v1370 = vadd.f32 %v1299, %v1316
  %v1371 = vadd.f32 %v1300, %v1316
  %v1372 = vadd.f32 %v1301, %v1316
  %v1373 = vadd.f32 %v1302, %v1316
  %v1374 = vadd.f32 %v1303, %v1316
  %v1375 = vadd.f32 %v1304, %v1316
  %v1376 = vadd.f32 %v1305, %v1316
  %v1377 = vadd.f32 %v1306, %v1316
  %v1378 = vadd.f32 %v1307, %v1316
  %v1379 = vadd.f32 %v1308, %v1316
  %v1380 = vadd.f32 %v1309, %v1316
  %v1381 = vadd.f32 %v1310, %v1316
  %v1382 = vmax.f32 %v1318, 0.0
  %v1383 = vmax.f32 %v1319, 0.0
  %v1384 = vmax.f32 %v1320, 0.0
  %v1385 = vmax.f32 %v1321, 0.0
  %v1386 = vmax.f32 %v1322, 0.0
  %v1387 = vmax.f32 %v1323, 0.0
  %v1388 = vmax.f32 %v1324, 0.0
  %v1389 = vmax.f32 %v1325, 0.0
  %v1390 = vmax.f32 %v1326, 0.0
  %v1391 = vmax.f32 %v1327, 0.0
  %v1392 = vmax.f32 %v1328, 0.0
  %v1393 = vmax.f32 %v1329, 0.0
  %v1394 = vmax.f32 %v1330, 0.0
  %v1395 = vmax.f32 %v1331, 0.0
  %v1396 = vmax.f32 %v1332, 0.0
  %v1397 = vmax.f32 %v1333, 0.0
  %v1398 = vmax.f32 %v1334, 0.0
  %v1399 = vmax.f32 %v1335, 0.0
  %v1400 = vmax.f32 %v1336, 0.0
  %v1401 = vmax.f32 %v1337, 0.0
  %v1402 = vmax.f32 %v1338, 0.0
  %v1403 = vmax.f32 %v1339, 0.0
  %v1404 = vmax.f32 %v1340, 0.0
  %v1405 = vmax.f32 %v1341, 0.0
  %v1406 = vmax.f32 %v1342, 0.0
  %v1407 = vmax.f32 %v1343, 0.0
  %v1408 = vmax.f32 %v1344, 0.0
  %v1409 = vmax.f32 %v1345, 0.0
  %v1410 = vmax.f32 %v1346, 0.0
  %v1411 = vmax.f32 %v1347, 0.0
  %v1412 = vmax.f32 %v1348, 0.0
  %v1413 = vmax.f32 %v1349, 0.0
  %v1414 = vmax.f32 %v1350, 0.0
  %v1415 = vmax.f32 %v1351, 0.0
  %v1416 = vmax.f32 %v1352, 0.0
  %v1417 = vmax.f32 %v1353, 0.0
  %v1418 = vmax.f32 %v1354, 0.0
  %v1419 = vmax.f32 %v1355, 0.0
  %v1420 = vmax.f32 %v1356, 0.0
  %v1421 = vmax.f32 %v1357, 0.0
  %v1422 = vmax.f32 %v1358, 0.0
  %v1423 = vmax.f32 %v1359, 0.0
  %v1424 = vmax.f32 %v1360, 0.0
  %v1425 = vmax.f32 %v1361, 0.0
  %v1426 = vmax.f32 %v1362, 0.0
  %v1427 = vmax.f32 %v1363, 0.0
  %v1428 = vmax.f32 %v1364, 0.0
  %v1429 = vmax.f32 %v1365, 0.0
  %v1430 = vmax.f32 %v1366, 0.0
  %v1431 = vmax.f32 %v1367, 0.0
  %v1432 = vmax.f32 %v1368, 0.0
  %v1433 = vmax.f32 %v1369, 0.0
  %v1434 = vmax.f32 %v1370, 0.0
  %v1435 = vmax.f32 %v1371, 0.0
  %v1436 = vmax.f32 %v1372, 0.0
  %v1437 = vmax.f32 %v1373, 0.0
  %v1438 = vmax.f32 %v1374, 0.0
  %v1439 = vmax.f32 %v1375, 0.0
  %v1440 = vmax.f32 %v1376, 0.0
  %v1441 = vmax.f32 %v1377, 0.0
  %v1442 = vmax.f32 %v1378, 0.0
  %v1443 = vmax.f32 %v1379, 0.0
  %v1444 = vmax.f32 %v1380, 0.0
  %v1445 = vmax.f32 %v1381, 0.0
  %1446 = vst.msk [vmem:[%s4] sm:$0xff] %vm839, %v1382
  %1447 = vst.msk [vmem:[%s4 + $0x8] sm:$0xff] %vm839, %v1383
  %1448 = vst.msk [vmem:[%s4 + $0x10] sm:$0xff] %vm839, %v1384
  %1449 = vst.msk [vmem:[%s4 + $0x18] sm:$0xff] %vm839, %v1385
  %1450 = vst.msk [vmem:[%s4 + $0x20] sm:$0xff] %vm839, %v1386
  %1451 = vst.msk [vmem:[%s4 + $0x28] sm:$0xff] %vm839, %v1387
  %1452 = vst.msk [vmem:[%s4 + $0x30] sm:$0xff] %vm839, %v1388
  %1453 = vst.msk [vmem:[%s4 + $0x38] sm:$0xff] %vm839, %v1389
  %1454 = vst.msk [vmem:[%s4 + $0x40] sm:$0xff] %vm839, %v1390
  %1455 = vst.msk [vmem:[%s4 + $0x48] sm:$0xff] %vm839, %v1391
  %1456 = vst.msk [vmem:[%s4 + $0x50] sm:$0xff] %vm839, %v1392
  %1457 = vst.msk [vmem:[%s4 + $0x58] sm:$0xff] %vm839, %v1393
  %1458 = vst.msk [vmem:[%s4 + $0x60] sm:$0xff] %vm839, %v1394
  %1459 = vst.msk [vmem:[%s4 + $0x68] sm:$0xff] %vm839, %v1395
  %1460 = vst.msk [vmem:[%s4 + $0x70] sm:$0xff] %vm839, %v1396
  %1461 = vst.msk [vmem:[%s4 + $0x78] sm:$0xff] %vm839, %v1397
  %1462 = vst.msk [vmem:[%s4 + $0x80] sm:$0xff] %vm839, %v1398
  %1463 = vst.msk [vmem:[%s4 + $0x88] sm:$0xff] %vm839, %v1399
  %1464 = vst.msk [vmem:[%s4 + $0x90] sm:$0xff] %vm839, %v1400
  %1465 = vst.msk [vmem:[%s4 + $0x98] sm:$0xff] %vm839, %v1401
  %1466 = vst.msk [vmem:[%s4 + $0xa0] sm:$0xff] %vm839, %v1402
  %1467 = vst.msk [vmem:[%s4 + $0xa8] sm:$0xff] %vm839, %v1403
  %1468 = vst.msk [vmem:[%s4 + $0xb0] sm:$0xff] %vm839, %v1404
  %1469 = vst.msk [vmem:[%s4 + $0xb8] sm:$0xff] %vm839, %v1405
  %1470 = vst.msk [vmem:[%s4 + $0xc0] sm:$0xff] %vm839, %v1406
  %1471 = vst.msk [vmem:[%s4 + $0xc8] sm:$0xff] %vm839, %v1407
  %1472 = vst.msk [vmem:[%s4 + $0xd0] sm:$0xff] %vm839, %v1408
  %1473 = vst.msk [vmem:[%s4 + $0xd8] sm:$0xff] %vm839, %v1409
  %1474 = vst.msk [vmem:[%s4 + $0xe0] sm:$0xff] %vm839, %v1410
  %1475 = vst.msk [vmem:[%s4 + $0xe8] sm:$0xff] %vm839, %v1411
  %1476 = vst.msk [vmem:[%s4 + $0xf0] sm:$0xff] %vm839, %v1412
  %1477 = vst.msk [vmem:[%s4 + $0xf8] sm:$0xff] %vm839, %v1413
  %1478 = vst.msk [vmem:[%s4 + $0x100] sm:$0xff] %vm839, %v1414
  %1479 = vst.msk [vmem:[%s4 + $0x108] sm:$0xff] %vm839, %v1415
  %1480 = vst.msk [vmem:[%s4 + $0x110] sm:$0xff] %vm839, %v1416
  %1481 = vst.msk [vmem:[%s4 + $0x118] sm:$0xff] %vm839, %v1417
  %1482 = vst.msk [vmem:[%s4 + $0x120] sm:$0xff] %vm839, %v1418
  %1483 = vst.msk [vmem:[%s4 + $0x128] sm:$0xff] %vm839, %v1419
  %1484 = vst.msk [vmem:[%s4 + $0x130] sm:$0xff] %vm839, %v1420
  %1485 = vst.msk [vmem:[%s4 + $0x138] sm:$0xff] %vm839, %v1421
  %1486 = vst.msk [vmem:[%s4 + $0x140] sm:$0xff] %vm839, %v1422
  %1487 = vst.msk [vmem:[%s4 + $0x148] sm:$0xff] %vm839, %v1423
  %1488 = vst.msk [vmem:[%s4 + $0x150] sm:$0xff] %vm839, %v1424
  %1489 = vst.msk [vmem:[%s4 + $0x158] sm:$0xff] %vm839, %v1425
  %1490 = vst.msk [vmem:[%s4 + $0x160] sm:$0xff] %vm839, %v1426
  %1491 = vst.msk [vmem:[%s4 + $0x168] sm:$0xff] %vm839, %v1427
  %1492 = vst.msk [vmem:[%s4 + $0x170] sm:$0xff] %vm839, %v1428
  %1493 = vst.msk [vmem:[%s4 + $0x178] sm:$0xff] %vm839, %v1429
  %1494 = vst.msk [vmem:[%s4 + $0x180] sm:$0xff] %vm839, %v1430
  %1495 = vst.msk [vmem:[%s4 + $0x188] sm:$0xff] %vm839, %v1431
  %1496 = vst.msk [vmem:[%s4 + $0x190] sm:$0xff] %vm839, %v1432
  %1497 = vst.msk [vmem:[%s4 + $0x198] sm:$0xff] %vm839, %v1433
  %1498 = vst.msk [vmem:[%s4 + $0x1a0] sm:$0xff] %vm839, %v1434
  %1499 = vst.msk [vmem:[%s4 + $0x1a8] sm:$0xff] %vm839, %v1435
  %1500 = vst.msk [vmem:[%s4 + $0x1b0] sm:$0xff] %vm839, %v1436
  %1501 = vst.msk [vmem:[%s4 + $0x1b8] sm:$0xff] %vm839, %v1437
  %1502 = vst.msk [vmem:[%s4 + $0x1c0] sm:$0xff] %vm839, %v1438
  %1503 = vst.msk [vmem:[%s4 + $0x1c8] sm:$0xff] %vm839, %v1439
  %1504 = vst.msk [vmem:[%s4 + $0x1d0] sm:$0xff] %vm839, %v1440
  %1505 = vst.msk [vmem:[%s4 + $0x1d8] sm:$0xff] %vm839, %v1441
  %1506 = vst.msk [vmem:[%s4 + $0x1e0] sm:$0xff] %vm839, %v1442
  %1507 = vst.msk [vmem:[%s4 + $0x1e8] sm:$0xff] %vm839, %v1443
  %1508 = vst.msk [vmem:[%s4 + $0x1f0] sm:$0xff] %vm839, %v1444
  %1509 = vst.msk [vmem:[%s4 + $0x1f8] sm:$0xff] %vm839, %v1445
  // Predicated region
  $region18: #{resnet_comp_forward.10} parent=0 // pred_check
    _
  $region19: #{resnet_comp_forward.10} parent=0 // pred_check_branch
    %1511 = sbr.rel (0) target = $region21
  $region20: #{resnet_comp_forward.10} parent=0 // pred_region
    _
  $region21: #{resnet_comp_forward.10} parent=0 // pred_fallthru
    _
  // Predicated region
  $region22: #{resnet_comp_forward.10} parent=0 // pred_check
    _
  $region23: #{resnet_comp_forward.10} parent=0 // pred_check_branch
    %1513 = sbr.rel (0) target = $region25
  $region24: #{resnet_comp_forward.10} parent=0 // pred_region
    _
  $region25: #{resnet_comp_forward.10} parent=0 // pred_fallthru
    _

// kernel: resnet_comp_forward.11
$region0: #{resnet_comp_forward.11}
  #allocation0 [shape = 'u32[]', space=smem, size = 0x4, offset = 0x4, fixed_abs, tag = 'smem constant byte address 0x4 - core index']
  #allocation1 [shape = 'u32[144,128]{1,0:T(1,128)}', space=vmem, size = 0x12000, scoped, tag = 'internal scratch']
  %s0 = inlined_call_operand.vmem [shape: f32[9,9,2,64], index: 0, kind: input, shape index: {}]
  %s1 = inlined_call_operand.vmem [shape: f32[9,9,2,64], index: 1, kind: input, shape index: {}]
  %s2 = inlined_call_operand.vmem [shape: f32[9,9,2,64], index: 2, kind: input, shape index: {}]
  %s3 = inlined_call_operand.vmem [shape: f32[9,9,2,64], index: 3, kind: input, shape index: {}]
  %s4 = inlined_call_operand.vmem [shape: f32[8,8,2,64], index: 4, kind: output, shape index: {}]
  %s5 = sld [smem:[#allocation0]]
  $region26: #{resnet_comp_forward.11} parent=0
    _
  %s7 = ssub.s32 1, %s5
  %s8 = scalar_select 0, %s7, %s5
  // Predicated region
  $region2: #{resnet_comp_forward.11} parent=0 // pred_check
    _
  $region3: #{resnet_comp_forward.11} parent=0 // pred_check_branch
    %10 = sbr.rel (0) target = $region5
  $region4: #{resnet_comp_forward.11} parent=0 // pred_region
    _
  $region5: #{resnet_comp_forward.11} parent=0 // pred_fallthru
    _
  // Predicated region
  $region6: #{resnet_comp_forward.11} parent=0 // pred_check
    _
  $region7: #{resnet_comp_forward.11} parent=0 // pred_check_branch
    %12 = sbr.rel (0) target = $region9
  $region8: #{resnet_comp_forward.11} parent=0 // pred_region
    _
  $region9: #{resnet_comp_forward.11} parent=0 // pred_fallthru
    _
  // Predicated region
  $region10: #{resnet_comp_forward.11} parent=0 // pred_check
    _
  $region11: #{resnet_comp_forward.11} parent=0 // pred_check_branch
    %14 = sbr.rel (0) target = $region13
  $region12: #{resnet_comp_forward.11} parent=0 // pred_region
    _
  $region13: #{resnet_comp_forward.11} parent=0 // pred_fallthru
    _
  // Predicated region
  $region14: #{resnet_comp_forward.11} parent=0 // pred_check
    _
  $region15: #{resnet_comp_forward.11} parent=0 // pred_check_branch
    %16 = sbr.rel (0) target = $region17
  $region16: #{resnet_comp_forward.11} parent=0 // pred_region
    _
  $region17: #{resnet_comp_forward.11} parent=0 // pred_fallthru
    _
  %v17 = vld [vmem:[%s0] sm:$0x3]
  %v18 = vld [vmem:[%s0 + $0x2] sm:$0x3]
  %v19 = vld [vmem:[%s0 + $0x4] sm:$0x3]
  %v20 = vld [vmem:[%s0 + $0x6] sm:$0x3]
  %v21 = vld [vmem:[%s0 + $0x8] sm:$0x3]
  %v22 = vld [vmem:[%s0 + $0xa] sm:$0x3]
  %v23 = vld [vmem:[%s0 + $0xc] sm:$0x3]
  %v24 = vld [vmem:[%s0 + $0xe] sm:$0x3]
  %v25 = vld [vmem:[%s0 + $0x12] sm:$0x3]
  %v26 = vld [vmem:[%s0 + $0x14] sm:$0x3]
  %v27 = vld [vmem:[%s0 + $0x16] sm:$0x3]
  %v28 = vld [vmem:[%s0 + $0x18] sm:$0x3]
  %v29 = vld [vmem:[%s0 + $0x1a] sm:$0x3]
  %v30 = vld [vmem:[%s0 + $0x1c] sm:$0x3]
  %v31 = vld [vmem:[%s0 + $0x1e] sm:$0x3]
  %v32 = vld [vmem:[%s0 + $0x20] sm:$0x3]
  %v33 = vld [vmem:[%s0 + $0x24] sm:$0x3]
  %v34 = vld [vmem:[%s0 + $0x26] sm:$0x3]
  %v35 = vld [vmem:[%s0 + $0x28] sm:$0x3]
  %v36 = vld [vmem:[%s0 + $0x2a] sm:$0x3]
  %v37 = vld [vmem:[%s0 + $0x2c] sm:$0x3]
  %v38 = vld [vmem:[%s0 + $0x2e] sm:$0x3]
  %v39 = vld [vmem:[%s0 + $0x30] sm:$0x3]
  %v40 = vld [vmem:[%s0 + $0x32] sm:$0x3]
  %v41 = vld [vmem:[%s0 + $0x36] sm:$0x3]
  %v42 = vld [vmem:[%s0 + $0x38] sm:$0x3]
  %v43 = vld [vmem:[%s0 + $0x3a] sm:$0x3]
  %v44 = vld [vmem:[%s0 + $0x3c] sm:$0x3]
  %v45 = vld [vmem:[%s0 + $0x3e] sm:$0x3]
  %v46 = vld [vmem:[%s0 + $0x40] sm:$0x3]
  %v47 = vld [vmem:[%s0 + $0x42] sm:$0x3]
  %v48 = vld [vmem:[%s0 + $0x44] sm:$0x3]
  %v49 = vld [vmem:[%s0 + $0x48] sm:$0x3]
  %v50 = vld [vmem:[%s0 + $0x4a] sm:$0x3]
  %v51 = vld [vmem:[%s0 + $0x4c] sm:$0x3]
  %v52 = vld [vmem:[%s0 + $0x4e] sm:$0x3]
  %v53 = vld [vmem:[%s0 + $0x50] sm:$0x3]
  %v54 = vld [vmem:[%s0 + $0x52] sm:$0x3]
  %v55 = vld [vmem:[%s0 + $0x54] sm:$0x3]
  %v56 = vld [vmem:[%s0 + $0x56] sm:$0x3]
  %v57 = vld [vmem:[%s0 + $0x5a] sm:$0x3]
  %v58 = vld [vmem:[%s0 + $0x5c] sm:$0x3]
  %v59 = vld [vmem:[%s0 + $0x5e] sm:$0x3]
  %v60 = vld [vmem:[%s0 + $0x60] sm:$0x3]
  %v61 = vld [vmem:[%s0 + $0x62] sm:$0x3]
  %v62 = vld [vmem:[%s0 + $0x64] sm:$0x3]
  %v63 = vld [vmem:[%s0 + $0x66] sm:$0x3]
  %v64 = vld [vmem:[%s0 + $0x68] sm:$0x3]
  %v65 = vld [vmem:[%s0 + $0x6c] sm:$0x3]
  %v66 = vld [vmem:[%s0 + $0x6e] sm:$0x3]
  %v67 = vld [vmem:[%s0 + $0x70] sm:$0x3]
  %v68 = vld [vmem:[%s0 + $0x72] sm:$0x3]
  %v69 = vld [vmem:[%s0 + $0x74] sm:$0x3]
  %v70 = vld [vmem:[%s0 + $0x76] sm:$0x3]
  %v71 = vld [vmem:[%s0 + $0x78] sm:$0x3]
  %v72 = vld [vmem:[%s0 + $0x7a] sm:$0x3]
  %v73 = vld [vmem:[%s0 + $0x7e] sm:$0x3]
  %v74 = vld [vmem:[%s0 + $0x80] sm:$0x3]
  %v75 = vld [vmem:[%s0 + $0x82] sm:$0x3]
  %v76 = vld [vmem:[%s0 + $0x84] sm:$0x3]
  %v77 = vld [vmem:[%s0 + $0x86] sm:$0x3]
  %v78 = vld [vmem:[%s0 + $0x88] sm:$0x3]
  %v79 = vld [vmem:[%s0 + $0x8a] sm:$0x3]
  %v80 = vld [vmem:[%s0 + $0x8c] sm:$0x3]
  %s81 = scalar_lea.vmem %s0, 2
  %v82 = vld [vmem:[%s81] sm:$0x3]
  %v83 = vld [vmem:[%s81 + $0x2] sm:$0x3]
  %v84 = vld [vmem:[%s81 + $0x4] sm:$0x3]
  %v85 = vld [vmem:[%s81 + $0x6] sm:$0x3]
  %v86 = vld [vmem:[%s81 + $0x8] sm:$0x3]
  %v87 = vld [vmem:[%s81 + $0xa] sm:$0x3]
  %v88 = vld [vmem:[%s81 + $0xc] sm:$0x3]
  %v89 = vld [vmem:[%s81 + $0xe] sm:$0x3]
  %v90 = vld [vmem:[%s81 + $0x12] sm:$0x3]
  %v91 = vld [vmem:[%s81 + $0x14] sm:$0x3]
  %v92 = vld [vmem:[%s81 + $0x16] sm:$0x3]
  %v93 = vld [vmem:[%s81 + $0x18] sm:$0x3]
  %v94 = vld [vmem:[%s81 + $0x1a] sm:$0x3]
  %v95 = vld [vmem:[%s81 + $0x1c] sm:$0x3]
  %v96 = vld [vmem:[%s81 + $0x1e] sm:$0x3]
  %v97 = vld [vmem:[%s81 + $0x20] sm:$0x3]
  %v98 = vld [vmem:[%s81 + $0x24] sm:$0x3]
  %v99 = vld [vmem:[%s81 + $0x26] sm:$0x3]
  %v100 = vld [vmem:[%s81 + $0x28] sm:$0x3]
  %v101 = vld [vmem:[%s81 + $0x2a] sm:$0x3]
  %v102 = vld [vmem:[%s81 + $0x2c] sm:$0x3]
  %v103 = vld [vmem:[%s81 + $0x2e] sm:$0x3]
  %v104 = vld [vmem:[%s81 + $0x30] sm:$0x3]
  %v105 = vld [vmem:[%s81 + $0x32] sm:$0x3]
  %v106 = vld [vmem:[%s81 + $0x36] sm:$0x3]
  %v107 = vld [vmem:[%s81 + $0x38] sm:$0x3]
  %v108 = vld [vmem:[%s81 + $0x3a] sm:$0x3]
  %v109 = vld [vmem:[%s81 + $0x3c] sm:$0x3]
  %v110 = vld [vmem:[%s81 + $0x3e] sm:$0x3]
  %v111 = vld [vmem:[%s81 + $0x40] sm:$0x3]
  %v112 = vld [vmem:[%s81 + $0x42] sm:$0x3]
  %v113 = vld [vmem:[%s81 + $0x44] sm:$0x3]
  %v114 = vld [vmem:[%s81 + $0x48] sm:$0x3]
  %v115 = vld [vmem:[%s81 + $0x4a] sm:$0x3]
  %v116 = vld [vmem:[%s81 + $0x4c] sm:$0x3]
  %v117 = vld [vmem:[%s81 + $0x4e] sm:$0x3]
  %v118 = vld [vmem:[%s81 + $0x50] sm:$0x3]
  %v119 = vld [vmem:[%s81 + $0x52] sm:$0x3]
  %v120 = vld [vmem:[%s81 + $0x54] sm:$0x3]
  %v121 = vld [vmem:[%s81 + $0x56] sm:$0x3]
  %v122 = vld [vmem:[%s81 + $0x5a] sm:$0x3]
  %v123 = vld [vmem:[%s81 + $0x5c] sm:$0x3]
  %v124 = vld [vmem:[%s81 + $0x5e] sm:$0x3]
  %v125 = vld [vmem:[%s81 + $0x60] sm:$0x3]
  %v126 = vld [vmem:[%s81 + $0x62] sm:$0x3]
  %v127 = vld [vmem:[%s81 + $0x64] sm:$0x3]
  %v128 = vld [vmem:[%s81 + $0x66] sm:$0x3]
  %v129 = vld [vmem:[%s81 + $0x68] sm:$0x3]
  %v130 = vld [vmem:[%s81 + $0x6c] sm:$0x3]
  %v131 = vld [vmem:[%s81 + $0x6e] sm:$0x3]
  %v132 = vld [vmem:[%s81 + $0x70] sm:$0x3]
  %v133 = vld [vmem:[%s81 + $0x72] sm:$0x3]
  %v134 = vld [vmem:[%s81 + $0x74] sm:$0x3]
  %v135 = vld [vmem:[%s81 + $0x76] sm:$0x3]
  %v136 = vld [vmem:[%s81 + $0x78] sm:$0x3]
  %v137 = vld [vmem:[%s81 + $0x7a] sm:$0x3]
  %v138 = vld [vmem:[%s81 + $0x7e] sm:$0x3]
  %v139 = vld [vmem:[%s81 + $0x80] sm:$0x3]
  %v140 = vld [vmem:[%s81 + $0x82] sm:$0x3]
  %v141 = vld [vmem:[%s81 + $0x84] sm:$0x3]
  %v142 = vld [vmem:[%s81 + $0x86] sm:$0x3]
  %v143 = vld [vmem:[%s81 + $0x88] sm:$0x3]
  %v144 = vld [vmem:[%s81 + $0x8a] sm:$0x3]
  %v145 = vld [vmem:[%s81 + $0x8c] sm:$0x3]
  %v146 = vmax.f32 %v17, %v82
  %v147 = vmax.f32 %v18, %v83
  %v148 = vmax.f32 %v19, %v84
  %v149 = vmax.f32 %v20, %v85
  %v150 = vmax.f32 %v21, %v86
  %v151 = vmax.f32 %v22, %v87
  %v152 = vmax.f32 %v23, %v88
  %v153 = vmax.f32 %v24, %v89
  %v154 = vmax.f32 %v25, %v90
  %v155 = vmax.f32 %v26, %v91
  %v156 = vmax.f32 %v27, %v92
  %v157 = vmax.f32 %v28, %v93
  %v158 = vmax.f32 %v29, %v94
  %v159 = vmax.f32 %v30, %v95
  %v160 = vmax.f32 %v31, %v96
  %v161 = vmax.f32 %v32, %v97
  %v162 = vmax.f32 %v33, %v98
  %v163 = vmax.f32 %v34, %v99
  %v164 = vmax.f32 %v35, %v100
  %v165 = vmax.f32 %v36, %v101
  %v166 = vmax.f32 %v37, %v102
  %v167 = vmax.f32 %v38, %v103
  %v168 = vmax.f32 %v39, %v104
  %v169 = vmax.f32 %v40, %v105
  %v170 = vmax.f32 %v41, %v106
  %v171 = vmax.f32 %v42, %v107
  %v172 = vmax.f32 %v43, %v108
  %v173 = vmax.f32 %v44, %v109
  %v174 = vmax.f32 %v45, %v110
  %v175 = vmax.f32 %v46, %v111
  %v176 = vmax.f32 %v47, %v112
  %v177 = vmax.f32 %v48, %v113
  %v178 = vmax.f32 %v49, %v114
  %v179 = vmax.f32 %v50, %v115
  %v180 = vmax.f32 %v51, %v116
  %v181 = vmax.f32 %v52, %v117
  %v182 = vmax.f32 %v53, %v118
  %v183 = vmax.f32 %v54, %v119
  %v184 = vmax.f32 %v55, %v120
  %v185 = vmax.f32 %v56, %v121
  %v186 = vmax.f32 %v57, %v122
  %v187 = vmax.f32 %v58, %v123
  %v188 = vmax.f32 %v59, %v124
  %v189 = vmax.f32 %v60, %v125
  %v190 = vmax.f32 %v61, %v126
  %v191 = vmax.f32 %v62, %v127
  %v192 = vmax.f32 %v63, %v128
  %v193 = vmax.f32 %v64, %v129
  %v194 = vmax.f32 %v65, %v130
  %v195 = vmax.f32 %v66, %v131
  %v196 = vmax.f32 %v67, %v132
  %v197 = vmax.f32 %v68, %v133
  %v198 = vmax.f32 %v69, %v134
  %v199 = vmax.f32 %v70, %v135
  %v200 = vmax.f32 %v71, %v136
  %v201 = vmax.f32 %v72, %v137
  %v202 = vmax.f32 %v73, %v138
  %v203 = vmax.f32 %v74, %v139
  %v204 = vmax.f32 %v75, %v140
  %v205 = vmax.f32 %v76, %v141
  %v206 = vmax.f32 %v77, %v142
  %v207 = vmax.f32 %v78, %v143
  %v208 = vmax.f32 %v79, %v144
  %v209 = vmax.f32 %v80, %v145
  %s210 = scalar_lea.vmem %s0, 18
  %v211 = vld [vmem:[%s210] sm:$0x3]
  %v212 = vld [vmem:[%s210 + $0x2] sm:$0x3]
  %v213 = vld [vmem:[%s210 + $0x4] sm:$0x3]
  %v214 = vld [vmem:[%s210 + $0x6] sm:$0x3]
  %v215 = vld [vmem:[%s210 + $0x8] sm:$0x3]
  %v216 = vld [vmem:[%s210 + $0xa] sm:$0x3]
  %v217 = vld [vmem:[%s210 + $0xc] sm:$0x3]
  %v218 = vld [vmem:[%s210 + $0xe] sm:$0x3]
  %v219 = vld [vmem:[%s210 + $0x12] sm:$0x3]
  %v220 = vld [vmem:[%s210 + $0x14] sm:$0x3]
  %v221 = vld [vmem:[%s210 + $0x16] sm:$0x3]
  %v222 = vld [vmem:[%s210 + $0x18] sm:$0x3]
  %v223 = vld [vmem:[%s210 + $0x1a] sm:$0x3]
  %v224 = vld [vmem:[%s210 + $0x1c] sm:$0x3]
  %v225 = vld [vmem:[%s210 + $0x1e] sm:$0x3]
  %v226 = vld [vmem:[%s210 + $0x20] sm:$0x3]
  %v227 = vld [vmem:[%s210 + $0x24] sm:$0x3]
  %v228 = vld [vmem:[%s210 + $0x26] sm:$0x3]
  %v229 = vld [vmem:[%s210 + $0x28] sm:$0x3]
  %v230 = vld [vmem:[%s210 + $0x2a] sm:$0x3]
  %v231 = vld [vmem:[%s210 + $0x2c] sm:$0x3]
  %v232 = vld [vmem:[%s210 + $0x2e] sm:$0x3]
  %v233 = vld [vmem:[%s210 + $0x30] sm:$0x3]
  %v234 = vld [vmem:[%s210 + $0x32] sm:$0x3]
  %v235 = vld [vmem:[%s210 + $0x36] sm:$0x3]
  %v236 = vld [vmem:[%s210 + $0x38] sm:$0x3]
  %v237 = vld [vmem:[%s210 + $0x3a] sm:$0x3]
  %v238 = vld [vmem:[%s210 + $0x3c] sm:$0x3]
  %v239 = vld [vmem:[%s210 + $0x3e] sm:$0x3]
  %v240 = vld [vmem:[%s210 + $0x40] sm:$0x3]
  %v241 = vld [vmem:[%s210 + $0x42] sm:$0x3]
  %v242 = vld [vmem:[%s210 + $0x44] sm:$0x3]
  %v243 = vld [vmem:[%s210 + $0x48] sm:$0x3]
  %v244 = vld [vmem:[%s210 + $0x4a] sm:$0x3]
  %v245 = vld [vmem:[%s210 + $0x4c] sm:$0x3]
  %v246 = vld [vmem:[%s210 + $0x4e] sm:$0x3]
  %v247 = vld [vmem:[%s210 + $0x50] sm:$0x3]
  %v248 = vld [vmem:[%s210 + $0x52] sm:$0x3]
  %v249 = vld [vmem:[%s210 + $0x54] sm:$0x3]
  %v250 = vld [vmem:[%s210 + $0x56] sm:$0x3]
  %v251 = vld [vmem:[%s210 + $0x5a] sm:$0x3]
  %v252 = vld [vmem:[%s210 + $0x5c] sm:$0x3]
  %v253 = vld [vmem:[%s210 + $0x5e] sm:$0x3]
  %v254 = vld [vmem:[%s210 + $0x60] sm:$0x3]
  %v255 = vld [vmem:[%s210 + $0x62] sm:$0x3]
  %v256 = vld [vmem:[%s210 + $0x64] sm:$0x3]
  %v257 = vld [vmem:[%s210 + $0x66] sm:$0x3]
  %v258 = vld [vmem:[%s210 + $0x68] sm:$0x3]
  %v259 = vld [vmem:[%s210 + $0x6c] sm:$0x3]
  %v260 = vld [vmem:[%s210 + $0x6e] sm:$0x3]
  %v261 = vld [vmem:[%s210 + $0x70] sm:$0x3]
  %v262 = vld [vmem:[%s210 + $0x72] sm:$0x3]
  %v263 = vld [vmem:[%s210 + $0x74] sm:$0x3]
  %v264 = vld [vmem:[%s210 + $0x76] sm:$0x3]
  %v265 = vld [vmem:[%s210 + $0x78] sm:$0x3]
  %v266 = vld [vmem:[%s210 + $0x7a] sm:$0x3]
  %v267 = vld [vmem:[%s210 + $0x7e] sm:$0x3]
  %v268 = vld [vmem:[%s210 + $0x80] sm:$0x3]
  %v269 = vld [vmem:[%s210 + $0x82] sm:$0x3]
  %v270 = vld [vmem:[%s210 + $0x84] sm:$0x3]
  %v271 = vld [vmem:[%s210 + $0x86] sm:$0x3]
  %v272 = vld [vmem:[%s210 + $0x88] sm:$0x3]
  %v273 = vld [vmem:[%s210 + $0x8a] sm:$0x3]
  %v274 = vld [vmem:[%s210 + $0x8c] sm:$0x3]
  %v275 = vmax.f32 %v146, %v211
  %v276 = vmax.f32 %v147, %v212
  %v277 = vmax.f32 %v148, %v213
  %v278 = vmax.f32 %v149, %v214
  %v279 = vmax.f32 %v150, %v215
  %v280 = vmax.f32 %v151, %v216
  %v281 = vmax.f32 %v152, %v217
  %v282 = vmax.f32 %v153, %v218
  %v283 = vmax.f32 %v154, %v219
  %v284 = vmax.f32 %v155, %v220
  %v285 = vmax.f32 %v156, %v221
  %v286 = vmax.f32 %v157, %v222
  %v287 = vmax.f32 %v158, %v223
  %v288 = vmax.f32 %v159, %v224
  %v289 = vmax.f32 %v160, %v225
  %v290 = vmax.f32 %v161, %v226
  %v291 = vmax.f32 %v162, %v227
  %v292 = vmax.f32 %v163, %v228
  %v293 = vmax.f32 %v164, %v229
  %v294 = vmax.f32 %v165, %v230
  %v295 = vmax.f32 %v166, %v231
  %v296 = vmax.f32 %v167, %v232
  %v297 = vmax.f32 %v168, %v233
  %v298 = vmax.f32 %v169, %v234
  %v299 = vmax.f32 %v170, %v235
  %v300 = vmax.f32 %v171, %v236
  %v301 = vmax.f32 %v172, %v237
  %v302 = vmax.f32 %v173, %v238
  %v303 = vmax.f32 %v174, %v239
  %v304 = vmax.f32 %v175, %v240
  %v305 = vmax.f32 %v176, %v241
  %v306 = vmax.f32 %v177, %v242
  %v307 = vmax.f32 %v178, %v243
  %v308 = vmax.f32 %v179, %v244
  %v309 = vmax.f32 %v180, %v245
  %v310 = vmax.f32 %v181, %v246
  %v311 = vmax.f32 %v182, %v247
  %v312 = vmax.f32 %v183, %v248
  %v313 = vmax.f32 %v184, %v249
  %v314 = vmax.f32 %v185, %v250
  %v315 = vmax.f32 %v186, %v251
  %v316 = vmax.f32 %v187, %v252
  %v317 = vmax.f32 %v188, %v253
  %v318 = vmax.f32 %v189, %v254
  %v319 = vmax.f32 %v190, %v255
  %v320 = vmax.f32 %v191, %v256
  %v321 = vmax.f32 %v192, %v257
  %v322 = vmax.f32 %v193, %v258
  %v323 = vmax.f32 %v194, %v259
  %v324 = vmax.f32 %v195, %v260
  %v325 = vmax.f32 %v196, %v261
  %v326 = vmax.f32 %v197, %v262
  %v327 = vmax.f32 %v198, %v263
  %v328 = vmax.f32 %v199, %v264
  %v329 = vmax.f32 %v200, %v265
  %v330 = vmax.f32 %v201, %v266
  %v331 = vmax.f32 %v202, %v267
  %v332 = vmax.f32 %v203, %v268
  %v333 = vmax.f32 %v204, %v269
  %v334 = vmax.f32 %v205, %v270
  %v335 = vmax.f32 %v206, %v271
  %v336 = vmax.f32 %v207, %v272
  %v337 = vmax.f32 %v208, %v273
  %v338 = vmax.f32 %v209, %v274
  %s339 = scalar_lea.vmem %s0, 20
  %v340 = vld [vmem:[%s339] sm:$0x3]
  %v341 = vld [vmem:[%s339 + $0x2] sm:$0x3]
  %v342 = vld [vmem:[%s339 + $0x4] sm:$0x3]
  %v343 = vld [vmem:[%s339 + $0x6] sm:$0x3]
  %v344 = vld [vmem:[%s339 + $0x8] sm:$0x3]
  %v345 = vld [vmem:[%s339 + $0xa] sm:$0x3]
  %v346 = vld [vmem:[%s339 + $0xc] sm:$0x3]
  %v347 = vld [vmem:[%s339 + $0xe] sm:$0x3]
  %v348 = vld [vmem:[%s339 + $0x12] sm:$0x3]
  %v349 = vld [vmem:[%s339 + $0x14] sm:$0x3]
  %v350 = vld [vmem:[%s339 + $0x16] sm:$0x3]
  %v351 = vld [vmem:[%s339 + $0x18] sm:$0x3]
  %v352 = vld [vmem:[%s339 + $0x1a] sm:$0x3]
  %v353 = vld [vmem:[%s339 + $0x1c] sm:$0x3]
  %v354 = vld [vmem:[%s339 + $0x1e] sm:$0x3]
  %v355 = vld [vmem:[%s339 + $0x20] sm:$0x3]
  %v356 = vld [vmem:[%s339 + $0x24] sm:$0x3]
  %v357 = vld [vmem:[%s339 + $0x26] sm:$0x3]
  %v358 = vld [vmem:[%s339 + $0x28] sm:$0x3]
  %v359 = vld [vmem:[%s339 + $0x2a] sm:$0x3]
  %v360 = vld [vmem:[%s339 + $0x2c] sm:$0x3]
  %v361 = vld [vmem:[%s339 + $0x2e] sm:$0x3]
  %v362 = vld [vmem:[%s339 + $0x30] sm:$0x3]
  %v363 = vld [vmem:[%s339 + $0x32] sm:$0x3]
  %v364 = vld [vmem:[%s339 + $0x36] sm:$0x3]
  %v365 = vld [vmem:[%s339 + $0x38] sm:$0x3]
  %v366 = vld [vmem:[%s339 + $0x3a] sm:$0x3]
  %v367 = vld [vmem:[%s339 + $0x3c] sm:$0x3]
  %v368 = vld [vmem:[%s339 + $0x3e] sm:$0x3]
  %v369 = vld [vmem:[%s339 + $0x40] sm:$0x3]
  %v370 = vld [vmem:[%s339 + $0x42] sm:$0x3]
  %v371 = vld [vmem:[%s339 + $0x44] sm:$0x3]
  %v372 = vld [vmem:[%s339 + $0x48] sm:$0x3]
  %v373 = vld [vmem:[%s339 + $0x4a] sm:$0x3]
  %v374 = vld [vmem:[%s339 + $0x4c] sm:$0x3]
  %v375 = vld [vmem:[%s339 + $0x4e] sm:$0x3]
  %v376 = vld [vmem:[%s339 + $0x50] sm:$0x3]
  %v377 = vld [vmem:[%s339 + $0x52] sm:$0x3]
  %v378 = vld [vmem:[%s339 + $0x54] sm:$0x3]
  %v379 = vld [vmem:[%s339 + $0x56] sm:$0x3]
  %v380 = vld [vmem:[%s339 + $0x5a] sm:$0x3]
  %v381 = vld [vmem:[%s339 + $0x5c] sm:$0x3]
  %v382 = vld [vmem:[%s339 + $0x5e] sm:$0x3]
  %v383 = vld [vmem:[%s339 + $0x60] sm:$0x3]
  %v384 = vld [vmem:[%s339 + $0x62] sm:$0x3]
  %v385 = vld [vmem:[%s339 + $0x64] sm:$0x3]
  %v386 = vld [vmem:[%s339 + $0x66] sm:$0x3]
  %v387 = vld [vmem:[%s339 + $0x68] sm:$0x3]
  %v388 = vld [vmem:[%s339 + $0x6c] sm:$0x3]
  %v389 = vld [vmem:[%s339 + $0x6e] sm:$0x3]
  %v390 = vld [vmem:[%s339 + $0x70] sm:$0x3]
  %v391 = vld [vmem:[%s339 + $0x72] sm:$0x3]
  %v392 = vld [vmem:[%s339 + $0x74] sm:$0x3]
  %v393 = vld [vmem:[%s339 + $0x76] sm:$0x3]
  %v394 = vld [vmem:[%s339 + $0x78] sm:$0x3]
  %v395 = vld [vmem:[%s339 + $0x7a] sm:$0x3]
  %v396 = vld [vmem:[%s339 + $0x7e] sm:$0x3]
  %v397 = vld [vmem:[%s339 + $0x80] sm:$0x3]
  %v398 = vld [vmem:[%s339 + $0x82] sm:$0x3]
  %v399 = vld [vmem:[%s339 + $0x84] sm:$0x3]
  %v400 = vld [vmem:[%s339 + $0x86] sm:$0x3]
  %v401 = vld [vmem:[%s339 + $0x88] sm:$0x3]
  %v402 = vld [vmem:[%s339 + $0x8a] sm:$0x3]
  %v403 = vld [vmem:[%s339 + $0x8c] sm:$0x3]
  %v404 = vmax.f32 %v275, %v340
  %v405 = vmax.f32 %v276, %v341
  %v406 = vmax.f32 %v277, %v342
  %v407 = vmax.f32 %v278, %v343
  %v408 = vmax.f32 %v279, %v344
  %v409 = vmax.f32 %v280, %v345
  %v410 = vmax.f32 %v281, %v346
  %v411 = vmax.f32 %v282, %v347
  %v412 = vmax.f32 %v283, %v348
  %v413 = vmax.f32 %v284, %v349
  %v414 = vmax.f32 %v285, %v350
  %v415 = vmax.f32 %v286, %v351
  %v416 = vmax.f32 %v287, %v352
  %v417 = vmax.f32 %v288, %v353
  %v418 = vmax.f32 %v289, %v354
  %v419 = vmax.f32 %v290, %v355
  %v420 = vmax.f32 %v291, %v356
  %v421 = vmax.f32 %v292, %v357
  %v422 = vmax.f32 %v293, %v358
  %v423 = vmax.f32 %v294, %v359
  %v424 = vmax.f32 %v295, %v360
  %v425 = vmax.f32 %v296, %v361
  %v426 = vmax.f32 %v297, %v362
  %v427 = vmax.f32 %v298, %v363
  %v428 = vmax.f32 %v299, %v364
  %v429 = vmax.f32 %v300, %v365
  %v430 = vmax.f32 %v301, %v366
  %v431 = vmax.f32 %v302, %v367
  %v432 = vmax.f32 %v303, %v368
  %v433 = vmax.f32 %v304, %v369
  %v434 = vmax.f32 %v305, %v370
  %v435 = vmax.f32 %v306, %v371
  %v436 = vmax.f32 %v307, %v372
  %v437 = vmax.f32 %v308, %v373
  %v438 = vmax.f32 %v309, %v374
  %v439 = vmax.f32 %v310, %v375
  %v440 = vmax.f32 %v311, %v376
  %v441 = vmax.f32 %v312, %v377
  %v442 = vmax.f32 %v313, %v378
  %v443 = vmax.f32 %v314, %v379
  %v444 = vmax.f32 %v315, %v380
  %v445 = vmax.f32 %v316, %v381
  %v446 = vmax.f32 %v317, %v382
  %v447 = vmax.f32 %v318, %v383
  %v448 = vmax.f32 %v319, %v384
  %v449 = vmax.f32 %v320, %v385
  %v450 = vmax.f32 %v321, %v386
  %v451 = vmax.f32 %v322, %v387
  %v452 = vmax.f32 %v323, %v388
  %v453 = vmax.f32 %v324, %v389
  %v454 = vmax.f32 %v325, %v390
  %v455 = vmax.f32 %v326, %v391
  %v456 = vmax.f32 %v327, %v392
  %v457 = vmax.f32 %v328, %v393
  %v458 = vmax.f32 %v329, %v394
  %v459 = vmax.f32 %v330, %v395
  %v460 = vmax.f32 %v331, %v396
  %v461 = vmax.f32 %v332, %v397
  %v462 = vmax.f32 %v333, %v398
  %v463 = vmax.f32 %v334, %v399
  %v464 = vmax.f32 %v335, %v400
  %v465 = vmax.f32 %v336, %v401
  %v466 = vmax.f32 %v337, %v402
  %v467 = vmax.f32 %v338, %v403
  %v468 = vld [vmem:[%s1] sm:$0x3]
  %v469 = vld [vmem:[%s1 + $0x2] sm:$0x3]
  %v470 = vld [vmem:[%s1 + $0x4] sm:$0x3]
  %v471 = vld [vmem:[%s1 + $0x6] sm:$0x3]
  %v472 = vld [vmem:[%s1 + $0x8] sm:$0x3]
  %v473 = vld [vmem:[%s1 + $0xa] sm:$0x3]
  %v474 = vld [vmem:[%s1 + $0xc] sm:$0x3]
  %v475 = vld [vmem:[%s1 + $0xe] sm:$0x3]
  %v476 = vld [vmem:[%s1 + $0x12] sm:$0x3]
  %v477 = vld [vmem:[%s1 + $0x14] sm:$0x3]
  %v478 = vld [vmem:[%s1 + $0x16] sm:$0x3]
  %v479 = vld [vmem:[%s1 + $0x18] sm:$0x3]
  %v480 = vld [vmem:[%s1 + $0x1a] sm:$0x3]
  %v481 = vld [vmem:[%s1 + $0x1c] sm:$0x3]
  %v482 = vld [vmem:[%s1 + $0x1e] sm:$0x3]
  %v483 = vld [vmem:[%s1 + $0x20] sm:$0x3]
  %v484 = vld [vmem:[%s1 + $0x24] sm:$0x3]
  %v485 = vld [vmem:[%s1 + $0x26] sm:$0x3]
  %v486 = vld [vmem:[%s1 + $0x28] sm:$0x3]
  %v487 = vld [vmem:[%s1 + $0x2a] sm:$0x3]
  %v488 = vld [vmem:[%s1 + $0x2c] sm:$0x3]
  %v489 = vld [vmem:[%s1 + $0x2e] sm:$0x3]
  %v490 = vld [vmem:[%s1 + $0x30] sm:$0x3]
  %v491 = vld [vmem:[%s1 + $0x32] sm:$0x3]
  %v492 = vld [vmem:[%s1 + $0x36] sm:$0x3]
  %v493 = vld [vmem:[%s1 + $0x38] sm:$0x3]
  %v494 = vld [vmem:[%s1 + $0x3a] sm:$0x3]
  %v495 = vld [vmem:[%s1 + $0x3c] sm:$0x3]
  %v496 = vld [vmem:[%s1 + $0x3e] sm:$0x3]
  %v497 = vld [vmem:[%s1 + $0x40] sm:$0x3]
  %v498 = vld [vmem:[%s1 + $0x42] sm:$0x3]
  %v499 = vld [vmem:[%s1 + $0x44] sm:$0x3]
  %v500 = vld [vmem:[%s1 + $0x48] sm:$0x3]
  %v501 = vld [vmem:[%s1 + $0x4a] sm:$0x3]
  %v502 = vld [vmem:[%s1 + $0x4c] sm:$0x3]
  %v503 = vld [vmem:[%s1 + $0x4e] sm:$0x3]
  %v504 = vld [vmem:[%s1 + $0x50] sm:$0x3]
  %v505 = vld [vmem:[%s1 + $0x52] sm:$0x3]
  %v506 = vld [vmem:[%s1 + $0x54] sm:$0x3]
  %v507 = vld [vmem:[%s1 + $0x56] sm:$0x3]
  %v508 = vld [vmem:[%s1 + $0x5a] sm:$0x3]
  %v509 = vld [vmem:[%s1 + $0x5c] sm:$0x3]
  %v510 = vld [vmem:[%s1 + $0x5e] sm:$0x3]
  %v511 = vld [vmem:[%s1 + $0x60] sm:$0x3]
  %v512 = vld [vmem:[%s1 + $0x62] sm:$0x3]
  %v513 = vld [vmem:[%s1 + $0x64] sm:$0x3]
  %v514 = vld [vmem:[%s1 + $0x66] sm:$0x3]
  %v515 = vld [vmem:[%s1 + $0x68] sm:$0x3]
  %v516 = vld [vmem:[%s1 + $0x6c] sm:$0x3]
  %v517 = vld [vmem:[%s1 + $0x6e] sm:$0x3]
  %v518 = vld [vmem:[%s1 + $0x70] sm:$0x3]
  %v519 = vld [vmem:[%s1 + $0x72] sm:$0x3]
  %v520 = vld [vmem:[%s1 + $0x74] sm:$0x3]
  %v521 = vld [vmem:[%s1 + $0x76] sm:$0x3]
  %v522 = vld [vmem:[%s1 + $0x78] sm:$0x3]
  %v523 = vld [vmem:[%s1 + $0x7a] sm:$0x3]
  %v524 = vld [vmem:[%s1 + $0x7e] sm:$0x3]
  %v525 = vld [vmem:[%s1 + $0x80] sm:$0x3]
  %v526 = vld [vmem:[%s1 + $0x82] sm:$0x3]
  %v527 = vld [vmem:[%s1 + $0x84] sm:$0x3]
  %v528 = vld [vmem:[%s1 + $0x86] sm:$0x3]
  %v529 = vld [vmem:[%s1 + $0x88] sm:$0x3]
  %v530 = vld [vmem:[%s1 + $0x8a] sm:$0x3]
  %v531 = vld [vmem:[%s1 + $0x8c] sm:$0x3]
  %v532 = vmax.f32 %v404, %v468
  %v533 = vmax.f32 %v405, %v469
  %v534 = vmax.f32 %v406, %v470
  %v535 = vmax.f32 %v407, %v471
  %v536 = vmax.f32 %v408, %v472
  %v537 = vmax.f32 %v409, %v473
  %v538 = vmax.f32 %v410, %v474
  %v539 = vmax.f32 %v411, %v475
  %v540 = vmax.f32 %v412, %v476
  %v541 = vmax.f32 %v413, %v477
  %v542 = vmax.f32 %v414, %v478
  %v543 = vmax.f32 %v415, %v479
  %v544 = vmax.f32 %v416, %v480
  %v545 = vmax.f32 %v417, %v481
  %v546 = vmax.f32 %v418, %v482
  %v547 = vmax.f32 %v419, %v483
  %v548 = vmax.f32 %v420, %v484
  %v549 = vmax.f32 %v421, %v485
  %v550 = vmax.f32 %v422, %v486
  %v551 = vmax.f32 %v423, %v487
  %v552 = vmax.f32 %v424, %v488
  %v553 = vmax.f32 %v425, %v489
  %v554 = vmax.f32 %v426, %v490
  %v555 = vmax.f32 %v427, %v491
  %v556 = vmax.f32 %v428, %v492
  %v557 = vmax.f32 %v429, %v493
  %v558 = vmax.f32 %v430, %v494
  %v559 = vmax.f32 %v431, %v495
  %v560 = vmax.f32 %v432, %v496
  %v561 = vmax.f32 %v433, %v497
  %v562 = vmax.f32 %v434, %v498
  %v563 = vmax.f32 %v435, %v499
  %v564 = vmax.f32 %v436, %v500
  %v565 = vmax.f32 %v437, %v501
  %v566 = vmax.f32 %v438, %v502
  %v567 = vmax.f32 %v439, %v503
  %v568 = vmax.f32 %v440, %v504
  %v569 = vmax.f32 %v441, %v505
  %v570 = vmax.f32 %v442, %v506
  %v571 = vmax.f32 %v443, %v507
  %v572 = vmax.f32 %v444, %v508
  %v573 = vmax.f32 %v445, %v509
  %v574 = vmax.f32 %v446, %v510
  %v575 = vmax.f32 %v447, %v511
  %v576 = vmax.f32 %v448, %v512
  %v577 = vmax.f32 %v449, %v513
  %v578 = vmax.f32 %v450, %v514
  %v579 = vmax.f32 %v451, %v515
  %v580 = vmax.f32 %v452, %v516
  %v581 = vmax.f32 %v453, %v517
  %v582 = vmax.f32 %v454, %v518
  %v583 = vmax.f32 %v455, %v519
  %v584 = vmax.f32 %v456, %v520
  %v585 = vmax.f32 %v457, %v521
  %v586 = vmax.f32 %v458, %v522
  %v587 = vmax.f32 %v459, %v523
  %v588 = vmax.f32 %v460, %v524
  %v589 = vmax.f32 %v461, %v525
  %v590 = vmax.f32 %v462, %v526
  %v591 = vmax.f32 %v463, %v527
  %v592 = vmax.f32 %v464, %v528
  %v593 = vmax.f32 %v465, %v529
  %v594 = vmax.f32 %v466, %v530
  %v595 = vmax.f32 %v467, %v531
  %s596 = scalar_lea.vmem %s1, 18
  %v597 = vld [vmem:[%s596] sm:$0x3]
  %v598 = vld [vmem:[%s596 + $0x2] sm:$0x3]
  %v599 = vld [vmem:[%s596 + $0x4] sm:$0x3]
  %v600 = vld [vmem:[%s596 + $0x6] sm:$0x3]
  %v601 = vld [vmem:[%s596 + $0x8] sm:$0x3]
  %v602 = vld [vmem:[%s596 + $0xa] sm:$0x3]
  %v603 = vld [vmem:[%s596 + $0xc] sm:$0x3]
  %v604 = vld [vmem:[%s596 + $0xe] sm:$0x3]
  %v605 = vld [vmem:[%s596 + $0x12] sm:$0x3]
  %v606 = vld [vmem:[%s596 + $0x14] sm:$0x3]
  %v607 = vld [vmem:[%s596 + $0x16] sm:$0x3]
  %v608 = vld [vmem:[%s596 + $0x18] sm:$0x3]
  %v609 = vld [vmem:[%s596 + $0x1a] sm:$0x3]
  %v610 = vld [vmem:[%s596 + $0x1c] sm:$0x3]
  %v611 = vld [vmem:[%s596 + $0x1e] sm:$0x3]
  %v612 = vld [vmem:[%s596 + $0x20] sm:$0x3]
  %v613 = vld [vmem:[%s596 + $0x24] sm:$0x3]
  %v614 = vld [vmem:[%s596 + $0x26] sm:$0x3]
  %v615 = vld [vmem:[%s596 + $0x28] sm:$0x3]
  %v616 = vld [vmem:[%s596 + $0x2a] sm:$0x3]
  %v617 = vld [vmem:[%s596 + $0x2c] sm:$0x3]
  %v618 = vld [vmem:[%s596 + $0x2e] sm:$0x3]
  %v619 = vld [vmem:[%s596 + $0x30] sm:$0x3]
  %v620 = vld [vmem:[%s596 + $0x32] sm:$0x3]
  %v621 = vld [vmem:[%s596 + $0x36] sm:$0x3]
  %v622 = vld [vmem:[%s596 + $0x38] sm:$0x3]
  %v623 = vld [vmem:[%s596 + $0x3a] sm:$0x3]
  %v624 = vld [vmem:[%s596 + $0x3c] sm:$0x3]
  %v625 = vld [vmem:[%s596 + $0x3e] sm:$0x3]
  %v626 = vld [vmem:[%s596 + $0x40] sm:$0x3]
  %v627 = vld [vmem:[%s596 + $0x42] sm:$0x3]
  %v628 = vld [vmem:[%s596 + $0x44] sm:$0x3]
  %v629 = vld [vmem:[%s596 + $0x48] sm:$0x3]
  %v630 = vld [vmem:[%s596 + $0x4a] sm:$0x3]
  %v631 = vld [vmem:[%s596 + $0x4c] sm:$0x3]
  %v632 = vld [vmem:[%s596 + $0x4e] sm:$0x3]
  %v633 = vld [vmem:[%s596 + $0x50] sm:$0x3]
  %v634 = vld [vmem:[%s596 + $0x52] sm:$0x3]
  %v635 = vld [vmem:[%s596 + $0x54] sm:$0x3]
  %v636 = vld [vmem:[%s596 + $0x56] sm:$0x3]
  %v637 = vld [vmem:[%s596 + $0x5a] sm:$0x3]
  %v638 = vld [vmem:[%s596 + $0x5c] sm:$0x3]
  %v639 = vld [vmem:[%s596 + $0x5e] sm:$0x3]
  %v640 = vld [vmem:[%s596 + $0x60] sm:$0x3]
  %v641 = vld [vmem:[%s596 + $0x62] sm:$0x3]
  %v642 = vld [vmem:[%s596 + $0x64] sm:$0x3]
  %v643 = vld [vmem:[%s596 + $0x66] sm:$0x3]
  %v644 = vld [vmem:[%s596 + $0x68] sm:$0x3]
  %v645 = vld [vmem:[%s596 + $0x6c] sm:$0x3]
  %v646 = vld [vmem:[%s596 + $0x6e] sm:$0x3]
  %v647 = vld [vmem:[%s596 + $0x70] sm:$0x3]
  %v648 = vld [vmem:[%s596 + $0x72] sm:$0x3]
  %v649 = vld [vmem:[%s596 + $0x74] sm:$0x3]
  %v650 = vld [vmem:[%s596 + $0x76] sm:$0x3]
  %v651 = vld [vmem:[%s596 + $0x78] sm:$0x3]
  %v652 = vld [vmem:[%s596 + $0x7a] sm:$0x3]
  %v653 = vld [vmem:[%s596 + $0x7e] sm:$0x3]
  %v654 = vld [vmem:[%s596 + $0x80] sm:$0x3]
  %v655 = vld [vmem:[%s596 + $0x82] sm:$0x3]
  %v656 = vld [vmem:[%s596 + $0x84] sm:$0x3]
  %v657 = vld [vmem:[%s596 + $0x86] sm:$0x3]
  %v658 = vld [vmem:[%s596 + $0x88] sm:$0x3]
  %v659 = vld [vmem:[%s596 + $0x8a] sm:$0x3]
  %v660 = vld [vmem:[%s596 + $0x8c] sm:$0x3]
  %v661 = vmax.f32 %v532, %v597
  %v662 = vmax.f32 %v533, %v598
  %v663 = vmax.f32 %v534, %v599
  %v664 = vmax.f32 %v535, %v600
  %v665 = vmax.f32 %v536, %v601
  %v666 = vmax.f32 %v537, %v602
  %v667 = vmax.f32 %v538, %v603
  %v668 = vmax.f32 %v539, %v604
  %v669 = vmax.f32 %v540, %v605
  %v670 = vmax.f32 %v541, %v606
  %v671 = vmax.f32 %v542, %v607
  %v672 = vmax.f32 %v543, %v608
  %v673 = vmax.f32 %v544, %v609
  %v674 = vmax.f32 %v545, %v610
  %v675 = vmax.f32 %v546, %v611
  %v676 = vmax.f32 %v547, %v612
  %v677 = vmax.f32 %v548, %v613
  %v678 = vmax.f32 %v549, %v614
  %v679 = vmax.f32 %v550, %v615
  %v680 = vmax.f32 %v551, %v616
  %v681 = vmax.f32 %v552, %v617
  %v682 = vmax.f32 %v553, %v618
  %v683 = vmax.f32 %v554, %v619
  %v684 = vmax.f32 %v555, %v620
  %v685 = vmax.f32 %v556, %v621
  %v686 = vmax.f32 %v557, %v622
  %v687 = vmax.f32 %v558, %v623
  %v688 = vmax.f32 %v559, %v624
  %v689 = vmax.f32 %v560, %v625
  %v690 = vmax.f32 %v561, %v626
  %v691 = vmax.f32 %v562, %v627
  %v692 = vmax.f32 %v563, %v628
  %v693 = vmax.f32 %v564, %v629
  %v694 = vmax.f32 %v565, %v630
  %v695 = vmax.f32 %v566, %v631
  %v696 = vmax.f32 %v567, %v632
  %v697 = vmax.f32 %v568, %v633
  %v698 = vmax.f32 %v569, %v634
  %v699 = vmax.f32 %v570, %v635
  %v700 = vmax.f32 %v571, %v636
  %v701 = vmax.f32 %v572, %v637
  %v702 = vmax.f32 %v573, %v638
  %v703 = vmax.f32 %v574, %v639
  %v704 = vmax.f32 %v575, %v640
  %v705 = vmax.f32 %v576, %v641
  %v706 = vmax.f32 %v577, %v642
  %v707 = vmax.f32 %v578, %v643
  %v708 = vmax.f32 %v579, %v644
  %v709 = vmax.f32 %v580, %v645
  %v710 = vmax.f32 %v581, %v646
  %v711 = vmax.f32 %v582, %v647
  %v712 = vmax.f32 %v583, %v648
  %v713 = vmax.f32 %v584, %v649
  %v714 = vmax.f32 %v585, %v650
  %v715 = vmax.f32 %v586, %v651
  %v716 = vmax.f32 %v587, %v652
  %v717 = vmax.f32 %v588, %v653
  %v718 = vmax.f32 %v589, %v654
  %v719 = vmax.f32 %v590, %v655
  %v720 = vmax.f32 %v591, %v656
  %v721 = vmax.f32 %v592, %v657
  %v722 = vmax.f32 %v593, %v658
  %v723 = vmax.f32 %v594, %v659
  %v724 = vmax.f32 %v595, %v660
  %v725 = vld [vmem:[%s2] sm:$0x3]
  %v726 = vld [vmem:[%s2 + $0x2] sm:$0x3]
  %v727 = vld [vmem:[%s2 + $0x4] sm:$0x3]
  %v728 = vld [vmem:[%s2 + $0x6] sm:$0x3]
  %v729 = vld [vmem:[%s2 + $0x8] sm:$0x3]
  %v730 = vld [vmem:[%s2 + $0xa] sm:$0x3]
  %v731 = vld [vmem:[%s2 + $0xc] sm:$0x3]
  %v732 = vld [vmem:[%s2 + $0xe] sm:$0x3]
  %v733 = vld [vmem:[%s2 + $0x12] sm:$0x3]
  %v734 = vld [vmem:[%s2 + $0x14] sm:$0x3]
  %v735 = vld [vmem:[%s2 + $0x16] sm:$0x3]
  %v736 = vld [vmem:[%s2 + $0x18] sm:$0x3]
  %v737 = vld [vmem:[%s2 + $0x1a] sm:$0x3]
  %v738 = vld [vmem:[%s2 + $0x1c] sm:$0x3]
  %v739 = vld [vmem:[%s2 + $0x1e] sm:$0x3]
  %v740 = vld [vmem:[%s2 + $0x20] sm:$0x3]
  %v741 = vld [vmem:[%s2 + $0x24] sm:$0x3]
  %v742 = vld [vmem:[%s2 + $0x26] sm:$0x3]
  %v743 = vld [vmem:[%s2 + $0x28] sm:$0x3]
  %v744 = vld [vmem:[%s2 + $0x2a] sm:$0x3]
  %v745 = vld [vmem:[%s2 + $0x2c] sm:$0x3]
  %v746 = vld [vmem:[%s2 + $0x2e] sm:$0x3]
  %v747 = vld [vmem:[%s2 + $0x30] sm:$0x3]
  %v748 = vld [vmem:[%s2 + $0x32] sm:$0x3]
  %v749 = vld [vmem:[%s2 + $0x36] sm:$0x3]
  %v750 = vld [vmem:[%s2 + $0x38] sm:$0x3]
  %v751 = vld [vmem:[%s2 + $0x3a] sm:$0x3]
  %v752 = vld [vmem:[%s2 + $0x3c] sm:$0x3]
  %v753 = vld [vmem:[%s2 + $0x3e] sm:$0x3]
  %v754 = vld [vmem:[%s2 + $0x40] sm:$0x3]
  %v755 = vld [vmem:[%s2 + $0x42] sm:$0x3]
  %v756 = vld [vmem:[%s2 + $0x44] sm:$0x3]
  %v757 = vld [vmem:[%s2 + $0x48] sm:$0x3]
  %v758 = vld [vmem:[%s2 + $0x4a] sm:$0x3]
  %v759 = vld [vmem:[%s2 + $0x4c] sm:$0x3]
  %v760 = vld [vmem:[%s2 + $0x4e] sm:$0x3]
  %v761 = vld [vmem:[%s2 + $0x50] sm:$0x3]
  %v762 = vld [vmem:[%s2 + $0x52] sm:$0x3]
  %v763 = vld [vmem:[%s2 + $0x54] sm:$0x3]
  %v764 = vld [vmem:[%s2 + $0x56] sm:$0x3]
  %v765 = vld [vmem:[%s2 + $0x5a] sm:$0x3]
  %v766 = vld [vmem:[%s2 + $0x5c] sm:$0x3]
  %v767 = vld [vmem:[%s2 + $0x5e] sm:$0x3]
  %v768 = vld [vmem:[%s2 + $0x60] sm:$0x3]
  %v769 = vld [vmem:[%s2 + $0x62] sm:$0x3]
  %v770 = vld [vmem:[%s2 + $0x64] sm:$0x3]
  %v771 = vld [vmem:[%s2 + $0x66] sm:$0x3]
  %v772 = vld [vmem:[%s2 + $0x68] sm:$0x3]
  %v773 = vld [vmem:[%s2 + $0x6c] sm:$0x3]
  %v774 = vld [vmem:[%s2 + $0x6e] sm:$0x3]
  %v775 = vld [vmem:[%s2 + $0x70] sm:$0x3]
  %v776 = vld [vmem:[%s2 + $0x72] sm:$0x3]
  %v777 = vld [vmem:[%s2 + $0x74] sm:$0x3]
  %v778 = vld [vmem:[%s2 + $0x76] sm:$0x3]
  %v779 = vld [vmem:[%s2 + $0x78] sm:$0x3]
  %v780 = vld [vmem:[%s2 + $0x7a] sm:$0x3]
  %v781 = vld [vmem:[%s2 + $0x7e] sm:$0x3]
  %v782 = vld [vmem:[%s2 + $0x80] sm:$0x3]
  %v783 = vld [vmem:[%s2 + $0x82] sm:$0x3]
  %v784 = vld [vmem:[%s2 + $0x84] sm:$0x3]
  %v785 = vld [vmem:[%s2 + $0x86] sm:$0x3]
  %v786 = vld [vmem:[%s2 + $0x88] sm:$0x3]
  %v787 = vld [vmem:[%s2 + $0x8a] sm:$0x3]
  %v788 = vld [vmem:[%s2 + $0x8c] sm:$0x3]
  %v789 = vmax.f32 %v661, %v725
  %v790 = vmax.f32 %v662, %v726
  %v791 = vmax.f32 %v663, %v727
  %v792 = vmax.f32 %v664, %v728
  %v793 = vmax.f32 %v665, %v729
  %v794 = vmax.f32 %v666, %v730
  %v795 = vmax.f32 %v667, %v731
  %v796 = vmax.f32 %v668, %v732
  %v797 = vmax.f32 %v669, %v733
  %v798 = vmax.f32 %v670, %v734
  %v799 = vmax.f32 %v671, %v735
  %v800 = vmax.f32 %v672, %v736
  %v801 = vmax.f32 %v673, %v737
  %v802 = vmax.f32 %v674, %v738
  %v803 = vmax.f32 %v675, %v739
  %v804 = vmax.f32 %v676, %v740
  %v805 = vmax.f32 %v677, %v741
  %v806 = vmax.f32 %v678, %v742
  %v807 = vmax.f32 %v679, %v743
  %v808 = vmax.f32 %v680, %v744
  %v809 = vmax.f32 %v681, %v745
  %v810 = vmax.f32 %v682, %v746
  %v811 = vmax.f32 %v683, %v747
  %v812 = vmax.f32 %v684, %v748
  %v813 = vmax.f32 %v685, %v749
  %v814 = vmax.f32 %v686, %v750
  %v815 = vmax.f32 %v687, %v751
  %v816 = vmax.f32 %v688, %v752
  %v817 = vmax.f32 %v689, %v753
  %v818 = vmax.f32 %v690, %v754
  %v819 = vmax.f32 %v691, %v755
  %v820 = vmax.f32 %v692, %v756
  %v821 = vmax.f32 %v693, %v757
  %v822 = vmax.f32 %v694, %v758
  %v823 = vmax.f32 %v695, %v759
  %v824 = vmax.f32 %v696, %v760
  %v825 = vmax.f32 %v697, %v761
  %v826 = vmax.f32 %v698, %v762
  %v827 = vmax.f32 %v699, %v763
  %v828 = vmax.f32 %v700, %v764
  %v829 = vmax.f32 %v701, %v765
  %v830 = vmax.f32 %v702, %v766
  %v831 = vmax.f32 %v703, %v767
  %v832 = vmax.f32 %v704, %v768
  %v833 = vmax.f32 %v705, %v769
  %v834 = vmax.f32 %v706, %v770
  %v835 = vmax.f32 %v707, %v771
  %v836 = vmax.f32 %v708, %v772
  %v837 = vmax.f32 %v709, %v773
  %v838 = vmax.f32 %v710, %v774
  %v839 = vmax.f32 %v711, %v775
  %v840 = vmax.f32 %v712, %v776
  %v841 = vmax.f32 %v713, %v777
  %v842 = vmax.f32 %v714, %v778
  %v843 = vmax.f32 %v715, %v779
  %v844 = vmax.f32 %v716, %v780
  %v845 = vmax.f32 %v717, %v781
  %v846 = vmax.f32 %v718, %v782
  %v847 = vmax.f32 %v719, %v783
  %v848 = vmax.f32 %v720, %v784
  %v849 = vmax.f32 %v721, %v785
  %v850 = vmax.f32 %v722, %v786
  %v851 = vmax.f32 %v723, %v787
  %v852 = vmax.f32 %v724, %v788
  %s853 = scalar_lea.vmem %s2, 2
  %v854 = vld [vmem:[%s853] sm:$0x3]
  %v855 = vld [vmem:[%s853 + $0x2] sm:$0x3]
  %v856 = vld [vmem:[%s853 + $0x4] sm:$0x3]
  %v857 = vld [vmem:[%s853 + $0x6] sm:$0x3]
  %v858 = vld [vmem:[%s853 + $0x8] sm:$0x3]
  %v859 = vld [vmem:[%s853 + $0xa] sm:$0x3]
  %v860 = vld [vmem:[%s853 + $0xc] sm:$0x3]
  %v861 = vld [vmem:[%s853 + $0xe] sm:$0x3]
  %v862 = vld [vmem:[%s853 + $0x12] sm:$0x3]
  %v863 = vld [vmem:[%s853 + $0x14] sm:$0x3]
  %v864 = vld [vmem:[%s853 + $0x16] sm:$0x3]
  %v865 = vld [vmem:[%s853 + $0x18] sm:$0x3]
  %v866 = vld [vmem:[%s853 + $0x1a] sm:$0x3]
  %v867 = vld [vmem:[%s853 + $0x1c] sm:$0x3]
  %v868 = vld [vmem:[%s853 + $0x1e] sm:$0x3]
  %v869 = vld [vmem:[%s853 + $0x20] sm:$0x3]
  %v870 = vld [vmem:[%s853 + $0x24] sm:$0x3]
  %v871 = vld [vmem:[%s853 + $0x26] sm:$0x3]
  %v872 = vld [vmem:[%s853 + $0x28] sm:$0x3]
  %v873 = vld [vmem:[%s853 + $0x2a] sm:$0x3]
  %v874 = vld [vmem:[%s853 + $0x2c] sm:$0x3]
  %v875 = vld [vmem:[%s853 + $0x2e] sm:$0x3]
  %v876 = vld [vmem:[%s853 + $0x30] sm:$0x3]
  %v877 = vld [vmem:[%s853 + $0x32] sm:$0x3]
  %v878 = vld [vmem:[%s853 + $0x36] sm:$0x3]
  %v879 = vld [vmem:[%s853 + $0x38] sm:$0x3]
  %v880 = vld [vmem:[%s853 + $0x3a] sm:$0x3]
  %v881 = vld [vmem:[%s853 + $0x3c] sm:$0x3]
  %v882 = vld [vmem:[%s853 + $0x3e] sm:$0x3]
  %v883 = vld [vmem:[%s853 + $0x40] sm:$0x3]
  %v884 = vld [vmem:[%s853 + $0x42] sm:$0x3]
  %v885 = vld [vmem:[%s853 + $0x44] sm:$0x3]
  %v886 = vld [vmem:[%s853 + $0x48] sm:$0x3]
  %v887 = vld [vmem:[%s853 + $0x4a] sm:$0x3]
  %v888 = vld [vmem:[%s853 + $0x4c] sm:$0x3]
  %v889 = vld [vmem:[%s853 + $0x4e] sm:$0x3]
  %v890 = vld [vmem:[%s853 + $0x50] sm:$0x3]
  %v891 = vld [vmem:[%s853 + $0x52] sm:$0x3]
  %v892 = vld [vmem:[%s853 + $0x54] sm:$0x3]
  %v893 = vld [vmem:[%s853 + $0x56] sm:$0x3]
  %v894 = vld [vmem:[%s853 + $0x5a] sm:$0x3]
  %v895 = vld [vmem:[%s853 + $0x5c] sm:$0x3]
  %v896 = vld [vmem:[%s853 + $0x5e] sm:$0x3]
  %v897 = vld [vmem:[%s853 + $0x60] sm:$0x3]
  %v898 = vld [vmem:[%s853 + $0x62] sm:$0x3]
  %v899 = vld [vmem:[%s853 + $0x64] sm:$0x3]
  %v900 = vld [vmem:[%s853 + $0x66] sm:$0x3]
  %v901 = vld [vmem:[%s853 + $0x68] sm:$0x3]
  %v902 = vld [vmem:[%s853 + $0x6c] sm:$0x3]
  %v903 = vld [vmem:[%s853 + $0x6e] sm:$0x3]
  %v904 = vld [vmem:[%s853 + $0x70] sm:$0x3]
  %v905 = vld [vmem:[%s853 + $0x72] sm:$0x3]
  %v906 = vld [vmem:[%s853 + $0x74] sm:$0x3]
  %v907 = vld [vmem:[%s853 + $0x76] sm:$0x3]
  %v908 = vld [vmem:[%s853 + $0x78] sm:$0x3]
  %v909 = vld [vmem:[%s853 + $0x7a] sm:$0x3]
  %v910 = vld [vmem:[%s853 + $0x7e] sm:$0x3]
  %v911 = vld [vmem:[%s853 + $0x80] sm:$0x3]
  %v912 = vld [vmem:[%s853 + $0x82] sm:$0x3]
  %v913 = vld [vmem:[%s853 + $0x84] sm:$0x3]
  %v914 = vld [vmem:[%s853 + $0x86] sm:$0x3]
  %v915 = vld [vmem:[%s853 + $0x88] sm:$0x3]
  %v916 = vld [vmem:[%s853 + $0x8a] sm:$0x3]
  %v917 = vld [vmem:[%s853 + $0x8c] sm:$0x3]
  %v918 = vmax.f32 %v789, %v854
  %v919 = vmax.f32 %v790, %v855
  %v920 = vmax.f32 %v791, %v856
  %v921 = vmax.f32 %v792, %v857
  %v922 = vmax.f32 %v793, %v858
  %v923 = vmax.f32 %v794, %v859
  %v924 = vmax.f32 %v795, %v860
  %v925 = vmax.f32 %v796, %v861
  %v926 = vmax.f32 %v797, %v862
  %v927 = vmax.f32 %v798, %v863
  %v928 = vmax.f32 %v799, %v864
  %v929 = vmax.f32 %v800, %v865
  %v930 = vmax.f32 %v801, %v866
  %v931 = vmax.f32 %v802, %v867
  %v932 = vmax.f32 %v803, %v868
  %v933 = vmax.f32 %v804, %v869
  %v934 = vmax.f32 %v805, %v870
  %v935 = vmax.f32 %v806, %v871
  %v936 = vmax.f32 %v807, %v872
  %v937 = vmax.f32 %v808, %v873
  %v938 = vmax.f32 %v809, %v874
  %v939 = vmax.f32 %v810, %v875
  %v940 = vmax.f32 %v811, %v876
  %v941 = vmax.f32 %v812, %v877
  %v942 = vmax.f32 %v813, %v878
  %v943 = vmax.f32 %v814, %v879
  %v944 = vmax.f32 %v815, %v880
  %v945 = vmax.f32 %v816, %v881
  %v946 = vmax.f32 %v817, %v882
  %v947 = vmax.f32 %v818, %v883
  %v948 = vmax.f32 %v819, %v884
  %v949 = vmax.f32 %v820, %v885
  %v950 = vmax.f32 %v821, %v886
  %v951 = vmax.f32 %v822, %v887
  %v952 = vmax.f32 %v823, %v888
  %v953 = vmax.f32 %v824, %v889
  %v954 = vmax.f32 %v825, %v890
  %v955 = vmax.f32 %v826, %v891
  %v956 = vmax.f32 %v827, %v892
  %v957 = vmax.f32 %v828, %v893
  %v958 = vmax.f32 %v829, %v894
  %v959 = vmax.f32 %v830, %v895
  %v960 = vmax.f32 %v831, %v896
  %v961 = vmax.f32 %v832, %v897
  %v962 = vmax.f32 %v833, %v898
  %v963 = vmax.f32 %v834, %v899
  %v964 = vmax.f32 %v835, %v900
  %v965 = vmax.f32 %v836, %v901
  %v966 = vmax.f32 %v837, %v902
  %v967 = vmax.f32 %v838, %v903
  %v968 = vmax.f32 %v839, %v904
  %v969 = vmax.f32 %v840, %v905
  %v970 = vmax.f32 %v841, %v906
  %v971 = vmax.f32 %v842, %v907
  %v972 = vmax.f32 %v843, %v908
  %v973 = vmax.f32 %v844, %v909
  %v974 = vmax.f32 %v845, %v910
  %v975 = vmax.f32 %v846, %v911
  %v976 = vmax.f32 %v847, %v912
  %v977 = vmax.f32 %v848, %v913
  %v978 = vmax.f32 %v849, %v914
  %v979 = vmax.f32 %v850, %v915
  %v980 = vmax.f32 %v851, %v916
  %v981 = vmax.f32 %v852, %v917
  %v982 = vld [vmem:[%s3] sm:$0x3]
  %v983 = vld [vmem:[%s3 + $0x2] sm:$0x3]
  %v984 = vld [vmem:[%s3 + $0x4] sm:$0x3]
  %v985 = vld [vmem:[%s3 + $0x6] sm:$0x3]
  %v986 = vld [vmem:[%s3 + $0x8] sm:$0x3]
  %v987 = vld [vmem:[%s3 + $0xa] sm:$0x3]
  %v988 = vld [vmem:[%s3 + $0xc] sm:$0x3]
  %v989 = vld [vmem:[%s3 + $0xe] sm:$0x3]
  %v990 = vld [vmem:[%s3 + $0x12] sm:$0x3]
  %v991 = vld [vmem:[%s3 + $0x14] sm:$0x3]
  %v992 = vld [vmem:[%s3 + $0x16] sm:$0x3]
  %v993 = vld [vmem:[%s3 + $0x18] sm:$0x3]
  %v994 = vld [vmem:[%s3 + $0x1a] sm:$0x3]
  %v995 = vld [vmem:[%s3 + $0x1c] sm:$0x3]
  %v996 = vld [vmem:[%s3 + $0x1e] sm:$0x3]
  %v997 = vld [vmem:[%s3 + $0x20] sm:$0x3]
  %v998 = vld [vmem:[%s3 + $0x24] sm:$0x3]
  %v999 = vld [vmem:[%s3 + $0x26] sm:$0x3]
  %v1000 = vld [vmem:[%s3 + $0x28] sm:$0x3]
  %v1001 = vld [vmem:[%s3 + $0x2a] sm:$0x3]
  %v1002 = vld [vmem:[%s3 + $0x2c] sm:$0x3]
  %v1003 = vld [vmem:[%s3 + $0x2e] sm:$0x3]
  %v1004 = vld [vmem:[%s3 + $0x30] sm:$0x3]
  %v1005 = vld [vmem:[%s3 + $0x32] sm:$0x3]
  %v1006 = vld [vmem:[%s3 + $0x36] sm:$0x3]
  %v1007 = vld [vmem:[%s3 + $0x38] sm:$0x3]
  %v1008 = vld [vmem:[%s3 + $0x3a] sm:$0x3]
  %v1009 = vld [vmem:[%s3 + $0x3c] sm:$0x3]
  %v1010 = vld [vmem:[%s3 + $0x3e] sm:$0x3]
  %v1011 = vld [vmem:[%s3 + $0x40] sm:$0x3]
  %v1012 = vld [vmem:[%s3 + $0x42] sm:$0x3]
  %v1013 = vld [vmem:[%s3 + $0x44] sm:$0x3]
  %v1014 = vld [vmem:[%s3 + $0x48] sm:$0x3]
  %v1015 = vld [vmem:[%s3 + $0x4a] sm:$0x3]
  %v1016 = vld [vmem:[%s3 + $0x4c] sm:$0x3]
  %v1017 = vld [vmem:[%s3 + $0x4e] sm:$0x3]
  %v1018 = vld [vmem:[%s3 + $0x50] sm:$0x3]
  %v1019 = vld [vmem:[%s3 + $0x52] sm:$0x3]
  %v1020 = vld [vmem:[%s3 + $0x54] sm:$0x3]
  %v1021 = vld [vmem:[%s3 + $0x56] sm:$0x3]
  %v1022 = vld [vmem:[%s3 + $0x5a] sm:$0x3]
  %v1023 = vld [vmem:[%s3 + $0x5c] sm:$0x3]
  %v1024 = vld [vmem:[%s3 + $0x5e] sm:$0x3]
  %v1025 = vld [vmem:[%s3 + $0x60] sm:$0x3]
  %v1026 = vld [vmem:[%s3 + $0x62] sm:$0x3]
  %v1027 = vld [vmem:[%s3 + $0x64] sm:$0x3]
  %v1028 = vld [vmem:[%s3 + $0x66] sm:$0x3]
  %v1029 = vld [vmem:[%s3 + $0x68] sm:$0x3]
  %v1030 = vld [vmem:[%s3 + $0x6c] sm:$0x3]
  %v1031 = vld [vmem:[%s3 + $0x6e] sm:$0x3]
  %v1032 = vld [vmem:[%s3 + $0x70] sm:$0x3]
  %v1033 = vld [vmem:[%s3 + $0x72] sm:$0x3]
  %v1034 = vld [vmem:[%s3 + $0x74] sm:$0x3]
  %v1035 = vld [vmem:[%s3 + $0x76] sm:$0x3]
  %v1036 = vld [vmem:[%s3 + $0x78] sm:$0x3]
  %v1037 = vld [vmem:[%s3 + $0x7a] sm:$0x3]
  %v1038 = vld [vmem:[%s3 + $0x7e] sm:$0x3]
  %v1039 = vld [vmem:[%s3 + $0x80] sm:$0x3]
  %v1040 = vld [vmem:[%s3 + $0x82] sm:$0x3]
  %v1041 = vld [vmem:[%s3 + $0x84] sm:$0x3]
  %v1042 = vld [vmem:[%s3 + $0x86] sm:$0x3]
  %v1043 = vld [vmem:[%s3 + $0x88] sm:$0x3]
  %v1044 = vld [vmem:[%s3 + $0x8a] sm:$0x3]
  %v1045 = vld [vmem:[%s3 + $0x8c] sm:$0x3]
  %v1046 = vmax.f32 %v918, %v982
  %v1047 = vmax.f32 %v919, %v983
  %v1048 = vmax.f32 %v920, %v984
  %v1049 = vmax.f32 %v921, %v985
  %v1050 = vmax.f32 %v922, %v986
  %v1051 = vmax.f32 %v923, %v987
  %v1052 = vmax.f32 %v924, %v988
  %v1053 = vmax.f32 %v925, %v989
  %v1054 = vmax.f32 %v926, %v990
  %v1055 = vmax.f32 %v927, %v991
  %v1056 = vmax.f32 %v928, %v992
  %v1057 = vmax.f32 %v929, %v993
  %v1058 = vmax.f32 %v930, %v994
  %v1059 = vmax.f32 %v931, %v995
  %v1060 = vmax.f32 %v932, %v996
  %v1061 = vmax.f32 %v933, %v997
  %v1062 = vmax.f32 %v934, %v998
  %v1063 = vmax.f32 %v935, %v999
  %v1064 = vmax.f32 %v936, %v1000
  %v1065 = vmax.f32 %v937, %v1001
  %v1066 = vmax.f32 %v938, %v1002
  %v1067 = vmax.f32 %v939, %v1003
  %v1068 = vmax.f32 %v940, %v1004
  %v1069 = vmax.f32 %v941, %v1005
  %v1070 = vmax.f32 %v942, %v1006
  %v1071 = vmax.f32 %v943, %v1007
  %v1072 = vmax.f32 %v944, %v1008
  %v1073 = vmax.f32 %v945, %v1009
  %v1074 = vmax.f32 %v946, %v1010
  %v1075 = vmax.f32 %v947, %v1011
  %v1076 = vmax.f32 %v948, %v1012
  %v1077 = vmax.f32 %v949, %v1013
  %v1078 = vmax.f32 %v950, %v1014
  %v1079 = vmax.f32 %v951, %v1015
  %v1080 = vmax.f32 %v952, %v1016
  %v1081 = vmax.f32 %v953, %v1017
  %v1082 = vmax.f32 %v954, %v1018
  %v1083 = vmax.f32 %v955, %v1019
  %v1084 = vmax.f32 %v956, %v1020
  %v1085 = vmax.f32 %v957, %v1021
  %v1086 = vmax.f32 %v958, %v1022
  %v1087 = vmax.f32 %v959, %v1023
  %v1088 = vmax.f32 %v960, %v1024
  %v1089 = vmax.f32 %v961, %v1025
  %v1090 = vmax.f32 %v962, %v1026
  %v1091 = vmax.f32 %v963, %v1027
  %v1092 = vmax.f32 %v964, %v1028
  %v1093 = vmax.f32 %v965, %v1029
  %v1094 = vmax.f32 %v966, %v1030
  %v1095 = vmax.f32 %v967, %v1031
  %v1096 = vmax.f32 %v968, %v1032
  %v1097 = vmax.f32 %v969, %v1033
  %v1098 = vmax.f32 %v970, %v1034
  %v1099 = vmax.f32 %v971, %v1035
  %v1100 = vmax.f32 %v972, %v1036
  %v1101 = vmax.f32 %v973, %v1037
  %v1102 = vmax.f32 %v974, %v1038
  %v1103 = vmax.f32 %v975, %v1039
  %v1104 = vmax.f32 %v976, %v1040
  %v1105 = vmax.f32 %v977, %v1041
  %v1106 = vmax.f32 %v978, %v1042
  %v1107 = vmax.f32 %v979, %v1043
  %v1108 = vmax.f32 %v980, %v1044
  %v1109 = vmax.f32 %v981, %v1045
  %vm1110 = vcmask 517120
  %1111 = vst.msk [vmem:[%s4] sm:$0x3] %vm1110, %v1046
  %1112 = vst.msk [vmem:[%s4 + $0x2] sm:$0x3] %vm1110, %v1047
  %1113 = vst.msk [vmem:[%s4 + $0x4] sm:$0x3] %vm1110, %v1048
  %1114 = vst.msk [vmem:[%s4 + $0x6] sm:$0x3] %vm1110, %v1049
  %1115 = vst.msk [vmem:[%s4 + $0x8] sm:$0x3] %vm1110, %v1050
  %1116 = vst.msk [vmem:[%s4 + $0xa] sm:$0x3] %vm1110, %v1051
  %1117 = vst.msk [vmem:[%s4 + $0xc] sm:$0x3] %vm1110, %v1052
  %1118 = vst.msk [vmem:[%s4 + $0xe] sm:$0x3] %vm1110, %v1053
  %1119 = vst.msk [vmem:[%s4 + $0x10] sm:$0x3] %vm1110, %v1054
  %1120 = vst.msk [vmem:[%s4 + $0x12] sm:$0x3] %vm1110, %v1055
  %1121 = vst.msk [vmem:[%s4 + $0x14] sm:$0x3] %vm1110, %v1056
  %1122 = vst.msk [vmem:[%s4 + $0x16] sm:$0x3] %vm1110, %v1057
  %1123 = vst.msk [vmem:[%s4 + $0x18] sm:$0x3] %vm1110, %v1058
  %1124 = vst.msk [vmem:[%s4 + $0x1a] sm:$0x3] %vm1110, %v1059
  %1125 = vst.msk [vmem:[%s4 + $0x1c] sm:$0x3] %vm1110, %v1060
  %1126 = vst.msk [vmem:[%s4 + $0x1e] sm:$0x3] %vm1110, %v1061
  %1127 = vst.msk [vmem:[%s4 + $0x20] sm:$0x3] %vm1110, %v1062
  %1128 = vst.msk [vmem:[%s4 + $0x22] sm:$0x3] %vm1110, %v1063
  %1129 = vst.msk [vmem:[%s4 + $0x24] sm:$0x3] %vm1110, %v1064
  %1130 = vst.msk [vmem:[%s4 + $0x26] sm:$0x3] %vm1110, %v1065
  %1131 = vst.msk [vmem:[%s4 + $0x28] sm:$0x3] %vm1110, %v1066
  %1132 = vst.msk [vmem:[%s4 + $0x2a] sm:$0x3] %vm1110, %v1067
  %1133 = vst.msk [vmem:[%s4 + $0x2c] sm:$0x3] %vm1110, %v1068
  %1134 = vst.msk [vmem:[%s4 + $0x2e] sm:$0x3] %vm1110, %v1069
  %1135 = vst.msk [vmem:[%s4 + $0x30] sm:$0x3] %vm1110, %v1070
  %1136 = vst.msk [vmem:[%s4 + $0x32] sm:$0x3] %vm1110, %v1071
  %1137 = vst.msk [vmem:[%s4 + $0x34] sm:$0x3] %vm1110, %v1072
  %1138 = vst.msk [vmem:[%s4 + $0x36] sm:$0x3] %vm1110, %v1073
  %1139 = vst.msk [vmem:[%s4 + $0x38] sm:$0x3] %vm1110, %v1074
  %1140 = vst.msk [vmem:[%s4 + $0x3a] sm:$0x3] %vm1110, %v1075
  %1141 = vst.msk [vmem:[%s4 + $0x3c] sm:$0x3] %vm1110, %v1076
  %1142 = vst.msk [vmem:[%s4 + $0x3e] sm:$0x3] %vm1110, %v1077
  %1143 = vst.msk [vmem:[%s4 + $0x40] sm:$0x3] %vm1110, %v1078
  %1144 = vst.msk [vmem:[%s4 + $0x42] sm:$0x3] %vm1110, %v1079
  %1145 = vst.msk [vmem:[%s4 + $0x44] sm:$0x3] %vm1110, %v1080
  %1146 = vst.msk [vmem:[%s4 + $0x46] sm:$0x3] %vm1110, %v1081
  %1147 = vst.msk [vmem:[%s4 + $0x48] sm:$0x3] %vm1110, %v1082
  %1148 = vst.msk [vmem:[%s4 + $0x4a] sm:$0x3] %vm1110, %v1083
  %1149 = vst.msk [vmem:[%s4 + $0x4c] sm:$0x3] %vm1110, %v1084
  %1150 = vst.msk [vmem:[%s4 + $0x4e] sm:$0x3] %vm1110, %v1085
  %1151 = vst.msk [vmem:[%s4 + $0x50] sm:$0x3] %vm1110, %v1086
  %1152 = vst.msk [vmem:[%s4 + $0x52] sm:$0x3] %vm1110, %v1087
  %1153 = vst.msk [vmem:[%s4 + $0x54] sm:$0x3] %vm1110, %v1088
  %1154 = vst.msk [vmem:[%s4 + $0x56] sm:$0x3] %vm1110, %v1089
  %1155 = vst.msk [vmem:[%s4 + $0x58] sm:$0x3] %vm1110, %v1090
  %1156 = vst.msk [vmem:[%s4 + $0x5a] sm:$0x3] %vm1110, %v1091
  %1157 = vst.msk [vmem:[%s4 + $0x5c] sm:$0x3] %vm1110, %v1092
  %1158 = vst.msk [vmem:[%s4 + $0x5e] sm:$0x3] %vm1110, %v1093
  %1159 = vst.msk [vmem:[%s4 + $0x60] sm:$0x3] %vm1110, %v1094
  %1160 = vst.msk [vmem:[%s4 + $0x62] sm:$0x3] %vm1110, %v1095
  %1161 = vst.msk [vmem:[%s4 + $0x64] sm:$0x3] %vm1110, %v1096
  %1162 = vst.msk [vmem:[%s4 + $0x66] sm:$0x3] %vm1110, %v1097
  %1163 = vst.msk [vmem:[%s4 + $0x68] sm:$0x3] %vm1110, %v1098
  %1164 = vst.msk [vmem:[%s4 + $0x6a] sm:$0x3] %vm1110, %v1099
  %1165 = vst.msk [vmem:[%s4 + $0x6c] sm:$0x3] %vm1110, %v1100
  %1166 = vst.msk [vmem:[%s4 + $0x6e] sm:$0x3] %vm1110, %v1101
  %1167 = vst.msk [vmem:[%s4 + $0x70] sm:$0x3] %vm1110, %v1102
  %1168 = vst.msk [vmem:[%s4 + $0x72] sm:$0x3] %vm1110, %v1103
  %1169 = vst.msk [vmem:[%s4 + $0x74] sm:$0x3] %vm1110, %v1104
  %1170 = vst.msk [vmem:[%s4 + $0x76] sm:$0x3] %vm1110, %v1105
  %1171 = vst.msk [vmem:[%s4 + $0x78] sm:$0x3] %vm1110, %v1106
  %1172 = vst.msk [vmem:[%s4 + $0x7a] sm:$0x3] %vm1110, %v1107
  %1173 = vst.msk [vmem:[%s4 + $0x7c] sm:$0x3] %vm1110, %v1108
  %1174 = vst.msk [vmem:[%s4 + $0x7e] sm:$0x3] %vm1110, %v1109
  // Predicated region
  $region18: #{resnet_comp_forward.11} parent=0 // pred_check
    _
  $region19: #{resnet_comp_forward.11} parent=0 // pred_check_branch
    %1176 = sbr.rel (0) target = $region21
  $region20: #{resnet_comp_forward.11} parent=0 // pred_region
    _
  $region21: #{resnet_comp_forward.11} parent=0 // pred_fallthru
    _
  // Predicated region
  $region22: #{resnet_comp_forward.11} parent=0 // pred_check
    _
  $region23: #{resnet_comp_forward.11} parent=0 // pred_check_branch
    %1178 = sbr.rel (0) target = $region25
  $region24: #{resnet_comp_forward.11} parent=0 // pred_region
    _
  $region25: #{resnet_comp_forward.11} parent=0 // pred_fallthru
    _

// kernel: resnet_comp_forward.12
$region0: #{resnet_comp_forward.12}
  #allocation0 [shape = 'u32[]', space=smem, size = 0x4, offset = 0x4, fixed_abs, tag = 'smem constant byte address 0x4 - core index']
  #allocation1 [shape = 'u32[144,128]{1,0:T(1,128)}', space=vmem, size = 0x12000, scoped, tag = 'internal scratch']
  %s0 = inlined_call_operand.vmem [shape: bf16[128,576], index: 0, kind: input, shape index: {}]
  %s1 = inlined_call_operand.vmem [shape: bf16[576,64], index: 1, kind: input, shape index: {}]
  %s2 = inlined_call_operand.vmem [shape: f32[1,64], index: 2, kind: input, shape index: {}]
  %s3 = inlined_call_operand.vmem [shape: f32[1,64], index: 3, kind: input, shape index: {}]
  %s4 = inlined_call_operand.vmem [shape: f32[128,64], index: 4, kind: output, shape index: {}]
  %s5 = sld [smem:[#allocation0]]
  $region26: #{resnet_comp_forward.12} parent=0
    _
  %s7 = ssub.s32 1, %s5
  %s8 = scalar_select 0, %s7, %s5
  // Predicated region
  $region2: #{resnet_comp_forward.12} parent=0 // pred_check
    _
  $region3: #{resnet_comp_forward.12} parent=0 // pred_check_branch
    %10 = sbr.rel (0) target = $region5
  $region4: #{resnet_comp_forward.12} parent=0 // pred_region
    _
  $region5: #{resnet_comp_forward.12} parent=0 // pred_fallthru
    _
  // Predicated region
  $region6: #{resnet_comp_forward.12} parent=0 // pred_check
    _
  $region7: #{resnet_comp_forward.12} parent=0 // pred_check_branch
    %12 = sbr.rel (0) target = $region9
  $region8: #{resnet_comp_forward.12} parent=0 // pred_region
    _
  $region9: #{resnet_comp_forward.12} parent=0 // pred_fallthru
    _
  // Predicated region
  $region10: #{resnet_comp_forward.12} parent=0 // pred_check
    _
  $region11: #{resnet_comp_forward.12} parent=0 // pred_check_branch
    %14 = sbr.rel (0) target = $region13
  $region12: #{resnet_comp_forward.12} parent=0 // pred_region
    _
  $region13: #{resnet_comp_forward.12} parent=0 // pred_fallthru
    _
  // Predicated region
  $region14: #{resnet_comp_forward.12} parent=0 // pred_check
    _
  $region15: #{resnet_comp_forward.12} parent=0 // pred_check_branch
    %16 = sbr.rel (0) target = $region17
  $region16: #{resnet_comp_forward.12} parent=0 // pred_region
    _
  $region17: #{resnet_comp_forward.12} parent=0 // pred_fallthru
    _
  %v18 = vld [vmem:[%s0] sm:$0xff]
  %v19 = vld [vmem:[%s0 + $0x8] sm:$0xff]
  %v20 = vld [vmem:[%s0 + $0x10] sm:$0xf]
  %v21 = vld [vmem:[%s0 + $0x14] sm:$0xff]
  %v22 = vld [vmem:[%s0 + $0x1c] sm:$0xff]
  %v23 = vld [vmem:[%s0 + $0x24] sm:$0xf]
  %v24 = vld [vmem:[%s0 + $0x28] sm:$0xff]
  %v25 = vld [vmem:[%s0 + $0x30] sm:$0xff]
  %v26 = vld [vmem:[%s0 + $0x38] sm:$0xf]
  %v27 = vld [vmem:[%s0 + $0x3c] sm:$0xff]
  %v28 = vld [vmem:[%s0 + $0x44] sm:$0xff]
  %v29 = vld [vmem:[%s0 + $0x4c] sm:$0xf]
  %v30 = vld [vmem:[%s0 + $0x50] sm:$0xff]
  %v31 = vld [vmem:[%s0 + $0x58] sm:$0xff]
  %v32 = vld [vmem:[%s0 + $0x60] sm:$0xf]
  %v33 = vld [vmem:[%s0 + $0x64] sm:$0xff]
  %v34 = vld [vmem:[%s0 + $0x6c] sm:$0xff]
  %v35 = vld [vmem:[%s0 + $0x74] sm:$0xf]
  %v36 = vld [vmem:[%s0 + $0x78] sm:$0xff]
  %v37 = vld [vmem:[%s0 + $0x80] sm:$0xff]
  %v38 = vld [vmem:[%s0 + $0x88] sm:$0xf]
  %v39 = vld [vmem:[%s0 + $0x8c] sm:$0xff]
  %v40 = vld [vmem:[%s0 + $0x94] sm:$0xff]
  %v41 = vld [vmem:[%s0 + $0x9c] sm:$0xf]
  %v42 = vld [vmem:[%s0 + $0xa0] sm:$0xff]
  %v43 = vld [vmem:[%s0 + $0xa8] sm:$0xff]
  %v44 = vld [vmem:[%s0 + $0xb0] sm:$0xf]
  %v45 = vld [vmem:[%s0 + $0xb4] sm:$0xff]
  %v46 = vld [vmem:[%s0 + $0xbc] sm:$0xff]
  %v47 = vld [vmem:[%s0 + $0xc4] sm:$0xf]
  %v48 = vld [vmem:[%s0 + $0xc8] sm:$0xff]
  %v49 = vld [vmem:[%s0 + $0xd0] sm:$0xff]
  %v50 = vld [vmem:[%s0 + $0xd8] sm:$0xf]
  %v51 = vld [vmem:[%s0 + $0xdc] sm:$0xff]
  %v52 = vld [vmem:[%s0 + $0xe4] sm:$0xff]
  %v53 = vld [vmem:[%s0 + $0xec] sm:$0xf]
  %v54 = vld [vmem:[%s0 + $0xf0] sm:$0xff]
  %v55 = vld [vmem:[%s0 + $0xf8] sm:$0xff]
  %v56 = vld [vmem:[%s0 + $0x100] sm:$0xf]
  %v57 = vld [vmem:[%s0 + $0x104] sm:$0xff]
  %v58 = vld [vmem:[%s0 + $0x10c] sm:$0xff]
  %v59 = vld [vmem:[%s0 + $0x114] sm:$0xf]
  %v60 = vld [vmem:[%s0 + $0x118] sm:$0xff]
  %v61 = vld [vmem:[%s0 + $0x120] sm:$0xff]
  %v62 = vld [vmem:[%s0 + $0x128] sm:$0xf]
  %v63 = vld [vmem:[%s0 + $0x12c] sm:$0xff]
  %v64 = vld [vmem:[%s0 + $0x134] sm:$0xff]
  %v65 = vld [vmem:[%s0 + $0x13c] sm:$0xf]
  %v66 = vld [vmem:[%s1] sm:$0xf]
  %v67 = vld [vmem:[%s1 + $0x4] sm:$0xf]
  %v68 = vld [vmem:[%s1 + $0x8] sm:$0xf]
  %v69 = vld [vmem:[%s1 + $0xc] sm:$0xf]
  %v70 = vld [vmem:[%s1 + $0x10] sm:$0xf]
  %v71 = vld [vmem:[%s1 + $0x14] sm:$0xf]
  %v72 = vld [vmem:[%s1 + $0x18] sm:$0xf]
  %v73 = vld [vmem:[%s1 + $0x1c] sm:$0xf]
  %v74 = vld [vmem:[%s1 + $0x20] sm:$0xf]
  %v75 = vld [vmem:[%s1 + $0x24] sm:$0xf]
  %v76 = vld [vmem:[%s1 + $0x28] sm:$0xf]
  %v77 = vld [vmem:[%s1 + $0x2c] sm:$0xf]
  %v78 = vld [vmem:[%s1 + $0x30] sm:$0xf]
  %v79 = vld [vmem:[%s1 + $0x34] sm:$0xf]
  %v80 = vld [vmem:[%s1 + $0x38] sm:$0xf]
  %v81 = vld [vmem:[%s1 + $0x3c] sm:$0xf]
  %v82 = vld [vmem:[%s1 + $0x40] sm:$0xf]
  %v83 = vld [vmem:[%s1 + $0x44] sm:$0xf]
  %v84 = vld [vmem:[%s1 + $0x48] sm:$0xf]
  %v85 = vld [vmem:[%s1 + $0x4c] sm:$0xf]
  %v86 = vld [vmem:[%s1 + $0x50] sm:$0xf]
  %v87 = vld [vmem:[%s1 + $0x54] sm:$0xf]
  %v88 = vld [vmem:[%s1 + $0x58] sm:$0xf]
  %v89 = vld [vmem:[%s1 + $0x5c] sm:$0xf]
  %v90 = vld [vmem:[%s1 + $0x60] sm:$0xf]
  %v91 = vld [vmem:[%s1 + $0x64] sm:$0xf]
  %v92 = vld [vmem:[%s1 + $0x68] sm:$0xf]
  %v93 = vld [vmem:[%s1 + $0x6c] sm:$0xf]
  %v94 = vld [vmem:[%s1 + $0x70] sm:$0xf]
  %v95 = vld [vmem:[%s1 + $0x74] sm:$0xf]
  %v96 = vld [vmem:[%s1 + $0x78] sm:$0xf]
  %v97 = vld [vmem:[%s1 + $0x7c] sm:$0xf]
  %v98 = vld [vmem:[%s1 + $0x80] sm:$0xf]
  %v99 = vld [vmem:[%s1 + $0x84] sm:$0xf]
  %v100 = vld [vmem:[%s1 + $0x88] sm:$0xf]
  %v101 = vld [vmem:[%s1 + $0x8c] sm:$0xf]
  %v102 = vld [vmem:[%s1 + $0x90] sm:$0xf]
  %v103 = vld [vmem:[%s1 + $0x94] sm:$0xf]
  %v104 = vld [vmem:[%s1 + $0x98] sm:$0xf]
  %v105 = vld [vmem:[%s1 + $0x9c] sm:$0xf]
  %v106 = vld [vmem:[%s1 + $0xa0] sm:$0xf]
  %v107 = vld [vmem:[%s1 + $0xa4] sm:$0xf]
  %v108 = vld [vmem:[%s1 + $0xa8] sm:$0xf]
  %v109 = vld [vmem:[%s1 + $0xac] sm:$0xf]
  %v110 = vld [vmem:[%s1 + $0xb0] sm:$0xf]
  %v111 = vld [vmem:[%s1 + $0xb4] sm:$0xf]
  %v112 = vld [vmem:[%s1 + $0xb8] sm:$0xf]
  %v113 = vld [vmem:[%s1 + $0xbc] sm:$0xf]
  %v114 = vld [vmem:[%s1 + $0xc0] sm:$0xf]
  %v115 = vld [vmem:[%s1 + $0xc4] sm:$0xf]
  %v116 = vld [vmem:[%s1 + $0xc8] sm:$0xf]
  %v117 = vld [vmem:[%s1 + $0xcc] sm:$0xf]
  %v118 = vld [vmem:[%s1 + $0xd0] sm:$0xf]
  %v119 = vld [vmem:[%s1 + $0xd4] sm:$0xf]
  %v120 = vld [vmem:[%s1 + $0xd8] sm:$0xf]
  %v121 = vld [vmem:[%s1 + $0xdc] sm:$0xf]
  %v122 = vld [vmem:[%s1 + $0xe0] sm:$0xf]
  %v123 = vld [vmem:[%s1 + $0xe4] sm:$0xf]
  %v124 = vld [vmem:[%s1 + $0xe8] sm:$0xf]
  %v125 = vld [vmem:[%s1 + $0xec] sm:$0xf]
  %v126 = vld [vmem:[%s1 + $0xf0] sm:$0xf]
  %v127 = vld [vmem:[%s1 + $0xf4] sm:$0xf]
  %v128 = vld [vmem:[%s1 + $0xf8] sm:$0xf]
  %v129 = vld [vmem:[%s1 + $0xfc] sm:$0xf]
  %v130 = vld [vmem:[%s1 + $0x100] sm:$0xf]
  %v131 = vld [vmem:[%s1 + $0x104] sm:$0xf]
  %v132 = vld [vmem:[%s1 + $0x108] sm:$0xf]
  %v133 = vld [vmem:[%s1 + $0x10c] sm:$0xf]
  %v134 = vld [vmem:[%s1 + $0x110] sm:$0xf]
  %v135 = vld [vmem:[%s1 + $0x114] sm:$0xf]
  %v136 = vld [vmem:[%s1 + $0x118] sm:$0xf]
  %v137 = vld [vmem:[%s1 + $0x11c] sm:$0xf]
  %v186 = vunpack.c.l.b16 %v18
  %v187 = vunpack.c.h.b16 %v18
  %v188 = vunpack.c.l.b16 %v19
  %v189 = vunpack.c.h.b16 %v19
  %v190 = vunpack.c.l.b16 %v20
  %v191 = vunpack.c.l.b16 %v21
  %v192 = vunpack.c.h.b16 %v21
  %v193 = vunpack.c.l.b16 %v22
  %v194 = vunpack.c.h.b16 %v22
  %v195 = vunpack.c.l.b16 %v23
  %v196 = vunpack.c.l.b16 %v24
  %v197 = vunpack.c.h.b16 %v24
  %v198 = vunpack.c.l.b16 %v25
  %v199 = vunpack.c.h.b16 %v25
  %v200 = vunpack.c.l.b16 %v26
  %v201 = vunpack.c.l.b16 %v27
  %v202 = vunpack.c.h.b16 %v27
  %v203 = vunpack.c.l.b16 %v28
  %v204 = vunpack.c.h.b16 %v28
  %v205 = vunpack.c.l.b16 %v29
  %v206 = vunpack.c.l.b16 %v30
  %v207 = vunpack.c.h.b16 %v30
  %v208 = vunpack.c.l.b16 %v31
  %v209 = vunpack.c.h.b16 %v31
  %v210 = vunpack.c.l.b16 %v32
  %v211 = vunpack.c.l.b16 %v33
  %v212 = vunpack.c.h.b16 %v33
  %v213 = vunpack.c.l.b16 %v34
  %v214 = vunpack.c.h.b16 %v34
  %v215 = vunpack.c.l.b16 %v35
  %v216 = vunpack.c.l.b16 %v36
  %v217 = vunpack.c.h.b16 %v36
  %v218 = vunpack.c.l.b16 %v37
  %v219 = vunpack.c.h.b16 %v37
  %v220 = vunpack.c.l.b16 %v38
  %v221 = vunpack.c.l.b16 %v39
  %v222 = vunpack.c.h.b16 %v39
  %v223 = vunpack.c.l.b16 %v40
  %v224 = vunpack.c.h.b16 %v40
  %v225 = vunpack.c.l.b16 %v41
  %v226 = vunpack.c.l.b16 %v42
  %v227 = vunpack.c.h.b16 %v42
  %v228 = vunpack.c.l.b16 %v43
  %v229 = vunpack.c.h.b16 %v43
  %v230 = vunpack.c.l.b16 %v44
  %v231 = vunpack.c.l.b16 %v45
  %v232 = vunpack.c.h.b16 %v45
  %v233 = vunpack.c.l.b16 %v46
  %v234 = vunpack.c.h.b16 %v46
  %v235 = vunpack.c.l.b16 %v47
  %v236 = vunpack.c.l.b16 %v48
  %v237 = vunpack.c.h.b16 %v48
  %v238 = vunpack.c.l.b16 %v49
  %v239 = vunpack.c.h.b16 %v49
  %v240 = vunpack.c.l.b16 %v50
  %v241 = vunpack.c.l.b16 %v51
  %v242 = vunpack.c.h.b16 %v51
  %v243 = vunpack.c.l.b16 %v52
  %v244 = vunpack.c.h.b16 %v52
  %v245 = vunpack.c.l.b16 %v53
  %v246 = vunpack.c.l.b16 %v54
  %v247 = vunpack.c.h.b16 %v54
  %v248 = vunpack.c.l.b16 %v55
  %v249 = vunpack.c.h.b16 %v55
  %v250 = vunpack.c.l.b16 %v56
  %v251 = vunpack.c.l.b16 %v57
  %v252 = vunpack.c.h.b16 %v57
  %v253 = vunpack.c.l.b16 %v58
  %v254 = vunpack.c.h.b16 %v58
  %v255 = vunpack.c.l.b16 %v59
  %v256 = vunpack.c.l.b16 %v60
  %v257 = vunpack.c.h.b16 %v60
  %v258 = vunpack.c.l.b16 %v61
  %v259 = vunpack.c.h.b16 %v61
  %v260 = vunpack.c.l.b16 %v62
  %v261 = vunpack.c.l.b16 %v63
  %v262 = vunpack.c.h.b16 %v63
  %v263 = vunpack.c.l.b16 %v64
  %v264 = vunpack.c.h.b16 %v64
  %v265 = vunpack.c.l.b16 %v65
  %v266 = vpack.c.b16 %v191, %v186
  %v267 = vpack.c.b16 %v192, %v187
  %v268 = vpack.c.b16 %v193, %v188
  %v269 = vpack.c.b16 %v194, %v189
  %v270 = vpack.c.b16 %v195, %v190
  %v271 = vpack.c.b16 %v201, %v196
  %v272 = vpack.c.b16 %v202, %v197
  %v273 = vpack.c.b16 %v203, %v198
  %v274 = vpack.c.b16 %v204, %v199
  %v275 = vpack.c.b16 %v205, %v200
  %v276 = vpack.c.b16 %v211, %v206
  %v277 = vpack.c.b16 %v212, %v207
  %v278 = vpack.c.b16 %v213, %v208
  %v279 = vpack.c.b16 %v214, %v209
  %v280 = vpack.c.b16 %v215, %v210
  %v281 = vpack.c.b16 %v221, %v216
  %v282 = vpack.c.b16 %v222, %v217
  %v283 = vpack.c.b16 %v223, %v218
  %v284 = vpack.c.b16 %v224, %v219
  %v285 = vpack.c.b16 %v225, %v220
  %v286 = vpack.c.b16 %v231, %v226
  %v287 = vpack.c.b16 %v232, %v227
  %v288 = vpack.c.b16 %v233, %v228
  %v289 = vpack.c.b16 %v234, %v229
  %v290 = vpack.c.b16 %v235, %v230
  %v291 = vpack.c.b16 %v241, %v236
  %v292 = vpack.c.b16 %v242, %v237
  %v293 = vpack.c.b16 %v243, %v238
  %v294 = vpack.c.b16 %v244, %v239
  %v295 = vpack.c.b16 %v245, %v240
  %v296 = vpack.c.b16 %v251, %v246
  %v297 = vpack.c.b16 %v252, %v247
  %v298 = vpack.c.b16 %v253, %v248
  %v299 = vpack.c.b16 %v254, %v249
  %v300 = vpack.c.b16 %v255, %v250
  %v301 = vpack.c.b16 %v261, %v256
  %v302 = vpack.c.b16 %v262, %v257
  %v303 = vpack.c.b16 %v263, %v258
  %v304 = vpack.c.b16 %v264, %v259
  %v305 = vpack.c.b16 %v265, %v260
  %v410 = vunpack.c.l.b16 %v66
  %v411 = vunpack.c.l.b16 %v67
  %v412 = vunpack.c.l.b16 %v68
  %v413 = vunpack.c.l.b16 %v69
  %v414 = vunpack.c.l.b16 %v70
  %v415 = vunpack.c.l.b16 %v71
  %v416 = vunpack.c.l.b16 %v72
  %v417 = vunpack.c.l.b16 %v73
  %v418 = vunpack.c.l.b16 %v74
  %v419 = vunpack.c.l.b16 %v75
  %v420 = vunpack.c.l.b16 %v76
  %v421 = vunpack.c.l.b16 %v77
  %v422 = vunpack.c.l.b16 %v78
  %v423 = vunpack.c.l.b16 %v79
  %v424 = vunpack.c.l.b16 %v80
  %v425 = vunpack.c.l.b16 %v81
  %v426 = vunpack.c.l.b16 %v82
  %v427 = vunpack.c.l.b16 %v83
  %v428 = vunpack.c.l.b16 %v84
  %v429 = vunpack.c.l.b16 %v85
  %v430 = vunpack.c.l.b16 %v86
  %v431 = vunpack.c.l.b16 %v87
  %v432 = vunpack.c.l.b16 %v88
  %v433 = vunpack.c.l.b16 %v89
  %v434 = vunpack.c.l.b16 %v90
  %v435 = vunpack.c.l.b16 %v91
  %v436 = vunpack.c.l.b16 %v92
  %v437 = vunpack.c.l.b16 %v93
  %v438 = vunpack.c.l.b16 %v94
  %v439 = vunpack.c.l.b16 %v95
  %v440 = vunpack.c.l.b16 %v96
  %v441 = vunpack.c.l.b16 %v97
  %v442 = vunpack.c.l.b16 %v98
  %v443 = vunpack.c.l.b16 %v99
  %v444 = vunpack.c.l.b16 %v100
  %v445 = vunpack.c.l.b16 %v101
  %v446 = vunpack.c.l.b16 %v102
  %v447 = vunpack.c.l.b16 %v103
  %v448 = vunpack.c.l.b16 %v104
  %v449 = vunpack.c.l.b16 %v105
  %v450 = vunpack.c.l.b16 %v106
  %v451 = vunpack.c.l.b16 %v107
  %v452 = vunpack.c.l.b16 %v108
  %v453 = vunpack.c.l.b16 %v109
  %v454 = vunpack.c.l.b16 %v110
  %v455 = vunpack.c.l.b16 %v111
  %v456 = vunpack.c.l.b16 %v112
  %v457 = vunpack.c.l.b16 %v113
  %v458 = vunpack.c.l.b16 %v114
  %v459 = vunpack.c.l.b16 %v115
  %v460 = vunpack.c.l.b16 %v116
  %v461 = vunpack.c.l.b16 %v117
  %v462 = vunpack.c.l.b16 %v118
  %v463 = vunpack.c.l.b16 %v119
  %v464 = vunpack.c.l.b16 %v120
  %v465 = vunpack.c.l.b16 %v121
  %v466 = vunpack.c.l.b16 %v122
  %v467 = vunpack.c.l.b16 %v123
  %v468 = vunpack.c.l.b16 %v124
  %v469 = vunpack.c.l.b16 %v125
  %v470 = vunpack.c.l.b16 %v126
  %v471 = vunpack.c.l.b16 %v127
  %v472 = vunpack.c.l.b16 %v128
  %v473 = vunpack.c.l.b16 %v129
  %v474 = vunpack.c.l.b16 %v130
  %v475 = vunpack.c.l.b16 %v131
  %v476 = vunpack.c.l.b16 %v132
  %v477 = vunpack.c.l.b16 %v133
  %v478 = vunpack.c.l.b16 %v134
  %v479 = vunpack.c.l.b16 %v135
  %v480 = vunpack.c.l.b16 %v136
  %v481 = vunpack.c.l.b16 %v137
  %v482 = vpack.c.b16 %v411, %v410
  %v483 = vpack.c.b16 %v413, %v412
  %v484 = vpack.c.b16 %v415, %v414
  %v485 = vpack.c.b16 %v417, %v416
  %v486 = vpack.c.b16 %v419, %v418
  %v487 = vpack.c.b16 %v421, %v420
  %v488 = vpack.c.b16 %v423, %v422
  %v489 = vpack.c.b16 %v425, %v424
  %v490 = vpack.c.b16 %v427, %v426
  %v491 = vpack.c.b16 %v429, %v428
  %v492 = vpack.c.b16 %v431, %v430
  %v493 = vpack.c.b16 %v433, %v432
  %v494 = vpack.c.b16 %v435, %v434
  %v495 = vpack.c.b16 %v437, %v436
  %v496 = vpack.c.b16 %v439, %v438
  %v497 = vpack.c.b16 %v441, %v440
  %v498 = vpack.c.b16 %v443, %v442
  %v499 = vpack.c.b16 %v445, %v444
  %v500 = vpack.c.b16 %v447, %v446
  %v501 = vpack.c.b16 %v449, %v448
  %v502 = vpack.c.b16 %v451, %v450
  %v503 = vpack.c.b16 %v453, %v452
  %v504 = vpack.c.b16 %v455, %v454
  %v505 = vpack.c.b16 %v457, %v456
  %v506 = vpack.c.b16 %v459, %v458
  %v507 = vpack.c.b16 %v461, %v460
  %v508 = vpack.c.b16 %v463, %v462
  %v509 = vpack.c.b16 %v465, %v464
  %v510 = vpack.c.b16 %v467, %v466
  %v511 = vpack.c.b16 %v469, %v468
  %v512 = vpack.c.b16 %v471, %v470
  %v513 = vpack.c.b16 %v473, %v472
  %v514 = vpack.c.b16 %v475, %v474
  %v515 = vpack.c.b16 %v477, %v476
  %v516 = vpack.c.b16 %v479, %v478
  %v517 = vpack.c.b16 %v481, %v480
  %vm554 = vcmask 523264
  %v556 = vsel %vm554, %v270, 0
  %v559 = vsel %vm554, %v275, 0
  %v562 = vsel %vm554, %v280, 0
  %v565 = vsel %vm554, %v285, 0
  %v568 = vsel %vm554, %v290, 0
  %v571 = vsel %vm554, %v295, 0
  %v574 = vsel %vm554, %v300, 0
  %v577 = vsel %vm554, %v305, 0
  %579 = vmatprep.subr.bf16.mxu0 0
  %580 = vmatpush1.bf16.msra.mxu0 %v482
  %581 = vmatprep.subr.bf16.mxu0 0
  %582 = vmatpush1.bf16.msra.mxu0 %v483
  %583 = vmatprep.subr.bf16.mxu0 0
  %584 = vmatpush1.bf16.msra.mxu0 %v484
  %585 = vmatprep.subr.bf16.mxu0 0
  %586 = vmatpush1.bf16.msra.mxu0 %v485
  %587 = vmatprep.subr.bf16.mxu0 0
  %588 = vmatpush1.bf16.msra.mxu0 %v486
  %589 = vmatprep.subr.bf16.mxu0 0
  %590 = vmatpush1.bf16.msra.mxu0 %v487
  %591 = vmatprep.subr.bf16.mxu0 0
  %592 = vmatpush1.bf16.msra.mxu0 %v488
  %593 = vmatprep.subr.bf16.mxu0 0
  %594 = vmatpush1.bf16.msra.mxu0 %v489
  %595 = vmatprep.subr.bf16.mxu0 0
  %596 = vmatpush1.bf16.msra.mxu0 %v490
  %597 = vmatprep.subr.bf16.mxu0 0
  %598 = vmatpush1.bf16.msra.mxu0 %v491
  %599 = vmatprep.subr.bf16.mxu0 0
  %600 = vmatpush1.bf16.msra.mxu0 %v492
  %601 = vmatprep.subr.bf16.mxu0 0
  %602 = vmatpush1.bf16.msra.mxu0 %v493
  %603 = vmatprep.subr.bf16.mxu0 0
  %604 = vmatpush1.bf16.msra.mxu0 %v494
  %605 = vmatprep.subr.bf16.mxu0 0
  %606 = vmatpush1.bf16.msra.mxu0 %v495
  %607 = vmatprep.subr.bf16.mxu0 0
  %608 = vmatpush1.bf16.msra.mxu0 %v496
  %609 = vmatprep.subr.bf16.mxu0 0
  %610 = vmatpush1.bf16.msra.mxu0 %v497
  %611 = vmatprep.mubr.bf16.mxu0 %v267
  %612 = vmatmul.mubr.bf16.gmra.mrb[0].mxu0 %v266
  %v613 = vpop.f32.mrb[0].mxu0
  %v614 = vadd.f32 0.0, %v613
  %v615 = vpop.f32.mrb[0].mxu0
  %v616 = vpop.f32.mrb[0].mxu0
  %v617 = vadd.f32 0.0, %v616
  %v618 = vpop.f32.mrb[0].mxu0
  %619 = vmatprep.mubr.bf16.mxu0 %v272
  %620 = vmatmul.mubr.bf16.gmra.mrb[0].mxu0 %v271
  %v621 = vpop.f32.mrb[0].mxu0
  %v622 = vadd.f32 0.0, %v621
  %v623 = vpop.f32.mrb[0].mxu0
  %v624 = vpop.f32.mrb[0].mxu0
  %v625 = vadd.f32 0.0, %v624
  %v626 = vpop.f32.mrb[0].mxu0
  %627 = vmatprep.mubr.bf16.mxu0 %v277
  %628 = vmatmul.mubr.bf16.gmra.mrb[0].mxu0 %v276
  %v629 = vpop.f32.mrb[0].mxu0
  %v630 = vadd.f32 0.0, %v629
  %v631 = vpop.f32.mrb[0].mxu0
  %v632 = vpop.f32.mrb[0].mxu0
  %v633 = vadd.f32 0.0, %v632
  %v634 = vpop.f32.mrb[0].mxu0
  %635 = vmatprep.mubr.bf16.mxu0 %v282
  %636 = vmatmul.mubr.bf16.gmra.mrb[0].mxu0 %v281
  %v637 = vpop.f32.mrb[0].mxu0
  %v638 = vadd.f32 0.0, %v637
  %v639 = vpop.f32.mrb[0].mxu0
  %v640 = vpop.f32.mrb[0].mxu0
  %v641 = vadd.f32 0.0, %v640
  %v642 = vpop.f32.mrb[0].mxu0
  %643 = vmatprep.mubr.bf16.mxu0 %v287
  %644 = vmatmul.mubr.bf16.gmra.mrb[0].mxu0 %v286
  %v645 = vpop.f32.mrb[0].mxu0
  %v646 = vadd.f32 0.0, %v645
  %v647 = vpop.f32.mrb[0].mxu0
  %v648 = vpop.f32.mrb[0].mxu0
  %v649 = vadd.f32 0.0, %v648
  %v650 = vpop.f32.mrb[0].mxu0
  %651 = vmatprep.mubr.bf16.mxu0 %v292
  %652 = vmatmul.mubr.bf16.gmra.mrb[0].mxu0 %v291
  %v653 = vpop.f32.mrb[0].mxu0
  %v654 = vadd.f32 0.0, %v653
  %v655 = vpop.f32.mrb[0].mxu0
  %v656 = vpop.f32.mrb[0].mxu0
  %v657 = vadd.f32 0.0, %v656
  %v658 = vpop.f32.mrb[0].mxu0
  %659 = vmatprep.mubr.bf16.mxu0 %v297
  %660 = vmatmul.mubr.bf16.gmra.mrb[0].mxu0 %v296
  %v661 = vpop.f32.mrb[0].mxu0
  %v662 = vadd.f32 0.0, %v661
  %v663 = vpop.f32.mrb[0].mxu0
  %v664 = vpop.f32.mrb[0].mxu0
  %v665 = vadd.f32 0.0, %v664
  %v666 = vpop.f32.mrb[0].mxu0
  %667 = vmatprep.mubr.bf16.mxu0 %v302
  %668 = vmatmul.mubr.bf16.gmra.mrb[0].mxu0 %v301
  %v669 = vpop.f32.mrb[0].mxu0
  %v670 = vadd.f32 0.0, %v669
  %v671 = vpop.f32.mrb[0].mxu0
  %v672 = vpop.f32.mrb[0].mxu0
  %v673 = vadd.f32 0.0, %v672
  %v674 = vpop.f32.mrb[0].mxu0
  %675 = vdwg.mxu0
  %676 = vmatprep.subr.bf16.mxu0 0
  %677 = vmatpush1.bf16.msra.mxu0 %v498
  %678 = vmatprep.subr.bf16.mxu0 0
  %679 = vmatpush1.bf16.msra.mxu0 %v499
  %680 = vmatprep.subr.bf16.mxu0 0
  %681 = vmatpush1.bf16.msra.mxu0 %v500
  %682 = vmatprep.subr.bf16.mxu0 0
  %683 = vmatpush1.bf16.msra.mxu0 %v501
  %684 = vmatprep.subr.bf16.mxu0 0
  %685 = vmatpush1.bf16.msra.mxu0 %v502
  %686 = vmatprep.subr.bf16.mxu0 0
  %687 = vmatpush1.bf16.msra.mxu0 %v503
  %688 = vmatprep.subr.bf16.mxu0 0
  %689 = vmatpush1.bf16.msra.mxu0 %v504
  %690 = vmatprep.subr.bf16.mxu0 0
  %691 = vmatpush1.bf16.msra.mxu0 %v505
  %692 = vmatprep.subr.bf16.mxu0 0
  %693 = vmatpush1.bf16.msra.mxu0 %v506
  %694 = vmatprep.subr.bf16.mxu0 0
  %695 = vmatpush1.bf16.msra.mxu0 %v507
  %696 = vmatprep.subr.bf16.mxu0 0
  %697 = vmatpush1.bf16.msra.mxu0 %v508
  %698 = vmatprep.subr.bf16.mxu0 0
  %699 = vmatpush1.bf16.msra.mxu0 %v509
  %700 = vmatprep.subr.bf16.mxu0 0
  %701 = vmatpush1.bf16.msra.mxu0 %v510
  %702 = vmatprep.subr.bf16.mxu0 0
  %703 = vmatpush1.bf16.msra.mxu0 %v511
  %704 = vmatprep.subr.bf16.mxu0 0
  %705 = vmatpush1.bf16.msra.mxu0 %v512
  %706 = vmatprep.subr.bf16.mxu0 0
  %707 = vmatpush1.bf16.msra.mxu0 %v513
  %708 = vmatprep.mubr.bf16.mxu0 %v269
  %709 = vmatmul.mubr.bf16.gmra.mrb[0].mxu0 %v268
  %v710 = vpop.f32.mrb[0].mxu0
  %v711 = vadd.f32 %v614, %v710
  %v712 = vpop.f32.mrb[0].mxu0
  %v713 = vpop.f32.mrb[0].mxu0
  %v714 = vadd.f32 %v617, %v713
  %v715 = vpop.f32.mrb[0].mxu0
  %716 = vmatprep.mubr.bf16.mxu0 %v274
  %717 = vmatmul.mubr.bf16.gmra.mrb[0].mxu0 %v273
  %v718 = vpop.f32.mrb[0].mxu0
  %v719 = vadd.f32 %v622, %v718
  %v720 = vpop.f32.mrb[0].mxu0
  %v721 = vpop.f32.mrb[0].mxu0
  %v722 = vadd.f32 %v625, %v721
  %v723 = vpop.f32.mrb[0].mxu0
  %724 = vmatprep.mubr.bf16.mxu0 %v279
  %725 = vmatmul.mubr.bf16.gmra.mrb[0].mxu0 %v278
  %v726 = vpop.f32.mrb[0].mxu0
  %v727 = vadd.f32 %v630, %v726
  %v728 = vpop.f32.mrb[0].mxu0
  %v729 = vpop.f32.mrb[0].mxu0
  %v730 = vadd.f32 %v633, %v729
  %v731 = vpop.f32.mrb[0].mxu0
  %732 = vmatprep.mubr.bf16.mxu0 %v284
  %733 = vmatmul.mubr.bf16.gmra.mrb[0].mxu0 %v283
  %v734 = vpop.f32.mrb[0].mxu0
  %v735 = vadd.f32 %v638, %v734
  %v736 = vpop.f32.mrb[0].mxu0
  %v737 = vpop.f32.mrb[0].mxu0
  %v738 = vadd.f32 %v641, %v737
  %v739 = vpop.f32.mrb[0].mxu0
  %740 = vmatprep.mubr.bf16.mxu0 %v289
  %741 = vmatmul.mubr.bf16.gmra.mrb[0].mxu0 %v288
  %v742 = vpop.f32.mrb[0].mxu0
  %v743 = vadd.f32 %v646, %v742
  %v744 = vpop.f32.mrb[0].mxu0
  %v745 = vpop.f32.mrb[0].mxu0
  %v746 = vadd.f32 %v649, %v745
  %v747 = vpop.f32.mrb[0].mxu0
  %748 = vmatprep.mubr.bf16.mxu0 %v294
  %749 = vmatmul.mubr.bf16.gmra.mrb[0].mxu0 %v293
  %v750 = vpop.f32.mrb[0].mxu0
  %v751 = vadd.f32 %v654, %v750
  %v752 = vpop.f32.mrb[0].mxu0
  %v753 = vpop.f32.mrb[0].mxu0
  %v754 = vadd.f32 %v657, %v753
  %v755 = vpop.f32.mrb[0].mxu0
  %756 = vmatprep.mubr.bf16.mxu0 %v299
  %757 = vmatmul.mubr.bf16.gmra.mrb[0].mxu0 %v298
  %v758 = vpop.f32.mrb[0].mxu0
  %v759 = vadd.f32 %v662, %v758
  %v760 = vpop.f32.mrb[0].mxu0
  %v761 = vpop.f32.mrb[0].mxu0
  %v762 = vadd.f32 %v665, %v761
  %v763 = vpop.f32.mrb[0].mxu0
  %764 = vmatprep.mubr.bf16.mxu0 %v304
  %765 = vmatmul.mubr.bf16.gmra.mrb[0].mxu0 %v303
  %v766 = vpop.f32.mrb[0].mxu0
  %v767 = vadd.f32 %v670, %v766
  %v768 = vpop.f32.mrb[0].mxu0
  %v769 = vpop.f32.mrb[0].mxu0
  %v770 = vadd.f32 %v673, %v769
  %v771 = vpop.f32.mrb[0].mxu0
  %772 = vdwg.mxu0
  %773 = vmatprep.subr.bf16.mxu0 0
  %774 = vmatpush1.bf16.msra.mxu0 %v514
  %775 = vmatprep.subr.bf16.mxu0 0
  %776 = vmatpush1.bf16.msra.mxu0 %v515
  %777 = vmatprep.subr.bf16.mxu0 0
  %778 = vmatpush1.bf16.msra.mxu0 %v516
  %779 = vmatprep.subr.bf16.mxu0 0
  %780 = vmatpush1.bf16.msra.mxu0 %v517
  %781 = vmatprep.subr.bf16.mxu0 0
  %782 = vmatpush1.bf16.msra.mxu0 0
  %783 = vmatprep.subr.bf16.mxu0 0
  %784 = vmatpush1.bf16.msra.mxu0 0
  %785 = vmatprep.subr.bf16.mxu0 0
  %786 = vmatpush1.bf16.msra.mxu0 0
  %787 = vmatprep.subr.bf16.mxu0 0
  %788 = vmatpush1.bf16.msra.mxu0 0
  %789 = vmatprep.subr.bf16.mxu0 0
  %790 = vmatpush1.bf16.msra.mxu0 0
  %791 = vmatprep.subr.bf16.mxu0 0
  %792 = vmatpush1.bf16.msra.mxu0 0
  %793 = vmatprep.subr.bf16.mxu0 0
  %794 = vmatpush1.bf16.msra.mxu0 0
  %795 = vmatprep.subr.bf16.mxu0 0
  %796 = vmatpush1.bf16.msra.mxu0 0
  %797 = vmatprep.subr.bf16.mxu0 0
  %798 = vmatpush1.bf16.msra.mxu0 0
  %799 = vmatprep.subr.bf16.mxu0 0
  %800 = vmatpush1.bf16.msra.mxu0 0
  %801 = vmatprep.subr.bf16.mxu0 0
  %802 = vmatpush1.bf16.msra.mxu0 0
  %803 = vmatprep.subr.bf16.mxu0 0
  %804 = vmatpush1.bf16.msra.mxu0 0
  %805 = vmatprep.mubr.bf16.mxu0 0
  %806 = vmatmul.mubr.bf16.gmra.mrb[0].mxu0 %v556
  %v807 = vpop.f32.mrb[0].mxu0
  %v808 = vadd.f32 %v711, %v807
  %v809 = vpop.f32.mrb[0].mxu0
  %v810 = vpop.f32.mrb[0].mxu0
  %v811 = vadd.f32 %v714, %v810
  %v812 = vpop.f32.mrb[0].mxu0
  %813 = vmatprep.mubr.bf16.mxu0 0
  %814 = vmatmul.mubr.bf16.gmra.mrb[0].mxu0 %v559
  %v815 = vpop.f32.mrb[0].mxu0
  %v816 = vadd.f32 %v719, %v815
  %v817 = vpop.f32.mrb[0].mxu0
  %v818 = vpop.f32.mrb[0].mxu0
  %v819 = vadd.f32 %v722, %v818
  %v820 = vpop.f32.mrb[0].mxu0
  %821 = vmatprep.mubr.bf16.mxu0 0
  %822 = vmatmul.mubr.bf16.gmra.mrb[0].mxu0 %v562
  %v823 = vpop.f32.mrb[0].mxu0
  %v824 = vadd.f32 %v727, %v823
  %v825 = vpop.f32.mrb[0].mxu0
  %v826 = vpop.f32.mrb[0].mxu0
  %v827 = vadd.f32 %v730, %v826
  %v828 = vpop.f32.mrb[0].mxu0
  %829 = vmatprep.mubr.bf16.mxu0 0
  %830 = vmatmul.mubr.bf16.gmra.mrb[0].mxu0 %v565
  %v831 = vpop.f32.mrb[0].mxu0
  %v832 = vadd.f32 %v735, %v831
  %v833 = vpop.f32.mrb[0].mxu0
  %v834 = vpop.f32.mrb[0].mxu0
  %v835 = vadd.f32 %v738, %v834
  %v836 = vpop.f32.mrb[0].mxu0
  %837 = vmatprep.mubr.bf16.mxu0 0
  %838 = vmatmul.mubr.bf16.gmra.mrb[0].mxu0 %v568
  %v839 = vpop.f32.mrb[0].mxu0
  %v840 = vadd.f32 %v743, %v839
  %v841 = vpop.f32.mrb[0].mxu0
  %v842 = vpop.f32.mrb[0].mxu0
  %v843 = vadd.f32 %v746, %v842
  %v844 = vpop.f32.mrb[0].mxu0
  %845 = vmatprep.mubr.bf16.mxu0 0
  %846 = vmatmul.mubr.bf16.gmra.mrb[0].mxu0 %v571
  %v847 = vpop.f32.mrb[0].mxu0
  %v848 = vadd.f32 %v751, %v847
  %v849 = vpop.f32.mrb[0].mxu0
  %v850 = vpop.f32.mrb[0].mxu0
  %v851 = vadd.f32 %v754, %v850
  %v852 = vpop.f32.mrb[0].mxu0
  %853 = vmatprep.mubr.bf16.mxu0 0
  %854 = vmatmul.mubr.bf16.gmra.mrb[0].mxu0 %v574
  %v855 = vpop.f32.mrb[0].mxu0
  %v856 = vadd.f32 %v759, %v855
  %v857 = vpop.f32.mrb[0].mxu0
  %v858 = vpop.f32.mrb[0].mxu0
  %v859 = vadd.f32 %v762, %v858
  %v860 = vpop.f32.mrb[0].mxu0
  %861 = vmatprep.mubr.bf16.mxu0 0
  %862 = vmatmul.mubr.bf16.gmra.mrb[0].mxu0 %v577
  %v863 = vpop.f32.mrb[0].mxu0
  %v864 = vadd.f32 %v767, %v863
  %v865 = vpop.f32.mrb[0].mxu0
  %v866 = vpop.f32.mrb[0].mxu0
  %v867 = vadd.f32 %v770, %v866
  %v868 = vpop.f32.mrb[0].mxu0
  %869 = vdwg.mxu0
  %v870 = vsel %vm554, %v808, 0.0
  %v871 = vsel %vm554, %v811, 0.0
  %v872 = vadd.f32 %v870, %v871
  %v873 = vsel %vm554, %v816, 0.0
  %v874 = vadd.f32 %v872, %v873
  %v875 = vsel %vm554, %v819, 0.0
  %v876 = vadd.f32 %v874, %v875
  %v877 = vsel %vm554, %v824, 0.0
  %v878 = vadd.f32 %v876, %v877
  %v879 = vsel %vm554, %v827, 0.0
  %v880 = vadd.f32 %v878, %v879
  %v881 = vsel %vm554, %v832, 0.0
  %v882 = vadd.f32 %v880, %v881
  %v883 = vsel %vm554, %v835, 0.0
  %v884 = vadd.f32 %v882, %v883
  %v885 = vsel %vm554, %v840, 0.0
  %v886 = vadd.f32 %v884, %v885
  %v887 = vsel %vm554, %v843, 0.0
  %v888 = vadd.f32 %v886, %v887
  %v889 = vsel %vm554, %v848, 0.0
  %v890 = vadd.f32 %v888, %v889
  %v891 = vsel %vm554, %v851, 0.0
  %v892 = vadd.f32 %v890, %v891
  %v893 = vsel %vm554, %v856, 0.0
  %v894 = vadd.f32 %v892, %v893
  %v895 = vsel %vm554, %v859, 0.0
  %v896 = vadd.f32 %v894, %v895
  %v897 = vsel %vm554, %v864, 0.0
  %v898 = vadd.f32 %v896, %v897
  %v899 = vsel %vm554, %v867, 0.0
  %v900 = vadd.f32 %v898, %v899
  %v901 = vrot.slane %v900, 4
  %v902 = vadd.f32 %v900, %v901
  %v903 = vrot.slane %v902, 2
  %v904 = vadd.f32 %v902, %v903
  %v905 = vrot.slane %v904, 1
  %v906 = vadd.f32 %v904, %v905
  %v907 = vrcp.pop 128.0
  %v908 = vmul.f32 %v906, %v907
  %v909 = vsub.f32 %v808, %v908
  %v910 = vsub.f32 %v811, %v908
  %v911 = vsub.f32 %v816, %v908
  %v912 = vsub.f32 %v819, %v908
  %v913 = vsub.f32 %v824, %v908
  %v914 = vsub.f32 %v827, %v908
  %v915 = vsub.f32 %v832, %v908
  %v916 = vsub.f32 %v835, %v908
  %v917 = vsub.f32 %v840, %v908
  %v918 = vsub.f32 %v843, %v908
  %v919 = vsub.f32 %v848, %v908
  %v920 = vsub.f32 %v851, %v908
  %v921 = vsub.f32 %v856, %v908
  %v922 = vsub.f32 %v859, %v908
  %v923 = vsub.f32 %v864, %v908
  %v924 = vsub.f32 %v867, %v908
  %v925 = vmul.f32 %v909, %v909
  %v926 = vmul.f32 %v910, %v910
  %v927 = vmul.f32 %v911, %v911
  %v928 = vmul.f32 %v912, %v912
  %v929 = vmul.f32 %v913, %v913
  %v930 = vmul.f32 %v914, %v914
  %v931 = vmul.f32 %v915, %v915
  %v932 = vmul.f32 %v916, %v916
  %v933 = vmul.f32 %v917, %v917
  %v934 = vmul.f32 %v918, %v918
  %v935 = vmul.f32 %v919, %v919
  %v936 = vmul.f32 %v920, %v920
  %v937 = vmul.f32 %v921, %v921
  %v938 = vmul.f32 %v922, %v922
  %v939 = vmul.f32 %v923, %v923
  %v940 = vmul.f32 %v924, %v924
  %v941 = vsel %vm554, %v925, 0.0
  %v942 = vsel %vm554, %v926, 0.0
  %v943 = vadd.f32 %v941, %v942
  %v944 = vsel %vm554, %v927, 0.0
  %v945 = vadd.f32 %v943, %v944
  %v946 = vsel %vm554, %v928, 0.0
  %v947 = vadd.f32 %v945, %v946
  %v948 = vsel %vm554, %v929, 0.0
  %v949 = vadd.f32 %v947, %v948
  %v950 = vsel %vm554, %v930, 0.0
  %v951 = vadd.f32 %v949, %v950
  %v952 = vsel %vm554, %v931, 0.0
  %v953 = vadd.f32 %v951, %v952
  %v954 = vsel %vm554, %v932, 0.0
  %v955 = vadd.f32 %v953, %v954
  %v956 = vsel %vm554, %v933, 0.0
  %v957 = vadd.f32 %v955, %v956
  %v958 = vsel %vm554, %v934, 0.0
  %v959 = vadd.f32 %v957, %v958
  %v960 = vsel %vm554, %v935, 0.0
  %v961 = vadd.f32 %v959, %v960
  %v962 = vsel %vm554, %v936, 0.0
  %v963 = vadd.f32 %v961, %v962
  %v964 = vsel %vm554, %v937, 0.0
  %v965 = vadd.f32 %v963, %v964
  %v966 = vsel %vm554, %v938, 0.0
  %v967 = vadd.f32 %v965, %v966
  %v968 = vsel %vm554, %v939, 0.0
  %v969 = vadd.f32 %v967, %v968
  %v970 = vsel %vm554, %v940, 0.0
  %v971 = vadd.f32 %v969, %v970
  %v972 = vrot.slane %v971, 4
  %v973 = vadd.f32 %v971, %v972
  %v974 = vrot.slane %v973, 2
  %v975 = vadd.f32 %v973, %v974
  %v976 = vrot.slane %v975, 1
  %v977 = vadd.f32 %v975, %v976
  %v978 = vmul.f32 %v977, %v907
  %v979 = vld [vmem:[%s2] sm:$0x1]
  %v980 = vadd.f32 %v978, 1e-05
  %v981 = vrsqrt.pop %v980
  %v982 = vmul.f32 %v979, %v981
  %v984 = vlaneseq
  %v985 = vshrl.u32 %v984, 7
  %v986 = vsub.s32 0, %v985
  %v987 = vrot.slane %v982, %v986
  %v989 = vmul.f32 %v909, %v987
  %v990 = vmul.f32 %v910, %v987
  %v991 = vmul.f32 %v911, %v987
  %v992 = vmul.f32 %v912, %v987
  %v993 = vmul.f32 %v913, %v987
  %v994 = vmul.f32 %v914, %v987
  %v995 = vmul.f32 %v915, %v987
  %v996 = vmul.f32 %v916, %v987
  %v997 = vmul.f32 %v917, %v987
  %v998 = vmul.f32 %v918, %v987
  %v999 = vmul.f32 %v919, %v987
  %v1000 = vmul.f32 %v920, %v987
  %v1001 = vmul.f32 %v921, %v987
  %v1002 = vmul.f32 %v922, %v987
  %v1003 = vmul.f32 %v923, %v987
  %v1004 = vmul.f32 %v924, %v987
  %v1005 = vld [vmem:[%s3] sm:$0x1]
  %v1007 = vlaneseq
  %v1008 = vshrl.u32 %v1007, 7
  %v1009 = vsub.s32 0, %v1008
  %v1010 = vrot.slane %v1005, %v1009
  %v1012 = vadd.f32 %v989, %v1010
  %v1013 = vadd.f32 %v990, %v1010
  %v1014 = vadd.f32 %v991, %v1010
  %v1015 = vadd.f32 %v992, %v1010
  %v1016 = vadd.f32 %v993, %v1010
  %v1017 = vadd.f32 %v994, %v1010
  %v1018 = vadd.f32 %v995, %v1010
  %v1019 = vadd.f32 %v996, %v1010
  %v1020 = vadd.f32 %v997, %v1010
  %v1021 = vadd.f32 %v998, %v1010
  %v1022 = vadd.f32 %v999, %v1010
  %v1023 = vadd.f32 %v1000, %v1010
  %v1024 = vadd.f32 %v1001, %v1010
  %v1025 = vadd.f32 %v1002, %v1010
  %v1026 = vadd.f32 %v1003, %v1010
  %v1027 = vadd.f32 %v1004, %v1010
  %v1028 = vmax.f32 %v1012, 0.0
  %v1029 = vmax.f32 %v1013, 0.0
  %v1030 = vmax.f32 %v1014, 0.0
  %v1031 = vmax.f32 %v1015, 0.0
  %v1032 = vmax.f32 %v1016, 0.0
  %v1033 = vmax.f32 %v1017, 0.0
  %v1034 = vmax.f32 %v1018, 0.0
  %v1035 = vmax.f32 %v1019, 0.0
  %v1036 = vmax.f32 %v1020, 0.0
  %v1037 = vmax.f32 %v1021, 0.0
  %v1038 = vmax.f32 %v1022, 0.0
  %v1039 = vmax.f32 %v1023, 0.0
  %v1040 = vmax.f32 %v1024, 0.0
  %v1041 = vmax.f32 %v1025, 0.0
  %v1042 = vmax.f32 %v1026, 0.0
  %v1043 = vmax.f32 %v1027, 0.0
  %1044 = vst.msk [vmem:[%s4] sm:$0xff] %vm554, %v1028
  %1045 = vst.msk [vmem:[%s4 + $0x8] sm:$0xff] %vm554, %v1029
  %1046 = vst.msk [vmem:[%s4 + $0x10] sm:$0xff] %vm554, %v1030
  %1047 = vst.msk [vmem:[%s4 + $0x18] sm:$0xff] %vm554, %v1031
  %1048 = vst.msk [vmem:[%s4 + $0x20] sm:$0xff] %vm554, %v1032
  %1049 = vst.msk [vmem:[%s4 + $0x28] sm:$0xff] %vm554, %v1033
  %1050 = vst.msk [vmem:[%s4 + $0x30] sm:$0xff] %vm554, %v1034
  %1051 = vst.msk [vmem:[%s4 + $0x38] sm:$0xff] %vm554, %v1035
  %1052 = vst.msk [vmem:[%s4 + $0x40] sm:$0xff] %vm554, %v1036
  %1053 = vst.msk [vmem:[%s4 + $0x48] sm:$0xff] %vm554, %v1037
  %1054 = vst.msk [vmem:[%s4 + $0x50] sm:$0xff] %vm554, %v1038
  %1055 = vst.msk [vmem:[%s4 + $0x58] sm:$0xff] %vm554, %v1039
  %1056 = vst.msk [vmem:[%s4 + $0x60] sm:$0xff] %vm554, %v1040
  %1057 = vst.msk [vmem:[%s4 + $0x68] sm:$0xff] %vm554, %v1041
  %1058 = vst.msk [vmem:[%s4 + $0x70] sm:$0xff] %vm554, %v1042
  %1059 = vst.msk [vmem:[%s4 + $0x78] sm:$0xff] %vm554, %v1043
  // Predicated region
  $region18: #{resnet_comp_forward.12} parent=0 // pred_check
    _
  $region19: #{resnet_comp_forward.12} parent=0 // pred_check_branch
    %1061 = sbr.rel (0) target = $region21
  $region20: #{resnet_comp_forward.12} parent=0 // pred_region
    _
  $region21: #{resnet_comp_forward.12} parent=0 // pred_fallthru
    _
  // Predicated region
  $region22: #{resnet_comp_forward.12} parent=0 // pred_check
    _
  $region23: #{resnet_comp_forward.12} parent=0 // pred_check_branch
    %1063 = sbr.rel (0) target = $region25
  $region24: #{resnet_comp_forward.12} parent=0 // pred_region
    _
  $region25: #{resnet_comp_forward.12} parent=0 // pred_fallthru
    _

// kernel: resnet_comp_forward.13
$region0: #{resnet_comp_forward.13}
  #allocation0 [shape = 'u32[]', space=smem, size = 0x4, offset = 0x4, fixed_abs, tag = 'smem constant byte address 0x4 - core index']
  #allocation1 [shape = 'u32[144,128]{1,0:T(1,128)}', space=vmem, size = 0x12000, scoped, tag = 'internal scratch']
  %s0 = inlined_call_operand.vmem [shape: bf16[128,576], index: 0, kind: input, shape index: {}]
  %s1 = inlined_call_operand.vmem [shape: bf16[576,64], index: 1, kind: input, shape index: {}]
  %s2 = inlined_call_operand.vmem [shape: f32[1,64], index: 2, kind: input, shape index: {}]
  %s3 = inlined_call_operand.vmem [shape: f32[1,64], index: 3, kind: input, shape index: {}]
  %s4 = inlined_call_operand.vmem [shape: f32[128,64], index: 4, kind: input, shape index: {}]
  %s5 = inlined_call_operand.vmem [shape: f32[128,64], index: 5, kind: output, shape index: {}]
  %s6 = sld [smem:[#allocation0]]
  $region30: #{resnet_comp_forward.13} parent=0
    _
  %s8 = ssub.s32 1, %s6
  %s9 = scalar_select 0, %s8, %s6
  // Predicated region
  $region2: #{resnet_comp_forward.13} parent=0 // pred_check
    _
  $region3: #{resnet_comp_forward.13} parent=0 // pred_check_branch
    %11 = sbr.rel (0) target = $region5
  $region4: #{resnet_comp_forward.13} parent=0 // pred_region
    _
  $region5: #{resnet_comp_forward.13} parent=0 // pred_fallthru
    _
  // Predicated region
  $region6: #{resnet_comp_forward.13} parent=0 // pred_check
    _
  $region7: #{resnet_comp_forward.13} parent=0 // pred_check_branch
    %13 = sbr.rel (0) target = $region9
  $region8: #{resnet_comp_forward.13} parent=0 // pred_region
    _
  $region9: #{resnet_comp_forward.13} parent=0 // pred_fallthru
    _
  // Predicated region
  $region10: #{resnet_comp_forward.13} parent=0 // pred_check
    _
  $region11: #{resnet_comp_forward.13} parent=0 // pred_check_branch
    %15 = sbr.rel (0) target = $region13
  $region12: #{resnet_comp_forward.13} parent=0 // pred_region
    _
  $region13: #{resnet_comp_forward.13} parent=0 // pred_fallthru
    _
  // Predicated region
  $region14: #{resnet_comp_forward.13} parent=0 // pred_check
    _
  $region15: #{resnet_comp_forward.13} parent=0 // pred_check_branch
    %17 = sbr.rel (0) target = $region17
  $region16: #{resnet_comp_forward.13} parent=0 // pred_region
    _
  $region17: #{resnet_comp_forward.13} parent=0 // pred_fallthru
    _
  // Predicated region
  $region18: #{resnet_comp_forward.13} parent=0 // pred_check
    _
  $region19: #{resnet_comp_forward.13} parent=0 // pred_check_branch
    %19 = sbr.rel (0) target = $region21
  $region20: #{resnet_comp_forward.13} parent=0 // pred_region
    _
  $region21: #{resnet_comp_forward.13} parent=0 // pred_fallthru
    _
  %v21 = vld [vmem:[%s0] sm:$0xff]
  %v22 = vld [vmem:[%s0 + $0x8] sm:$0xff]
  %v23 = vld [vmem:[%s0 + $0x10] sm:$0xf]
  %v24 = vld [vmem:[%s0 + $0x14] sm:$0xff]
  %v25 = vld [vmem:[%s0 + $0x1c] sm:$0xff]
  %v26 = vld [vmem:[%s0 + $0x24] sm:$0xf]
  %v27 = vld [vmem:[%s0 + $0x28] sm:$0xff]
  %v28 = vld [vmem:[%s0 + $0x30] sm:$0xff]
  %v29 = vld [vmem:[%s0 + $0x38] sm:$0xf]
  %v30 = vld [vmem:[%s0 + $0x3c] sm:$0xff]
  %v31 = vld [vmem:[%s0 + $0x44] sm:$0xff]
  %v32 = vld [vmem:[%s0 + $0x4c] sm:$0xf]
  %v33 = vld [vmem:[%s0 + $0x50] sm:$0xff]
  %v34 = vld [vmem:[%s0 + $0x58] sm:$0xff]
  %v35 = vld [vmem:[%s0 + $0x60] sm:$0xf]
  %v36 = vld [vmem:[%s0 + $0x64] sm:$0xff]
  %v37 = vld [vmem:[%s0 + $0x6c] sm:$0xff]
  %v38 = vld [vmem:[%s0 + $0x74] sm:$0xf]
  %v39 = vld [vmem:[%s0 + $0x78] sm:$0xff]
  %v40 = vld [vmem:[%s0 + $0x80] sm:$0xff]
  %v41 = vld [vmem:[%s0 + $0x88] sm:$0xf]
  %v42 = vld [vmem:[%s0 + $0x8c] sm:$0xff]
  %v43 = vld [vmem:[%s0 + $0x94] sm:$0xff]
  %v44 = vld [vmem:[%s0 + $0x9c] sm:$0xf]
  %v45 = vld [vmem:[%s0 + $0xa0] sm:$0xff]
  %v46 = vld [vmem:[%s0 + $0xa8] sm:$0xff]
  %v47 = vld [vmem:[%s0 + $0xb0] sm:$0xf]
  %v48 = vld [vmem:[%s0 + $0xb4] sm:$0xff]
  %v49 = vld [vmem:[%s0 + $0xbc] sm:$0xff]
  %v50 = vld [vmem:[%s0 + $0xc4] sm:$0xf]
  %v51 = vld [vmem:[%s0 + $0xc8] sm:$0xff]
  %v52 = vld [vmem:[%s0 + $0xd0] sm:$0xff]
  %v53 = vld [vmem:[%s0 + $0xd8] sm:$0xf]
  %v54 = vld [vmem:[%s0 + $0xdc] sm:$0xff]
  %v55 = vld [vmem:[%s0 + $0xe4] sm:$0xff]
  %v56 = vld [vmem:[%s0 + $0xec] sm:$0xf]
  %v57 = vld [vmem:[%s0 + $0xf0] sm:$0xff]
  %v58 = vld [vmem:[%s0 + $0xf8] sm:$0xff]
  %v59 = vld [vmem:[%s0 + $0x100] sm:$0xf]
  %v60 = vld [vmem:[%s0 + $0x104] sm:$0xff]
  %v61 = vld [vmem:[%s0 + $0x10c] sm:$0xff]
  %v62 = vld [vmem:[%s0 + $0x114] sm:$0xf]
  %v63 = vld [vmem:[%s0 + $0x118] sm:$0xff]
  %v64 = vld [vmem:[%s0 + $0x120] sm:$0xff]
  %v65 = vld [vmem:[%s0 + $0x128] sm:$0xf]
  %v66 = vld [vmem:[%s0 + $0x12c] sm:$0xff]
  %v67 = vld [vmem:[%s0 + $0x134] sm:$0xff]
  %v68 = vld [vmem:[%s0 + $0x13c] sm:$0xf]
  %v69 = vld [vmem:[%s1] sm:$0xf]
  %v70 = vld [vmem:[%s1 + $0x4] sm:$0xf]
  %v71 = vld [vmem:[%s1 + $0x8] sm:$0xf]
  %v72 = vld [vmem:[%s1 + $0xc] sm:$0xf]
  %v73 = vld [vmem:[%s1 + $0x10] sm:$0xf]
  %v74 = vld [vmem:[%s1 + $0x14] sm:$0xf]
  %v75 = vld [vmem:[%s1 + $0x18] sm:$0xf]
  %v76 = vld [vmem:[%s1 + $0x1c] sm:$0xf]
  %v77 = vld [vmem:[%s1 + $0x20] sm:$0xf]
  %v78 = vld [vmem:[%s1 + $0x24] sm:$0xf]
  %v79 = vld [vmem:[%s1 + $0x28] sm:$0xf]
  %v80 = vld [vmem:[%s1 + $0x2c] sm:$0xf]
  %v81 = vld [vmem:[%s1 + $0x30] sm:$0xf]
  %v82 = vld [vmem:[%s1 + $0x34] sm:$0xf]
  %v83 = vld [vmem:[%s1 + $0x38] sm:$0xf]
  %v84 = vld [vmem:[%s1 + $0x3c] sm:$0xf]
  %v85 = vld [vmem:[%s1 + $0x40] sm:$0xf]
  %v86 = vld [vmem:[%s1 + $0x44] sm:$0xf]
  %v87 = vld [vmem:[%s1 + $0x48] sm:$0xf]
  %v88 = vld [vmem:[%s1 + $0x4c] sm:$0xf]
  %v89 = vld [vmem:[%s1 + $0x50] sm:$0xf]
  %v90 = vld [vmem:[%s1 + $0x54] sm:$0xf]
  %v91 = vld [vmem:[%s1 + $0x58] sm:$0xf]
  %v92 = vld [vmem:[%s1 + $0x5c] sm:$0xf]
  %v93 = vld [vmem:[%s1 + $0x60] sm:$0xf]
  %v94 = vld [vmem:[%s1 + $0x64] sm:$0xf]
  %v95 = vld [vmem:[%s1 + $0x68] sm:$0xf]
  %v96 = vld [vmem:[%s1 + $0x6c] sm:$0xf]
  %v97 = vld [vmem:[%s1 + $0x70] sm:$0xf]
  %v98 = vld [vmem:[%s1 + $0x74] sm:$0xf]
  %v99 = vld [vmem:[%s1 + $0x78] sm:$0xf]
  %v100 = vld [vmem:[%s1 + $0x7c] sm:$0xf]
  %v101 = vld [vmem:[%s1 + $0x80] sm:$0xf]
  %v102 = vld [vmem:[%s1 + $0x84] sm:$0xf]
  %v103 = vld [vmem:[%s1 + $0x88] sm:$0xf]
  %v104 = vld [vmem:[%s1 + $0x8c] sm:$0xf]
  %v105 = vld [vmem:[%s1 + $0x90] sm:$0xf]
  %v106 = vld [vmem:[%s1 + $0x94] sm:$0xf]
  %v107 = vld [vmem:[%s1 + $0x98] sm:$0xf]
  %v108 = vld [vmem:[%s1 + $0x9c] sm:$0xf]
  %v109 = vld [vmem:[%s1 + $0xa0] sm:$0xf]
  %v110 = vld [vmem:[%s1 + $0xa4] sm:$0xf]
  %v111 = vld [vmem:[%s1 + $0xa8] sm:$0xf]
  %v112 = vld [vmem:[%s1 + $0xac] sm:$0xf]
  %v113 = vld [vmem:[%s1 + $0xb0] sm:$0xf]
  %v114 = vld [vmem:[%s1 + $0xb4] sm:$0xf]
  %v115 = vld [vmem:[%s1 + $0xb8] sm:$0xf]
  %v116 = vld [vmem:[%s1 + $0xbc] sm:$0xf]
  %v117 = vld [vmem:[%s1 + $0xc0] sm:$0xf]
  %v118 = vld [vmem:[%s1 + $0xc4] sm:$0xf]
  %v119 = vld [vmem:[%s1 + $0xc8] sm:$0xf]
  %v120 = vld [vmem:[%s1 + $0xcc] sm:$0xf]
  %v121 = vld [vmem:[%s1 + $0xd0] sm:$0xf]
  %v122 = vld [vmem:[%s1 + $0xd4] sm:$0xf]
  %v123 = vld [vmem:[%s1 + $0xd8] sm:$0xf]
  %v124 = vld [vmem:[%s1 + $0xdc] sm:$0xf]
  %v125 = vld [vmem:[%s1 + $0xe0] sm:$0xf]
  %v126 = vld [vmem:[%s1 + $0xe4] sm:$0xf]
  %v127 = vld [vmem:[%s1 + $0xe8] sm:$0xf]
  %v128 = vld [vmem:[%s1 + $0xec] sm:$0xf]
  %v129 = vld [vmem:[%s1 + $0xf0] sm:$0xf]
  %v130 = vld [vmem:[%s1 + $0xf4] sm:$0xf]
  %v131 = vld [vmem:[%s1 + $0xf8] sm:$0xf]
  %v132 = vld [vmem:[%s1 + $0xfc] sm:$0xf]
  %v133 = vld [vmem:[%s1 + $0x100] sm:$0xf]
  %v134 = vld [vmem:[%s1 + $0x104] sm:$0xf]
  %v135 = vld [vmem:[%s1 + $0x108] sm:$0xf]
  %v136 = vld [vmem:[%s1 + $0x10c] sm:$0xf]
  %v137 = vld [vmem:[%s1 + $0x110] sm:$0xf]
  %v138 = vld [vmem:[%s1 + $0x114] sm:$0xf]
  %v139 = vld [vmem:[%s1 + $0x118] sm:$0xf]
  %v140 = vld [vmem:[%s1 + $0x11c] sm:$0xf]
  %v189 = vunpack.c.l.b16 %v21
  %v190 = vunpack.c.h.b16 %v21
  %v191 = vunpack.c.l.b16 %v22
  %v192 = vunpack.c.h.b16 %v22
  %v193 = vunpack.c.l.b16 %v23
  %v194 = vunpack.c.l.b16 %v24
  %v195 = vunpack.c.h.b16 %v24
  %v196 = vunpack.c.l.b16 %v25
  %v197 = vunpack.c.h.b16 %v25
  %v198 = vunpack.c.l.b16 %v26
  %v199 = vunpack.c.l.b16 %v27
  %v200 = vunpack.c.h.b16 %v27
  %v201 = vunpack.c.l.b16 %v28
  %v202 = vunpack.c.h.b16 %v28
  %v203 = vunpack.c.l.b16 %v29
  %v204 = vunpack.c.l.b16 %v30
  %v205 = vunpack.c.h.b16 %v30
  %v206 = vunpack.c.l.b16 %v31
  %v207 = vunpack.c.h.b16 %v31
  %v208 = vunpack.c.l.b16 %v32
  %v209 = vunpack.c.l.b16 %v33
  %v210 = vunpack.c.h.b16 %v33
  %v211 = vunpack.c.l.b16 %v34
  %v212 = vunpack.c.h.b16 %v34
  %v213 = vunpack.c.l.b16 %v35
  %v214 = vunpack.c.l.b16 %v36
  %v215 = vunpack.c.h.b16 %v36
  %v216 = vunpack.c.l.b16 %v37
  %v217 = vunpack.c.h.b16 %v37
  %v218 = vunpack.c.l.b16 %v38
  %v219 = vunpack.c.l.b16 %v39
  %v220 = vunpack.c.h.b16 %v39
  %v221 = vunpack.c.l.b16 %v40
  %v222 = vunpack.c.h.b16 %v40
  %v223 = vunpack.c.l.b16 %v41
  %v224 = vunpack.c.l.b16 %v42
  %v225 = vunpack.c.h.b16 %v42
  %v226 = vunpack.c.l.b16 %v43
  %v227 = vunpack.c.h.b16 %v43
  %v228 = vunpack.c.l.b16 %v44
  %v229 = vunpack.c.l.b16 %v45
  %v230 = vunpack.c.h.b16 %v45
  %v231 = vunpack.c.l.b16 %v46
  %v232 = vunpack.c.h.b16 %v46
  %v233 = vunpack.c.l.b16 %v47
  %v234 = vunpack.c.l.b16 %v48
  %v235 = vunpack.c.h.b16 %v48
  %v236 = vunpack.c.l.b16 %v49
  %v237 = vunpack.c.h.b16 %v49
  %v238 = vunpack.c.l.b16 %v50
  %v239 = vunpack.c.l.b16 %v51
  %v240 = vunpack.c.h.b16 %v51
  %v241 = vunpack.c.l.b16 %v52
  %v242 = vunpack.c.h.b16 %v52
  %v243 = vunpack.c.l.b16 %v53
  %v244 = vunpack.c.l.b16 %v54
  %v245 = vunpack.c.h.b16 %v54
  %v246 = vunpack.c.l.b16 %v55
  %v247 = vunpack.c.h.b16 %v55
  %v248 = vunpack.c.l.b16 %v56
  %v249 = vunpack.c.l.b16 %v57
  %v250 = vunpack.c.h.b16 %v57
  %v251 = vunpack.c.l.b16 %v58
  %v252 = vunpack.c.h.b16 %v58
  %v253 = vunpack.c.l.b16 %v59
  %v254 = vunpack.c.l.b16 %v60
  %v255 = vunpack.c.h.b16 %v60
  %v256 = vunpack.c.l.b16 %v61
  %v257 = vunpack.c.h.b16 %v61
  %v258 = vunpack.c.l.b16 %v62
  %v259 = vunpack.c.l.b16 %v63
  %v260 = vunpack.c.h.b16 %v63
  %v261 = vunpack.c.l.b16 %v64
  %v262 = vunpack.c.h.b16 %v64
  %v263 = vunpack.c.l.b16 %v65
  %v264 = vunpack.c.l.b16 %v66
  %v265 = vunpack.c.h.b16 %v66
  %v266 = vunpack.c.l.b16 %v67
  %v267 = vunpack.c.h.b16 %v67
  %v268 = vunpack.c.l.b16 %v68
  %v269 = vpack.c.b16 %v194, %v189
  %v270 = vpack.c.b16 %v195, %v190
  %v271 = vpack.c.b16 %v196, %v191
  %v272 = vpack.c.b16 %v197, %v192
  %v273 = vpack.c.b16 %v198, %v193
  %v274 = vpack.c.b16 %v204, %v199
  %v275 = vpack.c.b16 %v205, %v200
  %v276 = vpack.c.b16 %v206, %v201
  %v277 = vpack.c.b16 %v207, %v202
  %v278 = vpack.c.b16 %v208, %v203
  %v279 = vpack.c.b16 %v214, %v209
  %v280 = vpack.c.b16 %v215, %v210
  %v281 = vpack.c.b16 %v216, %v211
  %v282 = vpack.c.b16 %v217, %v212
  %v283 = vpack.c.b16 %v218, %v213
  %v284 = vpack.c.b16 %v224, %v219
  %v285 = vpack.c.b16 %v225, %v220
  %v286 = vpack.c.b16 %v226, %v221
  %v287 = vpack.c.b16 %v227, %v222
  %v288 = vpack.c.b16 %v228, %v223
  %v289 = vpack.c.b16 %v234, %v229
  %v290 = vpack.c.b16 %v235, %v230
  %v291 = vpack.c.b16 %v236, %v231
  %v292 = vpack.c.b16 %v237, %v232
  %v293 = vpack.c.b16 %v238, %v233
  %v294 = vpack.c.b16 %v244, %v239
  %v295 = vpack.c.b16 %v245, %v240
  %v296 = vpack.c.b16 %v246, %v241
  %v297 = vpack.c.b16 %v247, %v242
  %v298 = vpack.c.b16 %v248, %v243
  %v299 = vpack.c.b16 %v254, %v249
  %v300 = vpack.c.b16 %v255, %v250
  %v301 = vpack.c.b16 %v256, %v251
  %v302 = vpack.c.b16 %v257, %v252
  %v303 = vpack.c.b16 %v258, %v253
  %v304 = vpack.c.b16 %v264, %v259
  %v305 = vpack.c.b16 %v265, %v260
  %v306 = vpack.c.b16 %v266, %v261
  %v307 = vpack.c.b16 %v267, %v262
  %v308 = vpack.c.b16 %v268, %v263
  %v413 = vunpack.c.l.b16 %v69
  %v414 = vunpack.c.l.b16 %v70
  %v415 = vunpack.c.l.b16 %v71
  %v416 = vunpack.c.l.b16 %v72
  %v417 = vunpack.c.l.b16 %v73
  %v418 = vunpack.c.l.b16 %v74
  %v419 = vunpack.c.l.b16 %v75
  %v420 = vunpack.c.l.b16 %v76
  %v421 = vunpack.c.l.b16 %v77
  %v422 = vunpack.c.l.b16 %v78
  %v423 = vunpack.c.l.b16 %v79
  %v424 = vunpack.c.l.b16 %v80
  %v425 = vunpack.c.l.b16 %v81
  %v426 = vunpack.c.l.b16 %v82
  %v427 = vunpack.c.l.b16 %v83
  %v428 = vunpack.c.l.b16 %v84
  %v429 = vunpack.c.l.b16 %v85
  %v430 = vunpack.c.l.b16 %v86
  %v431 = vunpack.c.l.b16 %v87
  %v432 = vunpack.c.l.b16 %v88
  %v433 = vunpack.c.l.b16 %v89
  %v434 = vunpack.c.l.b16 %v90
  %v435 = vunpack.c.l.b16 %v91
  %v436 = vunpack.c.l.b16 %v92
  %v437 = vunpack.c.l.b16 %v93
  %v438 = vunpack.c.l.b16 %v94
  %v439 = vunpack.c.l.b16 %v95
  %v440 = vunpack.c.l.b16 %v96
  %v441 = vunpack.c.l.b16 %v97
  %v442 = vunpack.c.l.b16 %v98
  %v443 = vunpack.c.l.b16 %v99
  %v444 = vunpack.c.l.b16 %v100
  %v445 = vunpack.c.l.b16 %v101
  %v446 = vunpack.c.l.b16 %v102
  %v447 = vunpack.c.l.b16 %v103
  %v448 = vunpack.c.l.b16 %v104
  %v449 = vunpack.c.l.b16 %v105
  %v450 = vunpack.c.l.b16 %v106
  %v451 = vunpack.c.l.b16 %v107
  %v452 = vunpack.c.l.b16 %v108
  %v453 = vunpack.c.l.b16 %v109
  %v454 = vunpack.c.l.b16 %v110
  %v455 = vunpack.c.l.b16 %v111
  %v456 = vunpack.c.l.b16 %v112
  %v457 = vunpack.c.l.b16 %v113
  %v458 = vunpack.c.l.b16 %v114
  %v459 = vunpack.c.l.b16 %v115
  %v460 = vunpack.c.l.b16 %v116
  %v461 = vunpack.c.l.b16 %v117
  %v462 = vunpack.c.l.b16 %v118
  %v463 = vunpack.c.l.b16 %v119
  %v464 = vunpack.c.l.b16 %v120
  %v465 = vunpack.c.l.b16 %v121
  %v466 = vunpack.c.l.b16 %v122
  %v467 = vunpack.c.l.b16 %v123
  %v468 = vunpack.c.l.b16 %v124
  %v469 = vunpack.c.l.b16 %v125
  %v470 = vunpack.c.l.b16 %v126
  %v471 = vunpack.c.l.b16 %v127
  %v472 = vunpack.c.l.b16 %v128
  %v473 = vunpack.c.l.b16 %v129
  %v474 = vunpack.c.l.b16 %v130
  %v475 = vunpack.c.l.b16 %v131
  %v476 = vunpack.c.l.b16 %v132
  %v477 = vunpack.c.l.b16 %v133
  %v478 = vunpack.c.l.b16 %v134
  %v479 = vunpack.c.l.b16 %v135
  %v480 = vunpack.c.l.b16 %v136
  %v481 = vunpack.c.l.b16 %v137
  %v482 = vunpack.c.l.b16 %v138
  %v483 = vunpack.c.l.b16 %v139
  %v484 = vunpack.c.l.b16 %v140
  %v485 = vpack.c.b16 %v414, %v413
  %v486 = vpack.c.b16 %v416, %v415
  %v487 = vpack.c.b16 %v418, %v417
  %v488 = vpack.c.b16 %v420, %v419
  %v489 = vpack.c.b16 %v422, %v421
  %v490 = vpack.c.b16 %v424, %v423
  %v491 = vpack.c.b16 %v426, %v425
  %v492 = vpack.c.b16 %v428, %v427
  %v493 = vpack.c.b16 %v430, %v429
  %v494 = vpack.c.b16 %v432, %v431
  %v495 = vpack.c.b16 %v434, %v433
  %v496 = vpack.c.b16 %v436, %v435
  %v497 = vpack.c.b16 %v438, %v437
  %v498 = vpack.c.b16 %v440, %v439
  %v499 = vpack.c.b16 %v442, %v441
  %v500 = vpack.c.b16 %v444, %v443
  %v501 = vpack.c.b16 %v446, %v445
  %v502 = vpack.c.b16 %v448, %v447
  %v503 = vpack.c.b16 %v450, %v449
  %v504 = vpack.c.b16 %v452, %v451
  %v505 = vpack.c.b16 %v454, %v453
  %v506 = vpack.c.b16 %v456, %v455
  %v507 = vpack.c.b16 %v458, %v457
  %v508 = vpack.c.b16 %v460, %v459
  %v509 = vpack.c.b16 %v462, %v461
  %v510 = vpack.c.b16 %v464, %v463
  %v511 = vpack.c.b16 %v466, %v465
  %v512 = vpack.c.b16 %v468, %v467
  %v513 = vpack.c.b16 %v470, %v469
  %v514 = vpack.c.b16 %v472, %v471
  %v515 = vpack.c.b16 %v474, %v473
  %v516 = vpack.c.b16 %v476, %v475
  %v517 = vpack.c.b16 %v478, %v477
  %v518 = vpack.c.b16 %v480, %v479
  %v519 = vpack.c.b16 %v482, %v481
  %v520 = vpack.c.b16 %v484, %v483
  %vm557 = vcmask 523264
  %v559 = vsel %vm557, %v273, 0
  %v562 = vsel %vm557, %v278, 0
  %v565 = vsel %vm557, %v283, 0
  %v568 = vsel %vm557, %v288, 0
  %v571 = vsel %vm557, %v293, 0
  %v574 = vsel %vm557, %v298, 0
  %v577 = vsel %vm557, %v303, 0
  %v580 = vsel %vm557, %v308, 0
  %582 = vmatprep.subr.bf16.mxu0 0
  %583 = vmatpush1.bf16.msra.mxu0 %v485
  %584 = vmatprep.subr.bf16.mxu0 0
  %585 = vmatpush1.bf16.msra.mxu0 %v486
  %586 = vmatprep.subr.bf16.mxu0 0
  %587 = vmatpush1.bf16.msra.mxu0 %v487
  %588 = vmatprep.subr.bf16.mxu0 0
  %589 = vmatpush1.bf16.msra.mxu0 %v488
  %590 = vmatprep.subr.bf16.mxu0 0
  %591 = vmatpush1.bf16.msra.mxu0 %v489
  %592 = vmatprep.subr.bf16.mxu0 0
  %593 = vmatpush1.bf16.msra.mxu0 %v490
  %594 = vmatprep.subr.bf16.mxu0 0
  %595 = vmatpush1.bf16.msra.mxu0 %v491
  %596 = vmatprep.subr.bf16.mxu0 0
  %597 = vmatpush1.bf16.msra.mxu0 %v492
  %598 = vmatprep.subr.bf16.mxu0 0
  %599 = vmatpush1.bf16.msra.mxu0 %v493
  %600 = vmatprep.subr.bf16.mxu0 0
  %601 = vmatpush1.bf16.msra.mxu0 %v494
  %602 = vmatprep.subr.bf16.mxu0 0
  %603 = vmatpush1.bf16.msra.mxu0 %v495
  %604 = vmatprep.subr.bf16.mxu0 0
  %605 = vmatpush1.bf16.msra.mxu0 %v496
  %606 = vmatprep.subr.bf16.mxu0 0
  %607 = vmatpush1.bf16.msra.mxu0 %v497
  %608 = vmatprep.subr.bf16.mxu0 0
  %609 = vmatpush1.bf16.msra.mxu0 %v498
  %610 = vmatprep.subr.bf16.mxu0 0
  %611 = vmatpush1.bf16.msra.mxu0 %v499
  %612 = vmatprep.subr.bf16.mxu0 0
  %613 = vmatpush1.bf16.msra.mxu0 %v500
  %614 = vmatprep.mubr.bf16.mxu0 %v270
  %615 = vmatmul.mubr.bf16.gmra.mrb[0].mxu0 %v269
  %v616 = vpop.f32.mrb[0].mxu0
  %v617 = vadd.f32 0.0, %v616
  %v618 = vpop.f32.mrb[0].mxu0
  %v619 = vpop.f32.mrb[0].mxu0
  %v620 = vadd.f32 0.0, %v619
  %v621 = vpop.f32.mrb[0].mxu0
  %622 = vmatprep.mubr.bf16.mxu0 %v275
  %623 = vmatmul.mubr.bf16.gmra.mrb[0].mxu0 %v274
  %v624 = vpop.f32.mrb[0].mxu0
  %v625 = vadd.f32 0.0, %v624
  %v626 = vpop.f32.mrb[0].mxu0
  %v627 = vpop.f32.mrb[0].mxu0
  %v628 = vadd.f32 0.0, %v627
  %v629 = vpop.f32.mrb[0].mxu0
  %630 = vmatprep.mubr.bf16.mxu0 %v280
  %631 = vmatmul.mubr.bf16.gmra.mrb[0].mxu0 %v279
  %v632 = vpop.f32.mrb[0].mxu0
  %v633 = vadd.f32 0.0, %v632
  %v634 = vpop.f32.mrb[0].mxu0
  %v635 = vpop.f32.mrb[0].mxu0
  %v636 = vadd.f32 0.0, %v635
  %v637 = vpop.f32.mrb[0].mxu0
  %638 = vmatprep.mubr.bf16.mxu0 %v285
  %639 = vmatmul.mubr.bf16.gmra.mrb[0].mxu0 %v284
  %v640 = vpop.f32.mrb[0].mxu0
  %v641 = vadd.f32 0.0, %v640
  %v642 = vpop.f32.mrb[0].mxu0
  %v643 = vpop.f32.mrb[0].mxu0
  %v644 = vadd.f32 0.0, %v643
  %v645 = vpop.f32.mrb[0].mxu0
  %646 = vmatprep.mubr.bf16.mxu0 %v290
  %647 = vmatmul.mubr.bf16.gmra.mrb[0].mxu0 %v289
  %v648 = vpop.f32.mrb[0].mxu0
  %v649 = vadd.f32 0.0, %v648
  %v650 = vpop.f32.mrb[0].mxu0
  %v651 = vpop.f32.mrb[0].mxu0
  %v652 = vadd.f32 0.0, %v651
  %v653 = vpop.f32.mrb[0].mxu0
  %654 = vmatprep.mubr.bf16.mxu0 %v295
  %655 = vmatmul.mubr.bf16.gmra.mrb[0].mxu0 %v294
  %v656 = vpop.f32.mrb[0].mxu0
  %v657 = vadd.f32 0.0, %v656
  %v658 = vpop.f32.mrb[0].mxu0
  %v659 = vpop.f32.mrb[0].mxu0
  %v660 = vadd.f32 0.0, %v659
  %v661 = vpop.f32.mrb[0].mxu0
  %662 = vmatprep.mubr.bf16.mxu0 %v300
  %663 = vmatmul.mubr.bf16.gmra.mrb[0].mxu0 %v299
  %v664 = vpop.f32.mrb[0].mxu0
  %v665 = vadd.f32 0.0, %v664
  %v666 = vpop.f32.mrb[0].mxu0
  %v667 = vpop.f32.mrb[0].mxu0
  %v668 = vadd.f32 0.0, %v667
  %v669 = vpop.f32.mrb[0].mxu0
  %670 = vmatprep.mubr.bf16.mxu0 %v305
  %671 = vmatmul.mubr.bf16.gmra.mrb[0].mxu0 %v304
  %v672 = vpop.f32.mrb[0].mxu0
  %v673 = vadd.f32 0.0, %v672
  %v674 = vpop.f32.mrb[0].mxu0
  %v675 = vpop.f32.mrb[0].mxu0
  %v676 = vadd.f32 0.0, %v675
  %v677 = vpop.f32.mrb[0].mxu0
  %678 = vdwg.mxu0
  %679 = vmatprep.subr.bf16.mxu0 0
  %680 = vmatpush1.bf16.msra.mxu0 %v501
  %681 = vmatprep.subr.bf16.mxu0 0
  %682 = vmatpush1.bf16.msra.mxu0 %v502
  %683 = vmatprep.subr.bf16.mxu0 0
  %684 = vmatpush1.bf16.msra.mxu0 %v503
  %685 = vmatprep.subr.bf16.mxu0 0
  %686 = vmatpush1.bf16.msra.mxu0 %v504
  %687 = vmatprep.subr.bf16.mxu0 0
  %688 = vmatpush1.bf16.msra.mxu0 %v505
  %689 = vmatprep.subr.bf16.mxu0 0
  %690 = vmatpush1.bf16.msra.mxu0 %v506
  %691 = vmatprep.subr.bf16.mxu0 0
  %692 = vmatpush1.bf16.msra.mxu0 %v507
  %693 = vmatprep.subr.bf16.mxu0 0
  %694 = vmatpush1.bf16.msra.mxu0 %v508
  %695 = vmatprep.subr.bf16.mxu0 0
  %696 = vmatpush1.bf16.msra.mxu0 %v509
  %697 = vmatprep.subr.bf16.mxu0 0
  %698 = vmatpush1.bf16.msra.mxu0 %v510
  %699 = vmatprep.subr.bf16.mxu0 0
  %700 = vmatpush1.bf16.msra.mxu0 %v511
  %701 = vmatprep.subr.bf16.mxu0 0
  %702 = vmatpush1.bf16.msra.mxu0 %v512
  %703 = vmatprep.subr.bf16.mxu0 0
  %704 = vmatpush1.bf16.msra.mxu0 %v513
  %705 = vmatprep.subr.bf16.mxu0 0
  %706 = vmatpush1.bf16.msra.mxu0 %v514
  %707 = vmatprep.subr.bf16.mxu0 0
  %708 = vmatpush1.bf16.msra.mxu0 %v515
  %709 = vmatprep.subr.bf16.mxu0 0
  %710 = vmatpush1.bf16.msra.mxu0 %v516
  %711 = vmatprep.mubr.bf16.mxu0 %v272
  %712 = vmatmul.mubr.bf16.gmra.mrb[0].mxu0 %v271
  %v713 = vpop.f32.mrb[0].mxu0
  %v714 = vadd.f32 %v617, %v713
  %v715 = vpop.f32.mrb[0].mxu0
  %v716 = vpop.f32.mrb[0].mxu0
  %v717 = vadd.f32 %v620, %v716
  %v718 = vpop.f32.mrb[0].mxu0
  %719 = vmatprep.mubr.bf16.mxu0 %v277
  %720 = vmatmul.mubr.bf16.gmra.mrb[0].mxu0 %v276
  %v721 = vpop.f32.mrb[0].mxu0
  %v722 = vadd.f32 %v625, %v721
  %v723 = vpop.f32.mrb[0].mxu0
  %v724 = vpop.f32.mrb[0].mxu0
  %v725 = vadd.f32 %v628, %v724
  %v726 = vpop.f32.mrb[0].mxu0
  %727 = vmatprep.mubr.bf16.mxu0 %v282
  %728 = vmatmul.mubr.bf16.gmra.mrb[0].mxu0 %v281
  %v729 = vpop.f32.mrb[0].mxu0
  %v730 = vadd.f32 %v633, %v729
  %v731 = vpop.f32.mrb[0].mxu0
  %v732 = vpop.f32.mrb[0].mxu0
  %v733 = vadd.f32 %v636, %v732
  %v734 = vpop.f32.mrb[0].mxu0
  %735 = vmatprep.mubr.bf16.mxu0 %v287
  %736 = vmatmul.mubr.bf16.gmra.mrb[0].mxu0 %v286
  %v737 = vpop.f32.mrb[0].mxu0
  %v738 = vadd.f32 %v641, %v737
  %v739 = vpop.f32.mrb[0].mxu0
  %v740 = vpop.f32.mrb[0].mxu0
  %v741 = vadd.f32 %v644, %v740
  %v742 = vpop.f32.mrb[0].mxu0
  %743 = vmatprep.mubr.bf16.mxu0 %v292
  %744 = vmatmul.mubr.bf16.gmra.mrb[0].mxu0 %v291
  %v745 = vpop.f32.mrb[0].mxu0
  %v746 = vadd.f32 %v649, %v745
  %v747 = vpop.f32.mrb[0].mxu0
  %v748 = vpop.f32.mrb[0].mxu0
  %v749 = vadd.f32 %v652, %v748
  %v750 = vpop.f32.mrb[0].mxu0
  %751 = vmatprep.mubr.bf16.mxu0 %v297
  %752 = vmatmul.mubr.bf16.gmra.mrb[0].mxu0 %v296
  %v753 = vpop.f32.mrb[0].mxu0
  %v754 = vadd.f32 %v657, %v753
  %v755 = vpop.f32.mrb[0].mxu0
  %v756 = vpop.f32.mrb[0].mxu0
  %v757 = vadd.f32 %v660, %v756
  %v758 = vpop.f32.mrb[0].mxu0
  %759 = vmatprep.mubr.bf16.mxu0 %v302
  %760 = vmatmul.mubr.bf16.gmra.mrb[0].mxu0 %v301
  %v761 = vpop.f32.mrb[0].mxu0
  %v762 = vadd.f32 %v665, %v761
  %v763 = vpop.f32.mrb[0].mxu0
  %v764 = vpop.f32.mrb[0].mxu0
  %v765 = vadd.f32 %v668, %v764
  %v766 = vpop.f32.mrb[0].mxu0
  %767 = vmatprep.mubr.bf16.mxu0 %v307
  %768 = vmatmul.mubr.bf16.gmra.mrb[0].mxu0 %v306
  %v769 = vpop.f32.mrb[0].mxu0
  %v770 = vadd.f32 %v673, %v769
  %v771 = vpop.f32.mrb[0].mxu0
  %v772 = vpop.f32.mrb[0].mxu0
  %v773 = vadd.f32 %v676, %v772
  %v774 = vpop.f32.mrb[0].mxu0
  %775 = vdwg.mxu0
  %776 = vmatprep.subr.bf16.mxu0 0
  %777 = vmatpush1.bf16.msra.mxu0 %v517
  %778 = vmatprep.subr.bf16.mxu0 0
  %779 = vmatpush1.bf16.msra.mxu0 %v518
  %780 = vmatprep.subr.bf16.mxu0 0
  %781 = vmatpush1.bf16.msra.mxu0 %v519
  %782 = vmatprep.subr.bf16.mxu0 0
  %783 = vmatpush1.bf16.msra.mxu0 %v520
  %784 = vmatprep.subr.bf16.mxu0 0
  %785 = vmatpush1.bf16.msra.mxu0 0
  %786 = vmatprep.subr.bf16.mxu0 0
  %787 = vmatpush1.bf16.msra.mxu0 0
  %788 = vmatprep.subr.bf16.mxu0 0
  %789 = vmatpush1.bf16.msra.mxu0 0
  %790 = vmatprep.subr.bf16.mxu0 0
  %791 = vmatpush1.bf16.msra.mxu0 0
  %792 = vmatprep.subr.bf16.mxu0 0
  %793 = vmatpush1.bf16.msra.mxu0 0
  %794 = vmatprep.subr.bf16.mxu0 0
  %795 = vmatpush1.bf16.msra.mxu0 0
  %796 = vmatprep.subr.bf16.mxu0 0
  %797 = vmatpush1.bf16.msra.mxu0 0
  %798 = vmatprep.subr.bf16.mxu0 0
  %799 = vmatpush1.bf16.msra.mxu0 0
  %800 = vmatprep.subr.bf16.mxu0 0
  %801 = vmatpush1.bf16.msra.mxu0 0
  %802 = vmatprep.subr.bf16.mxu0 0
  %803 = vmatpush1.bf16.msra.mxu0 0
  %804 = vmatprep.subr.bf16.mxu0 0
  %805 = vmatpush1.bf16.msra.mxu0 0
  %806 = vmatprep.subr.bf16.mxu0 0
  %807 = vmatpush1.bf16.msra.mxu0 0
  %808 = vmatprep.mubr.bf16.mxu0 0
  %809 = vmatmul.mubr.bf16.gmra.mrb[0].mxu0 %v559
  %v810 = vpop.f32.mrb[0].mxu0
  %v811 = vadd.f32 %v714, %v810
  %v812 = vpop.f32.mrb[0].mxu0
  %v813 = vpop.f32.mrb[0].mxu0
  %v814 = vadd.f32 %v717, %v813
  %v815 = vpop.f32.mrb[0].mxu0
  %816 = vmatprep.mubr.bf16.mxu0 0
  %817 = vmatmul.mubr.bf16.gmra.mrb[0].mxu0 %v562
  %v818 = vpop.f32.mrb[0].mxu0
  %v819 = vadd.f32 %v722, %v818
  %v820 = vpop.f32.mrb[0].mxu0
  %v821 = vpop.f32.mrb[0].mxu0
  %v822 = vadd.f32 %v725, %v821
  %v823 = vpop.f32.mrb[0].mxu0
  %824 = vmatprep.mubr.bf16.mxu0 0
  %825 = vmatmul.mubr.bf16.gmra.mrb[0].mxu0 %v565
  %v826 = vpop.f32.mrb[0].mxu0
  %v827 = vadd.f32 %v730, %v826
  %v828 = vpop.f32.mrb[0].mxu0
  %v829 = vpop.f32.mrb[0].mxu0
  %v830 = vadd.f32 %v733, %v829
  %v831 = vpop.f32.mrb[0].mxu0
  %832 = vmatprep.mubr.bf16.mxu0 0
  %833 = vmatmul.mubr.bf16.gmra.mrb[0].mxu0 %v568
  %v834 = vpop.f32.mrb[0].mxu0
  %v835 = vadd.f32 %v738, %v834
  %v836 = vpop.f32.mrb[0].mxu0
  %v837 = vpop.f32.mrb[0].mxu0
  %v838 = vadd.f32 %v741, %v837
  %v839 = vpop.f32.mrb[0].mxu0
  %840 = vmatprep.mubr.bf16.mxu0 0
  %841 = vmatmul.mubr.bf16.gmra.mrb[0].mxu0 %v571
  %v842 = vpop.f32.mrb[0].mxu0
  %v843 = vadd.f32 %v746, %v842
  %v844 = vpop.f32.mrb[0].mxu0
  %v845 = vpop.f32.mrb[0].mxu0
  %v846 = vadd.f32 %v749, %v845
  %v847 = vpop.f32.mrb[0].mxu0
  %848 = vmatprep.mubr.bf16.mxu0 0
  %849 = vmatmul.mubr.bf16.gmra.mrb[0].mxu0 %v574
  %v850 = vpop.f32.mrb[0].mxu0
  %v851 = vadd.f32 %v754, %v850
  %v852 = vpop.f32.mrb[0].mxu0
  %v853 = vpop.f32.mrb[0].mxu0
  %v854 = vadd.f32 %v757, %v853
  %v855 = vpop.f32.mrb[0].mxu0
  %856 = vmatprep.mubr.bf16.mxu0 0
  %857 = vmatmul.mubr.bf16.gmra.mrb[0].mxu0 %v577
  %v858 = vpop.f32.mrb[0].mxu0
  %v859 = vadd.f32 %v762, %v858
  %v860 = vpop.f32.mrb[0].mxu0
  %v861 = vpop.f32.mrb[0].mxu0
  %v862 = vadd.f32 %v765, %v861
  %v863 = vpop.f32.mrb[0].mxu0
  %864 = vmatprep.mubr.bf16.mxu0 0
  %865 = vmatmul.mubr.bf16.gmra.mrb[0].mxu0 %v580
  %v866 = vpop.f32.mrb[0].mxu0
  %v867 = vadd.f32 %v770, %v866
  %v868 = vpop.f32.mrb[0].mxu0
  %v869 = vpop.f32.mrb[0].mxu0
  %v870 = vadd.f32 %v773, %v869
  %v871 = vpop.f32.mrb[0].mxu0
  %872 = vdwg.mxu0
  %v873 = vsel %vm557, %v811, 0.0
  %v874 = vsel %vm557, %v814, 0.0
  %v875 = vadd.f32 %v873, %v874
  %v876 = vsel %vm557, %v819, 0.0
  %v877 = vadd.f32 %v875, %v876
  %v878 = vsel %vm557, %v822, 0.0
  %v879 = vadd.f32 %v877, %v878
  %v880 = vsel %vm557, %v827, 0.0
  %v881 = vadd.f32 %v879, %v880
  %v882 = vsel %vm557, %v830, 0.0
  %v883 = vadd.f32 %v881, %v882
  %v884 = vsel %vm557, %v835, 0.0
  %v885 = vadd.f32 %v883, %v884
  %v886 = vsel %vm557, %v838, 0.0
  %v887 = vadd.f32 %v885, %v886
  %v888 = vsel %vm557, %v843, 0.0
  %v889 = vadd.f32 %v887, %v888
  %v890 = vsel %vm557, %v846, 0.0
  %v891 = vadd.f32 %v889, %v890
  %v892 = vsel %vm557, %v851, 0.0
  %v893 = vadd.f32 %v891, %v892
  %v894 = vsel %vm557, %v854, 0.0
  %v895 = vadd.f32 %v893, %v894
  %v896 = vsel %vm557, %v859, 0.0
  %v897 = vadd.f32 %v895, %v896
  %v898 = vsel %vm557, %v862, 0.0
  %v899 = vadd.f32 %v897, %v898
  %v900 = vsel %vm557, %v867, 0.0
  %v901 = vadd.f32 %v899, %v900
  %v902 = vsel %vm557, %v870, 0.0
  %v903 = vadd.f32 %v901, %v902
  %v904 = vrot.slane %v903, 4
  %v905 = vadd.f32 %v903, %v904
  %v906 = vrot.slane %v905, 2
  %v907 = vadd.f32 %v905, %v906
  %v908 = vrot.slane %v907, 1
  %v909 = vadd.f32 %v907, %v908
  %v910 = vrcp.pop 128.0
  %v911 = vmul.f32 %v909, %v910
  %v912 = vsub.f32 %v811, %v911
  %v913 = vsub.f32 %v814, %v911
  %v914 = vsub.f32 %v819, %v911
  %v915 = vsub.f32 %v822, %v911
  %v916 = vsub.f32 %v827, %v911
  %v917 = vsub.f32 %v830, %v911
  %v918 = vsub.f32 %v835, %v911
  %v919 = vsub.f32 %v838, %v911
  %v920 = vsub.f32 %v843, %v911
  %v921 = vsub.f32 %v846, %v911
  %v922 = vsub.f32 %v851, %v911
  %v923 = vsub.f32 %v854, %v911
  %v924 = vsub.f32 %v859, %v911
  %v925 = vsub.f32 %v862, %v911
  %v926 = vsub.f32 %v867, %v911
  %v927 = vsub.f32 %v870, %v911
  %v928 = vmul.f32 %v912, %v912
  %v929 = vmul.f32 %v913, %v913
  %v930 = vmul.f32 %v914, %v914
  %v931 = vmul.f32 %v915, %v915
  %v932 = vmul.f32 %v916, %v916
  %v933 = vmul.f32 %v917, %v917
  %v934 = vmul.f32 %v918, %v918
  %v935 = vmul.f32 %v919, %v919
  %v936 = vmul.f32 %v920, %v920
  %v937 = vmul.f32 %v921, %v921
  %v938 = vmul.f32 %v922, %v922
  %v939 = vmul.f32 %v923, %v923
  %v940 = vmul.f32 %v924, %v924
  %v941 = vmul.f32 %v925, %v925
  %v942 = vmul.f32 %v926, %v926
  %v943 = vmul.f32 %v927, %v927
  %v944 = vsel %vm557, %v928, 0.0
  %v945 = vsel %vm557, %v929, 0.0
  %v946 = vadd.f32 %v944, %v945
  %v947 = vsel %vm557, %v930, 0.0
  %v948 = vadd.f32 %v946, %v947
  %v949 = vsel %vm557, %v931, 0.0
  %v950 = vadd.f32 %v948, %v949
  %v951 = vsel %vm557, %v932, 0.0
  %v952 = vadd.f32 %v950, %v951
  %v953 = vsel %vm557, %v933, 0.0
  %v954 = vadd.f32 %v952, %v953
  %v955 = vsel %vm557, %v934, 0.0
  %v956 = vadd.f32 %v954, %v955
  %v957 = vsel %vm557, %v935, 0.0
  %v958 = vadd.f32 %v956, %v957
  %v959 = vsel %vm557, %v936, 0.0
  %v960 = vadd.f32 %v958, %v959
  %v961 = vsel %vm557, %v937, 0.0
  %v962 = vadd.f32 %v960, %v961
  %v963 = vsel %vm557, %v938, 0.0
  %v964 = vadd.f32 %v962, %v963
  %v965 = vsel %vm557, %v939, 0.0
  %v966 = vadd.f32 %v964, %v965
  %v967 = vsel %vm557, %v940, 0.0
  %v968 = vadd.f32 %v966, %v967
  %v969 = vsel %vm557, %v941, 0.0
  %v970 = vadd.f32 %v968, %v969
  %v971 = vsel %vm557, %v942, 0.0
  %v972 = vadd.f32 %v970, %v971
  %v973 = vsel %vm557, %v943, 0.0
  %v974 = vadd.f32 %v972, %v973
  %v975 = vrot.slane %v974, 4
  %v976 = vadd.f32 %v974, %v975
  %v977 = vrot.slane %v976, 2
  %v978 = vadd.f32 %v976, %v977
  %v979 = vrot.slane %v978, 1
  %v980 = vadd.f32 %v978, %v979
  %v981 = vmul.f32 %v980, %v910
  %v982 = vld [vmem:[%s2] sm:$0x1]
  %v983 = vadd.f32 %v981, 1e-05
  %v984 = vrsqrt.pop %v983
  %v985 = vmul.f32 %v982, %v984
  %v987 = vlaneseq
  %v988 = vshrl.u32 %v987, 7
  %v989 = vsub.s32 0, %v988
  %v990 = vrot.slane %v985, %v989
  %v992 = vmul.f32 %v912, %v990
  %v993 = vmul.f32 %v913, %v990
  %v994 = vmul.f32 %v914, %v990
  %v995 = vmul.f32 %v915, %v990
  %v996 = vmul.f32 %v916, %v990
  %v997 = vmul.f32 %v917, %v990
  %v998 = vmul.f32 %v918, %v990
  %v999 = vmul.f32 %v919, %v990
  %v1000 = vmul.f32 %v920, %v990
  %v1001 = vmul.f32 %v921, %v990
  %v1002 = vmul.f32 %v922, %v990
  %v1003 = vmul.f32 %v923, %v990
  %v1004 = vmul.f32 %v924, %v990
  %v1005 = vmul.f32 %v925, %v990
  %v1006 = vmul.f32 %v926, %v990
  %v1007 = vmul.f32 %v927, %v990
  %v1008 = vld [vmem:[%s3] sm:$0x1]
  %v1010 = vlaneseq
  %v1011 = vshrl.u32 %v1010, 7
  %v1012 = vsub.s32 0, %v1011
  %v1013 = vrot.slane %v1008, %v1012
  %v1015 = vadd.f32 %v992, %v1013
  %v1016 = vadd.f32 %v993, %v1013
  %v1017 = vadd.f32 %v994, %v1013
  %v1018 = vadd.f32 %v995, %v1013
  %v1019 = vadd.f32 %v996, %v1013
  %v1020 = vadd.f32 %v997, %v1013
  %v1021 = vadd.f32 %v998, %v1013
  %v1022 = vadd.f32 %v999, %v1013
  %v1023 = vadd.f32 %v1000, %v1013
  %v1024 = vadd.f32 %v1001, %v1013
  %v1025 = vadd.f32 %v1002, %v1013
  %v1026 = vadd.f32 %v1003, %v1013
  %v1027 = vadd.f32 %v1004, %v1013
  %v1028 = vadd.f32 %v1005, %v1013
  %v1029 = vadd.f32 %v1006, %v1013
  %v1030 = vadd.f32 %v1007, %v1013
  %v1031 = vld [vmem:[%s4] sm:$0xff]
  %v1032 = vld [vmem:[%s4 + $0x8] sm:$0xff]
  %v1033 = vld [vmem:[%s4 + $0x10] sm:$0xff]
  %v1034 = vld [vmem:[%s4 + $0x18] sm:$0xff]
  %v1035 = vld [vmem:[%s4 + $0x20] sm:$0xff]
  %v1036 = vld [vmem:[%s4 + $0x28] sm:$0xff]
  %v1037 = vld [vmem:[%s4 + $0x30] sm:$0xff]
  %v1038 = vld [vmem:[%s4 + $0x38] sm:$0xff]
  %v1039 = vld [vmem:[%s4 + $0x40] sm:$0xff]
  %v1040 = vld [vmem:[%s4 + $0x48] sm:$0xff]
  %v1041 = vld [vmem:[%s4 + $0x50] sm:$0xff]
  %v1042 = vld [vmem:[%s4 + $0x58] sm:$0xff]
  %v1043 = vld [vmem:[%s4 + $0x60] sm:$0xff]
  %v1044 = vld [vmem:[%s4 + $0x68] sm:$0xff]
  %v1045 = vld [vmem:[%s4 + $0x70] sm:$0xff]
  %v1046 = vld [vmem:[%s4 + $0x78] sm:$0xff]
  %v1047 = vadd.f32 %v1015, %v1031
  %v1048 = vadd.f32 %v1016, %v1032
  %v1049 = vadd.f32 %v1017, %v1033
  %v1050 = vadd.f32 %v1018, %v1034
  %v1051 = vadd.f32 %v1019, %v1035
  %v1052 = vadd.f32 %v1020, %v1036
  %v1053 = vadd.f32 %v1021, %v1037
  %v1054 = vadd.f32 %v1022, %v1038
  %v1055 = vadd.f32 %v1023, %v1039
  %v1056 = vadd.f32 %v1024, %v1040
  %v1057 = vadd.f32 %v1025, %v1041
  %v1058 = vadd.f32 %v1026, %v1042
  %v1059 = vadd.f32 %v1027, %v1043
  %v1060 = vadd.f32 %v1028, %v1044
  %v1061 = vadd.f32 %v1029, %v1045
  %v1062 = vadd.f32 %v1030, %v1046
  %v1063 = vmax.f32 %v1047, 0.0
  %v1064 = vmax.f32 %v1048, 0.0
  %v1065 = vmax.f32 %v1049, 0.0
  %v1066 = vmax.f32 %v1050, 0.0
  %v1067 = vmax.f32 %v1051, 0.0
  %v1068 = vmax.f32 %v1052, 0.0
  %v1069 = vmax.f32 %v1053, 0.0
  %v1070 = vmax.f32 %v1054, 0.0
  %v1071 = vmax.f32 %v1055, 0.0
  %v1072 = vmax.f32 %v1056, 0.0
  %v1073 = vmax.f32 %v1057, 0.0
  %v1074 = vmax.f32 %v1058, 0.0
  %v1075 = vmax.f32 %v1059, 0.0
  %v1076 = vmax.f32 %v1060, 0.0
  %v1077 = vmax.f32 %v1061, 0.0
  %v1078 = vmax.f32 %v1062, 0.0
  %1079 = vst.msk [vmem:[%s5] sm:$0xff] %vm557, %v1063
  %1080 = vst.msk [vmem:[%s5 + $0x8] sm:$0xff] %vm557, %v1064
  %1081 = vst.msk [vmem:[%s5 + $0x10] sm:$0xff] %vm557, %v1065
  %1082 = vst.msk [vmem:[%s5 + $0x18] sm:$0xff] %vm557, %v1066
  %1083 = vst.msk [vmem:[%s5 + $0x20] sm:$0xff] %vm557, %v1067
  %1084 = vst.msk [vmem:[%s5 + $0x28] sm:$0xff] %vm557, %v1068
  %1085 = vst.msk [vmem:[%s5 + $0x30] sm:$0xff] %vm557, %v1069
  %1086 = vst.msk [vmem:[%s5 + $0x38] sm:$0xff] %vm557, %v1070
  %1087 = vst.msk [vmem:[%s5 + $0x40] sm:$0xff] %vm557, %v1071
  %1088 = vst.msk [vmem:[%s5 + $0x48] sm:$0xff] %vm557, %v1072
  %1089 = vst.msk [vmem:[%s5 + $0x50] sm:$0xff] %vm557, %v1073
  %1090 = vst.msk [vmem:[%s5 + $0x58] sm:$0xff] %vm557, %v1074
  %1091 = vst.msk [vmem:[%s5 + $0x60] sm:$0xff] %vm557, %v1075
  %1092 = vst.msk [vmem:[%s5 + $0x68] sm:$0xff] %vm557, %v1076
  %1093 = vst.msk [vmem:[%s5 + $0x70] sm:$0xff] %vm557, %v1077
  %1094 = vst.msk [vmem:[%s5 + $0x78] sm:$0xff] %vm557, %v1078
  // Predicated region
  $region22: #{resnet_comp_forward.13} parent=0 // pred_check
    _
  $region23: #{resnet_comp_forward.13} parent=0 // pred_check_branch
    %1096 = sbr.rel (0) target = $region25
  $region24: #{resnet_comp_forward.13} parent=0 // pred_region
    _
  $region25: #{resnet_comp_forward.13} parent=0 // pred_fallthru
    _
  // Predicated region
  $region26: #{resnet_comp_forward.13} parent=0 // pred_check
    _
  $region27: #{resnet_comp_forward.13} parent=0 // pred_check_branch
    %1098 = sbr.rel (0) target = $region29
  $region28: #{resnet_comp_forward.13} parent=0 // pred_region
    _
  $region29: #{resnet_comp_forward.13} parent=0 // pred_fallthru
    _

// kernel: resnet_comp_forward.14
$region0: #{resnet_comp_forward.14}
  #allocation0 [shape = 'u32[]', space=smem, size = 0x4, offset = 0x4, fixed_abs, tag = 'smem constant byte address 0x4 - core index']
  #allocation1 [shape = 'u32[144,128]{1,0:T(1,128)}', space=vmem, size = 0x12000, scoped, tag = 'internal scratch']
  %s0 = inlined_call_operand.vmem [shape: bf16[32,576], index: 0, kind: input, shape index: {}]
  %s1 = inlined_call_operand.vmem [shape: bf16[576,128], index: 1, kind: input, shape index: {}]
  %s2 = inlined_call_operand.vmem [shape: f32[1,128], index: 2, kind: input, shape index: {}]
  %s3 = inlined_call_operand.vmem [shape: f32[1,128], index: 3, kind: input, shape index: {}]
  %s4 = inlined_call_operand.vmem [shape: f32[32,128], index: 4, kind: output, shape index: {}]
  %s5 = sld [smem:[#allocation0]]
  $region26: #{resnet_comp_forward.14} parent=0
    _
  %s7 = ssub.s32 1, %s5
  %s8 = scalar_select 0, %s7, %s5
  // Predicated region
  $region2: #{resnet_comp_forward.14} parent=0 // pred_check
    _
  $region3: #{resnet_comp_forward.14} parent=0 // pred_check_branch
    %10 = sbr.rel (0) target = $region5
  $region4: #{resnet_comp_forward.14} parent=0 // pred_region
    _
  $region5: #{resnet_comp_forward.14} parent=0 // pred_fallthru
    _
  // Predicated region
  $region6: #{resnet_comp_forward.14} parent=0 // pred_check
    _
  $region7: #{resnet_comp_forward.14} parent=0 // pred_check_branch
    %12 = sbr.rel (0) target = $region9
  $region8: #{resnet_comp_forward.14} parent=0 // pred_region
    _
  $region9: #{resnet_comp_forward.14} parent=0 // pred_fallthru
    _
  // Predicated region
  $region10: #{resnet_comp_forward.14} parent=0 // pred_check
    _
  $region11: #{resnet_comp_forward.14} parent=0 // pred_check_branch
    %14 = sbr.rel (0) target = $region13
  $region12: #{resnet_comp_forward.14} parent=0 // pred_region
    _
  $region13: #{resnet_comp_forward.14} parent=0 // pred_fallthru
    _
  // Predicated region
  $region14: #{resnet_comp_forward.14} parent=0 // pred_check
    _
  $region15: #{resnet_comp_forward.14} parent=0 // pred_check_branch
    %16 = sbr.rel (0) target = $region17
  $region16: #{resnet_comp_forward.14} parent=0 // pred_region
    _
  $region17: #{resnet_comp_forward.14} parent=0 // pred_fallthru
    _
  %v18 = vld [vmem:[%s0] sm:$0xff]
  %v19 = vld [vmem:[%s0 + $0x8] sm:$0xff]
  %v20 = vld [vmem:[%s0 + $0x10] sm:$0xf]
  %v21 = vld [vmem:[%s0 + $0x14] sm:$0xff]
  %v22 = vld [vmem:[%s0 + $0x1c] sm:$0xff]
  %v23 = vld [vmem:[%s0 + $0x24] sm:$0xf]
  %v24 = vld [vmem:[%s0 + $0x28] sm:$0xff]
  %v25 = vld [vmem:[%s0 + $0x30] sm:$0xff]
  %v26 = vld [vmem:[%s0 + $0x38] sm:$0xf]
  %v27 = vld [vmem:[%s0 + $0x3c] sm:$0xff]
  %v28 = vld [vmem:[%s0 + $0x44] sm:$0xff]
  %v29 = vld [vmem:[%s0 + $0x4c] sm:$0xf]
  %v30 = vld [vmem:[%s1] sm:$0xf]
  %v31 = vld [vmem:[%s1 + $0x4] sm:$0xf]
  %v32 = vld [vmem:[%s1 + $0x8] sm:$0xf]
  %v33 = vld [vmem:[%s1 + $0xc] sm:$0xf]
  %v34 = vld [vmem:[%s1 + $0x10] sm:$0xf]
  %v35 = vld [vmem:[%s1 + $0x14] sm:$0xf]
  %v36 = vld [vmem:[%s1 + $0x18] sm:$0xf]
  %v37 = vld [vmem:[%s1 + $0x1c] sm:$0xf]
  %v38 = vld [vmem:[%s1 + $0x20] sm:$0xf]
  %v39 = vld [vmem:[%s1 + $0x24] sm:$0xf]
  %v40 = vld [vmem:[%s1 + $0x28] sm:$0xf]
  %v41 = vld [vmem:[%s1 + $0x2c] sm:$0xf]
  %v42 = vld [vmem:[%s1 + $0x30] sm:$0xf]
  %v43 = vld [vmem:[%s1 + $0x34] sm:$0xf]
  %v44 = vld [vmem:[%s1 + $0x38] sm:$0xf]
  %v45 = vld [vmem:[%s1 + $0x3c] sm:$0xf]
  %v46 = vld [vmem:[%s1 + $0x40] sm:$0xf]
  %v47 = vld [vmem:[%s1 + $0x44] sm:$0xf]
  %v48 = vld [vmem:[%s1 + $0x48] sm:$0xf]
  %v49 = vld [vmem:[%s1 + $0x4c] sm:$0xf]
  %v50 = vld [vmem:[%s1 + $0x50] sm:$0xf]
  %v51 = vld [vmem:[%s1 + $0x54] sm:$0xf]
  %v52 = vld [vmem:[%s1 + $0x58] sm:$0xf]
  %v53 = vld [vmem:[%s1 + $0x5c] sm:$0xf]
  %v54 = vld [vmem:[%s1 + $0x60] sm:$0xf]
  %v55 = vld [vmem:[%s1 + $0x64] sm:$0xf]
  %v56 = vld [vmem:[%s1 + $0x68] sm:$0xf]
  %v57 = vld [vmem:[%s1 + $0x6c] sm:$0xf]
  %v58 = vld [vmem:[%s1 + $0x70] sm:$0xf]
  %v59 = vld [vmem:[%s1 + $0x74] sm:$0xf]
  %v60 = vld [vmem:[%s1 + $0x78] sm:$0xf]
  %v61 = vld [vmem:[%s1 + $0x7c] sm:$0xf]
  %v62 = vld [vmem:[%s1 + $0x80] sm:$0xf]
  %v63 = vld [vmem:[%s1 + $0x84] sm:$0xf]
  %v64 = vld [vmem:[%s1 + $0x88] sm:$0xf]
  %v65 = vld [vmem:[%s1 + $0x8c] sm:$0xf]
  %v66 = vld [vmem:[%s1 + $0x90] sm:$0xf]
  %v67 = vld [vmem:[%s1 + $0x94] sm:$0xf]
  %v68 = vld [vmem:[%s1 + $0x98] sm:$0xf]
  %v69 = vld [vmem:[%s1 + $0x9c] sm:$0xf]
  %v70 = vld [vmem:[%s1 + $0xa0] sm:$0xf]
  %v71 = vld [vmem:[%s1 + $0xa4] sm:$0xf]
  %v72 = vld [vmem:[%s1 + $0xa8] sm:$0xf]
  %v73 = vld [vmem:[%s1 + $0xac] sm:$0xf]
  %v74 = vld [vmem:[%s1 + $0xb0] sm:$0xf]
  %v75 = vld [vmem:[%s1 + $0xb4] sm:$0xf]
  %v76 = vld [vmem:[%s1 + $0xb8] sm:$0xf]
  %v77 = vld [vmem:[%s1 + $0xbc] sm:$0xf]
  %v78 = vld [vmem:[%s1 + $0xc0] sm:$0xf]
  %v79 = vld [vmem:[%s1 + $0xc4] sm:$0xf]
  %v80 = vld [vmem:[%s1 + $0xc8] sm:$0xf]
  %v81 = vld [vmem:[%s1 + $0xcc] sm:$0xf]
  %v82 = vld [vmem:[%s1 + $0xd0] sm:$0xf]
  %v83 = vld [vmem:[%s1 + $0xd4] sm:$0xf]
  %v84 = vld [vmem:[%s1 + $0xd8] sm:$0xf]
  %v85 = vld [vmem:[%s1 + $0xdc] sm:$0xf]
  %v86 = vld [vmem:[%s1 + $0xe0] sm:$0xf]
  %v87 = vld [vmem:[%s1 + $0xe4] sm:$0xf]
  %v88 = vld [vmem:[%s1 + $0xe8] sm:$0xf]
  %v89 = vld [vmem:[%s1 + $0xec] sm:$0xf]
  %v90 = vld [vmem:[%s1 + $0xf0] sm:$0xf]
  %v91 = vld [vmem:[%s1 + $0xf4] sm:$0xf]
  %v92 = vld [vmem:[%s1 + $0xf8] sm:$0xf]
  %v93 = vld [vmem:[%s1 + $0xfc] sm:$0xf]
  %v94 = vld [vmem:[%s1 + $0x100] sm:$0xf]
  %v95 = vld [vmem:[%s1 + $0x104] sm:$0xf]
  %v96 = vld [vmem:[%s1 + $0x108] sm:$0xf]
  %v97 = vld [vmem:[%s1 + $0x10c] sm:$0xf]
  %v98 = vld [vmem:[%s1 + $0x110] sm:$0xf]
  %v99 = vld [vmem:[%s1 + $0x114] sm:$0xf]
  %v100 = vld [vmem:[%s1 + $0x118] sm:$0xf]
  %v101 = vld [vmem:[%s1 + $0x11c] sm:$0xf]
  %v114 = vunpack.c.l.b16 %v18
  %v115 = vunpack.c.h.b16 %v18
  %v116 = vunpack.c.l.b16 %v19
  %v117 = vunpack.c.h.b16 %v19
  %v118 = vunpack.c.l.b16 %v20
  %v119 = vunpack.c.l.b16 %v21
  %v120 = vunpack.c.h.b16 %v21
  %v121 = vunpack.c.l.b16 %v22
  %v122 = vunpack.c.h.b16 %v22
  %v123 = vunpack.c.l.b16 %v23
  %v124 = vunpack.c.l.b16 %v24
  %v125 = vunpack.c.h.b16 %v24
  %v126 = vunpack.c.l.b16 %v25
  %v127 = vunpack.c.h.b16 %v25
  %v128 = vunpack.c.l.b16 %v26
  %v129 = vunpack.c.l.b16 %v27
  %v130 = vunpack.c.h.b16 %v27
  %v131 = vunpack.c.l.b16 %v28
  %v132 = vunpack.c.h.b16 %v28
  %v133 = vunpack.c.l.b16 %v29
  %v134 = vpack.c.b16 %v119, %v114
  %v135 = vpack.c.b16 %v120, %v115
  %v136 = vpack.c.b16 %v121, %v116
  %v137 = vpack.c.b16 %v122, %v117
  %v138 = vpack.c.b16 %v123, %v118
  %v139 = vpack.c.b16 %v129, %v124
  %v140 = vpack.c.b16 %v130, %v125
  %v141 = vpack.c.b16 %v131, %v126
  %v142 = vpack.c.b16 %v132, %v127
  %v143 = vpack.c.b16 %v133, %v128
  %v224 = vunpack.c.l.b16 %v30
  %v225 = vunpack.c.l.b16 %v31
  %v226 = vunpack.c.l.b16 %v32
  %v227 = vunpack.c.l.b16 %v33
  %v228 = vunpack.c.l.b16 %v34
  %v229 = vunpack.c.l.b16 %v35
  %v230 = vunpack.c.l.b16 %v36
  %v231 = vunpack.c.l.b16 %v37
  %v232 = vunpack.c.l.b16 %v38
  %v233 = vunpack.c.l.b16 %v39
  %v234 = vunpack.c.l.b16 %v40
  %v235 = vunpack.c.l.b16 %v41
  %v236 = vunpack.c.l.b16 %v42
  %v237 = vunpack.c.l.b16 %v43
  %v238 = vunpack.c.l.b16 %v44
  %v239 = vunpack.c.l.b16 %v45
  %v240 = vunpack.c.l.b16 %v46
  %v241 = vunpack.c.l.b16 %v47
  %v242 = vunpack.c.l.b16 %v48
  %v243 = vunpack.c.l.b16 %v49
  %v244 = vunpack.c.l.b16 %v50
  %v245 = vunpack.c.l.b16 %v51
  %v246 = vunpack.c.l.b16 %v52
  %v247 = vunpack.c.l.b16 %v53
  %v248 = vunpack.c.l.b16 %v54
  %v249 = vunpack.c.l.b16 %v55
  %v250 = vunpack.c.l.b16 %v56
  %v251 = vunpack.c.l.b16 %v57
  %v252 = vunpack.c.l.b16 %v58
  %v253 = vunpack.c.l.b16 %v59
  %v254 = vunpack.c.l.b16 %v60
  %v255 = vunpack.c.l.b16 %v61
  %v256 = vunpack.c.l.b16 %v62
  %v257 = vunpack.c.l.b16 %v63
  %v258 = vunpack.c.l.b16 %v64
  %v259 = vunpack.c.l.b16 %v65
  %v260 = vunpack.c.l.b16 %v66
  %v261 = vunpack.c.l.b16 %v67
  %v262 = vunpack.c.l.b16 %v68
  %v263 = vunpack.c.l.b16 %v69
  %v264 = vunpack.c.l.b16 %v70
  %v265 = vunpack.c.l.b16 %v71
  %v266 = vunpack.c.l.b16 %v72
  %v267 = vunpack.c.l.b16 %v73
  %v268 = vunpack.c.l.b16 %v74
  %v269 = vunpack.c.l.b16 %v75
  %v270 = vunpack.c.l.b16 %v76
  %v271 = vunpack.c.l.b16 %v77
  %v272 = vunpack.c.l.b16 %v78
  %v273 = vunpack.c.l.b16 %v79
  %v274 = vunpack.c.l.b16 %v80
  %v275 = vunpack.c.l.b16 %v81
  %v276 = vunpack.c.l.b16 %v82
  %v277 = vunpack.c.l.b16 %v83
  %v278 = vunpack.c.l.b16 %v84
  %v279 = vunpack.c.l.b16 %v85
  %v280 = vunpack.c.l.b16 %v86
  %v281 = vunpack.c.l.b16 %v87
  %v282 = vunpack.c.l.b16 %v88
  %v283 = vunpack.c.l.b16 %v89
  %v284 = vunpack.c.l.b16 %v90
  %v285 = vunpack.c.l.b16 %v91
  %v286 = vunpack.c.l.b16 %v92
  %v287 = vunpack.c.l.b16 %v93
  %v288 = vunpack.c.l.b16 %v94
  %v289 = vunpack.c.l.b16 %v95
  %v290 = vunpack.c.l.b16 %v96
  %v291 = vunpack.c.l.b16 %v97
  %v292 = vunpack.c.l.b16 %v98
  %v293 = vunpack.c.l.b16 %v99
  %v294 = vunpack.c.l.b16 %v100
  %v295 = vunpack.c.l.b16 %v101
  %v296 = vpack.c.b16 %v225, %v224
  %v297 = vpack.c.b16 %v227, %v226
  %v298 = vpack.c.b16 %v229, %v228
  %v299 = vpack.c.b16 %v231, %v230
  %v300 = vpack.c.b16 %v233, %v232
  %v301 = vpack.c.b16 %v235, %v234
  %v302 = vpack.c.b16 %v237, %v236
  %v303 = vpack.c.b16 %v239, %v238
  %v304 = vpack.c.b16 %v241, %v240
  %v305 = vpack.c.b16 %v243, %v242
  %v306 = vpack.c.b16 %v245, %v244
  %v307 = vpack.c.b16 %v247, %v246
  %v308 = vpack.c.b16 %v249, %v248
  %v309 = vpack.c.b16 %v251, %v250
  %v310 = vpack.c.b16 %v253, %v252
  %v311 = vpack.c.b16 %v255, %v254
  %v312 = vpack.c.b16 %v257, %v256
  %v313 = vpack.c.b16 %v259, %v258
  %v314 = vpack.c.b16 %v261, %v260
  %v315 = vpack.c.b16 %v263, %v262
  %v316 = vpack.c.b16 %v265, %v264
  %v317 = vpack.c.b16 %v267, %v266
  %v318 = vpack.c.b16 %v269, %v268
  %v319 = vpack.c.b16 %v271, %v270
  %v320 = vpack.c.b16 %v273, %v272
  %v321 = vpack.c.b16 %v275, %v274
  %v322 = vpack.c.b16 %v277, %v276
  %v323 = vpack.c.b16 %v279, %v278
  %v324 = vpack.c.b16 %v281, %v280
  %v325 = vpack.c.b16 %v283, %v282
  %v326 = vpack.c.b16 %v285, %v284
  %v327 = vpack.c.b16 %v287, %v286
  %v328 = vpack.c.b16 %v289, %v288
  %v329 = vpack.c.b16 %v291, %v290
  %v330 = vpack.c.b16 %v293, %v292
  %v331 = vpack.c.b16 %v295, %v294
  %vm368 = vcmask 523264
  %v370 = vsel %vm368, %v138, 0
  %v373 = vsel %vm368, %v143, 0
  %375 = vmatprep.subr.bf16.mxu0 0
  %376 = vmatpush1.bf16.msra.mxu0 %v296
  %377 = vmatprep.subr.bf16.mxu0 0
  %378 = vmatpush1.bf16.msra.mxu0 %v297
  %379 = vmatprep.subr.bf16.mxu0 0
  %380 = vmatpush1.bf16.msra.mxu0 %v298
  %381 = vmatprep.subr.bf16.mxu0 0
  %382 = vmatpush1.bf16.msra.mxu0 %v299
  %383 = vmatprep.subr.bf16.mxu0 0
  %384 = vmatpush1.bf16.msra.mxu0 %v300
  %385 = vmatprep.subr.bf16.mxu0 0
  %386 = vmatpush1.bf16.msra.mxu0 %v301
  %387 = vmatprep.subr.bf16.mxu0 0
  %388 = vmatpush1.bf16.msra.mxu0 %v302
  %389 = vmatprep.subr.bf16.mxu0 0
  %390 = vmatpush1.bf16.msra.mxu0 %v303
  %391 = vmatprep.subr.bf16.mxu0 0
  %392 = vmatpush1.bf16.msra.mxu0 %v304
  %393 = vmatprep.subr.bf16.mxu0 0
  %394 = vmatpush1.bf16.msra.mxu0 %v305
  %395 = vmatprep.subr.bf16.mxu0 0
  %396 = vmatpush1.bf16.msra.mxu0 %v306
  %397 = vmatprep.subr.bf16.mxu0 0
  %398 = vmatpush1.bf16.msra.mxu0 %v307
  %399 = vmatprep.subr.bf16.mxu0 0
  %400 = vmatpush1.bf16.msra.mxu0 %v308
  %401 = vmatprep.subr.bf16.mxu0 0
  %402 = vmatpush1.bf16.msra.mxu0 %v309
  %403 = vmatprep.subr.bf16.mxu0 0
  %404 = vmatpush1.bf16.msra.mxu0 %v310
  %405 = vmatprep.subr.bf16.mxu0 0
  %406 = vmatpush1.bf16.msra.mxu0 %v311
  %407 = vmatprep.mubr.bf16.mxu0 %v135
  %408 = vmatmul.mubr.bf16.gmra.mrb[0].mxu0 %v134
  %v409 = vpop.f32.mrb[0].mxu0
  %v410 = vadd.f32 0.0, %v409
  %v411 = vpop.f32.mrb[0].mxu0
  %v412 = vpop.f32.mrb[0].mxu0
  %v413 = vadd.f32 0.0, %v412
  %v414 = vpop.f32.mrb[0].mxu0
  %415 = vmatprep.mubr.bf16.mxu0 %v140
  %416 = vmatmul.mubr.bf16.gmra.mrb[0].mxu0 %v139
  %v417 = vpop.f32.mrb[0].mxu0
  %v418 = vadd.f32 0.0, %v417
  %v419 = vpop.f32.mrb[0].mxu0
  %v420 = vpop.f32.mrb[0].mxu0
  %v421 = vadd.f32 0.0, %v420
  %v422 = vpop.f32.mrb[0].mxu0
  %423 = vdwg.mxu0
  %424 = vmatprep.subr.bf16.mxu0 0
  %425 = vmatpush1.bf16.msra.mxu0 %v312
  %426 = vmatprep.subr.bf16.mxu0 0
  %427 = vmatpush1.bf16.msra.mxu0 %v313
  %428 = vmatprep.subr.bf16.mxu0 0
  %429 = vmatpush1.bf16.msra.mxu0 %v314
  %430 = vmatprep.subr.bf16.mxu0 0
  %431 = vmatpush1.bf16.msra.mxu0 %v315
  %432 = vmatprep.subr.bf16.mxu0 0
  %433 = vmatpush1.bf16.msra.mxu0 %v316
  %434 = vmatprep.subr.bf16.mxu0 0
  %435 = vmatpush1.bf16.msra.mxu0 %v317
  %436 = vmatprep.subr.bf16.mxu0 0
  %437 = vmatpush1.bf16.msra.mxu0 %v318
  %438 = vmatprep.subr.bf16.mxu0 0
  %439 = vmatpush1.bf16.msra.mxu0 %v319
  %440 = vmatprep.subr.bf16.mxu0 0
  %441 = vmatpush1.bf16.msra.mxu0 %v320
  %442 = vmatprep.subr.bf16.mxu0 0
  %443 = vmatpush1.bf16.msra.mxu0 %v321
  %444 = vmatprep.subr.bf16.mxu0 0
  %445 = vmatpush1.bf16.msra.mxu0 %v322
  %446 = vmatprep.subr.bf16.mxu0 0
  %447 = vmatpush1.bf16.msra.mxu0 %v323
  %448 = vmatprep.subr.bf16.mxu0 0
  %449 = vmatpush1.bf16.msra.mxu0 %v324
  %450 = vmatprep.subr.bf16.mxu0 0
  %451 = vmatpush1.bf16.msra.mxu0 %v325
  %452 = vmatprep.subr.bf16.mxu0 0
  %453 = vmatpush1.bf16.msra.mxu0 %v326
  %454 = vmatprep.subr.bf16.mxu0 0
  %455 = vmatpush1.bf16.msra.mxu0 %v327
  %456 = vmatprep.mubr.bf16.mxu0 %v137
  %457 = vmatmul.mubr.bf16.gmra.mrb[0].mxu0 %v136
  %v458 = vpop.f32.mrb[0].mxu0
  %v459 = vadd.f32 %v410, %v458
  %v460 = vpop.f32.mrb[0].mxu0
  %v461 = vpop.f32.mrb[0].mxu0
  %v462 = vadd.f32 %v413, %v461
  %v463 = vpop.f32.mrb[0].mxu0
  %464 = vmatprep.mubr.bf16.mxu0 %v142
  %465 = vmatmul.mubr.bf16.gmra.mrb[0].mxu0 %v141
  %v466 = vpop.f32.mrb[0].mxu0
  %v467 = vadd.f32 %v418, %v466
  %v468 = vpop.f32.mrb[0].mxu0
  %v469 = vpop.f32.mrb[0].mxu0
  %v470 = vadd.f32 %v421, %v469
  %v471 = vpop.f32.mrb[0].mxu0
  %472 = vdwg.mxu0
  %473 = vmatprep.subr.bf16.mxu0 0
  %474 = vmatpush1.bf16.msra.mxu0 %v328
  %475 = vmatprep.subr.bf16.mxu0 0
  %476 = vmatpush1.bf16.msra.mxu0 %v329
  %477 = vmatprep.subr.bf16.mxu0 0
  %478 = vmatpush1.bf16.msra.mxu0 %v330
  %479 = vmatprep.subr.bf16.mxu0 0
  %480 = vmatpush1.bf16.msra.mxu0 %v331
  %481 = vmatprep.subr.bf16.mxu0 0
  %482 = vmatpush1.bf16.msra.mxu0 0
  %483 = vmatprep.subr.bf16.mxu0 0
  %484 = vmatpush1.bf16.msra.mxu0 0
  %485 = vmatprep.subr.bf16.mxu0 0
  %486 = vmatpush1.bf16.msra.mxu0 0
  %487 = vmatprep.subr.bf16.mxu0 0
  %488 = vmatpush1.bf16.msra.mxu0 0
  %489 = vmatprep.subr.bf16.mxu0 0
  %490 = vmatpush1.bf16.msra.mxu0 0
  %491 = vmatprep.subr.bf16.mxu0 0
  %492 = vmatpush1.bf16.msra.mxu0 0
  %493 = vmatprep.subr.bf16.mxu0 0
  %494 = vmatpush1.bf16.msra.mxu0 0
  %495 = vmatprep.subr.bf16.mxu0 0
  %496 = vmatpush1.bf16.msra.mxu0 0
  %497 = vmatprep.subr.bf16.mxu0 0
  %498 = vmatpush1.bf16.msra.mxu0 0
  %499 = vmatprep.subr.bf16.mxu0 0
  %500 = vmatpush1.bf16.msra.mxu0 0
  %501 = vmatprep.subr.bf16.mxu0 0
  %502 = vmatpush1.bf16.msra.mxu0 0
  %503 = vmatprep.subr.bf16.mxu0 0
  %504 = vmatpush1.bf16.msra.mxu0 0
  %505 = vmatprep.mubr.bf16.mxu0 0
  %506 = vmatmul.mubr.bf16.gmra.mrb[0].mxu0 %v370
  %v507 = vpop.f32.mrb[0].mxu0
  %v508 = vadd.f32 %v459, %v507
  %v509 = vpop.f32.mrb[0].mxu0
  %v510 = vpop.f32.mrb[0].mxu0
  %v511 = vadd.f32 %v462, %v510
  %v512 = vpop.f32.mrb[0].mxu0
  %513 = vmatprep.mubr.bf16.mxu0 0
  %514 = vmatmul.mubr.bf16.gmra.mrb[0].mxu0 %v373
  %v515 = vpop.f32.mrb[0].mxu0
  %v516 = vadd.f32 %v467, %v515
  %v517 = vpop.f32.mrb[0].mxu0
  %v518 = vpop.f32.mrb[0].mxu0
  %v519 = vadd.f32 %v470, %v518
  %v520 = vpop.f32.mrb[0].mxu0
  %521 = vdwg.mxu0
  %v522 = vadd.f32 %v508, %v511
  %v523 = vadd.f32 %v522, %v516
  %v524 = vadd.f32 %v523, %v519
  %v525 = vrot.slane %v524, 4
  %v526 = vadd.f32 %v524, %v525
  %v527 = vrot.slane %v526, 2
  %v528 = vadd.f32 %v526, %v527
  %v529 = vrot.slane %v528, 1
  %v530 = vadd.f32 %v528, %v529
  %v531 = vrcp.pop 32.0
  %v532 = vmul.f32 %v530, %v531
  %v533 = vsub.f32 %v508, %v532
  %v534 = vsub.f32 %v511, %v532
  %v535 = vsub.f32 %v516, %v532
  %v536 = vsub.f32 %v519, %v532
  %v537 = vmul.f32 %v533, %v533
  %v538 = vmul.f32 %v534, %v534
  %v539 = vmul.f32 %v535, %v535
  %v540 = vmul.f32 %v536, %v536
  %v541 = vadd.f32 %v537, %v538
  %v542 = vadd.f32 %v541, %v539
  %v543 = vadd.f32 %v542, %v540
  %v544 = vrot.slane %v543, 4
  %v545 = vadd.f32 %v543, %v544
  %v546 = vrot.slane %v545, 2
  %v547 = vadd.f32 %v545, %v546
  %v548 = vrot.slane %v547, 1
  %v549 = vadd.f32 %v547, %v548
  %v550 = vmul.f32 %v549, %v531
  %v551 = vld [vmem:[%s2] sm:$0x1]
  %v552 = vadd.f32 %v550, 1e-05
  %v553 = vrsqrt.pop %v552
  %v554 = vmul.f32 %v551, %v553
  %v556 = vlaneseq
  %v557 = vshrl.u32 %v556, 7
  %v558 = vsub.s32 0, %v557
  %v559 = vrot.slane %v554, %v558
  %v561 = vmul.f32 %v533, %v559
  %v562 = vmul.f32 %v534, %v559
  %v563 = vmul.f32 %v535, %v559
  %v564 = vmul.f32 %v536, %v559
  %v565 = vld [vmem:[%s3] sm:$0x1]
  %v567 = vlaneseq
  %v568 = vshrl.u32 %v567, 7
  %v569 = vsub.s32 0, %v568
  %v570 = vrot.slane %v565, %v569
  %v572 = vadd.f32 %v561, %v570
  %v573 = vadd.f32 %v562, %v570
  %v574 = vadd.f32 %v563, %v570
  %v575 = vadd.f32 %v564, %v570
  %v576 = vmax.f32 %v572, 0.0
  %v577 = vmax.f32 %v573, 0.0
  %v578 = vmax.f32 %v574, 0.0
  %v579 = vmax.f32 %v575, 0.0
  %580 = vst [vmem:[%s4] sm:$0xff] %v576
  %581 = vst [vmem:[%s4 + $0x8] sm:$0xff] %v577
  %582 = vst [vmem:[%s4 + $0x10] sm:$0xff] %v578
  %583 = vst [vmem:[%s4 + $0x18] sm:$0xff] %v579
  // Predicated region
  $region18: #{resnet_comp_forward.14} parent=0 // pred_check
    _
  $region19: #{resnet_comp_forward.14} parent=0 // pred_check_branch
    %585 = sbr.rel (0) target = $region21
  $region20: #{resnet_comp_forward.14} parent=0 // pred_region
    _
  $region21: #{resnet_comp_forward.14} parent=0 // pred_fallthru
    _
  // Predicated region
  $region22: #{resnet_comp_forward.14} parent=0 // pred_check
    _
  $region23: #{resnet_comp_forward.14} parent=0 // pred_check_branch
    %587 = sbr.rel (0) target = $region25
  $region24: #{resnet_comp_forward.14} parent=0 // pred_region
    _
  $region25: #{resnet_comp_forward.14} parent=0 // pred_fallthru
    _

// kernel: resnet_comp_forward.15
$region0: #{resnet_comp_forward.15}
  #allocation0 [shape = 'u32[]', space=smem, size = 0x4, offset = 0x4, fixed_abs, tag = 'smem constant byte address 0x4 - core index']
  #allocation1 [shape = 'u32[144,128]{1,0:T(1,128)}', space=vmem, size = 0x12000, scoped, tag = 'internal scratch']
  %s0 = inlined_call_operand.vmem [shape: bf16[32,64], index: 0, kind: input, shape index: {}]
  %s1 = inlined_call_operand.vmem [shape: bf16[64,128], index: 1, kind: input, shape index: {}]
  %s2 = inlined_call_operand.vmem [shape: f32[1,128], index: 2, kind: input, shape index: {}]
  %s3 = inlined_call_operand.vmem [shape: f32[1,128], index: 3, kind: input, shape index: {}]
  %s4 = inlined_call_operand.vmem [shape: f32[32,128], index: 4, kind: output, shape index: {}]
  %s5 = sld [smem:[#allocation0]]
  $region26: #{resnet_comp_forward.15} parent=0
    _
  %s7 = ssub.s32 1, %s5
  %s8 = scalar_select 0, %s7, %s5
  // Predicated region
  $region2: #{resnet_comp_forward.15} parent=0 // pred_check
    _
  $region3: #{resnet_comp_forward.15} parent=0 // pred_check_branch
    %10 = sbr.rel (0) target = $region5
  $region4: #{resnet_comp_forward.15} parent=0 // pred_region
    _
  $region5: #{resnet_comp_forward.15} parent=0 // pred_fallthru
    _
  // Predicated region
  $region6: #{resnet_comp_forward.15} parent=0 // pred_check
    _
  $region7: #{resnet_comp_forward.15} parent=0 // pred_check_branch
    %12 = sbr.rel (0) target = $region9
  $region8: #{resnet_comp_forward.15} parent=0 // pred_region
    _
  $region9: #{resnet_comp_forward.15} parent=0 // pred_fallthru
    _
  // Predicated region
  $region10: #{resnet_comp_forward.15} parent=0 // pred_check
    _
  $region11: #{resnet_comp_forward.15} parent=0 // pred_check_branch
    %14 = sbr.rel (0) target = $region13
  $region12: #{resnet_comp_forward.15} parent=0 // pred_region
    _
  $region13: #{resnet_comp_forward.15} parent=0 // pred_fallthru
    _
  // Predicated region
  $region14: #{resnet_comp_forward.15} parent=0 // pred_check
    _
  $region15: #{resnet_comp_forward.15} parent=0 // pred_check_branch
    %16 = sbr.rel (0) target = $region17
  $region16: #{resnet_comp_forward.15} parent=0 // pred_region
    _
  $region17: #{resnet_comp_forward.15} parent=0 // pred_fallthru
    _
  %v18 = vld [vmem:[%s0] sm:$0xf]
  %v19 = vld [vmem:[%s0 + $0x4] sm:$0xf]
  %v20 = vld [vmem:[%s0 + $0x8] sm:$0xf]
  %v21 = vld [vmem:[%s0 + $0xc] sm:$0xf]
  %v22 = vld [vmem:[%s1] sm:$0xf]
  %v23 = vld [vmem:[%s1 + $0x4] sm:$0xf]
  %v24 = vld [vmem:[%s1 + $0x8] sm:$0xf]
  %v25 = vld [vmem:[%s1 + $0xc] sm:$0xf]
  %v26 = vld [vmem:[%s1 + $0x10] sm:$0xf]
  %v27 = vld [vmem:[%s1 + $0x14] sm:$0xf]
  %v28 = vld [vmem:[%s1 + $0x18] sm:$0xf]
  %v29 = vld [vmem:[%s1 + $0x1c] sm:$0xf]
  %v34 = vunpack.c.l.b16 %v18
  %v35 = vunpack.c.l.b16 %v19
  %v36 = vunpack.c.l.b16 %v20
  %v37 = vunpack.c.l.b16 %v21
  %v38 = vpack.c.b16 %v35, %v34
  %v39 = vpack.c.b16 %v37, %v36
  %v48 = vunpack.c.l.b16 %v22
  %v49 = vunpack.c.l.b16 %v23
  %v50 = vunpack.c.l.b16 %v24
  %v51 = vunpack.c.l.b16 %v25
  %v52 = vunpack.c.l.b16 %v26
  %v53 = vunpack.c.l.b16 %v27
  %v54 = vunpack.c.l.b16 %v28
  %v55 = vunpack.c.l.b16 %v29
  %v56 = vpack.c.b16 %v49, %v48
  %v57 = vpack.c.b16 %v51, %v50
  %v58 = vpack.c.b16 %v53, %v52
  %v59 = vpack.c.b16 %v55, %v54
  %vm64 = vcmask 523264
  %v66 = vsel %vm64, %v38, 0
  %v69 = vsel %vm64, %v39, 0
  %71 = vmatprep.subr.bf16.mxu0 0
  %72 = vmatpush1.bf16.msra.mxu0 %v56
  %73 = vmatprep.subr.bf16.mxu0 0
  %74 = vmatpush1.bf16.msra.mxu0 %v57
  %75 = vmatprep.subr.bf16.mxu0 0
  %76 = vmatpush1.bf16.msra.mxu0 %v58
  %77 = vmatprep.subr.bf16.mxu0 0
  %78 = vmatpush1.bf16.msra.mxu0 %v59
  %79 = vmatprep.subr.bf16.mxu0 0
  %80 = vmatpush1.bf16.msra.mxu0 0
  %81 = vmatprep.subr.bf16.mxu0 0
  %82 = vmatpush1.bf16.msra.mxu0 0
  %83 = vmatprep.subr.bf16.mxu0 0
  %84 = vmatpush1.bf16.msra.mxu0 0
  %85 = vmatprep.subr.bf16.mxu0 0
  %86 = vmatpush1.bf16.msra.mxu0 0
  %87 = vmatprep.subr.bf16.mxu0 0
  %88 = vmatpush1.bf16.msra.mxu0 0
  %89 = vmatprep.subr.bf16.mxu0 0
  %90 = vmatpush1.bf16.msra.mxu0 0
  %91 = vmatprep.subr.bf16.mxu0 0
  %92 = vmatpush1.bf16.msra.mxu0 0
  %93 = vmatprep.subr.bf16.mxu0 0
  %94 = vmatpush1.bf16.msra.mxu0 0
  %95 = vmatprep.subr.bf16.mxu0 0
  %96 = vmatpush1.bf16.msra.mxu0 0
  %97 = vmatprep.subr.bf16.mxu0 0
  %98 = vmatpush1.bf16.msra.mxu0 0
  %99 = vmatprep.subr.bf16.mxu0 0
  %100 = vmatpush1.bf16.msra.mxu0 0
  %101 = vmatprep.subr.bf16.mxu0 0
  %102 = vmatpush1.bf16.msra.mxu0 0
  %103 = vmatprep.mubr.bf16.mxu0 0
  %104 = vmatmul.mubr.bf16.gmra.mrb[0].mxu0 %v66
  %v105 = vpop.f32.mrb[0].mxu0
  %v106 = vadd.f32 0.0, %v105
  %v107 = vpop.f32.mrb[0].mxu0
  %v108 = vpop.f32.mrb[0].mxu0
  %v109 = vadd.f32 0.0, %v108
  %v110 = vpop.f32.mrb[0].mxu0
  %111 = vmatprep.mubr.bf16.mxu0 0
  %112 = vmatmul.mubr.bf16.gmra.mrb[0].mxu0 %v69
  %v113 = vpop.f32.mrb[0].mxu0
  %v114 = vadd.f32 0.0, %v113
  %v115 = vpop.f32.mrb[0].mxu0
  %v116 = vpop.f32.mrb[0].mxu0
  %v117 = vadd.f32 0.0, %v116
  %v118 = vpop.f32.mrb[0].mxu0
  %119 = vdwg.mxu0
  %v120 = vadd.f32 %v106, %v109
  %v121 = vadd.f32 %v120, %v114
  %v122 = vadd.f32 %v121, %v117
  %v123 = vrot.slane %v122, 4
  %v124 = vadd.f32 %v122, %v123
  %v125 = vrot.slane %v124, 2
  %v126 = vadd.f32 %v124, %v125
  %v127 = vrot.slane %v126, 1
  %v128 = vadd.f32 %v126, %v127
  %v129 = vrcp.pop 32.0
  %v130 = vmul.f32 %v128, %v129
  %v131 = vsub.f32 %v106, %v130
  %v132 = vsub.f32 %v109, %v130
  %v133 = vsub.f32 %v114, %v130
  %v134 = vsub.f32 %v117, %v130
  %v135 = vmul.f32 %v131, %v131
  %v136 = vmul.f32 %v132, %v132
  %v137 = vmul.f32 %v133, %v133
  %v138 = vmul.f32 %v134, %v134
  %v139 = vadd.f32 %v135, %v136
  %v140 = vadd.f32 %v139, %v137
  %v141 = vadd.f32 %v140, %v138
  %v142 = vrot.slane %v141, 4
  %v143 = vadd.f32 %v141, %v142
  %v144 = vrot.slane %v143, 2
  %v145 = vadd.f32 %v143, %v144
  %v146 = vrot.slane %v145, 1
  %v147 = vadd.f32 %v145, %v146
  %v148 = vmul.f32 %v147, %v129
  %v149 = vld [vmem:[%s2] sm:$0x1]
  %v150 = vadd.f32 %v148, 1e-05
  %v151 = vrsqrt.pop %v150
  %v152 = vmul.f32 %v149, %v151
  %v154 = vlaneseq
  %v155 = vshrl.u32 %v154, 7
  %v156 = vsub.s32 0, %v155
  %v157 = vrot.slane %v152, %v156
  %v159 = vmul.f32 %v131, %v157
  %v160 = vmul.f32 %v132, %v157
  %v161 = vmul.f32 %v133, %v157
  %v162 = vmul.f32 %v134, %v157
  %v163 = vld [vmem:[%s3] sm:$0x1]
  %v165 = vlaneseq
  %v166 = vshrl.u32 %v165, 7
  %v167 = vsub.s32 0, %v166
  %v168 = vrot.slane %v163, %v167
  %v170 = vadd.f32 %v159, %v168
  %v171 = vadd.f32 %v160, %v168
  %v172 = vadd.f32 %v161, %v168
  %v173 = vadd.f32 %v162, %v168
  %174 = vst [vmem:[%s4] sm:$0xff] %v170
  %175 = vst [vmem:[%s4 + $0x8] sm:$0xff] %v171
  %176 = vst [vmem:[%s4 + $0x10] sm:$0xff] %v172
  %177 = vst [vmem:[%s4 + $0x18] sm:$0xff] %v173
  // Predicated region
  $region18: #{resnet_comp_forward.15} parent=0 // pred_check
    _
  $region19: #{resnet_comp_forward.15} parent=0 // pred_check_branch
    %179 = sbr.rel (0) target = $region21
  $region20: #{resnet_comp_forward.15} parent=0 // pred_region
    _
  $region21: #{resnet_comp_forward.15} parent=0 // pred_fallthru
    _
  // Predicated region
  $region22: #{resnet_comp_forward.15} parent=0 // pred_check
    _
  $region23: #{resnet_comp_forward.15} parent=0 // pred_check_branch
    %181 = sbr.rel (0) target = $region25
  $region24: #{resnet_comp_forward.15} parent=0 // pred_region
    _
  $region25: #{resnet_comp_forward.15} parent=0 // pred_fallthru
    _

// kernel: resnet_comp_forward.16
$region0: #{resnet_comp_forward.16}
  #allocation0 [shape = 'u32[]', space=smem, size = 0x4, offset = 0x4, fixed_abs, tag = 'smem constant byte address 0x4 - core index']
  #allocation1 [shape = 'u32[144,128]{1,0:T(1,128)}', space=vmem, size = 0x12000, scoped, tag = 'internal scratch']
  %s0 = inlined_call_operand.vmem [shape: bf16[32,1152], index: 0, kind: input, shape index: {}]
  %s1 = inlined_call_operand.vmem [shape: bf16[1152,128], index: 1, kind: input, shape index: {}]
  %s2 = inlined_call_operand.vmem [shape: f32[1,128], index: 2, kind: input, shape index: {}]
  %s3 = inlined_call_operand.vmem [shape: f32[1,128], index: 3, kind: input, shape index: {}]
  %s4 = inlined_call_operand.vmem [shape: f32[32,128], index: 4, kind: input, shape index: {}]
  %s5 = inlined_call_operand.vmem [shape: f32[32,128], index: 5, kind: output, shape index: {}]
  %s6 = sld [smem:[#allocation0]]
  $region30: #{resnet_comp_forward.16} parent=0
    _
  %s8 = ssub.s32 1, %s6
  %s9 = scalar_select 0, %s8, %s6
  // Predicated region
  $region2: #{resnet_comp_forward.16} parent=0 // pred_check
    _
  $region3: #{resnet_comp_forward.16} parent=0 // pred_check_branch
    %11 = sbr.rel (0) target = $region5
  $region4: #{resnet_comp_forward.16} parent=0 // pred_region
    _
  $region5: #{resnet_comp_forward.16} parent=0 // pred_fallthru
    _
  // Predicated region
  $region6: #{resnet_comp_forward.16} parent=0 // pred_check
    _
  $region7: #{resnet_comp_forward.16} parent=0 // pred_check_branch
    %13 = sbr.rel (0) target = $region9
  $region8: #{resnet_comp_forward.16} parent=0 // pred_region
    _
  $region9: #{resnet_comp_forward.16} parent=0 // pred_fallthru
    _
  // Predicated region
  $region10: #{resnet_comp_forward.16} parent=0 // pred_check
    _
  $region11: #{resnet_comp_forward.16} parent=0 // pred_check_branch
    %15 = sbr.rel (0) target = $region13
  $region12: #{resnet_comp_forward.16} parent=0 // pred_region
    _
  $region13: #{resnet_comp_forward.16} parent=0 // pred_fallthru
    _
  // Predicated region
  $region14: #{resnet_comp_forward.16} parent=0 // pred_check
    _
  $region15: #{resnet_comp_forward.16} parent=0 // pred_check_branch
    %17 = sbr.rel (0) target = $region17
  $region16: #{resnet_comp_forward.16} parent=0 // pred_region
    _
  $region17: #{resnet_comp_forward.16} parent=0 // pred_fallthru
    _
  // Predicated region
  $region18: #{resnet_comp_forward.16} parent=0 // pred_check
    _
  $region19: #{resnet_comp_forward.16} parent=0 // pred_check_branch
    %19 = sbr.rel (0) target = $region21
  $region20: #{resnet_comp_forward.16} parent=0 // pred_region
    _
  $region21: #{resnet_comp_forward.16} parent=0 // pred_fallthru
    _
  %v21 = vld [vmem:[%s0] sm:$0xff]
  %v22 = vld [vmem:[%s0 + $0x8] sm:$0xff]
  %v23 = vld [vmem:[%s0 + $0x10] sm:$0xff]
  %v24 = vld [vmem:[%s0 + $0x18] sm:$0xff]
  %v25 = vld [vmem:[%s0 + $0x20] sm:$0xf]
  %v26 = vld [vmem:[%s0 + $0x24] sm:$0xff]
  %v27 = vld [vmem:[%s0 + $0x2c] sm:$0xff]
  %v28 = vld [vmem:[%s0 + $0x34] sm:$0xff]
  %v29 = vld [vmem:[%s0 + $0x3c] sm:$0xff]
  %v30 = vld [vmem:[%s0 + $0x44] sm:$0xf]
  %v31 = vld [vmem:[%s0 + $0x48] sm:$0xff]
  %v32 = vld [vmem:[%s0 + $0x50] sm:$0xff]
  %v33 = vld [vmem:[%s0 + $0x58] sm:$0xff]
  %v34 = vld [vmem:[%s0 + $0x60] sm:$0xff]
  %v35 = vld [vmem:[%s0 + $0x68] sm:$0xf]
  %v36 = vld [vmem:[%s0 + $0x6c] sm:$0xff]
  %v37 = vld [vmem:[%s0 + $0x74] sm:$0xff]
  %v38 = vld [vmem:[%s0 + $0x7c] sm:$0xff]
  %v39 = vld [vmem:[%s0 + $0x84] sm:$0xff]
  %v40 = vld [vmem:[%s0 + $0x8c] sm:$0xf]
  %v41 = vld [vmem:[%s1] sm:$0xf]
  %v42 = vld [vmem:[%s1 + $0x4] sm:$0xf]
  %v43 = vld [vmem:[%s1 + $0x8] sm:$0xf]
  %v44 = vld [vmem:[%s1 + $0xc] sm:$0xf]
  %v45 = vld [vmem:[%s1 + $0x10] sm:$0xf]
  %v46 = vld [vmem:[%s1 + $0x14] sm:$0xf]
  %v47 = vld [vmem:[%s1 + $0x18] sm:$0xf]
  %v48 = vld [vmem:[%s1 + $0x1c] sm:$0xf]
  %v49 = vld [vmem:[%s1 + $0x20] sm:$0xf]
  %v50 = vld [vmem:[%s1 + $0x24] sm:$0xf]
  %v51 = vld [vmem:[%s1 + $0x28] sm:$0xf]
  %v52 = vld [vmem:[%s1 + $0x2c] sm:$0xf]
  %v53 = vld [vmem:[%s1 + $0x30] sm:$0xf]
  %v54 = vld [vmem:[%s1 + $0x34] sm:$0xf]
  %v55 = vld [vmem:[%s1 + $0x38] sm:$0xf]
  %v56 = vld [vmem:[%s1 + $0x3c] sm:$0xf]
  %v57 = vld [vmem:[%s1 + $0x40] sm:$0xf]
  %v58 = vld [vmem:[%s1 + $0x44] sm:$0xf]
  %v59 = vld [vmem:[%s1 + $0x48] sm:$0xf]
  %v60 = vld [vmem:[%s1 + $0x4c] sm:$0xf]
  %v61 = vld [vmem:[%s1 + $0x50] sm:$0xf]
  %v62 = vld [vmem:[%s1 + $0x54] sm:$0xf]
  %v63 = vld [vmem:[%s1 + $0x58] sm:$0xf]
  %v64 = vld [vmem:[%s1 + $0x5c] sm:$0xf]
  %v65 = vld [vmem:[%s1 + $0x60] sm:$0xf]
  %v66 = vld [vmem:[%s1 + $0x64] sm:$0xf]
  %v67 = vld [vmem:[%s1 + $0x68] sm:$0xf]
  %v68 = vld [vmem:[%s1 + $0x6c] sm:$0xf]
  %v69 = vld [vmem:[%s1 + $0x70] sm:$0xf]
  %v70 = vld [vmem:[%s1 + $0x74] sm:$0xf]
  %v71 = vld [vmem:[%s1 + $0x78] sm:$0xf]
  %v72 = vld [vmem:[%s1 + $0x7c] sm:$0xf]
  %v73 = vld [vmem:[%s1 + $0x80] sm:$0xf]
  %v74 = vld [vmem:[%s1 + $0x84] sm:$0xf]
  %v75 = vld [vmem:[%s1 + $0x88] sm:$0xf]
  %v76 = vld [vmem:[%s1 + $0x8c] sm:$0xf]
  %v77 = vld [vmem:[%s1 + $0x90] sm:$0xf]
  %v78 = vld [vmem:[%s1 + $0x94] sm:$0xf]
  %v79 = vld [vmem:[%s1 + $0x98] sm:$0xf]
  %v80 = vld [vmem:[%s1 + $0x9c] sm:$0xf]
  %v81 = vld [vmem:[%s1 + $0xa0] sm:$0xf]
  %v82 = vld [vmem:[%s1 + $0xa4] sm:$0xf]
  %v83 = vld [vmem:[%s1 + $0xa8] sm:$0xf]
  %v84 = vld [vmem:[%s1 + $0xac] sm:$0xf]
  %v85 = vld [vmem:[%s1 + $0xb0] sm:$0xf]
  %v86 = vld [vmem:[%s1 + $0xb4] sm:$0xf]
  %v87 = vld [vmem:[%s1 + $0xb8] sm:$0xf]
  %v88 = vld [vmem:[%s1 + $0xbc] sm:$0xf]
  %v89 = vld [vmem:[%s1 + $0xc0] sm:$0xf]
  %v90 = vld [vmem:[%s1 + $0xc4] sm:$0xf]
  %v91 = vld [vmem:[%s1 + $0xc8] sm:$0xf]
  %v92 = vld [vmem:[%s1 + $0xcc] sm:$0xf]
  %v93 = vld [vmem:[%s1 + $0xd0] sm:$0xf]
  %v94 = vld [vmem:[%s1 + $0xd4] sm:$0xf]
  %v95 = vld [vmem:[%s1 + $0xd8] sm:$0xf]
  %v96 = vld [vmem:[%s1 + $0xdc] sm:$0xf]
  %v97 = vld [vmem:[%s1 + $0xe0] sm:$0xf]
  %v98 = vld [vmem:[%s1 + $0xe4] sm:$0xf]
  %v99 = vld [vmem:[%s1 + $0xe8] sm:$0xf]
  %v100 = vld [vmem:[%s1 + $0xec] sm:$0xf]
  %v101 = vld [vmem:[%s1 + $0xf0] sm:$0xf]
  %v102 = vld [vmem:[%s1 + $0xf4] sm:$0xf]
  %v103 = vld [vmem:[%s1 + $0xf8] sm:$0xf]
  %v104 = vld [vmem:[%s1 + $0xfc] sm:$0xf]
  %v105 = vld [vmem:[%s1 + $0x100] sm:$0xf]
  %v106 = vld [vmem:[%s1 + $0x104] sm:$0xf]
  %v107 = vld [vmem:[%s1 + $0x108] sm:$0xf]
  %v108 = vld [vmem:[%s1 + $0x10c] sm:$0xf]
  %v109 = vld [vmem:[%s1 + $0x110] sm:$0xf]
  %v110 = vld [vmem:[%s1 + $0x114] sm:$0xf]
  %v111 = vld [vmem:[%s1 + $0x118] sm:$0xf]
  %v112 = vld [vmem:[%s1 + $0x11c] sm:$0xf]
  %v113 = vld [vmem:[%s1 + $0x120] sm:$0xf]
  %v114 = vld [vmem:[%s1 + $0x124] sm:$0xf]
  %v115 = vld [vmem:[%s1 + $0x128] sm:$0xf]
  %v116 = vld [vmem:[%s1 + $0x12c] sm:$0xf]
  %v117 = vld [vmem:[%s1 + $0x130] sm:$0xf]
  %v118 = vld [vmem:[%s1 + $0x134] sm:$0xf]
  %v119 = vld [vmem:[%s1 + $0x138] sm:$0xf]
  %v120 = vld [vmem:[%s1 + $0x13c] sm:$0xf]
  %v121 = vld [vmem:[%s1 + $0x140] sm:$0xf]
  %v122 = vld [vmem:[%s1 + $0x144] sm:$0xf]
  %v123 = vld [vmem:[%s1 + $0x148] sm:$0xf]
  %v124 = vld [vmem:[%s1 + $0x14c] sm:$0xf]
  %v125 = vld [vmem:[%s1 + $0x150] sm:$0xf]
  %v126 = vld [vmem:[%s1 + $0x154] sm:$0xf]
  %v127 = vld [vmem:[%s1 + $0x158] sm:$0xf]
  %v128 = vld [vmem:[%s1 + $0x15c] sm:$0xf]
  %v129 = vld [vmem:[%s1 + $0x160] sm:$0xf]
  %v130 = vld [vmem:[%s1 + $0x164] sm:$0xf]
  %v131 = vld [vmem:[%s1 + $0x168] sm:$0xf]
  %v132 = vld [vmem:[%s1 + $0x16c] sm:$0xf]
  %v133 = vld [vmem:[%s1 + $0x170] sm:$0xf]
  %v134 = vld [vmem:[%s1 + $0x174] sm:$0xf]
  %v135 = vld [vmem:[%s1 + $0x178] sm:$0xf]
  %v136 = vld [vmem:[%s1 + $0x17c] sm:$0xf]
  %v137 = vld [vmem:[%s1 + $0x180] sm:$0xf]
  %v138 = vld [vmem:[%s1 + $0x184] sm:$0xf]
  %v139 = vld [vmem:[%s1 + $0x188] sm:$0xf]
  %v140 = vld [vmem:[%s1 + $0x18c] sm:$0xf]
  %v141 = vld [vmem:[%s1 + $0x190] sm:$0xf]
  %v142 = vld [vmem:[%s1 + $0x194] sm:$0xf]
  %v143 = vld [vmem:[%s1 + $0x198] sm:$0xf]
  %v144 = vld [vmem:[%s1 + $0x19c] sm:$0xf]
  %v145 = vld [vmem:[%s1 + $0x1a0] sm:$0xf]
  %v146 = vld [vmem:[%s1 + $0x1a4] sm:$0xf]
  %v147 = vld [vmem:[%s1 + $0x1a8] sm:$0xf]
  %v148 = vld [vmem:[%s1 + $0x1ac] sm:$0xf]
  %v149 = vld [vmem:[%s1 + $0x1b0] sm:$0xf]
  %v150 = vld [vmem:[%s1 + $0x1b4] sm:$0xf]
  %v151 = vld [vmem:[%s1 + $0x1b8] sm:$0xf]
  %v152 = vld [vmem:[%s1 + $0x1bc] sm:$0xf]
  %v153 = vld [vmem:[%s1 + $0x1c0] sm:$0xf]
  %v154 = vld [vmem:[%s1 + $0x1c4] sm:$0xf]
  %v155 = vld [vmem:[%s1 + $0x1c8] sm:$0xf]
  %v156 = vld [vmem:[%s1 + $0x1cc] sm:$0xf]
  %v157 = vld [vmem:[%s1 + $0x1d0] sm:$0xf]
  %v158 = vld [vmem:[%s1 + $0x1d4] sm:$0xf]
  %v159 = vld [vmem:[%s1 + $0x1d8] sm:$0xf]
  %v160 = vld [vmem:[%s1 + $0x1dc] sm:$0xf]
  %v161 = vld [vmem:[%s1 + $0x1e0] sm:$0xf]
  %v162 = vld [vmem:[%s1 + $0x1e4] sm:$0xf]
  %v163 = vld [vmem:[%s1 + $0x1e8] sm:$0xf]
  %v164 = vld [vmem:[%s1 + $0x1ec] sm:$0xf]
  %v165 = vld [vmem:[%s1 + $0x1f0] sm:$0xf]
  %v166 = vld [vmem:[%s1 + $0x1f4] sm:$0xf]
  %v167 = vld [vmem:[%s1 + $0x1f8] sm:$0xf]
  %v168 = vld [vmem:[%s1 + $0x1fc] sm:$0xf]
  %v169 = vld [vmem:[%s1 + $0x200] sm:$0xf]
  %v170 = vld [vmem:[%s1 + $0x204] sm:$0xf]
  %v171 = vld [vmem:[%s1 + $0x208] sm:$0xf]
  %v172 = vld [vmem:[%s1 + $0x20c] sm:$0xf]
  %v173 = vld [vmem:[%s1 + $0x210] sm:$0xf]
  %v174 = vld [vmem:[%s1 + $0x214] sm:$0xf]
  %v175 = vld [vmem:[%s1 + $0x218] sm:$0xf]
  %v176 = vld [vmem:[%s1 + $0x21c] sm:$0xf]
  %v177 = vld [vmem:[%s1 + $0x220] sm:$0xf]
  %v178 = vld [vmem:[%s1 + $0x224] sm:$0xf]
  %v179 = vld [vmem:[%s1 + $0x228] sm:$0xf]
  %v180 = vld [vmem:[%s1 + $0x22c] sm:$0xf]
  %v181 = vld [vmem:[%s1 + $0x230] sm:$0xf]
  %v182 = vld [vmem:[%s1 + $0x234] sm:$0xf]
  %v183 = vld [vmem:[%s1 + $0x238] sm:$0xf]
  %v184 = vld [vmem:[%s1 + $0x23c] sm:$0xf]
  %v205 = vunpack.c.l.b16 %v21
  %v206 = vunpack.c.h.b16 %v21
  %v207 = vunpack.c.l.b16 %v22
  %v208 = vunpack.c.h.b16 %v22
  %v209 = vunpack.c.l.b16 %v23
  %v210 = vunpack.c.h.b16 %v23
  %v211 = vunpack.c.l.b16 %v24
  %v212 = vunpack.c.h.b16 %v24
  %v213 = vunpack.c.l.b16 %v25
  %v214 = vunpack.c.l.b16 %v26
  %v215 = vunpack.c.h.b16 %v26
  %v216 = vunpack.c.l.b16 %v27
  %v217 = vunpack.c.h.b16 %v27
  %v218 = vunpack.c.l.b16 %v28
  %v219 = vunpack.c.h.b16 %v28
  %v220 = vunpack.c.l.b16 %v29
  %v221 = vunpack.c.h.b16 %v29
  %v222 = vunpack.c.l.b16 %v30
  %v223 = vunpack.c.l.b16 %v31
  %v224 = vunpack.c.h.b16 %v31
  %v225 = vunpack.c.l.b16 %v32
  %v226 = vunpack.c.h.b16 %v32
  %v227 = vunpack.c.l.b16 %v33
  %v228 = vunpack.c.h.b16 %v33
  %v229 = vunpack.c.l.b16 %v34
  %v230 = vunpack.c.h.b16 %v34
  %v231 = vunpack.c.l.b16 %v35
  %v232 = vunpack.c.l.b16 %v36
  %v233 = vunpack.c.h.b16 %v36
  %v234 = vunpack.c.l.b16 %v37
  %v235 = vunpack.c.h.b16 %v37
  %v236 = vunpack.c.l.b16 %v38
  %v237 = vunpack.c.h.b16 %v38
  %v238 = vunpack.c.l.b16 %v39
  %v239 = vunpack.c.h.b16 %v39
  %v240 = vunpack.c.l.b16 %v40
  %v241 = vpack.c.b16 %v214, %v205
  %v242 = vpack.c.b16 %v215, %v206
  %v243 = vpack.c.b16 %v216, %v207
  %v244 = vpack.c.b16 %v217, %v208
  %v245 = vpack.c.b16 %v218, %v209
  %v246 = vpack.c.b16 %v219, %v210
  %v247 = vpack.c.b16 %v220, %v211
  %v248 = vpack.c.b16 %v221, %v212
  %v249 = vpack.c.b16 %v222, %v213
  %v250 = vpack.c.b16 %v232, %v223
  %v251 = vpack.c.b16 %v233, %v224
  %v252 = vpack.c.b16 %v234, %v225
  %v253 = vpack.c.b16 %v235, %v226
  %v254 = vpack.c.b16 %v236, %v227
  %v255 = vpack.c.b16 %v237, %v228
  %v256 = vpack.c.b16 %v238, %v229
  %v257 = vpack.c.b16 %v239, %v230
  %v258 = vpack.c.b16 %v240, %v231
  %v421 = vunpack.c.l.b16 %v41
  %v422 = vunpack.c.l.b16 %v42
  %v423 = vunpack.c.l.b16 %v43
  %v424 = vunpack.c.l.b16 %v44
  %v425 = vunpack.c.l.b16 %v45
  %v426 = vunpack.c.l.b16 %v46
  %v427 = vunpack.c.l.b16 %v47
  %v428 = vunpack.c.l.b16 %v48
  %v429 = vunpack.c.l.b16 %v49
  %v430 = vunpack.c.l.b16 %v50
  %v431 = vunpack.c.l.b16 %v51
  %v432 = vunpack.c.l.b16 %v52
  %v433 = vunpack.c.l.b16 %v53
  %v434 = vunpack.c.l.b16 %v54
  %v435 = vunpack.c.l.b16 %v55
  %v436 = vunpack.c.l.b16 %v56
  %v437 = vunpack.c.l.b16 %v57
  %v438 = vunpack.c.l.b16 %v58
  %v439 = vunpack.c.l.b16 %v59
  %v440 = vunpack.c.l.b16 %v60
  %v441 = vunpack.c.l.b16 %v61
  %v442 = vunpack.c.l.b16 %v62
  %v443 = vunpack.c.l.b16 %v63
  %v444 = vunpack.c.l.b16 %v64
  %v445 = vunpack.c.l.b16 %v65
  %v446 = vunpack.c.l.b16 %v66
  %v447 = vunpack.c.l.b16 %v67
  %v448 = vunpack.c.l.b16 %v68
  %v449 = vunpack.c.l.b16 %v69
  %v450 = vunpack.c.l.b16 %v70
  %v451 = vunpack.c.l.b16 %v71
  %v452 = vunpack.c.l.b16 %v72
  %v453 = vunpack.c.l.b16 %v73
  %v454 = vunpack.c.l.b16 %v74
  %v455 = vunpack.c.l.b16 %v75
  %v456 = vunpack.c.l.b16 %v76
  %v457 = vunpack.c.l.b16 %v77
  %v458 = vunpack.c.l.b16 %v78
  %v459 = vunpack.c.l.b16 %v79
  %v460 = vunpack.c.l.b16 %v80
  %v461 = vunpack.c.l.b16 %v81
  %v462 = vunpack.c.l.b16 %v82
  %v463 = vunpack.c.l.b16 %v83
  %v464 = vunpack.c.l.b16 %v84
  %v465 = vunpack.c.l.b16 %v85
  %v466 = vunpack.c.l.b16 %v86
  %v467 = vunpack.c.l.b16 %v87
  %v468 = vunpack.c.l.b16 %v88
  %v469 = vunpack.c.l.b16 %v89
  %v470 = vunpack.c.l.b16 %v90
  %v471 = vunpack.c.l.b16 %v91
  %v472 = vunpack.c.l.b16 %v92
  %v473 = vunpack.c.l.b16 %v93
  %v474 = vunpack.c.l.b16 %v94
  %v475 = vunpack.c.l.b16 %v95
  %v476 = vunpack.c.l.b16 %v96
  %v477 = vunpack.c.l.b16 %v97
  %v478 = vunpack.c.l.b16 %v98
  %v479 = vunpack.c.l.b16 %v99
  %v480 = vunpack.c.l.b16 %v100
  %v481 = vunpack.c.l.b16 %v101
  %v482 = vunpack.c.l.b16 %v102
  %v483 = vunpack.c.l.b16 %v103
  %v484 = vunpack.c.l.b16 %v104
  %v485 = vunpack.c.l.b16 %v105
  %v486 = vunpack.c.l.b16 %v106
  %v487 = vunpack.c.l.b16 %v107
  %v488 = vunpack.c.l.b16 %v108
  %v489 = vunpack.c.l.b16 %v109
  %v490 = vunpack.c.l.b16 %v110
  %v491 = vunpack.c.l.b16 %v111
  %v492 = vunpack.c.l.b16 %v112
  %v493 = vunpack.c.l.b16 %v113
  %v494 = vunpack.c.l.b16 %v114
  %v495 = vunpack.c.l.b16 %v115
  %v496 = vunpack.c.l.b16 %v116
  %v497 = vunpack.c.l.b16 %v117
  %v498 = vunpack.c.l.b16 %v118
  %v499 = vunpack.c.l.b16 %v119
  %v500 = vunpack.c.l.b16 %v120
  %v501 = vunpack.c.l.b16 %v121
  %v502 = vunpack.c.l.b16 %v122
  %v503 = vunpack.c.l.b16 %v123
  %v504 = vunpack.c.l.b16 %v124
  %v505 = vunpack.c.l.b16 %v125
  %v506 = vunpack.c.l.b16 %v126
  %v507 = vunpack.c.l.b16 %v127
  %v508 = vunpack.c.l.b16 %v128
  %v509 = vunpack.c.l.b16 %v129
  %v510 = vunpack.c.l.b16 %v130
  %v511 = vunpack.c.l.b16 %v131
  %v512 = vunpack.c.l.b16 %v132
  %v513 = vunpack.c.l.b16 %v133
  %v514 = vunpack.c.l.b16 %v134
  %v515 = vunpack.c.l.b16 %v135
  %v516 = vunpack.c.l.b16 %v136
  %v517 = vunpack.c.l.b16 %v137
  %v518 = vunpack.c.l.b16 %v138
  %v519 = vunpack.c.l.b16 %v139
  %v520 = vunpack.c.l.b16 %v140
  %v521 = vunpack.c.l.b16 %v141
  %v522 = vunpack.c.l.b16 %v142
  %v523 = vunpack.c.l.b16 %v143
  %v524 = vunpack.c.l.b16 %v144
  %v525 = vunpack.c.l.b16 %v145
  %v526 = vunpack.c.l.b16 %v146
  %v527 = vunpack.c.l.b16 %v147
  %v528 = vunpack.c.l.b16 %v148
  %v529 = vunpack.c.l.b16 %v149
  %v530 = vunpack.c.l.b16 %v150
  %v531 = vunpack.c.l.b16 %v151
  %v532 = vunpack.c.l.b16 %v152
  %v533 = vunpack.c.l.b16 %v153
  %v534 = vunpack.c.l.b16 %v154
  %v535 = vunpack.c.l.b16 %v155
  %v536 = vunpack.c.l.b16 %v156
  %v537 = vunpack.c.l.b16 %v157
  %v538 = vunpack.c.l.b16 %v158
  %v539 = vunpack.c.l.b16 %v159
  %v540 = vunpack.c.l.b16 %v160
  %v541 = vunpack.c.l.b16 %v161
  %v542 = vunpack.c.l.b16 %v162
  %v543 = vunpack.c.l.b16 %v163
  %v544 = vunpack.c.l.b16 %v164
  %v545 = vunpack.c.l.b16 %v165
  %v546 = vunpack.c.l.b16 %v166
  %v547 = vunpack.c.l.b16 %v167
  %v548 = vunpack.c.l.b16 %v168
  %v549 = vunpack.c.l.b16 %v169
  %v550 = vunpack.c.l.b16 %v170
  %v551 = vunpack.c.l.b16 %v171
  %v552 = vunpack.c.l.b16 %v172
  %v553 = vunpack.c.l.b16 %v173
  %v554 = vunpack.c.l.b16 %v174
  %v555 = vunpack.c.l.b16 %v175
  %v556 = vunpack.c.l.b16 %v176
  %v557 = vunpack.c.l.b16 %v177
  %v558 = vunpack.c.l.b16 %v178
  %v559 = vunpack.c.l.b16 %v179
  %v560 = vunpack.c.l.b16 %v180
  %v561 = vunpack.c.l.b16 %v181
  %v562 = vunpack.c.l.b16 %v182
  %v563 = vunpack.c.l.b16 %v183
  %v564 = vunpack.c.l.b16 %v184
  %v565 = vpack.c.b16 %v422, %v421
  %v566 = vpack.c.b16 %v424, %v423
  %v567 = vpack.c.b16 %v426, %v425
  %v568 = vpack.c.b16 %v428, %v427
  %v569 = vpack.c.b16 %v430, %v429
  %v570 = vpack.c.b16 %v432, %v431
  %v571 = vpack.c.b16 %v434, %v433
  %v572 = vpack.c.b16 %v436, %v435
  %v573 = vpack.c.b16 %v438, %v437
  %v574 = vpack.c.b16 %v440, %v439
  %v575 = vpack.c.b16 %v442, %v441
  %v576 = vpack.c.b16 %v444, %v443
  %v577 = vpack.c.b16 %v446, %v445
  %v578 = vpack.c.b16 %v448, %v447
  %v579 = vpack.c.b16 %v450, %v449
  %v580 = vpack.c.b16 %v452, %v451
  %v581 = vpack.c.b16 %v454, %v453
  %v582 = vpack.c.b16 %v456, %v455
  %v583 = vpack.c.b16 %v458, %v457
  %v584 = vpack.c.b16 %v460, %v459
  %v585 = vpack.c.b16 %v462, %v461
  %v586 = vpack.c.b16 %v464, %v463
  %v587 = vpack.c.b16 %v466, %v465
  %v588 = vpack.c.b16 %v468, %v467
  %v589 = vpack.c.b16 %v470, %v469
  %v590 = vpack.c.b16 %v472, %v471
  %v591 = vpack.c.b16 %v474, %v473
  %v592 = vpack.c.b16 %v476, %v475
  %v593 = vpack.c.b16 %v478, %v477
  %v594 = vpack.c.b16 %v480, %v479
  %v595 = vpack.c.b16 %v482, %v481
  %v596 = vpack.c.b16 %v484, %v483
  %v597 = vpack.c.b16 %v486, %v485
  %v598 = vpack.c.b16 %v488, %v487
  %v599 = vpack.c.b16 %v490, %v489
  %v600 = vpack.c.b16 %v492, %v491
  %v601 = vpack.c.b16 %v494, %v493
  %v602 = vpack.c.b16 %v496, %v495
  %v603 = vpack.c.b16 %v498, %v497
  %v604 = vpack.c.b16 %v500, %v499
  %v605 = vpack.c.b16 %v502, %v501
  %v606 = vpack.c.b16 %v504, %v503
  %v607 = vpack.c.b16 %v506, %v505
  %v608 = vpack.c.b16 %v508, %v507
  %v609 = vpack.c.b16 %v510, %v509
  %v610 = vpack.c.b16 %v512, %v511
  %v611 = vpack.c.b16 %v514, %v513
  %v612 = vpack.c.b16 %v516, %v515
  %v613 = vpack.c.b16 %v518, %v517
  %v614 = vpack.c.b16 %v520, %v519
  %v615 = vpack.c.b16 %v522, %v521
  %v616 = vpack.c.b16 %v524, %v523
  %v617 = vpack.c.b16 %v526, %v525
  %v618 = vpack.c.b16 %v528, %v527
  %v619 = vpack.c.b16 %v530, %v529
  %v620 = vpack.c.b16 %v532, %v531
  %v621 = vpack.c.b16 %v534, %v533
  %v622 = vpack.c.b16 %v536, %v535
  %v623 = vpack.c.b16 %v538, %v537
  %v624 = vpack.c.b16 %v540, %v539
  %v625 = vpack.c.b16 %v542, %v541
  %v626 = vpack.c.b16 %v544, %v543
  %v627 = vpack.c.b16 %v546, %v545
  %v628 = vpack.c.b16 %v548, %v547
  %v629 = vpack.c.b16 %v550, %v549
  %v630 = vpack.c.b16 %v552, %v551
  %v631 = vpack.c.b16 %v554, %v553
  %v632 = vpack.c.b16 %v556, %v555
  %v633 = vpack.c.b16 %v558, %v557
  %v634 = vpack.c.b16 %v560, %v559
  %v635 = vpack.c.b16 %v562, %v561
  %v636 = vpack.c.b16 %v564, %v563
  %709 = vmatprep.subr.bf16.mxu0 0
  %710 = vmatpush1.bf16.msra.mxu0 %v565
  %711 = vmatprep.subr.bf16.mxu0 0
  %712 = vmatpush1.bf16.msra.mxu0 %v566
  %713 = vmatprep.subr.bf16.mxu0 0
  %714 = vmatpush1.bf16.msra.mxu0 %v567
  %715 = vmatprep.subr.bf16.mxu0 0
  %716 = vmatpush1.bf16.msra.mxu0 %v568
  %717 = vmatprep.subr.bf16.mxu0 0
  %718 = vmatpush1.bf16.msra.mxu0 %v569
  %719 = vmatprep.subr.bf16.mxu0 0
  %720 = vmatpush1.bf16.msra.mxu0 %v570
  %721 = vmatprep.subr.bf16.mxu0 0
  %722 = vmatpush1.bf16.msra.mxu0 %v571
  %723 = vmatprep.subr.bf16.mxu0 0
  %724 = vmatpush1.bf16.msra.mxu0 %v572
  %725 = vmatprep.subr.bf16.mxu0 0
  %726 = vmatpush1.bf16.msra.mxu0 %v573
  %727 = vmatprep.subr.bf16.mxu0 0
  %728 = vmatpush1.bf16.msra.mxu0 %v574
  %729 = vmatprep.subr.bf16.mxu0 0
  %730 = vmatpush1.bf16.msra.mxu0 %v575
  %731 = vmatprep.subr.bf16.mxu0 0
  %732 = vmatpush1.bf16.msra.mxu0 %v576
  %733 = vmatprep.subr.bf16.mxu0 0
  %734 = vmatpush1.bf16.msra.mxu0 %v577
  %735 = vmatprep.subr.bf16.mxu0 0
  %736 = vmatpush1.bf16.msra.mxu0 %v578
  %737 = vmatprep.subr.bf16.mxu0 0
  %738 = vmatpush1.bf16.msra.mxu0 %v579
  %739 = vmatprep.subr.bf16.mxu0 0
  %740 = vmatpush1.bf16.msra.mxu0 %v580
  %741 = vmatprep.mubr.bf16.mxu0 %v242
  %742 = vmatmul.mubr.bf16.gmra.mrb[0].mxu0 %v241
  %v743 = vpop.f32.mrb[0].mxu0
  %v744 = vadd.f32 0.0, %v743
  %v745 = vpop.f32.mrb[0].mxu0
  %v746 = vpop.f32.mrb[0].mxu0
  %v747 = vadd.f32 0.0, %v746
  %v748 = vpop.f32.mrb[0].mxu0
  %749 = vmatprep.mubr.bf16.mxu0 %v251
  %750 = vmatmul.mubr.bf16.gmra.mrb[0].mxu0 %v250
  %v751 = vpop.f32.mrb[0].mxu0
  %v752 = vadd.f32 0.0, %v751
  %v753 = vpop.f32.mrb[0].mxu0
  %v754 = vpop.f32.mrb[0].mxu0
  %v755 = vadd.f32 0.0, %v754
  %v756 = vpop.f32.mrb[0].mxu0
  %757 = vdwg.mxu0
  %758 = vmatprep.subr.bf16.mxu0 0
  %759 = vmatpush1.bf16.msra.mxu0 %v581
  %760 = vmatprep.subr.bf16.mxu0 0
  %761 = vmatpush1.bf16.msra.mxu0 %v582
  %762 = vmatprep.subr.bf16.mxu0 0
  %763 = vmatpush1.bf16.msra.mxu0 %v583
  %764 = vmatprep.subr.bf16.mxu0 0
  %765 = vmatpush1.bf16.msra.mxu0 %v584
  %766 = vmatprep.subr.bf16.mxu0 0
  %767 = vmatpush1.bf16.msra.mxu0 %v585
  %768 = vmatprep.subr.bf16.mxu0 0
  %769 = vmatpush1.bf16.msra.mxu0 %v586
  %770 = vmatprep.subr.bf16.mxu0 0
  %771 = vmatpush1.bf16.msra.mxu0 %v587
  %772 = vmatprep.subr.bf16.mxu0 0
  %773 = vmatpush1.bf16.msra.mxu0 %v588
  %774 = vmatprep.subr.bf16.mxu0 0
  %775 = vmatpush1.bf16.msra.mxu0 %v589
  %776 = vmatprep.subr.bf16.mxu0 0
  %777 = vmatpush1.bf16.msra.mxu0 %v590
  %778 = vmatprep.subr.bf16.mxu0 0
  %779 = vmatpush1.bf16.msra.mxu0 %v591
  %780 = vmatprep.subr.bf16.mxu0 0
  %781 = vmatpush1.bf16.msra.mxu0 %v592
  %782 = vmatprep.subr.bf16.mxu0 0
  %783 = vmatpush1.bf16.msra.mxu0 %v593
  %784 = vmatprep.subr.bf16.mxu0 0
  %785 = vmatpush1.bf16.msra.mxu0 %v594
  %786 = vmatprep.subr.bf16.mxu0 0
  %787 = vmatpush1.bf16.msra.mxu0 %v595
  %788 = vmatprep.subr.bf16.mxu0 0
  %789 = vmatpush1.bf16.msra.mxu0 %v596
  %790 = vmatprep.mubr.bf16.mxu0 %v244
  %791 = vmatmul.mubr.bf16.gmra.mrb[0].mxu0 %v243
  %v792 = vpop.f32.mrb[0].mxu0
  %v793 = vadd.f32 %v744, %v792
  %v794 = vpop.f32.mrb[0].mxu0
  %v795 = vpop.f32.mrb[0].mxu0
  %v796 = vadd.f32 %v747, %v795
  %v797 = vpop.f32.mrb[0].mxu0
  %798 = vmatprep.mubr.bf16.mxu0 %v253
  %799 = vmatmul.mubr.bf16.gmra.mrb[0].mxu0 %v252
  %v800 = vpop.f32.mrb[0].mxu0
  %v801 = vadd.f32 %v752, %v800
  %v802 = vpop.f32.mrb[0].mxu0
  %v803 = vpop.f32.mrb[0].mxu0
  %v804 = vadd.f32 %v755, %v803
  %v805 = vpop.f32.mrb[0].mxu0
  %806 = vdwg.mxu0
  %807 = vmatprep.subr.bf16.mxu0 0
  %808 = vmatpush1.bf16.msra.mxu0 %v597
  %809 = vmatprep.subr.bf16.mxu0 0
  %810 = vmatpush1.bf16.msra.mxu0 %v598
  %811 = vmatprep.subr.bf16.mxu0 0
  %812 = vmatpush1.bf16.msra.mxu0 %v599
  %813 = vmatprep.subr.bf16.mxu0 0
  %814 = vmatpush1.bf16.msra.mxu0 %v600
  %815 = vmatprep.subr.bf16.mxu0 0
  %816 = vmatpush1.bf16.msra.mxu0 %v601
  %817 = vmatprep.subr.bf16.mxu0 0
  %818 = vmatpush1.bf16.msra.mxu0 %v602
  %819 = vmatprep.subr.bf16.mxu0 0
  %820 = vmatpush1.bf16.msra.mxu0 %v603
  %821 = vmatprep.subr.bf16.mxu0 0
  %822 = vmatpush1.bf16.msra.mxu0 %v604
  %823 = vmatprep.subr.bf16.mxu0 0
  %824 = vmatpush1.bf16.msra.mxu0 %v605
  %825 = vmatprep.subr.bf16.mxu0 0
  %826 = vmatpush1.bf16.msra.mxu0 %v606
  %827 = vmatprep.subr.bf16.mxu0 0
  %828 = vmatpush1.bf16.msra.mxu0 %v607
  %829 = vmatprep.subr.bf16.mxu0 0
  %830 = vmatpush1.bf16.msra.mxu0 %v608
  %831 = vmatprep.subr.bf16.mxu0 0
  %832 = vmatpush1.bf16.msra.mxu0 %v609
  %833 = vmatprep.subr.bf16.mxu0 0
  %834 = vmatpush1.bf16.msra.mxu0 %v610
  %835 = vmatprep.subr.bf16.mxu0 0
  %836 = vmatpush1.bf16.msra.mxu0 %v611
  %837 = vmatprep.subr.bf16.mxu0 0
  %838 = vmatpush1.bf16.msra.mxu0 %v612
  %839 = vmatprep.mubr.bf16.mxu0 %v246
  %840 = vmatmul.mubr.bf16.gmra.mrb[0].mxu0 %v245
  %v841 = vpop.f32.mrb[0].mxu0
  %v842 = vadd.f32 %v793, %v841
  %v843 = vpop.f32.mrb[0].mxu0
  %v844 = vpop.f32.mrb[0].mxu0
  %v845 = vadd.f32 %v796, %v844
  %v846 = vpop.f32.mrb[0].mxu0
  %847 = vmatprep.mubr.bf16.mxu0 %v255
  %848 = vmatmul.mubr.bf16.gmra.mrb[0].mxu0 %v254
  %v849 = vpop.f32.mrb[0].mxu0
  %v850 = vadd.f32 %v801, %v849
  %v851 = vpop.f32.mrb[0].mxu0
  %v852 = vpop.f32.mrb[0].mxu0
  %v853 = vadd.f32 %v804, %v852
  %v854 = vpop.f32.mrb[0].mxu0
  %855 = vdwg.mxu0
  %856 = vmatprep.subr.bf16.mxu0 0
  %857 = vmatpush1.bf16.msra.mxu0 %v613
  %858 = vmatprep.subr.bf16.mxu0 0
  %859 = vmatpush1.bf16.msra.mxu0 %v614
  %860 = vmatprep.subr.bf16.mxu0 0
  %861 = vmatpush1.bf16.msra.mxu0 %v615
  %862 = vmatprep.subr.bf16.mxu0 0
  %863 = vmatpush1.bf16.msra.mxu0 %v616
  %864 = vmatprep.subr.bf16.mxu0 0
  %865 = vmatpush1.bf16.msra.mxu0 %v617
  %866 = vmatprep.subr.bf16.mxu0 0
  %867 = vmatpush1.bf16.msra.mxu0 %v618
  %868 = vmatprep.subr.bf16.mxu0 0
  %869 = vmatpush1.bf16.msra.mxu0 %v619
  %870 = vmatprep.subr.bf16.mxu0 0
  %871 = vmatpush1.bf16.msra.mxu0 %v620
  %872 = vmatprep.subr.bf16.mxu0 0
  %873 = vmatpush1.bf16.msra.mxu0 %v621
  %874 = vmatprep.subr.bf16.mxu0 0
  %875 = vmatpush1.bf16.msra.mxu0 %v622
  %876 = vmatprep.subr.bf16.mxu0 0
  %877 = vmatpush1.bf16.msra.mxu0 %v623
  %878 = vmatprep.subr.bf16.mxu0 0
  %879 = vmatpush1.bf16.msra.mxu0 %v624
  %880 = vmatprep.subr.bf16.mxu0 0
  %881 = vmatpush1.bf16.msra.mxu0 %v625
  %882 = vmatprep.subr.bf16.mxu0 0
  %883 = vmatpush1.bf16.msra.mxu0 %v626
  %884 = vmatprep.subr.bf16.mxu0 0
  %885 = vmatpush1.bf16.msra.mxu0 %v627
  %886 = vmatprep.subr.bf16.mxu0 0
  %887 = vmatpush1.bf16.msra.mxu0 %v628
  %888 = vmatprep.mubr.bf16.mxu0 %v248
  %889 = vmatmul.mubr.bf16.gmra.mrb[0].mxu0 %v247
  %v890 = vpop.f32.mrb[0].mxu0
  %v891 = vadd.f32 %v842, %v890
  %v892 = vpop.f32.mrb[0].mxu0
  %v893 = vpop.f32.mrb[0].mxu0
  %v894 = vadd.f32 %v845, %v893
  %v895 = vpop.f32.mrb[0].mxu0
  %896 = vmatprep.mubr.bf16.mxu0 %v257
  %897 = vmatmul.mubr.bf16.gmra.mrb[0].mxu0 %v256
  %v898 = vpop.f32.mrb[0].mxu0
  %v899 = vadd.f32 %v850, %v898
  %v900 = vpop.f32.mrb[0].mxu0
  %v901 = vpop.f32.mrb[0].mxu0
  %v902 = vadd.f32 %v853, %v901
  %v903 = vpop.f32.mrb[0].mxu0
  %904 = vdwg.mxu0
  %905 = vmatprep.subr.bf16.mxu0 0
  %906 = vmatpush1.bf16.msra.mxu0 %v629
  %907 = vmatprep.subr.bf16.mxu0 0
  %908 = vmatpush1.bf16.msra.mxu0 %v630
  %909 = vmatprep.subr.bf16.mxu0 0
  %910 = vmatpush1.bf16.msra.mxu0 %v631
  %911 = vmatprep.subr.bf16.mxu0 0
  %912 = vmatpush1.bf16.msra.mxu0 %v632
  %913 = vmatprep.subr.bf16.mxu0 0
  %914 = vmatpush1.bf16.msra.mxu0 %v633
  %915 = vmatprep.subr.bf16.mxu0 0
  %916 = vmatpush1.bf16.msra.mxu0 %v634
  %917 = vmatprep.subr.bf16.mxu0 0
  %918 = vmatpush1.bf16.msra.mxu0 %v635
  %919 = vmatprep.subr.bf16.mxu0 0
  %920 = vmatpush1.bf16.msra.mxu0 %v636
  %921 = vmatprep.subr.bf16.mxu0 0
  %922 = vmatpush1.bf16.msra.mxu0 0
  %923 = vmatprep.subr.bf16.mxu0 0
  %924 = vmatpush1.bf16.msra.mxu0 0
  %925 = vmatprep.subr.bf16.mxu0 0
  %926 = vmatpush1.bf16.msra.mxu0 0
  %927 = vmatprep.subr.bf16.mxu0 0
  %928 = vmatpush1.bf16.msra.mxu0 0
  %929 = vmatprep.subr.bf16.mxu0 0
  %930 = vmatpush1.bf16.msra.mxu0 0
  %931 = vmatprep.subr.bf16.mxu0 0
  %932 = vmatpush1.bf16.msra.mxu0 0
  %933 = vmatprep.subr.bf16.mxu0 0
  %934 = vmatpush1.bf16.msra.mxu0 0
  %935 = vmatprep.subr.bf16.mxu0 0
  %936 = vmatpush1.bf16.msra.mxu0 0
  %937 = vmatprep.mubr.bf16.mxu0 0
  %938 = vmatmul.mubr.bf16.gmra.mrb[0].mxu0 %v249
  %v939 = vpop.f32.mrb[0].mxu0
  %v940 = vadd.f32 %v891, %v939
  %v941 = vpop.f32.mrb[0].mxu0
  %v942 = vpop.f32.mrb[0].mxu0
  %v943 = vadd.f32 %v894, %v942
  %v944 = vpop.f32.mrb[0].mxu0
  %945 = vmatprep.mubr.bf16.mxu0 0
  %946 = vmatmul.mubr.bf16.gmra.mrb[0].mxu0 %v258
  %v947 = vpop.f32.mrb[0].mxu0
  %v948 = vadd.f32 %v899, %v947
  %v949 = vpop.f32.mrb[0].mxu0
  %v950 = vpop.f32.mrb[0].mxu0
  %v951 = vadd.f32 %v902, %v950
  %v952 = vpop.f32.mrb[0].mxu0
  %953 = vdwg.mxu0
  %v954 = vadd.f32 %v940, %v943
  %v955 = vadd.f32 %v954, %v948
  %v956 = vadd.f32 %v955, %v951
  %v957 = vrot.slane %v956, 4
  %v958 = vadd.f32 %v956, %v957
  %v959 = vrot.slane %v958, 2
  %v960 = vadd.f32 %v958, %v959
  %v961 = vrot.slane %v960, 1
  %v962 = vadd.f32 %v960, %v961
  %v963 = vrcp.pop 32.0
  %v964 = vmul.f32 %v962, %v963
  %v965 = vsub.f32 %v940, %v964
  %v966 = vsub.f32 %v943, %v964
  %v967 = vsub.f32 %v948, %v964
  %v968 = vsub.f32 %v951, %v964
  %v969 = vmul.f32 %v965, %v965
  %v970 = vmul.f32 %v966, %v966
  %v971 = vmul.f32 %v967, %v967
  %v972 = vmul.f32 %v968, %v968
  %v973 = vadd.f32 %v969, %v970
  %v974 = vadd.f32 %v973, %v971
  %v975 = vadd.f32 %v974, %v972
  %v976 = vrot.slane %v975, 4
  %v977 = vadd.f32 %v975, %v976
  %v978 = vrot.slane %v977, 2
  %v979 = vadd.f32 %v977, %v978
  %v980 = vrot.slane %v979, 1
  %v981 = vadd.f32 %v979, %v980
  %v982 = vmul.f32 %v981, %v963
  %v983 = vld [vmem:[%s2] sm:$0x1]
  %v984 = vadd.f32 %v982, 1e-05
  %v985 = vrsqrt.pop %v984
  %v986 = vmul.f32 %v983, %v985
  %v988 = vlaneseq
  %v989 = vshrl.u32 %v988, 7
  %v990 = vsub.s32 0, %v989
  %v991 = vrot.slane %v986, %v990
  %v993 = vmul.f32 %v965, %v991
  %v994 = vmul.f32 %v966, %v991
  %v995 = vmul.f32 %v967, %v991
  %v996 = vmul.f32 %v968, %v991
  %v997 = vld [vmem:[%s3] sm:$0x1]
  %v999 = vlaneseq
  %v1000 = vshrl.u32 %v999, 7
  %v1001 = vsub.s32 0, %v1000
  %v1002 = vrot.slane %v997, %v1001
  %v1004 = vadd.f32 %v993, %v1002
  %v1005 = vadd.f32 %v994, %v1002
  %v1006 = vadd.f32 %v995, %v1002
  %v1007 = vadd.f32 %v996, %v1002
  %v1008 = vld [vmem:[%s4] sm:$0xff]
  %v1009 = vld [vmem:[%s4 + $0x8] sm:$0xff]
  %v1010 = vld [vmem:[%s4 + $0x10] sm:$0xff]
  %v1011 = vld [vmem:[%s4 + $0x18] sm:$0xff]
  %v1012 = vadd.f32 %v1004, %v1008
  %v1013 = vadd.f32 %v1005, %v1009
  %v1014 = vadd.f32 %v1006, %v1010
  %v1015 = vadd.f32 %v1007, %v1011
  %v1016 = vmax.f32 %v1012, 0.0
  %v1017 = vmax.f32 %v1013, 0.0
  %v1018 = vmax.f32 %v1014, 0.0
  %v1019 = vmax.f32 %v1015, 0.0
  %1020 = vst [vmem:[%s5] sm:$0xff] %v1016
  %1021 = vst [vmem:[%s5 + $0x8] sm:$0xff] %v1017
  %1022 = vst [vmem:[%s5 + $0x10] sm:$0xff] %v1018
  %1023 = vst [vmem:[%s5 + $0x18] sm:$0xff] %v1019
  // Predicated region
  $region22: #{resnet_comp_forward.16} parent=0 // pred_check
    _
  $region23: #{resnet_comp_forward.16} parent=0 // pred_check_branch
    %1025 = sbr.rel (0) target = $region25
  $region24: #{resnet_comp_forward.16} parent=0 // pred_region
    _
  $region25: #{resnet_comp_forward.16} parent=0 // pred_fallthru
    _
  // Predicated region
  $region26: #{resnet_comp_forward.16} parent=0 // pred_check
    _
  $region27: #{resnet_comp_forward.16} parent=0 // pred_check_branch
    %1027 = sbr.rel (0) target = $region29
  $region28: #{resnet_comp_forward.16} parent=0 // pred_region
    _
  $region29: #{resnet_comp_forward.16} parent=0 // pred_fallthru
    _

// kernel: resnet_comp_forward.17
$region0: #{resnet_comp_forward.17}
  #allocation0 [shape = 'u32[]', space=smem, size = 0x4, offset = 0x4, fixed_abs, tag = 'smem constant byte address 0x4 - core index']
  #allocation1 [shape = 'u32[144,128]{1,0:T(1,128)}', space=vmem, size = 0x12000, scoped, tag = 'internal scratch']
  %s0 = inlined_call_operand.vmem [shape: bf16[8,1152], index: 0, kind: input, shape index: {}]
  %s1 = inlined_call_operand.vmem [shape: bf16[1152,256], index: 1, kind: input, shape index: {}]
  %s2 = inlined_call_operand.vmem [shape: f32[1,256], index: 2, kind: input, shape index: {}]
  %s3 = inlined_call_operand.vmem [shape: f32[1,256], index: 3, kind: input, shape index: {}]
  %s4 = inlined_call_operand.vmem [shape: f32[8,256], index: 4, kind: output, shape index: {}]
  %s5 = sld [smem:[#allocation0]]
  $region26: #{resnet_comp_forward.17} parent=0
    _
  %s7 = ssub.s32 1, %s5
  %s8 = scalar_select 0, %s7, %s5
  // Predicated region
  $region2: #{resnet_comp_forward.17} parent=0 // pred_check
    _
  $region3: #{resnet_comp_forward.17} parent=0 // pred_check_branch
    %10 = sbr.rel (0) target = $region5
  $region4: #{resnet_comp_forward.17} parent=0 // pred_region
    _
  $region5: #{resnet_comp_forward.17} parent=0 // pred_fallthru
    _
  // Predicated region
  $region6: #{resnet_comp_forward.17} parent=0 // pred_check
    _
  $region7: #{resnet_comp_forward.17} parent=0 // pred_check_branch
    %12 = sbr.rel (0) target = $region9
  $region8: #{resnet_comp_forward.17} parent=0 // pred_region
    _
  $region9: #{resnet_comp_forward.17} parent=0 // pred_fallthru
    _
  // Predicated region
  $region10: #{resnet_comp_forward.17} parent=0 // pred_check
    _
  $region11: #{resnet_comp_forward.17} parent=0 // pred_check_branch
    %14 = sbr.rel (0) target = $region13
  $region12: #{resnet_comp_forward.17} parent=0 // pred_region
    _
  $region13: #{resnet_comp_forward.17} parent=0 // pred_fallthru
    _
  // Predicated region
  $region14: #{resnet_comp_forward.17} parent=0 // pred_check
    _
  $region15: #{resnet_comp_forward.17} parent=0 // pred_check_branch
    %16 = sbr.rel (0) target = $region17
  $region16: #{resnet_comp_forward.17} parent=0 // pred_region
    _
  $region17: #{resnet_comp_forward.17} parent=0 // pred_fallthru
    _
  %v18 = vld [vmem:[%s0] sm:$0xff]
  %v19 = vld [vmem:[%s0 + $0x8] sm:$0xff]
  %v20 = vld [vmem:[%s0 + $0x10] sm:$0xff]
  %v21 = vld [vmem:[%s0 + $0x18] sm:$0xff]
  %v22 = vld [vmem:[%s0 + $0x20] sm:$0xf]
  %v23 = vld [vmem:[%s1] sm:$0xff]
  %v24 = vld [vmem:[%s1 + $0x8] sm:$0xff]
  %v25 = vld [vmem:[%s1 + $0x10] sm:$0xff]
  %v26 = vld [vmem:[%s1 + $0x18] sm:$0xff]
  %v27 = vld [vmem:[%s1 + $0x20] sm:$0xff]
  %v28 = vld [vmem:[%s1 + $0x28] sm:$0xff]
  %v29 = vld [vmem:[%s1 + $0x30] sm:$0xff]
  %v30 = vld [vmem:[%s1 + $0x38] sm:$0xff]
  %v31 = vld [vmem:[%s1 + $0x40] sm:$0xff]
  %v32 = vld [vmem:[%s1 + $0x48] sm:$0xff]
  %v33 = vld [vmem:[%s1 + $0x50] sm:$0xff]
  %v34 = vld [vmem:[%s1 + $0x58] sm:$0xff]
  %v35 = vld [vmem:[%s1 + $0x60] sm:$0xff]
  %v36 = vld [vmem:[%s1 + $0x68] sm:$0xff]
  %v37 = vld [vmem:[%s1 + $0x70] sm:$0xff]
  %v38 = vld [vmem:[%s1 + $0x78] sm:$0xff]
  %v39 = vld [vmem:[%s1 + $0x80] sm:$0xff]
  %v40 = vld [vmem:[%s1 + $0x88] sm:$0xff]
  %v41 = vld [vmem:[%s1 + $0x90] sm:$0xff]
  %v42 = vld [vmem:[%s1 + $0x98] sm:$0xff]
  %v43 = vld [vmem:[%s1 + $0xa0] sm:$0xff]
  %v44 = vld [vmem:[%s1 + $0xa8] sm:$0xff]
  %v45 = vld [vmem:[%s1 + $0xb0] sm:$0xff]
  %v46 = vld [vmem:[%s1 + $0xb8] sm:$0xff]
  %v47 = vld [vmem:[%s1 + $0xc0] sm:$0xff]
  %v48 = vld [vmem:[%s1 + $0xc8] sm:$0xff]
  %v49 = vld [vmem:[%s1 + $0xd0] sm:$0xff]
  %v50 = vld [vmem:[%s1 + $0xd8] sm:$0xff]
  %v51 = vld [vmem:[%s1 + $0xe0] sm:$0xff]
  %v52 = vld [vmem:[%s1 + $0xe8] sm:$0xff]
  %v53 = vld [vmem:[%s1 + $0xf0] sm:$0xff]
  %v54 = vld [vmem:[%s1 + $0xf8] sm:$0xff]
  %v55 = vld [vmem:[%s1 + $0x100] sm:$0xff]
  %v56 = vld [vmem:[%s1 + $0x108] sm:$0xff]
  %v57 = vld [vmem:[%s1 + $0x110] sm:$0xff]
  %v58 = vld [vmem:[%s1 + $0x118] sm:$0xff]
  %v59 = vld [vmem:[%s1 + $0x120] sm:$0xff]
  %v60 = vld [vmem:[%s1 + $0x128] sm:$0xff]
  %v61 = vld [vmem:[%s1 + $0x130] sm:$0xff]
  %v62 = vld [vmem:[%s1 + $0x138] sm:$0xff]
  %v63 = vld [vmem:[%s1 + $0x140] sm:$0xff]
  %v64 = vld [vmem:[%s1 + $0x148] sm:$0xff]
  %v65 = vld [vmem:[%s1 + $0x150] sm:$0xff]
  %v66 = vld [vmem:[%s1 + $0x158] sm:$0xff]
  %v67 = vld [vmem:[%s1 + $0x160] sm:$0xff]
  %v68 = vld [vmem:[%s1 + $0x168] sm:$0xff]
  %v69 = vld [vmem:[%s1 + $0x170] sm:$0xff]
  %v70 = vld [vmem:[%s1 + $0x178] sm:$0xff]
  %v71 = vld [vmem:[%s1 + $0x180] sm:$0xff]
  %v72 = vld [vmem:[%s1 + $0x188] sm:$0xff]
  %v73 = vld [vmem:[%s1 + $0x190] sm:$0xff]
  %v74 = vld [vmem:[%s1 + $0x198] sm:$0xff]
  %v75 = vld [vmem:[%s1 + $0x1a0] sm:$0xff]
  %v76 = vld [vmem:[%s1 + $0x1a8] sm:$0xff]
  %v77 = vld [vmem:[%s1 + $0x1b0] sm:$0xff]
  %v78 = vld [vmem:[%s1 + $0x1b8] sm:$0xff]
  %v79 = vld [vmem:[%s1 + $0x1c0] sm:$0xff]
  %v80 = vld [vmem:[%s1 + $0x1c8] sm:$0xff]
  %v81 = vld [vmem:[%s1 + $0x1d0] sm:$0xff]
  %v82 = vld [vmem:[%s1 + $0x1d8] sm:$0xff]
  %v83 = vld [vmem:[%s1 + $0x1e0] sm:$0xff]
  %v84 = vld [vmem:[%s1 + $0x1e8] sm:$0xff]
  %v85 = vld [vmem:[%s1 + $0x1f0] sm:$0xff]
  %v86 = vld [vmem:[%s1 + $0x1f8] sm:$0xff]
  %v87 = vld [vmem:[%s1 + $0x200] sm:$0xff]
  %v88 = vld [vmem:[%s1 + $0x208] sm:$0xff]
  %v89 = vld [vmem:[%s1 + $0x210] sm:$0xff]
  %v90 = vld [vmem:[%s1 + $0x218] sm:$0xff]
  %v91 = vld [vmem:[%s1 + $0x220] sm:$0xff]
  %v92 = vld [vmem:[%s1 + $0x228] sm:$0xff]
  %v93 = vld [vmem:[%s1 + $0x230] sm:$0xff]
  %v94 = vld [vmem:[%s1 + $0x238] sm:$0xff]
  %v95 = vld [vmem:[%s1 + $0x240] sm:$0xff]
  %v96 = vld [vmem:[%s1 + $0x248] sm:$0xff]
  %v97 = vld [vmem:[%s1 + $0x250] sm:$0xff]
  %v98 = vld [vmem:[%s1 + $0x258] sm:$0xff]
  %v99 = vld [vmem:[%s1 + $0x260] sm:$0xff]
  %v100 = vld [vmem:[%s1 + $0x268] sm:$0xff]
  %v101 = vld [vmem:[%s1 + $0x270] sm:$0xff]
  %v102 = vld [vmem:[%s1 + $0x278] sm:$0xff]
  %v103 = vld [vmem:[%s1 + $0x280] sm:$0xff]
  %v104 = vld [vmem:[%s1 + $0x288] sm:$0xff]
  %v105 = vld [vmem:[%s1 + $0x290] sm:$0xff]
  %v106 = vld [vmem:[%s1 + $0x298] sm:$0xff]
  %v107 = vld [vmem:[%s1 + $0x2a0] sm:$0xff]
  %v108 = vld [vmem:[%s1 + $0x2a8] sm:$0xff]
  %v109 = vld [vmem:[%s1 + $0x2b0] sm:$0xff]
  %v110 = vld [vmem:[%s1 + $0x2b8] sm:$0xff]
  %v111 = vld [vmem:[%s1 + $0x2c0] sm:$0xff]
  %v112 = vld [vmem:[%s1 + $0x2c8] sm:$0xff]
  %v113 = vld [vmem:[%s1 + $0x2d0] sm:$0xff]
  %v114 = vld [vmem:[%s1 + $0x2d8] sm:$0xff]
  %v115 = vld [vmem:[%s1 + $0x2e0] sm:$0xff]
  %v116 = vld [vmem:[%s1 + $0x2e8] sm:$0xff]
  %v117 = vld [vmem:[%s1 + $0x2f0] sm:$0xff]
  %v118 = vld [vmem:[%s1 + $0x2f8] sm:$0xff]
  %v119 = vld [vmem:[%s1 + $0x300] sm:$0xff]
  %v120 = vld [vmem:[%s1 + $0x308] sm:$0xff]
  %v121 = vld [vmem:[%s1 + $0x310] sm:$0xff]
  %v122 = vld [vmem:[%s1 + $0x318] sm:$0xff]
  %v123 = vld [vmem:[%s1 + $0x320] sm:$0xff]
  %v124 = vld [vmem:[%s1 + $0x328] sm:$0xff]
  %v125 = vld [vmem:[%s1 + $0x330] sm:$0xff]
  %v126 = vld [vmem:[%s1 + $0x338] sm:$0xff]
  %v127 = vld [vmem:[%s1 + $0x340] sm:$0xff]
  %v128 = vld [vmem:[%s1 + $0x348] sm:$0xff]
  %v129 = vld [vmem:[%s1 + $0x350] sm:$0xff]
  %v130 = vld [vmem:[%s1 + $0x358] sm:$0xff]
  %v131 = vld [vmem:[%s1 + $0x360] sm:$0xff]
  %v132 = vld [vmem:[%s1 + $0x368] sm:$0xff]
  %v133 = vld [vmem:[%s1 + $0x370] sm:$0xff]
  %v134 = vld [vmem:[%s1 + $0x378] sm:$0xff]
  %v135 = vld [vmem:[%s1 + $0x380] sm:$0xff]
  %v136 = vld [vmem:[%s1 + $0x388] sm:$0xff]
  %v137 = vld [vmem:[%s1 + $0x390] sm:$0xff]
  %v138 = vld [vmem:[%s1 + $0x398] sm:$0xff]
  %v139 = vld [vmem:[%s1 + $0x3a0] sm:$0xff]
  %v140 = vld [vmem:[%s1 + $0x3a8] sm:$0xff]
  %v141 = vld [vmem:[%s1 + $0x3b0] sm:$0xff]
  %v142 = vld [vmem:[%s1 + $0x3b8] sm:$0xff]
  %v143 = vld [vmem:[%s1 + $0x3c0] sm:$0xff]
  %v144 = vld [vmem:[%s1 + $0x3c8] sm:$0xff]
  %v145 = vld [vmem:[%s1 + $0x3d0] sm:$0xff]
  %v146 = vld [vmem:[%s1 + $0x3d8] sm:$0xff]
  %v147 = vld [vmem:[%s1 + $0x3e0] sm:$0xff]
  %v148 = vld [vmem:[%s1 + $0x3e8] sm:$0xff]
  %v149 = vld [vmem:[%s1 + $0x3f0] sm:$0xff]
  %v150 = vld [vmem:[%s1 + $0x3f8] sm:$0xff]
  %v151 = vld [vmem:[%s1 + $0x400] sm:$0xff]
  %v152 = vld [vmem:[%s1 + $0x408] sm:$0xff]
  %v153 = vld [vmem:[%s1 + $0x410] sm:$0xff]
  %v154 = vld [vmem:[%s1 + $0x418] sm:$0xff]
  %v155 = vld [vmem:[%s1 + $0x420] sm:$0xff]
  %v156 = vld [vmem:[%s1 + $0x428] sm:$0xff]
  %v157 = vld [vmem:[%s1 + $0x430] sm:$0xff]
  %v158 = vld [vmem:[%s1 + $0x438] sm:$0xff]
  %v159 = vld [vmem:[%s1 + $0x440] sm:$0xff]
  %v160 = vld [vmem:[%s1 + $0x448] sm:$0xff]
  %v161 = vld [vmem:[%s1 + $0x450] sm:$0xff]
  %v162 = vld [vmem:[%s1 + $0x458] sm:$0xff]
  %v163 = vld [vmem:[%s1 + $0x460] sm:$0xff]
  %v164 = vld [vmem:[%s1 + $0x468] sm:$0xff]
  %v165 = vld [vmem:[%s1 + $0x470] sm:$0xff]
  %v166 = vld [vmem:[%s1 + $0x478] sm:$0xff]
  %v172 = vunpack.c.l.b16 %v18
  %v173 = vunpack.c.h.b16 %v18
  %v174 = vunpack.c.l.b16 %v19
  %v175 = vunpack.c.h.b16 %v19
  %v176 = vunpack.c.l.b16 %v20
  %v177 = vunpack.c.h.b16 %v20
  %v178 = vunpack.c.l.b16 %v21
  %v179 = vunpack.c.h.b16 %v21
  %v180 = vunpack.c.l.b16 %v22
  %v181 = vpack.c.b16 %v172, %v172
  %v182 = vpack.c.b16 %v173, %v173
  %v183 = vpack.c.b16 %v174, %v174
  %v184 = vpack.c.b16 %v175, %v175
  %v185 = vpack.c.b16 %v176, %v176
  %v186 = vpack.c.b16 %v177, %v177
  %v187 = vpack.c.b16 %v178, %v178
  %v188 = vpack.c.b16 %v179, %v179
  %v189 = vpack.c.b16 %v180, %v180
  %v343 = vunpack.c.l.b16 %v23
  %v344 = vunpack.c.h.b16 %v23
  %v345 = vunpack.c.l.b16 %v24
  %v346 = vunpack.c.h.b16 %v24
  %v347 = vunpack.c.l.b16 %v25
  %v348 = vunpack.c.h.b16 %v25
  %v349 = vunpack.c.l.b16 %v26
  %v350 = vunpack.c.h.b16 %v26
  %v351 = vunpack.c.l.b16 %v27
  %v352 = vunpack.c.h.b16 %v27
  %v353 = vunpack.c.l.b16 %v28
  %v354 = vunpack.c.h.b16 %v28
  %v355 = vunpack.c.l.b16 %v29
  %v356 = vunpack.c.h.b16 %v29
  %v357 = vunpack.c.l.b16 %v30
  %v358 = vunpack.c.h.b16 %v30
  %v359 = vunpack.c.l.b16 %v31
  %v360 = vunpack.c.h.b16 %v31
  %v361 = vunpack.c.l.b16 %v32
  %v362 = vunpack.c.h.b16 %v32
  %v363 = vunpack.c.l.b16 %v33
  %v364 = vunpack.c.h.b16 %v33
  %v365 = vunpack.c.l.b16 %v34
  %v366 = vunpack.c.h.b16 %v34
  %v367 = vunpack.c.l.b16 %v35
  %v368 = vunpack.c.h.b16 %v35
  %v369 = vunpack.c.l.b16 %v36
  %v370 = vunpack.c.h.b16 %v36
  %v371 = vunpack.c.l.b16 %v37
  %v372 = vunpack.c.h.b16 %v37
  %v373 = vunpack.c.l.b16 %v38
  %v374 = vunpack.c.h.b16 %v38
  %v375 = vunpack.c.l.b16 %v39
  %v376 = vunpack.c.h.b16 %v39
  %v377 = vunpack.c.l.b16 %v40
  %v378 = vunpack.c.h.b16 %v40
  %v379 = vunpack.c.l.b16 %v41
  %v380 = vunpack.c.h.b16 %v41
  %v381 = vunpack.c.l.b16 %v42
  %v382 = vunpack.c.h.b16 %v42
  %v383 = vunpack.c.l.b16 %v43
  %v384 = vunpack.c.h.b16 %v43
  %v385 = vunpack.c.l.b16 %v44
  %v386 = vunpack.c.h.b16 %v44
  %v387 = vunpack.c.l.b16 %v45
  %v388 = vunpack.c.h.b16 %v45
  %v389 = vunpack.c.l.b16 %v46
  %v390 = vunpack.c.h.b16 %v46
  %v391 = vunpack.c.l.b16 %v47
  %v392 = vunpack.c.h.b16 %v47
  %v393 = vunpack.c.l.b16 %v48
  %v394 = vunpack.c.h.b16 %v48
  %v395 = vunpack.c.l.b16 %v49
  %v396 = vunpack.c.h.b16 %v49
  %v397 = vunpack.c.l.b16 %v50
  %v398 = vunpack.c.h.b16 %v50
  %v399 = vunpack.c.l.b16 %v51
  %v400 = vunpack.c.h.b16 %v51
  %v401 = vunpack.c.l.b16 %v52
  %v402 = vunpack.c.h.b16 %v52
  %v403 = vunpack.c.l.b16 %v53
  %v404 = vunpack.c.h.b16 %v53
  %v405 = vunpack.c.l.b16 %v54
  %v406 = vunpack.c.h.b16 %v54
  %v407 = vunpack.c.l.b16 %v55
  %v408 = vunpack.c.h.b16 %v55
  %v409 = vunpack.c.l.b16 %v56
  %v410 = vunpack.c.h.b16 %v56
  %v411 = vunpack.c.l.b16 %v57
  %v412 = vunpack.c.h.b16 %v57
  %v413 = vunpack.c.l.b16 %v58
  %v414 = vunpack.c.h.b16 %v58
  %v415 = vunpack.c.l.b16 %v59
  %v416 = vunpack.c.h.b16 %v59
  %v417 = vunpack.c.l.b16 %v60
  %v418 = vunpack.c.h.b16 %v60
  %v419 = vunpack.c.l.b16 %v61
  %v420 = vunpack.c.h.b16 %v61
  %v421 = vunpack.c.l.b16 %v62
  %v422 = vunpack.c.h.b16 %v62
  %v423 = vunpack.c.l.b16 %v63
  %v424 = vunpack.c.h.b16 %v63
  %v425 = vunpack.c.l.b16 %v64
  %v426 = vunpack.c.h.b16 %v64
  %v427 = vunpack.c.l.b16 %v65
  %v428 = vunpack.c.h.b16 %v65
  %v429 = vunpack.c.l.b16 %v66
  %v430 = vunpack.c.h.b16 %v66
  %v431 = vunpack.c.l.b16 %v67
  %v432 = vunpack.c.h.b16 %v67
  %v433 = vunpack.c.l.b16 %v68
  %v434 = vunpack.c.h.b16 %v68
  %v435 = vunpack.c.l.b16 %v69
  %v436 = vunpack.c.h.b16 %v69
  %v437 = vunpack.c.l.b16 %v70
  %v438 = vunpack.c.h.b16 %v70
  %v439 = vunpack.c.l.b16 %v71
  %v440 = vunpack.c.h.b16 %v71
  %v441 = vunpack.c.l.b16 %v72
  %v442 = vunpack.c.h.b16 %v72
  %v443 = vunpack.c.l.b16 %v73
  %v444 = vunpack.c.h.b16 %v73
  %v445 = vunpack.c.l.b16 %v74
  %v446 = vunpack.c.h.b16 %v74
  %v447 = vunpack.c.l.b16 %v75
  %v448 = vunpack.c.h.b16 %v75
  %v449 = vunpack.c.l.b16 %v76
  %v450 = vunpack.c.h.b16 %v76
  %v451 = vunpack.c.l.b16 %v77
  %v452 = vunpack.c.h.b16 %v77
  %v453 = vunpack.c.l.b16 %v78
  %v454 = vunpack.c.h.b16 %v78
  %v455 = vunpack.c.l.b16 %v79
  %v456 = vunpack.c.h.b16 %v79
  %v457 = vunpack.c.l.b16 %v80
  %v458 = vunpack.c.h.b16 %v80
  %v459 = vunpack.c.l.b16 %v81
  %v460 = vunpack.c.h.b16 %v81
  %v461 = vunpack.c.l.b16 %v82
  %v462 = vunpack.c.h.b16 %v82
  %v463 = vunpack.c.l.b16 %v83
  %v464 = vunpack.c.h.b16 %v83
  %v465 = vunpack.c.l.b16 %v84
  %v466 = vunpack.c.h.b16 %v84
  %v467 = vunpack.c.l.b16 %v85
  %v468 = vunpack.c.h.b16 %v85
  %v469 = vunpack.c.l.b16 %v86
  %v470 = vunpack.c.h.b16 %v86
  %v471 = vunpack.c.l.b16 %v87
  %v472 = vunpack.c.h.b16 %v87
  %v473 = vunpack.c.l.b16 %v88
  %v474 = vunpack.c.h.b16 %v88
  %v475 = vunpack.c.l.b16 %v89
  %v476 = vunpack.c.h.b16 %v89
  %v477 = vunpack.c.l.b16 %v90
  %v478 = vunpack.c.h.b16 %v90
  %v479 = vunpack.c.l.b16 %v91
  %v480 = vunpack.c.h.b16 %v91
  %v481 = vunpack.c.l.b16 %v92
  %v482 = vunpack.c.h.b16 %v92
  %v483 = vunpack.c.l.b16 %v93
  %v484 = vunpack.c.h.b16 %v93
  %v485 = vunpack.c.l.b16 %v94
  %v486 = vunpack.c.h.b16 %v94
  %v487 = vunpack.c.l.b16 %v95
  %v488 = vunpack.c.h.b16 %v95
  %v489 = vunpack.c.l.b16 %v96
  %v490 = vunpack.c.h.b16 %v96
  %v491 = vunpack.c.l.b16 %v97
  %v492 = vunpack.c.h.b16 %v97
  %v493 = vunpack.c.l.b16 %v98
  %v494 = vunpack.c.h.b16 %v98
  %v495 = vunpack.c.l.b16 %v99
  %v496 = vunpack.c.h.b16 %v99
  %v497 = vunpack.c.l.b16 %v100
  %v498 = vunpack.c.h.b16 %v100
  %v499 = vunpack.c.l.b16 %v101
  %v500 = vunpack.c.h.b16 %v101
  %v501 = vunpack.c.l.b16 %v102
  %v502 = vunpack.c.h.b16 %v102
  %v503 = vunpack.c.l.b16 %v103
  %v504 = vunpack.c.h.b16 %v103
  %v505 = vunpack.c.l.b16 %v104
  %v506 = vunpack.c.h.b16 %v104
  %v507 = vunpack.c.l.b16 %v105
  %v508 = vunpack.c.h.b16 %v105
  %v509 = vunpack.c.l.b16 %v106
  %v510 = vunpack.c.h.b16 %v106
  %v511 = vunpack.c.l.b16 %v107
  %v512 = vunpack.c.h.b16 %v107
  %v513 = vunpack.c.l.b16 %v108
  %v514 = vunpack.c.h.b16 %v108
  %v515 = vunpack.c.l.b16 %v109
  %v516 = vunpack.c.h.b16 %v109
  %v517 = vunpack.c.l.b16 %v110
  %v518 = vunpack.c.h.b16 %v110
  %v519 = vunpack.c.l.b16 %v111
  %v520 = vunpack.c.h.b16 %v111
  %v521 = vunpack.c.l.b16 %v112
  %v522 = vunpack.c.h.b16 %v112
  %v523 = vunpack.c.l.b16 %v113
  %v524 = vunpack.c.h.b16 %v113
  %v525 = vunpack.c.l.b16 %v114
  %v526 = vunpack.c.h.b16 %v114
  %v527 = vunpack.c.l.b16 %v115
  %v528 = vunpack.c.h.b16 %v115
  %v529 = vunpack.c.l.b16 %v116
  %v530 = vunpack.c.h.b16 %v116
  %v531 = vunpack.c.l.b16 %v117
  %v532 = vunpack.c.h.b16 %v117
  %v533 = vunpack.c.l.b16 %v118
  %v534 = vunpack.c.h.b16 %v118
  %v535 = vunpack.c.l.b16 %v119
  %v536 = vunpack.c.h.b16 %v119
  %v537 = vunpack.c.l.b16 %v120
  %v538 = vunpack.c.h.b16 %v120
  %v539 = vunpack.c.l.b16 %v121
  %v540 = vunpack.c.h.b16 %v121
  %v541 = vunpack.c.l.b16 %v122
  %v542 = vunpack.c.h.b16 %v122
  %v543 = vunpack.c.l.b16 %v123
  %v544 = vunpack.c.h.b16 %v123
  %v545 = vunpack.c.l.b16 %v124
  %v546 = vunpack.c.h.b16 %v124
  %v547 = vunpack.c.l.b16 %v125
  %v548 = vunpack.c.h.b16 %v125
  %v549 = vunpack.c.l.b16 %v126
  %v550 = vunpack.c.h.b16 %v126
  %v551 = vunpack.c.l.b16 %v127
  %v552 = vunpack.c.h.b16 %v127
  %v553 = vunpack.c.l.b16 %v128
  %v554 = vunpack.c.h.b16 %v128
  %v555 = vunpack.c.l.b16 %v129
  %v556 = vunpack.c.h.b16 %v129
  %v557 = vunpack.c.l.b16 %v130
  %v558 = vunpack.c.h.b16 %v130
  %v559 = vunpack.c.l.b16 %v131
  %v560 = vunpack.c.h.b16 %v131
  %v561 = vunpack.c.l.b16 %v132
  %v562 = vunpack.c.h.b16 %v132
  %v563 = vunpack.c.l.b16 %v133
  %v564 = vunpack.c.h.b16 %v133
  %v565 = vunpack.c.l.b16 %v134
  %v566 = vunpack.c.h.b16 %v134
  %v567 = vunpack.c.l.b16 %v135
  %v568 = vunpack.c.h.b16 %v135
  %v569 = vunpack.c.l.b16 %v136
  %v570 = vunpack.c.h.b16 %v136
  %v571 = vunpack.c.l.b16 %v137
  %v572 = vunpack.c.h.b16 %v137
  %v573 = vunpack.c.l.b16 %v138
  %v574 = vunpack.c.h.b16 %v138
  %v575 = vunpack.c.l.b16 %v139
  %v576 = vunpack.c.h.b16 %v139
  %v577 = vunpack.c.l.b16 %v140
  %v578 = vunpack.c.h.b16 %v140
  %v579 = vunpack.c.l.b16 %v141
  %v580 = vunpack.c.h.b16 %v141
  %v581 = vunpack.c.l.b16 %v142
  %v582 = vunpack.c.h.b16 %v142
  %v583 = vunpack.c.l.b16 %v143
  %v584 = vunpack.c.h.b16 %v143
  %v585 = vunpack.c.l.b16 %v144
  %v586 = vunpack.c.h.b16 %v144
  %v587 = vunpack.c.l.b16 %v145
  %v588 = vunpack.c.h.b16 %v145
  %v589 = vunpack.c.l.b16 %v146
  %v590 = vunpack.c.h.b16 %v146
  %v591 = vunpack.c.l.b16 %v147
  %v592 = vunpack.c.h.b16 %v147
  %v593 = vunpack.c.l.b16 %v148
  %v594 = vunpack.c.h.b16 %v148
  %v595 = vunpack.c.l.b16 %v149
  %v596 = vunpack.c.h.b16 %v149
  %v597 = vunpack.c.l.b16 %v150
  %v598 = vunpack.c.h.b16 %v150
  %v599 = vunpack.c.l.b16 %v151
  %v600 = vunpack.c.h.b16 %v151
  %v601 = vunpack.c.l.b16 %v152
  %v602 = vunpack.c.h.b16 %v152
  %v603 = vunpack.c.l.b16 %v153
  %v604 = vunpack.c.h.b16 %v153
  %v605 = vunpack.c.l.b16 %v154
  %v606 = vunpack.c.h.b16 %v154
  %v607 = vunpack.c.l.b16 %v155
  %v608 = vunpack.c.h.b16 %v155
  %v609 = vunpack.c.l.b16 %v156
  %v610 = vunpack.c.h.b16 %v156
  %v611 = vunpack.c.l.b16 %v157
  %v612 = vunpack.c.h.b16 %v157
  %v613 = vunpack.c.l.b16 %v158
  %v614 = vunpack.c.h.b16 %v158
  %v615 = vunpack.c.l.b16 %v159
  %v616 = vunpack.c.h.b16 %v159
  %v617 = vunpack.c.l.b16 %v160
  %v618 = vunpack.c.h.b16 %v160
  %v619 = vunpack.c.l.b16 %v161
  %v620 = vunpack.c.h.b16 %v161
  %v621 = vunpack.c.l.b16 %v162
  %v622 = vunpack.c.h.b16 %v162
  %v623 = vunpack.c.l.b16 %v163
  %v624 = vunpack.c.h.b16 %v163
  %v625 = vunpack.c.l.b16 %v164
  %v626 = vunpack.c.h.b16 %v164
  %v627 = vunpack.c.l.b16 %v165
  %v628 = vunpack.c.h.b16 %v165
  %v629 = vunpack.c.l.b16 %v166
  %v630 = vunpack.c.h.b16 %v166
  %v631 = vpack.c.b16 %v345, %v343
  %v632 = vpack.c.b16 %v346, %v344
  %v633 = vpack.c.b16 %v349, %v347
  %v634 = vpack.c.b16 %v350, %v348
  %v635 = vpack.c.b16 %v353, %v351
  %v636 = vpack.c.b16 %v354, %v352
  %v637 = vpack.c.b16 %v357, %v355
  %v638 = vpack.c.b16 %v358, %v356
  %v639 = vpack.c.b16 %v361, %v359
  %v640 = vpack.c.b16 %v362, %v360
  %v641 = vpack.c.b16 %v365, %v363
  %v642 = vpack.c.b16 %v366, %v364
  %v643 = vpack.c.b16 %v369, %v367
  %v644 = vpack.c.b16 %v370, %v368
  %v645 = vpack.c.b16 %v373, %v371
  %v646 = vpack.c.b16 %v374, %v372
  %v647 = vpack.c.b16 %v377, %v375
  %v648 = vpack.c.b16 %v378, %v376
  %v649 = vpack.c.b16 %v381, %v379
  %v650 = vpack.c.b16 %v382, %v380
  %v651 = vpack.c.b16 %v385, %v383
  %v652 = vpack.c.b16 %v386, %v384
  %v653 = vpack.c.b16 %v389, %v387
  %v654 = vpack.c.b16 %v390, %v388
  %v655 = vpack.c.b16 %v393, %v391
  %v656 = vpack.c.b16 %v394, %v392
  %v657 = vpack.c.b16 %v397, %v395
  %v658 = vpack.c.b16 %v398, %v396
  %v659 = vpack.c.b16 %v401, %v399
  %v660 = vpack.c.b16 %v402, %v400
  %v661 = vpack.c.b16 %v405, %v403
  %v662 = vpack.c.b16 %v406, %v404
  %v663 = vpack.c.b16 %v409, %v407
  %v664 = vpack.c.b16 %v410, %v408
  %v665 = vpack.c.b16 %v413, %v411
  %v666 = vpack.c.b16 %v414, %v412
  %v667 = vpack.c.b16 %v417, %v415
  %v668 = vpack.c.b16 %v418, %v416
  %v669 = vpack.c.b16 %v421, %v419
  %v670 = vpack.c.b16 %v422, %v420
  %v671 = vpack.c.b16 %v425, %v423
  %v672 = vpack.c.b16 %v426, %v424
  %v673 = vpack.c.b16 %v429, %v427
  %v674 = vpack.c.b16 %v430, %v428
  %v675 = vpack.c.b16 %v433, %v431
  %v676 = vpack.c.b16 %v434, %v432
  %v677 = vpack.c.b16 %v437, %v435
  %v678 = vpack.c.b16 %v438, %v436
  %v679 = vpack.c.b16 %v441, %v439
  %v680 = vpack.c.b16 %v442, %v440
  %v681 = vpack.c.b16 %v445, %v443
  %v682 = vpack.c.b16 %v446, %v444
  %v683 = vpack.c.b16 %v449, %v447
  %v684 = vpack.c.b16 %v450, %v448
  %v685 = vpack.c.b16 %v453, %v451
  %v686 = vpack.c.b16 %v454, %v452
  %v687 = vpack.c.b16 %v457, %v455
  %v688 = vpack.c.b16 %v458, %v456
  %v689 = vpack.c.b16 %v461, %v459
  %v690 = vpack.c.b16 %v462, %v460
  %v691 = vpack.c.b16 %v465, %v463
  %v692 = vpack.c.b16 %v466, %v464
  %v693 = vpack.c.b16 %v469, %v467
  %v694 = vpack.c.b16 %v470, %v468
  %v695 = vpack.c.b16 %v473, %v471
  %v696 = vpack.c.b16 %v474, %v472
  %v697 = vpack.c.b16 %v477, %v475
  %v698 = vpack.c.b16 %v478, %v476
  %v699 = vpack.c.b16 %v481, %v479
  %v700 = vpack.c.b16 %v482, %v480
  %v701 = vpack.c.b16 %v485, %v483
  %v702 = vpack.c.b16 %v486, %v484
  %v703 = vpack.c.b16 %v489, %v487
  %v704 = vpack.c.b16 %v490, %v488
  %v705 = vpack.c.b16 %v493, %v491
  %v706 = vpack.c.b16 %v494, %v492
  %v707 = vpack.c.b16 %v497, %v495
  %v708 = vpack.c.b16 %v498, %v496
  %v709 = vpack.c.b16 %v501, %v499
  %v710 = vpack.c.b16 %v502, %v500
  %v711 = vpack.c.b16 %v505, %v503
  %v712 = vpack.c.b16 %v506, %v504
  %v713 = vpack.c.b16 %v509, %v507
  %v714 = vpack.c.b16 %v510, %v508
  %v715 = vpack.c.b16 %v513, %v511
  %v716 = vpack.c.b16 %v514, %v512
  %v717 = vpack.c.b16 %v517, %v515
  %v718 = vpack.c.b16 %v518, %v516
  %v719 = vpack.c.b16 %v521, %v519
  %v720 = vpack.c.b16 %v522, %v520
  %v721 = vpack.c.b16 %v525, %v523
  %v722 = vpack.c.b16 %v526, %v524
  %v723 = vpack.c.b16 %v529, %v527
  %v724 = vpack.c.b16 %v530, %v528
  %v725 = vpack.c.b16 %v533, %v531
  %v726 = vpack.c.b16 %v534, %v532
  %v727 = vpack.c.b16 %v537, %v535
  %v728 = vpack.c.b16 %v538, %v536
  %v729 = vpack.c.b16 %v541, %v539
  %v730 = vpack.c.b16 %v542, %v540
  %v731 = vpack.c.b16 %v545, %v543
  %v732 = vpack.c.b16 %v546, %v544
  %v733 = vpack.c.b16 %v549, %v547
  %v734 = vpack.c.b16 %v550, %v548
  %v735 = vpack.c.b16 %v553, %v551
  %v736 = vpack.c.b16 %v554, %v552
  %v737 = vpack.c.b16 %v557, %v555
  %v738 = vpack.c.b16 %v558, %v556
  %v739 = vpack.c.b16 %v561, %v559
  %v740 = vpack.c.b16 %v562, %v560
  %v741 = vpack.c.b16 %v565, %v563
  %v742 = vpack.c.b16 %v566, %v564
  %v743 = vpack.c.b16 %v569, %v567
  %v744 = vpack.c.b16 %v570, %v568
  %v745 = vpack.c.b16 %v573, %v571
  %v746 = vpack.c.b16 %v574, %v572
  %v747 = vpack.c.b16 %v577, %v575
  %v748 = vpack.c.b16 %v578, %v576
  %v749 = vpack.c.b16 %v581, %v579
  %v750 = vpack.c.b16 %v582, %v580
  %v751 = vpack.c.b16 %v585, %v583
  %v752 = vpack.c.b16 %v586, %v584
  %v753 = vpack.c.b16 %v589, %v587
  %v754 = vpack.c.b16 %v590, %v588
  %v755 = vpack.c.b16 %v593, %v591
  %v756 = vpack.c.b16 %v594, %v592
  %v757 = vpack.c.b16 %v597, %v595
  %v758 = vpack.c.b16 %v598, %v596
  %v759 = vpack.c.b16 %v601, %v599
  %v760 = vpack.c.b16 %v602, %v600
  %v761 = vpack.c.b16 %v605, %v603
  %v762 = vpack.c.b16 %v606, %v604
  %v763 = vpack.c.b16 %v609, %v607
  %v764 = vpack.c.b16 %v610, %v608
  %v765 = vpack.c.b16 %v613, %v611
  %v766 = vpack.c.b16 %v614, %v612
  %v767 = vpack.c.b16 %v617, %v615
  %v768 = vpack.c.b16 %v618, %v616
  %v769 = vpack.c.b16 %v621, %v619
  %v770 = vpack.c.b16 %v622, %v620
  %v771 = vpack.c.b16 %v625, %v623
  %v772 = vpack.c.b16 %v626, %v624
  %v773 = vpack.c.b16 %v629, %v627
  %v774 = vpack.c.b16 %v630, %v628
  %919 = vmatprep.subr.bf16.mxu0 %v632
  %920 = vmatpush1.bf16.msra.mxu0 %v631
  %921 = vmatprep.subr.bf16.mxu0 %v634
  %922 = vmatpush1.bf16.msra.mxu0 %v633
  %923 = vmatprep.subr.bf16.mxu0 %v636
  %924 = vmatpush1.bf16.msra.mxu0 %v635
  %925 = vmatprep.subr.bf16.mxu0 %v638
  %926 = vmatpush1.bf16.msra.mxu0 %v637
  %927 = vmatprep.subr.bf16.mxu0 %v640
  %928 = vmatpush1.bf16.msra.mxu0 %v639
  %929 = vmatprep.subr.bf16.mxu0 %v642
  %930 = vmatpush1.bf16.msra.mxu0 %v641
  %931 = vmatprep.subr.bf16.mxu0 %v644
  %932 = vmatpush1.bf16.msra.mxu0 %v643
  %933 = vmatprep.subr.bf16.mxu0 %v646
  %934 = vmatpush1.bf16.msra.mxu0 %v645
  %935 = vmatprep.subr.bf16.mxu0 %v648
  %936 = vmatpush1.bf16.msra.mxu0 %v647
  %937 = vmatprep.subr.bf16.mxu0 %v650
  %938 = vmatpush1.bf16.msra.mxu0 %v649
  %939 = vmatprep.subr.bf16.mxu0 %v652
  %940 = vmatpush1.bf16.msra.mxu0 %v651
  %941 = vmatprep.subr.bf16.mxu0 %v654
  %942 = vmatpush1.bf16.msra.mxu0 %v653
  %943 = vmatprep.subr.bf16.mxu0 %v656
  %944 = vmatpush1.bf16.msra.mxu0 %v655
  %945 = vmatprep.subr.bf16.mxu0 %v658
  %946 = vmatpush1.bf16.msra.mxu0 %v657
  %947 = vmatprep.subr.bf16.mxu0 %v660
  %948 = vmatpush1.bf16.msra.mxu0 %v659
  %949 = vmatprep.subr.bf16.mxu0 %v662
  %950 = vmatpush1.bf16.msra.mxu0 %v661
  %951 = vmatprep.mubr.bf16.mxu0 %v182
  %952 = vmatmul.mubr.bf16.gmra.mrb[0].mxu0 %v181
  %v953 = vpop.f32.mrb[0].mxu0
  %v954 = vadd.f32 0.0, %v953
  %v955 = vpop.f32.mrb[0].mxu0
  %v956 = vadd.f32 0.0, %v955
  %v957 = vpop.f32.mrb[0].mxu0
  %v958 = vpop.f32.mrb[0].mxu0
  %959 = vdwg.mxu0
  %960 = vmatprep.subr.bf16.mxu0 %v664
  %961 = vmatpush1.bf16.msra.mxu0 %v663
  %962 = vmatprep.subr.bf16.mxu0 %v666
  %963 = vmatpush1.bf16.msra.mxu0 %v665
  %964 = vmatprep.subr.bf16.mxu0 %v668
  %965 = vmatpush1.bf16.msra.mxu0 %v667
  %966 = vmatprep.subr.bf16.mxu0 %v670
  %967 = vmatpush1.bf16.msra.mxu0 %v669
  %968 = vmatprep.subr.bf16.mxu0 %v672
  %969 = vmatpush1.bf16.msra.mxu0 %v671
  %970 = vmatprep.subr.bf16.mxu0 %v674
  %971 = vmatpush1.bf16.msra.mxu0 %v673
  %972 = vmatprep.subr.bf16.mxu0 %v676
  %973 = vmatpush1.bf16.msra.mxu0 %v675
  %974 = vmatprep.subr.bf16.mxu0 %v678
  %975 = vmatpush1.bf16.msra.mxu0 %v677
  %976 = vmatprep.subr.bf16.mxu0 %v680
  %977 = vmatpush1.bf16.msra.mxu0 %v679
  %978 = vmatprep.subr.bf16.mxu0 %v682
  %979 = vmatpush1.bf16.msra.mxu0 %v681
  %980 = vmatprep.subr.bf16.mxu0 %v684
  %981 = vmatpush1.bf16.msra.mxu0 %v683
  %982 = vmatprep.subr.bf16.mxu0 %v686
  %983 = vmatpush1.bf16.msra.mxu0 %v685
  %984 = vmatprep.subr.bf16.mxu0 %v688
  %985 = vmatpush1.bf16.msra.mxu0 %v687
  %986 = vmatprep.subr.bf16.mxu0 %v690
  %987 = vmatpush1.bf16.msra.mxu0 %v689
  %988 = vmatprep.subr.bf16.mxu0 %v692
  %989 = vmatpush1.bf16.msra.mxu0 %v691
  %990 = vmatprep.subr.bf16.mxu0 %v694
  %991 = vmatpush1.bf16.msra.mxu0 %v693
  %992 = vmatprep.mubr.bf16.mxu0 %v184
  %993 = vmatmul.mubr.bf16.gmra.mrb[0].mxu0 %v183
  %v994 = vpop.f32.mrb[0].mxu0
  %v995 = vadd.f32 %v954, %v994
  %v996 = vpop.f32.mrb[0].mxu0
  %v997 = vadd.f32 %v956, %v996
  %v998 = vpop.f32.mrb[0].mxu0
  %v999 = vpop.f32.mrb[0].mxu0
  %1000 = vdwg.mxu0
  %1001 = vmatprep.subr.bf16.mxu0 %v696
  %1002 = vmatpush1.bf16.msra.mxu0 %v695
  %1003 = vmatprep.subr.bf16.mxu0 %v698
  %1004 = vmatpush1.bf16.msra.mxu0 %v697
  %1005 = vmatprep.subr.bf16.mxu0 %v700
  %1006 = vmatpush1.bf16.msra.mxu0 %v699
  %1007 = vmatprep.subr.bf16.mxu0 %v702
  %1008 = vmatpush1.bf16.msra.mxu0 %v701
  %1009 = vmatprep.subr.bf16.mxu0 %v704
  %1010 = vmatpush1.bf16.msra.mxu0 %v703
  %1011 = vmatprep.subr.bf16.mxu0 %v706
  %1012 = vmatpush1.bf16.msra.mxu0 %v705
  %1013 = vmatprep.subr.bf16.mxu0 %v708
  %1014 = vmatpush1.bf16.msra.mxu0 %v707
  %1015 = vmatprep.subr.bf16.mxu0 %v710
  %1016 = vmatpush1.bf16.msra.mxu0 %v709
  %1017 = vmatprep.subr.bf16.mxu0 %v712
  %1018 = vmatpush1.bf16.msra.mxu0 %v711
  %1019 = vmatprep.subr.bf16.mxu0 %v714
  %1020 = vmatpush1.bf16.msra.mxu0 %v713
  %1021 = vmatprep.subr.bf16.mxu0 %v716
  %1022 = vmatpush1.bf16.msra.mxu0 %v715
  %1023 = vmatprep.subr.bf16.mxu0 %v718
  %1024 = vmatpush1.bf16.msra.mxu0 %v717
  %1025 = vmatprep.subr.bf16.mxu0 %v720
  %1026 = vmatpush1.bf16.msra.mxu0 %v719
  %1027 = vmatprep.subr.bf16.mxu0 %v722
  %1028 = vmatpush1.bf16.msra.mxu0 %v721
  %1029 = vmatprep.subr.bf16.mxu0 %v724
  %1030 = vmatpush1.bf16.msra.mxu0 %v723
  %1031 = vmatprep.subr.bf16.mxu0 %v726
  %1032 = vmatpush1.bf16.msra.mxu0 %v725
  %1033 = vmatprep.mubr.bf16.mxu0 %v186
  %1034 = vmatmul.mubr.bf16.gmra.mrb[0].mxu0 %v185
  %v1035 = vpop.f32.mrb[0].mxu0
  %v1036 = vadd.f32 %v995, %v1035
  %v1037 = vpop.f32.mrb[0].mxu0
  %v1038 = vadd.f32 %v997, %v1037
  %v1039 = vpop.f32.mrb[0].mxu0
  %v1040 = vpop.f32.mrb[0].mxu0
  %1041 = vdwg.mxu0
  %1042 = vmatprep.subr.bf16.mxu0 %v728
  %1043 = vmatpush1.bf16.msra.mxu0 %v727
  %1044 = vmatprep.subr.bf16.mxu0 %v730
  %1045 = vmatpush1.bf16.msra.mxu0 %v729
  %1046 = vmatprep.subr.bf16.mxu0 %v732
  %1047 = vmatpush1.bf16.msra.mxu0 %v731
  %1048 = vmatprep.subr.bf16.mxu0 %v734
  %1049 = vmatpush1.bf16.msra.mxu0 %v733
  %1050 = vmatprep.subr.bf16.mxu0 %v736
  %1051 = vmatpush1.bf16.msra.mxu0 %v735
  %1052 = vmatprep.subr.bf16.mxu0 %v738
  %1053 = vmatpush1.bf16.msra.mxu0 %v737
  %1054 = vmatprep.subr.bf16.mxu0 %v740
  %1055 = vmatpush1.bf16.msra.mxu0 %v739
  %1056 = vmatprep.subr.bf16.mxu0 %v742
  %1057 = vmatpush1.bf16.msra.mxu0 %v741
  %1058 = vmatprep.subr.bf16.mxu0 %v744
  %1059 = vmatpush1.bf16.msra.mxu0 %v743
  %1060 = vmatprep.subr.bf16.mxu0 %v746
  %1061 = vmatpush1.bf16.msra.mxu0 %v745
  %1062 = vmatprep.subr.bf16.mxu0 %v748
  %1063 = vmatpush1.bf16.msra.mxu0 %v747
  %1064 = vmatprep.subr.bf16.mxu0 %v750
  %1065 = vmatpush1.bf16.msra.mxu0 %v749
  %1066 = vmatprep.subr.bf16.mxu0 %v752
  %1067 = vmatpush1.bf16.msra.mxu0 %v751
  %1068 = vmatprep.subr.bf16.mxu0 %v754
  %1069 = vmatpush1.bf16.msra.mxu0 %v753
  %1070 = vmatprep.subr.bf16.mxu0 %v756
  %1071 = vmatpush1.bf16.msra.mxu0 %v755
  %1072 = vmatprep.subr.bf16.mxu0 %v758
  %1073 = vmatpush1.bf16.msra.mxu0 %v757
  %1074 = vmatprep.mubr.bf16.mxu0 %v188
  %1075 = vmatmul.mubr.bf16.gmra.mrb[0].mxu0 %v187
  %v1076 = vpop.f32.mrb[0].mxu0
  %v1077 = vadd.f32 %v1036, %v1076
  %v1078 = vpop.f32.mrb[0].mxu0
  %v1079 = vadd.f32 %v1038, %v1078
  %v1080 = vpop.f32.mrb[0].mxu0
  %v1081 = vpop.f32.mrb[0].mxu0
  %1082 = vdwg.mxu0
  %1083 = vmatprep.subr.bf16.mxu0 %v760
  %1084 = vmatpush1.bf16.msra.mxu0 %v759
  %1085 = vmatprep.subr.bf16.mxu0 %v762
  %1086 = vmatpush1.bf16.msra.mxu0 %v761
  %1087 = vmatprep.subr.bf16.mxu0 %v764
  %1088 = vmatpush1.bf16.msra.mxu0 %v763
  %1089 = vmatprep.subr.bf16.mxu0 %v766
  %1090 = vmatpush1.bf16.msra.mxu0 %v765
  %1091 = vmatprep.subr.bf16.mxu0 %v768
  %1092 = vmatpush1.bf16.msra.mxu0 %v767
  %1093 = vmatprep.subr.bf16.mxu0 %v770
  %1094 = vmatpush1.bf16.msra.mxu0 %v769
  %1095 = vmatprep.subr.bf16.mxu0 %v772
  %1096 = vmatpush1.bf16.msra.mxu0 %v771
  %1097 = vmatprep.subr.bf16.mxu0 %v774
  %1098 = vmatpush1.bf16.msra.mxu0 %v773
  %1099 = vmatprep.subr.bf16.mxu0 0
  %1100 = vmatpush1.bf16.msra.mxu0 0
  %1101 = vmatprep.subr.bf16.mxu0 0
  %1102 = vmatpush1.bf16.msra.mxu0 0
  %1103 = vmatprep.subr.bf16.mxu0 0
  %1104 = vmatpush1.bf16.msra.mxu0 0
  %1105 = vmatprep.subr.bf16.mxu0 0
  %1106 = vmatpush1.bf16.msra.mxu0 0
  %1107 = vmatprep.subr.bf16.mxu0 0
  %1108 = vmatpush1.bf16.msra.mxu0 0
  %1109 = vmatprep.subr.bf16.mxu0 0
  %1110 = vmatpush1.bf16.msra.mxu0 0
  %1111 = vmatprep.subr.bf16.mxu0 0
  %1112 = vmatpush1.bf16.msra.mxu0 0
  %1113 = vmatprep.subr.bf16.mxu0 0
  %1114 = vmatpush1.bf16.msra.mxu0 0
  %1115 = vmatprep.mubr.bf16.mxu0 0
  %1116 = vmatmul.mubr.bf16.gmra.mrb[0].mxu0 %v189
  %v1117 = vpop.f32.mrb[0].mxu0
  %v1118 = vadd.f32 %v1077, %v1117
  %v1119 = vpop.f32.mrb[0].mxu0
  %v1120 = vadd.f32 %v1079, %v1119
  %v1121 = vpop.f32.mrb[0].mxu0
  %v1122 = vpop.f32.mrb[0].mxu0
  %1123 = vdwg.mxu0
  %v1124 = vrot.slane %v1118, 4
  %v1125 = vadd.f32 %v1118, %v1124
  %v1126 = vrot.slane %v1125, 2
  %v1127 = vadd.f32 %v1125, %v1126
  %v1128 = vrot.slane %v1127, 1
  %v1129 = vadd.f32 %v1127, %v1128
  %v1130 = vrot.slane %v1120, 4
  %v1131 = vadd.f32 %v1120, %v1130
  %v1132 = vrot.slane %v1131, 2
  %v1133 = vadd.f32 %v1131, %v1132
  %v1134 = vrot.slane %v1133, 1
  %v1135 = vadd.f32 %v1133, %v1134
  %v1136 = vrcp.pop 8.0
  %v1137 = vmul.f32 %v1129, %v1136
  %v1138 = vmul.f32 %v1135, %v1136
  %v1139 = vsub.f32 %v1118, %v1137
  %v1140 = vsub.f32 %v1120, %v1138
  %v1141 = vmul.f32 %v1139, %v1139
  %v1142 = vmul.f32 %v1140, %v1140
  %v1143 = vrot.slane %v1141, 4
  %v1144 = vadd.f32 %v1141, %v1143
  %v1145 = vrot.slane %v1144, 2
  %v1146 = vadd.f32 %v1144, %v1145
  %v1147 = vrot.slane %v1146, 1
  %v1148 = vadd.f32 %v1146, %v1147
  %v1149 = vrot.slane %v1142, 4
  %v1150 = vadd.f32 %v1142, %v1149
  %v1151 = vrot.slane %v1150, 2
  %v1152 = vadd.f32 %v1150, %v1151
  %v1153 = vrot.slane %v1152, 1
  %v1154 = vadd.f32 %v1152, %v1153
  %v1155 = vmul.f32 %v1148, %v1136
  %v1156 = vmul.f32 %v1154, %v1136
  %v1157 = vld [vmem:[%s2] sm:$0x3]
  %v1158 = vadd.f32 %v1155, 1e-05
  %v1159 = vadd.f32 %v1156, 1e-05
  %v1160 = vrsqrt.pop %v1158
  %v1161 = vrsqrt.pop %v1159
  %v1164 = vcombine.low %v1160, %v1161
  %v1166 = vunpack.c.l.s4 1966171168
  %v1167 = vunpack.c.0.s8 %v1166
  %v1168 = vlaneseq
  %v1169 = vshrl.u32 %v1168, 7
  %v1170 = vsub.s32 %v1167, %v1169
  %v1171 = vrot.slane %v1164, %v1170
  %v1173 = vunpack.c.l.s4 1966171168
  %v1174 = vunpack.c.0.s8 %v1173
  %v1175 = vlaneseq
  %v1176 = vshrl.u32 %v1175, 7
  %v1177 = vsub.s32 %v1174, %v1176
  %v1178 = vrot.slane %v1171, %v1177
  %v1180 = vmul.f32 %v1157, %v1178
  %v1182 = vlaneseq
  %v1183 = vshrl.u32 %v1182, 7
  %v1184 = vsub.s32 0, %v1183
  %v1185 = vrot.slane %v1180, %v1184
  %v1186 = vlaneseq
  %v1187 = vshrl.u32 %v1186, 7
  %v1188 = vsub.s32 1, %v1187
  %v1189 = vrot.slane %v1180, %v1188
  %v1192 = vmul.f32 %v1139, %v1185
  %v1193 = vmul.f32 %v1140, %v1189
  %v1194 = vld [vmem:[%s3] sm:$0x3]
  %v1196 = vlaneseq
  %v1197 = vshrl.u32 %v1196, 7
  %v1198 = vsub.s32 0, %v1197
  %v1199 = vrot.slane %v1194, %v1198
  %v1200 = vlaneseq
  %v1201 = vshrl.u32 %v1200, 7
  %v1202 = vsub.s32 1, %v1201
  %v1203 = vrot.slane %v1194, %v1202
  %v1206 = vadd.f32 %v1192, %v1199
  %v1207 = vadd.f32 %v1193, %v1203
  %v1208 = vmax.f32 %v1206, 0.0
  %v1209 = vmax.f32 %v1207, 0.0
  %1210 = vst [vmem:[%s4] sm:$0xff] %v1208
  %1211 = vst [vmem:[%s4 + $0x8] sm:$0xff] %v1209
  // Predicated region
  $region18: #{resnet_comp_forward.17} parent=0 // pred_check
    _
  $region19: #{resnet_comp_forward.17} parent=0 // pred_check_branch
    %1213 = sbr.rel (0) target = $region21
  $region20: #{resnet_comp_forward.17} parent=0 // pred_region
    _
  $region21: #{resnet_comp_forward.17} parent=0 // pred_fallthru
    _
  // Predicated region
  $region22: #{resnet_comp_forward.17} parent=0 // pred_check
    _
  $region23: #{resnet_comp_forward.17} parent=0 // pred_check_branch
    %1215 = sbr.rel (0) target = $region25
  $region24: #{resnet_comp_forward.17} parent=0 // pred_region
    _
  $region25: #{resnet_comp_forward.17} parent=0 // pred_fallthru
    _

// kernel: resnet_comp_forward.18
$region0: #{resnet_comp_forward.18}
  #allocation0 [shape = 'u32[]', space=smem, size = 0x4, offset = 0x4, fixed_abs, tag = 'smem constant byte address 0x4 - core index']
  #allocation1 [shape = 'u32[144,128]{1,0:T(1,128)}', space=vmem, size = 0x12000, scoped, tag = 'internal scratch']
  %s0 = inlined_call_operand.vmem [shape: bf16[8,128], index: 0, kind: input, shape index: {}]
  %s1 = inlined_call_operand.vmem [shape: bf16[128,256], index: 1, kind: input, shape index: {}]
  %s2 = inlined_call_operand.vmem [shape: f32[1,256], index: 2, kind: input, shape index: {}]
  %s3 = inlined_call_operand.vmem [shape: f32[1,256], index: 3, kind: input, shape index: {}]
  %s4 = inlined_call_operand.vmem [shape: f32[8,256], index: 4, kind: output, shape index: {}]
  %s5 = sld [smem:[#allocation0]]
  $region26: #{resnet_comp_forward.18} parent=0
    _
  %s7 = ssub.s32 1, %s5
  %s8 = scalar_select 0, %s7, %s5
  // Predicated region
  $region2: #{resnet_comp_forward.18} parent=0 // pred_check
    _
  $region3: #{resnet_comp_forward.18} parent=0 // pred_check_branch
    %10 = sbr.rel (0) target = $region5
  $region4: #{resnet_comp_forward.18} parent=0 // pred_region
    _
  $region5: #{resnet_comp_forward.18} parent=0 // pred_fallthru
    _
  // Predicated region
  $region6: #{resnet_comp_forward.18} parent=0 // pred_check
    _
  $region7: #{resnet_comp_forward.18} parent=0 // pred_check_branch
    %12 = sbr.rel (0) target = $region9
  $region8: #{resnet_comp_forward.18} parent=0 // pred_region
    _
  $region9: #{resnet_comp_forward.18} parent=0 // pred_fallthru
    _
  // Predicated region
  $region10: #{resnet_comp_forward.18} parent=0 // pred_check
    _
  $region11: #{resnet_comp_forward.18} parent=0 // pred_check_branch
    %14 = sbr.rel (0) target = $region13
  $region12: #{resnet_comp_forward.18} parent=0 // pred_region
    _
  $region13: #{resnet_comp_forward.18} parent=0 // pred_fallthru
    _
  // Predicated region
  $region14: #{resnet_comp_forward.18} parent=0 // pred_check
    _
  $region15: #{resnet_comp_forward.18} parent=0 // pred_check_branch
    %16 = sbr.rel (0) target = $region17
  $region16: #{resnet_comp_forward.18} parent=0 // pred_region
    _
  $region17: #{resnet_comp_forward.18} parent=0 // pred_fallthru
    _
  %v18 = vld [vmem:[%s0] sm:$0xf]
  %v19 = vld [vmem:[%s1] sm:$0xff]
  %v20 = vld [vmem:[%s1 + $0x8] sm:$0xff]
  %v21 = vld [vmem:[%s1 + $0x10] sm:$0xff]
  %v22 = vld [vmem:[%s1 + $0x18] sm:$0xff]
  %v23 = vld [vmem:[%s1 + $0x20] sm:$0xff]
  %v24 = vld [vmem:[%s1 + $0x28] sm:$0xff]
  %v25 = vld [vmem:[%s1 + $0x30] sm:$0xff]
  %v26 = vld [vmem:[%s1 + $0x38] sm:$0xff]
  %v27 = vld [vmem:[%s1 + $0x40] sm:$0xff]
  %v28 = vld [vmem:[%s1 + $0x48] sm:$0xff]
  %v29 = vld [vmem:[%s1 + $0x50] sm:$0xff]
  %v30 = vld [vmem:[%s1 + $0x58] sm:$0xff]
  %v31 = vld [vmem:[%s1 + $0x60] sm:$0xff]
  %v32 = vld [vmem:[%s1 + $0x68] sm:$0xff]
  %v33 = vld [vmem:[%s1 + $0x70] sm:$0xff]
  %v34 = vld [vmem:[%s1 + $0x78] sm:$0xff]
  %v51 = vunpack.c.l.b16 %v19
  %v52 = vunpack.c.h.b16 %v19
  %v53 = vunpack.c.l.b16 %v20
  %v54 = vunpack.c.h.b16 %v20
  %v55 = vunpack.c.l.b16 %v21
  %v56 = vunpack.c.h.b16 %v21
  %v57 = vunpack.c.l.b16 %v22
  %v58 = vunpack.c.h.b16 %v22
  %v59 = vunpack.c.l.b16 %v23
  %v60 = vunpack.c.h.b16 %v23
  %v61 = vunpack.c.l.b16 %v24
  %v62 = vunpack.c.h.b16 %v24
  %v63 = vunpack.c.l.b16 %v25
  %v64 = vunpack.c.h.b16 %v25
  %v65 = vunpack.c.l.b16 %v26
  %v66 = vunpack.c.h.b16 %v26
  %v67 = vunpack.c.l.b16 %v27
  %v68 = vunpack.c.h.b16 %v27
  %v69 = vunpack.c.l.b16 %v28
  %v70 = vunpack.c.h.b16 %v28
  %v71 = vunpack.c.l.b16 %v29
  %v72 = vunpack.c.h.b16 %v29
  %v73 = vunpack.c.l.b16 %v30
  %v74 = vunpack.c.h.b16 %v30
  %v75 = vunpack.c.l.b16 %v31
  %v76 = vunpack.c.h.b16 %v31
  %v77 = vunpack.c.l.b16 %v32
  %v78 = vunpack.c.h.b16 %v32
  %v79 = vunpack.c.l.b16 %v33
  %v80 = vunpack.c.h.b16 %v33
  %v81 = vunpack.c.l.b16 %v34
  %v82 = vunpack.c.h.b16 %v34
  %v83 = vpack.c.b16 %v53, %v51
  %v84 = vpack.c.b16 %v54, %v52
  %v85 = vpack.c.b16 %v57, %v55
  %v86 = vpack.c.b16 %v58, %v56
  %v87 = vpack.c.b16 %v61, %v59
  %v88 = vpack.c.b16 %v62, %v60
  %v89 = vpack.c.b16 %v65, %v63
  %v90 = vpack.c.b16 %v66, %v64
  %v91 = vpack.c.b16 %v69, %v67
  %v92 = vpack.c.b16 %v70, %v68
  %v93 = vpack.c.b16 %v73, %v71
  %v94 = vpack.c.b16 %v74, %v72
  %v95 = vpack.c.b16 %v77, %v75
  %v96 = vpack.c.b16 %v78, %v76
  %v97 = vpack.c.b16 %v81, %v79
  %v98 = vpack.c.b16 %v82, %v80
  %115 = vmatprep.subr.bf16.mxu0 %v84
  %116 = vmatpush1.bf16.msra.mxu0 %v83
  %117 = vmatprep.subr.bf16.mxu0 %v86
  %118 = vmatpush1.bf16.msra.mxu0 %v85
  %119 = vmatprep.subr.bf16.mxu0 %v88
  %120 = vmatpush1.bf16.msra.mxu0 %v87
  %121 = vmatprep.subr.bf16.mxu0 %v90
  %122 = vmatpush1.bf16.msra.mxu0 %v89
  %123 = vmatprep.subr.bf16.mxu0 %v92
  %124 = vmatpush1.bf16.msra.mxu0 %v91
  %125 = vmatprep.subr.bf16.mxu0 %v94
  %126 = vmatpush1.bf16.msra.mxu0 %v93
  %127 = vmatprep.subr.bf16.mxu0 %v96
  %128 = vmatpush1.bf16.msra.mxu0 %v95
  %129 = vmatprep.subr.bf16.mxu0 %v98
  %130 = vmatpush1.bf16.msra.mxu0 %v97
  %131 = vmatprep.subr.bf16.mxu0 0
  %132 = vmatpush1.bf16.msra.mxu0 0
  %133 = vmatprep.subr.bf16.mxu0 0
  %134 = vmatpush1.bf16.msra.mxu0 0
  %135 = vmatprep.subr.bf16.mxu0 0
  %136 = vmatpush1.bf16.msra.mxu0 0
  %137 = vmatprep.subr.bf16.mxu0 0
  %138 = vmatpush1.bf16.msra.mxu0 0
  %139 = vmatprep.subr.bf16.mxu0 0
  %140 = vmatpush1.bf16.msra.mxu0 0
  %141 = vmatprep.subr.bf16.mxu0 0
  %142 = vmatpush1.bf16.msra.mxu0 0
  %143 = vmatprep.subr.bf16.mxu0 0
  %144 = vmatpush1.bf16.msra.mxu0 0
  %145 = vmatprep.subr.bf16.mxu0 0
  %146 = vmatpush1.bf16.msra.mxu0 0
  %147 = vmatprep.mubr.bf16.mxu0 0
  %148 = vmatmul.mubr.bf16.gmra.mrb[0].mxu0 %v18
  %v149 = vpop.f32.mrb[0].mxu0
  %v150 = vadd.f32 0.0, %v149
  %v151 = vpop.f32.mrb[0].mxu0
  %v152 = vadd.f32 0.0, %v151
  %v153 = vpop.f32.mrb[0].mxu0
  %v154 = vpop.f32.mrb[0].mxu0
  %155 = vdwg.mxu0
  %v156 = vrot.slane %v150, 4
  %v157 = vadd.f32 %v150, %v156
  %v158 = vrot.slane %v157, 2
  %v159 = vadd.f32 %v157, %v158
  %v160 = vrot.slane %v159, 1
  %v161 = vadd.f32 %v159, %v160
  %v162 = vrot.slane %v152, 4
  %v163 = vadd.f32 %v152, %v162
  %v164 = vrot.slane %v163, 2
  %v165 = vadd.f32 %v163, %v164
  %v166 = vrot.slane %v165, 1
  %v167 = vadd.f32 %v165, %v166
  %v168 = vrcp.pop 8.0
  %v169 = vmul.f32 %v161, %v168
  %v170 = vmul.f32 %v167, %v168
  %v171 = vsub.f32 %v150, %v169
  %v172 = vsub.f32 %v152, %v170
  %v173 = vmul.f32 %v171, %v171
  %v174 = vmul.f32 %v172, %v172
  %v175 = vrot.slane %v173, 4
  %v176 = vadd.f32 %v173, %v175
  %v177 = vrot.slane %v176, 2
  %v178 = vadd.f32 %v176, %v177
  %v179 = vrot.slane %v178, 1
  %v180 = vadd.f32 %v178, %v179
  %v181 = vrot.slane %v174, 4
  %v182 = vadd.f32 %v174, %v181
  %v183 = vrot.slane %v182, 2
  %v184 = vadd.f32 %v182, %v183
  %v185 = vrot.slane %v184, 1
  %v186 = vadd.f32 %v184, %v185
  %v187 = vmul.f32 %v180, %v168
  %v188 = vmul.f32 %v186, %v168
  %v189 = vld [vmem:[%s2] sm:$0x3]
  %v190 = vadd.f32 %v187, 1e-05
  %v191 = vadd.f32 %v188, 1e-05
  %v192 = vrsqrt.pop %v190
  %v193 = vrsqrt.pop %v191
  %v196 = vcombine.low %v192, %v193
  %v198 = vunpack.c.l.s4 1966171168
  %v199 = vunpack.c.0.s8 %v198
  %v200 = vlaneseq
  %v201 = vshrl.u32 %v200, 7
  %v202 = vsub.s32 %v199, %v201
  %v203 = vrot.slane %v196, %v202
  %v205 = vunpack.c.l.s4 1966171168
  %v206 = vunpack.c.0.s8 %v205
  %v207 = vlaneseq
  %v208 = vshrl.u32 %v207, 7
  %v209 = vsub.s32 %v206, %v208
  %v210 = vrot.slane %v203, %v209
  %v212 = vmul.f32 %v189, %v210
  %v214 = vlaneseq
  %v215 = vshrl.u32 %v214, 7
  %v216 = vsub.s32 0, %v215
  %v217 = vrot.slane %v212, %v216
  %v218 = vlaneseq
  %v219 = vshrl.u32 %v218, 7
  %v220 = vsub.s32 1, %v219
  %v221 = vrot.slane %v212, %v220
  %v224 = vmul.f32 %v171, %v217
  %v225 = vmul.f32 %v172, %v221
  %v226 = vld [vmem:[%s3] sm:$0x3]
  %v228 = vlaneseq
  %v229 = vshrl.u32 %v228, 7
  %v230 = vsub.s32 0, %v229
  %v231 = vrot.slane %v226, %v230
  %v232 = vlaneseq
  %v233 = vshrl.u32 %v232, 7
  %v234 = vsub.s32 1, %v233
  %v235 = vrot.slane %v226, %v234
  %v238 = vadd.f32 %v224, %v231
  %v239 = vadd.f32 %v225, %v235
  %240 = vst [vmem:[%s4] sm:$0xff] %v238
  %241 = vst [vmem:[%s4 + $0x8] sm:$0xff] %v239
  // Predicated region
  $region18: #{resnet_comp_forward.18} parent=0 // pred_check
    _
  $region19: #{resnet_comp_forward.18} parent=0 // pred_check_branch
    %243 = sbr.rel (0) target = $region21
  $region20: #{resnet_comp_forward.18} parent=0 // pred_region
    _
  $region21: #{resnet_comp_forward.18} parent=0 // pred_fallthru
    _
  // Predicated region
  $region22: #{resnet_comp_forward.18} parent=0 // pred_check
    _
  $region23: #{resnet_comp_forward.18} parent=0 // pred_check_branch
    %245 = sbr.rel (0) target = $region25
  $region24: #{resnet_comp_forward.18} parent=0 // pred_region
    _
  $region25: #{resnet_comp_forward.18} parent=0 // pred_fallthru
    _

// kernel: resnet_comp_forward.19
$region0: #{resnet_comp_forward.19}
  #allocation0 [shape = 'u32[]', space=smem, size = 0x4, offset = 0x4, fixed_abs, tag = 'smem constant byte address 0x4 - core index']
  #allocation1 [shape = 'u32[144,128]{1,0:T(1,128)}', space=vmem, size = 0x12000, scoped, tag = 'internal scratch']
  %s0 = inlined_call_operand.vmem [shape: bf16[8,2304], index: 0, kind: input, shape index: {}]
  %s1 = inlined_call_operand.vmem [shape: bf16[2304,256], index: 1, kind: input, shape index: {}]
  %s2 = inlined_call_operand.vmem [shape: f32[1,256], index: 2, kind: input, shape index: {}]
  %s3 = inlined_call_operand.vmem [shape: f32[1,256], index: 3, kind: input, shape index: {}]
  %s4 = inlined_call_operand.vmem [shape: f32[8,256], index: 4, kind: input, shape index: {}]
  %s5 = inlined_call_operand.vmem [shape: f32[8,256], index: 5, kind: output, shape index: {}]
  %s6 = sld [smem:[#allocation0]]
  $region30: #{resnet_comp_forward.19} parent=0
    _
  %s8 = ssub.s32 1, %s6
  %s9 = scalar_select 0, %s8, %s6
  // Predicated region
  $region2: #{resnet_comp_forward.19} parent=0 // pred_check
    _
  $region3: #{resnet_comp_forward.19} parent=0 // pred_check_branch
    %11 = sbr.rel (0) target = $region5
  $region4: #{resnet_comp_forward.19} parent=0 // pred_region
    _
  $region5: #{resnet_comp_forward.19} parent=0 // pred_fallthru
    _
  // Predicated region
  $region6: #{resnet_comp_forward.19} parent=0 // pred_check
    _
  $region7: #{resnet_comp_forward.19} parent=0 // pred_check_branch
    %13 = sbr.rel (0) target = $region9
  $region8: #{resnet_comp_forward.19} parent=0 // pred_region
    _
  $region9: #{resnet_comp_forward.19} parent=0 // pred_fallthru
    _
  // Predicated region
  $region10: #{resnet_comp_forward.19} parent=0 // pred_check
    _
  $region11: #{resnet_comp_forward.19} parent=0 // pred_check_branch
    %15 = sbr.rel (0) target = $region13
  $region12: #{resnet_comp_forward.19} parent=0 // pred_region
    _
  $region13: #{resnet_comp_forward.19} parent=0 // pred_fallthru
    _
  // Predicated region
  $region14: #{resnet_comp_forward.19} parent=0 // pred_check
    _
  $region15: #{resnet_comp_forward.19} parent=0 // pred_check_branch
    %17 = sbr.rel (0) target = $region17
  $region16: #{resnet_comp_forward.19} parent=0 // pred_region
    _
  $region17: #{resnet_comp_forward.19} parent=0 // pred_fallthru
    _
  // Predicated region
  $region18: #{resnet_comp_forward.19} parent=0 // pred_check
    _
  $region19: #{resnet_comp_forward.19} parent=0 // pred_check_branch
    %19 = sbr.rel (0) target = $region21
  $region20: #{resnet_comp_forward.19} parent=0 // pred_region
    _
  $region21: #{resnet_comp_forward.19} parent=0 // pred_fallthru
    _
  %v20 = vld [vmem:[%s0] sm:$0xff]
  %v21 = vld [vmem:[%s0 + $0x8] sm:$0xff]
  %v22 = vld [vmem:[%s0 + $0x10] sm:$0xff]
  %v23 = vld [vmem:[%s0 + $0x18] sm:$0xff]
  %v24 = vld [vmem:[%s0 + $0x20] sm:$0xff]
  %v25 = vld [vmem:[%s0 + $0x28] sm:$0xff]
  %v26 = vld [vmem:[%s0 + $0x30] sm:$0xff]
  %v27 = vld [vmem:[%s0 + $0x38] sm:$0xff]
  %v28 = vld [vmem:[%s0 + $0x40] sm:$0xff]
  %v29 = vld [vmem:[%s1] sm:$0xff]
  %v30 = vld [vmem:[%s1 + $0x8] sm:$0xff]
  %v31 = vld [vmem:[%s1 + $0x10] sm:$0xff]
  %v32 = vld [vmem:[%s1 + $0x18] sm:$0xff]
  %v33 = vld [vmem:[%s1 + $0x20] sm:$0xff]
  %v34 = vld [vmem:[%s1 + $0x28] sm:$0xff]
  %v35 = vld [vmem:[%s1 + $0x30] sm:$0xff]
  %v36 = vld [vmem:[%s1 + $0x38] sm:$0xff]
  %v37 = vld [vmem:[%s1 + $0x40] sm:$0xff]
  %v38 = vld [vmem:[%s1 + $0x48] sm:$0xff]
  %v39 = vld [vmem:[%s1 + $0x50] sm:$0xff]
  %v40 = vld [vmem:[%s1 + $0x58] sm:$0xff]
  %v41 = vld [vmem:[%s1 + $0x60] sm:$0xff]
  %v42 = vld [vmem:[%s1 + $0x68] sm:$0xff]
  %v43 = vld [vmem:[%s1 + $0x70] sm:$0xff]
  %v44 = vld [vmem:[%s1 + $0x78] sm:$0xff]
  %v45 = vld [vmem:[%s1 + $0x80] sm:$0xff]
  %v46 = vld [vmem:[%s1 + $0x88] sm:$0xff]
  %v47 = vld [vmem:[%s1 + $0x90] sm:$0xff]
  %v48 = vld [vmem:[%s1 + $0x98] sm:$0xff]
  %v49 = vld [vmem:[%s1 + $0xa0] sm:$0xff]
  %v50 = vld [vmem:[%s1 + $0xa8] sm:$0xff]
  %v51 = vld [vmem:[%s1 + $0xb0] sm:$0xff]
  %v52 = vld [vmem:[%s1 + $0xb8] sm:$0xff]
  %v53 = vld [vmem:[%s1 + $0xc0] sm:$0xff]
  %v54 = vld [vmem:[%s1 + $0xc8] sm:$0xff]
  %v55 = vld [vmem:[%s1 + $0xd0] sm:$0xff]
  %v56 = vld [vmem:[%s1 + $0xd8] sm:$0xff]
  %v57 = vld [vmem:[%s1 + $0xe0] sm:$0xff]
  %v58 = vld [vmem:[%s1 + $0xe8] sm:$0xff]
  %v59 = vld [vmem:[%s1 + $0xf0] sm:$0xff]
  %v60 = vld [vmem:[%s1 + $0xf8] sm:$0xff]
  %v61 = vld [vmem:[%s1 + $0x100] sm:$0xff]
  %v62 = vld [vmem:[%s1 + $0x108] sm:$0xff]
  %v63 = vld [vmem:[%s1 + $0x110] sm:$0xff]
  %v64 = vld [vmem:[%s1 + $0x118] sm:$0xff]
  %v65 = vld [vmem:[%s1 + $0x120] sm:$0xff]
  %v66 = vld [vmem:[%s1 + $0x128] sm:$0xff]
  %v67 = vld [vmem:[%s1 + $0x130] sm:$0xff]
  %v68 = vld [vmem:[%s1 + $0x138] sm:$0xff]
  %v69 = vld [vmem:[%s1 + $0x140] sm:$0xff]
  %v70 = vld [vmem:[%s1 + $0x148] sm:$0xff]
  %v71 = vld [vmem:[%s1 + $0x150] sm:$0xff]
  %v72 = vld [vmem:[%s1 + $0x158] sm:$0xff]
  %v73 = vld [vmem:[%s1 + $0x160] sm:$0xff]
  %v74 = vld [vmem:[%s1 + $0x168] sm:$0xff]
  %v75 = vld [vmem:[%s1 + $0x170] sm:$0xff]
  %v76 = vld [vmem:[%s1 + $0x178] sm:$0xff]
  %v77 = vld [vmem:[%s1 + $0x180] sm:$0xff]
  %v78 = vld [vmem:[%s1 + $0x188] sm:$0xff]
  %v79 = vld [vmem:[%s1 + $0x190] sm:$0xff]
  %v80 = vld [vmem:[%s1 + $0x198] sm:$0xff]
  %v81 = vld [vmem:[%s1 + $0x1a0] sm:$0xff]
  %v82 = vld [vmem:[%s1 + $0x1a8] sm:$0xff]
  %v83 = vld [vmem:[%s1 + $0x1b0] sm:$0xff]
  %v84 = vld [vmem:[%s1 + $0x1b8] sm:$0xff]
  %v85 = vld [vmem:[%s1 + $0x1c0] sm:$0xff]
  %v86 = vld [vmem:[%s1 + $0x1c8] sm:$0xff]
  %v87 = vld [vmem:[%s1 + $0x1d0] sm:$0xff]
  %v88 = vld [vmem:[%s1 + $0x1d8] sm:$0xff]
  %v89 = vld [vmem:[%s1 + $0x1e0] sm:$0xff]
  %v90 = vld [vmem:[%s1 + $0x1e8] sm:$0xff]
  %v91 = vld [vmem:[%s1 + $0x1f0] sm:$0xff]
  %v92 = vld [vmem:[%s1 + $0x1f8] sm:$0xff]
  %v93 = vld [vmem:[%s1 + $0x200] sm:$0xff]
  %v94 = vld [vmem:[%s1 + $0x208] sm:$0xff]
  %v95 = vld [vmem:[%s1 + $0x210] sm:$0xff]
  %v96 = vld [vmem:[%s1 + $0x218] sm:$0xff]
  %v97 = vld [vmem:[%s1 + $0x220] sm:$0xff]
  %v98 = vld [vmem:[%s1 + $0x228] sm:$0xff]
  %v99 = vld [vmem:[%s1 + $0x230] sm:$0xff]
  %v100 = vld [vmem:[%s1 + $0x238] sm:$0xff]
  %v101 = vld [vmem:[%s1 + $0x240] sm:$0xff]
  %v102 = vld [vmem:[%s1 + $0x248] sm:$0xff]
  %v103 = vld [vmem:[%s1 + $0x250] sm:$0xff]
  %v104 = vld [vmem:[%s1 + $0x258] sm:$0xff]
  %v105 = vld [vmem:[%s1 + $0x260] sm:$0xff]
  %v106 = vld [vmem:[%s1 + $0x268] sm:$0xff]
  %v107 = vld [vmem:[%s1 + $0x270] sm:$0xff]
  %v108 = vld [vmem:[%s1 + $0x278] sm:$0xff]
  %v109 = vld [vmem:[%s1 + $0x280] sm:$0xff]
  %v110 = vld [vmem:[%s1 + $0x288] sm:$0xff]
  %v111 = vld [vmem:[%s1 + $0x290] sm:$0xff]
  %v112 = vld [vmem:[%s1 + $0x298] sm:$0xff]
  %v113 = vld [vmem:[%s1 + $0x2a0] sm:$0xff]
  %v114 = vld [vmem:[%s1 + $0x2a8] sm:$0xff]
  %v115 = vld [vmem:[%s1 + $0x2b0] sm:$0xff]
  %v116 = vld [vmem:[%s1 + $0x2b8] sm:$0xff]
  %v117 = vld [vmem:[%s1 + $0x2c0] sm:$0xff]
  %v118 = vld [vmem:[%s1 + $0x2c8] sm:$0xff]
  %v119 = vld [vmem:[%s1 + $0x2d0] sm:$0xff]
  %v120 = vld [vmem:[%s1 + $0x2d8] sm:$0xff]
  %v121 = vld [vmem:[%s1 + $0x2e0] sm:$0xff]
  %v122 = vld [vmem:[%s1 + $0x2e8] sm:$0xff]
  %v123 = vld [vmem:[%s1 + $0x2f0] sm:$0xff]
  %v124 = vld [vmem:[%s1 + $0x2f8] sm:$0xff]
  %v125 = vld [vmem:[%s1 + $0x300] sm:$0xff]
  %v126 = vld [vmem:[%s1 + $0x308] sm:$0xff]
  %v127 = vld [vmem:[%s1 + $0x310] sm:$0xff]
  %v128 = vld [vmem:[%s1 + $0x318] sm:$0xff]
  %v129 = vld [vmem:[%s1 + $0x320] sm:$0xff]
  %v130 = vld [vmem:[%s1 + $0x328] sm:$0xff]
  %v131 = vld [vmem:[%s1 + $0x330] sm:$0xff]
  %v132 = vld [vmem:[%s1 + $0x338] sm:$0xff]
  %v133 = vld [vmem:[%s1 + $0x340] sm:$0xff]
  %v134 = vld [vmem:[%s1 + $0x348] sm:$0xff]
  %v135 = vld [vmem:[%s1 + $0x350] sm:$0xff]
  %v136 = vld [vmem:[%s1 + $0x358] sm:$0xff]
  %v137 = vld [vmem:[%s1 + $0x360] sm:$0xff]
  %v138 = vld [vmem:[%s1 + $0x368] sm:$0xff]
  %v139 = vld [vmem:[%s1 + $0x370] sm:$0xff]
  %v140 = vld [vmem:[%s1 + $0x378] sm:$0xff]
  %v141 = vld [vmem:[%s1 + $0x380] sm:$0xff]
  %v142 = vld [vmem:[%s1 + $0x388] sm:$0xff]
  %v143 = vld [vmem:[%s1 + $0x390] sm:$0xff]
  %v144 = vld [vmem:[%s1 + $0x398] sm:$0xff]
  %v145 = vld [vmem:[%s1 + $0x3a0] sm:$0xff]
  %v146 = vld [vmem:[%s1 + $0x3a8] sm:$0xff]
  %v147 = vld [vmem:[%s1 + $0x3b0] sm:$0xff]
  %v148 = vld [vmem:[%s1 + $0x3b8] sm:$0xff]
  %v149 = vld [vmem:[%s1 + $0x3c0] sm:$0xff]
  %v150 = vld [vmem:[%s1 + $0x3c8] sm:$0xff]
  %v151 = vld [vmem:[%s1 + $0x3d0] sm:$0xff]
  %v152 = vld [vmem:[%s1 + $0x3d8] sm:$0xff]
  %v153 = vld [vmem:[%s1 + $0x3e0] sm:$0xff]
  %v154 = vld [vmem:[%s1 + $0x3e8] sm:$0xff]
  %v155 = vld [vmem:[%s1 + $0x3f0] sm:$0xff]
  %v156 = vld [vmem:[%s1 + $0x3f8] sm:$0xff]
  %v157 = vld [vmem:[%s1 + $0x400] sm:$0xff]
  %v158 = vld [vmem:[%s1 + $0x408] sm:$0xff]
  %v159 = vld [vmem:[%s1 + $0x410] sm:$0xff]
  %v160 = vld [vmem:[%s1 + $0x418] sm:$0xff]
  %v161 = vld [vmem:[%s1 + $0x420] sm:$0xff]
  %v162 = vld [vmem:[%s1 + $0x428] sm:$0xff]
  %v163 = vld [vmem:[%s1 + $0x430] sm:$0xff]
  %v164 = vld [vmem:[%s1 + $0x438] sm:$0xff]
  %v165 = vld [vmem:[%s1 + $0x440] sm:$0xff]
  %v166 = vld [vmem:[%s1 + $0x448] sm:$0xff]
  %v167 = vld [vmem:[%s1 + $0x450] sm:$0xff]
  %v168 = vld [vmem:[%s1 + $0x458] sm:$0xff]
  %v169 = vld [vmem:[%s1 + $0x460] sm:$0xff]
  %v170 = vld [vmem:[%s1 + $0x468] sm:$0xff]
  %v171 = vld [vmem:[%s1 + $0x470] sm:$0xff]
  %v172 = vld [vmem:[%s1 + $0x478] sm:$0xff]
  %v173 = vld [vmem:[%s1 + $0x480] sm:$0xff]
  %v174 = vld [vmem:[%s1 + $0x488] sm:$0xff]
  %v175 = vld [vmem:[%s1 + $0x490] sm:$0xff]
  %v176 = vld [vmem:[%s1 + $0x498] sm:$0xff]
  %v177 = vld [vmem:[%s1 + $0x4a0] sm:$0xff]
  %v178 = vld [vmem:[%s1 + $0x4a8] sm:$0xff]
  %v179 = vld [vmem:[%s1 + $0x4b0] sm:$0xff]
  %v180 = vld [vmem:[%s1 + $0x4b8] sm:$0xff]
  %v181 = vld [vmem:[%s1 + $0x4c0] sm:$0xff]
  %v182 = vld [vmem:[%s1 + $0x4c8] sm:$0xff]
  %v183 = vld [vmem:[%s1 + $0x4d0] sm:$0xff]
  %v184 = vld [vmem:[%s1 + $0x4d8] sm:$0xff]
  %v185 = vld [vmem:[%s1 + $0x4e0] sm:$0xff]
  %v186 = vld [vmem:[%s1 + $0x4e8] sm:$0xff]
  %v187 = vld [vmem:[%s1 + $0x4f0] sm:$0xff]
  %v188 = vld [vmem:[%s1 + $0x4f8] sm:$0xff]
  %v189 = vld [vmem:[%s1 + $0x500] sm:$0xff]
  %v190 = vld [vmem:[%s1 + $0x508] sm:$0xff]
  %v191 = vld [vmem:[%s1 + $0x510] sm:$0xff]
  %v192 = vld [vmem:[%s1 + $0x518] sm:$0xff]
  %v193 = vld [vmem:[%s1 + $0x520] sm:$0xff]
  %v194 = vld [vmem:[%s1 + $0x528] sm:$0xff]
  %v195 = vld [vmem:[%s1 + $0x530] sm:$0xff]
  %v196 = vld [vmem:[%s1 + $0x538] sm:$0xff]
  %v197 = vld [vmem:[%s1 + $0x540] sm:$0xff]
  %v198 = vld [vmem:[%s1 + $0x548] sm:$0xff]
  %v199 = vld [vmem:[%s1 + $0x550] sm:$0xff]
  %v200 = vld [vmem:[%s1 + $0x558] sm:$0xff]
  %v201 = vld [vmem:[%s1 + $0x560] sm:$0xff]
  %v202 = vld [vmem:[%s1 + $0x568] sm:$0xff]
  %v203 = vld [vmem:[%s1 + $0x570] sm:$0xff]
  %v204 = vld [vmem:[%s1 + $0x578] sm:$0xff]
  %v205 = vld [vmem:[%s1 + $0x580] sm:$0xff]
  %v206 = vld [vmem:[%s1 + $0x588] sm:$0xff]
  %v207 = vld [vmem:[%s1 + $0x590] sm:$0xff]
  %v208 = vld [vmem:[%s1 + $0x598] sm:$0xff]
  %v209 = vld [vmem:[%s1 + $0x5a0] sm:$0xff]
  %v210 = vld [vmem:[%s1 + $0x5a8] sm:$0xff]
  %v211 = vld [vmem:[%s1 + $0x5b0] sm:$0xff]
  %v212 = vld [vmem:[%s1 + $0x5b8] sm:$0xff]
  %v213 = vld [vmem:[%s1 + $0x5c0] sm:$0xff]
  %v214 = vld [vmem:[%s1 + $0x5c8] sm:$0xff]
  %v215 = vld [vmem:[%s1 + $0x5d0] sm:$0xff]
  %v216 = vld [vmem:[%s1 + $0x5d8] sm:$0xff]
  %v217 = vld [vmem:[%s1 + $0x5e0] sm:$0xff]
  %v218 = vld [vmem:[%s1 + $0x5e8] sm:$0xff]
  %v219 = vld [vmem:[%s1 + $0x5f0] sm:$0xff]
  %v220 = vld [vmem:[%s1 + $0x5f8] sm:$0xff]
  %v221 = vld [vmem:[%s1 + $0x600] sm:$0xff]
  %v222 = vld [vmem:[%s1 + $0x608] sm:$0xff]
  %v223 = vld [vmem:[%s1 + $0x610] sm:$0xff]
  %v224 = vld [vmem:[%s1 + $0x618] sm:$0xff]
  %v225 = vld [vmem:[%s1 + $0x620] sm:$0xff]
  %v226 = vld [vmem:[%s1 + $0x628] sm:$0xff]
  %v227 = vld [vmem:[%s1 + $0x630] sm:$0xff]
  %v228 = vld [vmem:[%s1 + $0x638] sm:$0xff]
  %v229 = vld [vmem:[%s1 + $0x640] sm:$0xff]
  %v230 = vld [vmem:[%s1 + $0x648] sm:$0xff]
  %v231 = vld [vmem:[%s1 + $0x650] sm:$0xff]
  %v232 = vld [vmem:[%s1 + $0x658] sm:$0xff]
  %v233 = vld [vmem:[%s1 + $0x660] sm:$0xff]
  %v234 = vld [vmem:[%s1 + $0x668] sm:$0xff]
  %v235 = vld [vmem:[%s1 + $0x670] sm:$0xff]
  %v236 = vld [vmem:[%s1 + $0x678] sm:$0xff]
  %v237 = vld [vmem:[%s1 + $0x680] sm:$0xff]
  %v238 = vld [vmem:[%s1 + $0x688] sm:$0xff]
  %v239 = vld [vmem:[%s1 + $0x690] sm:$0xff]
  %v240 = vld [vmem:[%s1 + $0x698] sm:$0xff]
  %v241 = vld [vmem:[%s1 + $0x6a0] sm:$0xff]
  %v242 = vld [vmem:[%s1 + $0x6a8] sm:$0xff]
  %v243 = vld [vmem:[%s1 + $0x6b0] sm:$0xff]
  %v244 = vld [vmem:[%s1 + $0x6b8] sm:$0xff]
  %v245 = vld [vmem:[%s1 + $0x6c0] sm:$0xff]
  %v246 = vld [vmem:[%s1 + $0x6c8] sm:$0xff]
  %v247 = vld [vmem:[%s1 + $0x6d0] sm:$0xff]
  %v248 = vld [vmem:[%s1 + $0x6d8] sm:$0xff]
  %v249 = vld [vmem:[%s1 + $0x6e0] sm:$0xff]
  %v250 = vld [vmem:[%s1 + $0x6e8] sm:$0xff]
  %v251 = vld [vmem:[%s1 + $0x6f0] sm:$0xff]
  %v252 = vld [vmem:[%s1 + $0x6f8] sm:$0xff]
  %v253 = vld [vmem:[%s1 + $0x700] sm:$0xff]
  %v254 = vld [vmem:[%s1 + $0x708] sm:$0xff]
  %v255 = vld [vmem:[%s1 + $0x710] sm:$0xff]
  %v256 = vld [vmem:[%s1 + $0x718] sm:$0xff]
  %v257 = vld [vmem:[%s1 + $0x720] sm:$0xff]
  %v258 = vld [vmem:[%s1 + $0x728] sm:$0xff]
  %v259 = vld [vmem:[%s1 + $0x730] sm:$0xff]
  %v260 = vld [vmem:[%s1 + $0x738] sm:$0xff]
  %v261 = vld [vmem:[%s1 + $0x740] sm:$0xff]
  %v262 = vld [vmem:[%s1 + $0x748] sm:$0xff]
  %v263 = vld [vmem:[%s1 + $0x750] sm:$0xff]
  %v264 = vld [vmem:[%s1 + $0x758] sm:$0xff]
  %v265 = vld [vmem:[%s1 + $0x760] sm:$0xff]
  %v266 = vld [vmem:[%s1 + $0x768] sm:$0xff]
  %v267 = vld [vmem:[%s1 + $0x770] sm:$0xff]
  %v268 = vld [vmem:[%s1 + $0x778] sm:$0xff]
  %v269 = vld [vmem:[%s1 + $0x780] sm:$0xff]
  %v270 = vld [vmem:[%s1 + $0x788] sm:$0xff]
  %v271 = vld [vmem:[%s1 + $0x790] sm:$0xff]
  %v272 = vld [vmem:[%s1 + $0x798] sm:$0xff]
  %v273 = vld [vmem:[%s1 + $0x7a0] sm:$0xff]
  %v274 = vld [vmem:[%s1 + $0x7a8] sm:$0xff]
  %v275 = vld [vmem:[%s1 + $0x7b0] sm:$0xff]
  %v276 = vld [vmem:[%s1 + $0x7b8] sm:$0xff]
  %v277 = vld [vmem:[%s1 + $0x7c0] sm:$0xff]
  %v278 = vld [vmem:[%s1 + $0x7c8] sm:$0xff]
  %v279 = vld [vmem:[%s1 + $0x7d0] sm:$0xff]
  %v280 = vld [vmem:[%s1 + $0x7d8] sm:$0xff]
  %v281 = vld [vmem:[%s1 + $0x7e0] sm:$0xff]
  %v282 = vld [vmem:[%s1 + $0x7e8] sm:$0xff]
  %v283 = vld [vmem:[%s1 + $0x7f0] sm:$0xff]
  %v284 = vld [vmem:[%s1 + $0x7f8] sm:$0xff]
  %v285 = vld [vmem:[%s1 + $0x800] sm:$0xff]
  %v286 = vld [vmem:[%s1 + $0x808] sm:$0xff]
  %v287 = vld [vmem:[%s1 + $0x810] sm:$0xff]
  %v288 = vld [vmem:[%s1 + $0x818] sm:$0xff]
  %v289 = vld [vmem:[%s1 + $0x820] sm:$0xff]
  %v290 = vld [vmem:[%s1 + $0x828] sm:$0xff]
  %v291 = vld [vmem:[%s1 + $0x830] sm:$0xff]
  %v292 = vld [vmem:[%s1 + $0x838] sm:$0xff]
  %v293 = vld [vmem:[%s1 + $0x840] sm:$0xff]
  %v294 = vld [vmem:[%s1 + $0x848] sm:$0xff]
  %v295 = vld [vmem:[%s1 + $0x850] sm:$0xff]
  %v296 = vld [vmem:[%s1 + $0x858] sm:$0xff]
  %v297 = vld [vmem:[%s1 + $0x860] sm:$0xff]
  %v298 = vld [vmem:[%s1 + $0x868] sm:$0xff]
  %v299 = vld [vmem:[%s1 + $0x870] sm:$0xff]
  %v300 = vld [vmem:[%s1 + $0x878] sm:$0xff]
  %v301 = vld [vmem:[%s1 + $0x880] sm:$0xff]
  %v302 = vld [vmem:[%s1 + $0x888] sm:$0xff]
  %v303 = vld [vmem:[%s1 + $0x890] sm:$0xff]
  %v304 = vld [vmem:[%s1 + $0x898] sm:$0xff]
  %v305 = vld [vmem:[%s1 + $0x8a0] sm:$0xff]
  %v306 = vld [vmem:[%s1 + $0x8a8] sm:$0xff]
  %v307 = vld [vmem:[%s1 + $0x8b0] sm:$0xff]
  %v308 = vld [vmem:[%s1 + $0x8b8] sm:$0xff]
  %v309 = vld [vmem:[%s1 + $0x8c0] sm:$0xff]
  %v310 = vld [vmem:[%s1 + $0x8c8] sm:$0xff]
  %v311 = vld [vmem:[%s1 + $0x8d0] sm:$0xff]
  %v312 = vld [vmem:[%s1 + $0x8d8] sm:$0xff]
  %v313 = vld [vmem:[%s1 + $0x8e0] sm:$0xff]
  %v314 = vld [vmem:[%s1 + $0x8e8] sm:$0xff]
  %v315 = vld [vmem:[%s1 + $0x8f0] sm:$0xff]
  %v316 = vld [vmem:[%s1 + $0x8f8] sm:$0xff]
  %v326 = vunpack.c.l.b16 %v20
  %v327 = vunpack.c.h.b16 %v20
  %v328 = vunpack.c.l.b16 %v21
  %v329 = vunpack.c.h.b16 %v21
  %v330 = vunpack.c.l.b16 %v22
  %v331 = vunpack.c.h.b16 %v22
  %v332 = vunpack.c.l.b16 %v23
  %v333 = vunpack.c.h.b16 %v23
  %v334 = vunpack.c.l.b16 %v24
  %v335 = vunpack.c.h.b16 %v24
  %v336 = vunpack.c.l.b16 %v25
  %v337 = vunpack.c.h.b16 %v25
  %v338 = vunpack.c.l.b16 %v26
  %v339 = vunpack.c.h.b16 %v26
  %v340 = vunpack.c.l.b16 %v27
  %v341 = vunpack.c.h.b16 %v27
  %v342 = vunpack.c.l.b16 %v28
  %v343 = vunpack.c.h.b16 %v28
  %v344 = vpack.c.b16 %v326, %v326
  %v345 = vpack.c.b16 %v327, %v327
  %v346 = vpack.c.b16 %v328, %v328
  %v347 = vpack.c.b16 %v329, %v329
  %v348 = vpack.c.b16 %v330, %v330
  %v349 = vpack.c.b16 %v331, %v331
  %v350 = vpack.c.b16 %v332, %v332
  %v351 = vpack.c.b16 %v333, %v333
  %v352 = vpack.c.b16 %v334, %v334
  %v353 = vpack.c.b16 %v335, %v335
  %v354 = vpack.c.b16 %v336, %v336
  %v355 = vpack.c.b16 %v337, %v337
  %v356 = vpack.c.b16 %v338, %v338
  %v357 = vpack.c.b16 %v339, %v339
  %v358 = vpack.c.b16 %v340, %v340
  %v359 = vpack.c.b16 %v341, %v341
  %v360 = vpack.c.b16 %v342, %v342
  %v361 = vpack.c.b16 %v343, %v343
  %v668 = vunpack.c.l.b16 %v29
  %v669 = vunpack.c.h.b16 %v29
  %v670 = vunpack.c.l.b16 %v30
  %v671 = vunpack.c.h.b16 %v30
  %v672 = vunpack.c.l.b16 %v31
  %v673 = vunpack.c.h.b16 %v31
  %v674 = vunpack.c.l.b16 %v32
  %v675 = vunpack.c.h.b16 %v32
  %v676 = vunpack.c.l.b16 %v33
  %v677 = vunpack.c.h.b16 %v33
  %v678 = vunpack.c.l.b16 %v34
  %v679 = vunpack.c.h.b16 %v34
  %v680 = vunpack.c.l.b16 %v35
  %v681 = vunpack.c.h.b16 %v35
  %v682 = vunpack.c.l.b16 %v36
  %v683 = vunpack.c.h.b16 %v36
  %v684 = vunpack.c.l.b16 %v37
  %v685 = vunpack.c.h.b16 %v37
  %v686 = vunpack.c.l.b16 %v38
  %v687 = vunpack.c.h.b16 %v38
  %v688 = vunpack.c.l.b16 %v39
  %v689 = vunpack.c.h.b16 %v39
  %v690 = vunpack.c.l.b16 %v40
  %v691 = vunpack.c.h.b16 %v40
  %v692 = vunpack.c.l.b16 %v41
  %v693 = vunpack.c.h.b16 %v41
  %v694 = vunpack.c.l.b16 %v42
  %v695 = vunpack.c.h.b16 %v42
  %v696 = vunpack.c.l.b16 %v43
  %v697 = vunpack.c.h.b16 %v43
  %v698 = vunpack.c.l.b16 %v44
  %v699 = vunpack.c.h.b16 %v44
  %v700 = vunpack.c.l.b16 %v45
  %v701 = vunpack.c.h.b16 %v45
  %v702 = vunpack.c.l.b16 %v46
  %v703 = vunpack.c.h.b16 %v46
  %v704 = vunpack.c.l.b16 %v47
  %v705 = vunpack.c.h.b16 %v47
  %v706 = vunpack.c.l.b16 %v48
  %v707 = vunpack.c.h.b16 %v48
  %v708 = vunpack.c.l.b16 %v49
  %v709 = vunpack.c.h.b16 %v49
  %v710 = vunpack.c.l.b16 %v50
  %v711 = vunpack.c.h.b16 %v50
  %v712 = vunpack.c.l.b16 %v51
  %v713 = vunpack.c.h.b16 %v51
  %v714 = vunpack.c.l.b16 %v52
  %v715 = vunpack.c.h.b16 %v52
  %v716 = vunpack.c.l.b16 %v53
  %v717 = vunpack.c.h.b16 %v53
  %v718 = vunpack.c.l.b16 %v54
  %v719 = vunpack.c.h.b16 %v54
  %v720 = vunpack.c.l.b16 %v55
  %v721 = vunpack.c.h.b16 %v55
  %v722 = vunpack.c.l.b16 %v56
  %v723 = vunpack.c.h.b16 %v56
  %v724 = vunpack.c.l.b16 %v57
  %v725 = vunpack.c.h.b16 %v57
  %v726 = vunpack.c.l.b16 %v58
  %v727 = vunpack.c.h.b16 %v58
  %v728 = vunpack.c.l.b16 %v59
  %v729 = vunpack.c.h.b16 %v59
  %v730 = vunpack.c.l.b16 %v60
  %v731 = vunpack.c.h.b16 %v60
  %v732 = vunpack.c.l.b16 %v61
  %v733 = vunpack.c.h.b16 %v61
  %v734 = vunpack.c.l.b16 %v62
  %v735 = vunpack.c.h.b16 %v62
  %v736 = vunpack.c.l.b16 %v63
  %v737 = vunpack.c.h.b16 %v63
  %v738 = vunpack.c.l.b16 %v64
  %v739 = vunpack.c.h.b16 %v64
  %v740 = vunpack.c.l.b16 %v65
  %v741 = vunpack.c.h.b16 %v65
  %v742 = vunpack.c.l.b16 %v66
  %v743 = vunpack.c.h.b16 %v66
  %v744 = vunpack.c.l.b16 %v67
  %v745 = vunpack.c.h.b16 %v67
  %v746 = vunpack.c.l.b16 %v68
  %v747 = vunpack.c.h.b16 %v68
  %v748 = vunpack.c.l.b16 %v69
  %v749 = vunpack.c.h.b16 %v69
  %v750 = vunpack.c.l.b16 %v70
  %v751 = vunpack.c.h.b16 %v70
  %v752 = vunpack.c.l.b16 %v71
  %v753 = vunpack.c.h.b16 %v71
  %v754 = vunpack.c.l.b16 %v72
  %v755 = vunpack.c.h.b16 %v72
  %v756 = vunpack.c.l.b16 %v73
  %v757 = vunpack.c.h.b16 %v73
  %v758 = vunpack.c.l.b16 %v74
  %v759 = vunpack.c.h.b16 %v74
  %v760 = vunpack.c.l.b16 %v75
  %v761 = vunpack.c.h.b16 %v75
  %v762 = vunpack.c.l.b16 %v76
  %v763 = vunpack.c.h.b16 %v76
  %v764 = vunpack.c.l.b16 %v77
  %v765 = vunpack.c.h.b16 %v77
  %v766 = vunpack.c.l.b16 %v78
  %v767 = vunpack.c.h.b16 %v78
  %v768 = vunpack.c.l.b16 %v79
  %v769 = vunpack.c.h.b16 %v79
  %v770 = vunpack.c.l.b16 %v80
  %v771 = vunpack.c.h.b16 %v80
  %v772 = vunpack.c.l.b16 %v81
  %v773 = vunpack.c.h.b16 %v81
  %v774 = vunpack.c.l.b16 %v82
  %v775 = vunpack.c.h.b16 %v82
  %v776 = vunpack.c.l.b16 %v83
  %v777 = vunpack.c.h.b16 %v83
  %v778 = vunpack.c.l.b16 %v84
  %v779 = vunpack.c.h.b16 %v84
  %v780 = vunpack.c.l.b16 %v85
  %v781 = vunpack.c.h.b16 %v85
  %v782 = vunpack.c.l.b16 %v86
  %v783 = vunpack.c.h.b16 %v86
  %v784 = vunpack.c.l.b16 %v87
  %v785 = vunpack.c.h.b16 %v87
  %v786 = vunpack.c.l.b16 %v88
  %v787 = vunpack.c.h.b16 %v88
  %v788 = vunpack.c.l.b16 %v89
  %v789 = vunpack.c.h.b16 %v89
  %v790 = vunpack.c.l.b16 %v90
  %v791 = vunpack.c.h.b16 %v90
  %v792 = vunpack.c.l.b16 %v91
  %v793 = vunpack.c.h.b16 %v91
  %v794 = vunpack.c.l.b16 %v92
  %v795 = vunpack.c.h.b16 %v92
  %v796 = vunpack.c.l.b16 %v93
  %v797 = vunpack.c.h.b16 %v93
  %v798 = vunpack.c.l.b16 %v94
  %v799 = vunpack.c.h.b16 %v94
  %v800 = vunpack.c.l.b16 %v95
  %v801 = vunpack.c.h.b16 %v95
  %v802 = vunpack.c.l.b16 %v96
  %v803 = vunpack.c.h.b16 %v96
  %v804 = vunpack.c.l.b16 %v97
  %v805 = vunpack.c.h.b16 %v97
  %v806 = vunpack.c.l.b16 %v98
  %v807 = vunpack.c.h.b16 %v98
  %v808 = vunpack.c.l.b16 %v99
  %v809 = vunpack.c.h.b16 %v99
  %v810 = vunpack.c.l.b16 %v100
  %v811 = vunpack.c.h.b16 %v100
  %v812 = vunpack.c.l.b16 %v101
  %v813 = vunpack.c.h.b16 %v101
  %v814 = vunpack.c.l.b16 %v102
  %v815 = vunpack.c.h.b16 %v102
  %v816 = vunpack.c.l.b16 %v103
  %v817 = vunpack.c.h.b16 %v103
  %v818 = vunpack.c.l.b16 %v104
  %v819 = vunpack.c.h.b16 %v104
  %v820 = vunpack.c.l.b16 %v105
  %v821 = vunpack.c.h.b16 %v105
  %v822 = vunpack.c.l.b16 %v106
  %v823 = vunpack.c.h.b16 %v106
  %v824 = vunpack.c.l.b16 %v107
  %v825 = vunpack.c.h.b16 %v107
  %v826 = vunpack.c.l.b16 %v108
  %v827 = vunpack.c.h.b16 %v108
  %v828 = vunpack.c.l.b16 %v109
  %v829 = vunpack.c.h.b16 %v109
  %v830 = vunpack.c.l.b16 %v110
  %v831 = vunpack.c.h.b16 %v110
  %v832 = vunpack.c.l.b16 %v111
  %v833 = vunpack.c.h.b16 %v111
  %v834 = vunpack.c.l.b16 %v112
  %v835 = vunpack.c.h.b16 %v112
  %v836 = vunpack.c.l.b16 %v113
  %v837 = vunpack.c.h.b16 %v113
  %v838 = vunpack.c.l.b16 %v114
  %v839 = vunpack.c.h.b16 %v114
  %v840 = vunpack.c.l.b16 %v115
  %v841 = vunpack.c.h.b16 %v115
  %v842 = vunpack.c.l.b16 %v116
  %v843 = vunpack.c.h.b16 %v116
  %v844 = vunpack.c.l.b16 %v117
  %v845 = vunpack.c.h.b16 %v117
  %v846 = vunpack.c.l.b16 %v118
  %v847 = vunpack.c.h.b16 %v118
  %v848 = vunpack.c.l.b16 %v119
  %v849 = vunpack.c.h.b16 %v119
  %v850 = vunpack.c.l.b16 %v120
  %v851 = vunpack.c.h.b16 %v120
  %v852 = vunpack.c.l.b16 %v121
  %v853 = vunpack.c.h.b16 %v121
  %v854 = vunpack.c.l.b16 %v122
  %v855 = vunpack.c.h.b16 %v122
  %v856 = vunpack.c.l.b16 %v123
  %v857 = vunpack.c.h.b16 %v123
  %v858 = vunpack.c.l.b16 %v124
  %v859 = vunpack.c.h.b16 %v124
  %v860 = vunpack.c.l.b16 %v125
  %v861 = vunpack.c.h.b16 %v125
  %v862 = vunpack.c.l.b16 %v126
  %v863 = vunpack.c.h.b16 %v126
  %v864 = vunpack.c.l.b16 %v127
  %v865 = vunpack.c.h.b16 %v127
  %v866 = vunpack.c.l.b16 %v128
  %v867 = vunpack.c.h.b16 %v128
  %v868 = vunpack.c.l.b16 %v129
  %v869 = vunpack.c.h.b16 %v129
  %v870 = vunpack.c.l.b16 %v130
  %v871 = vunpack.c.h.b16 %v130
  %v872 = vunpack.c.l.b16 %v131
  %v873 = vunpack.c.h.b16 %v131
  %v874 = vunpack.c.l.b16 %v132
  %v875 = vunpack.c.h.b16 %v132
  %v876 = vunpack.c.l.b16 %v133
  %v877 = vunpack.c.h.b16 %v133
  %v878 = vunpack.c.l.b16 %v134
  %v879 = vunpack.c.h.b16 %v134
  %v880 = vunpack.c.l.b16 %v135
  %v881 = vunpack.c.h.b16 %v135
  %v882 = vunpack.c.l.b16 %v136
  %v883 = vunpack.c.h.b16 %v136
  %v884 = vunpack.c.l.b16 %v137
  %v885 = vunpack.c.h.b16 %v137
  %v886 = vunpack.c.l.b16 %v138
  %v887 = vunpack.c.h.b16 %v138
  %v888 = vunpack.c.l.b16 %v139
  %v889 = vunpack.c.h.b16 %v139
  %v890 = vunpack.c.l.b16 %v140
  %v891 = vunpack.c.h.b16 %v140
  %v892 = vunpack.c.l.b16 %v141
  %v893 = vunpack.c.h.b16 %v141
  %v894 = vunpack.c.l.b16 %v142
  %v895 = vunpack.c.h.b16 %v142
  %v896 = vunpack.c.l.b16 %v143
  %v897 = vunpack.c.h.b16 %v143
  %v898 = vunpack.c.l.b16 %v144
  %v899 = vunpack.c.h.b16 %v144
  %v900 = vunpack.c.l.b16 %v145
  %v901 = vunpack.c.h.b16 %v145
  %v902 = vunpack.c.l.b16 %v146
  %v903 = vunpack.c.h.b16 %v146
  %v904 = vunpack.c.l.b16 %v147
  %v905 = vunpack.c.h.b16 %v147
  %v906 = vunpack.c.l.b16 %v148
  %v907 = vunpack.c.h.b16 %v148
  %v908 = vunpack.c.l.b16 %v149
  %v909 = vunpack.c.h.b16 %v149
  %v910 = vunpack.c.l.b16 %v150
  %v911 = vunpack.c.h.b16 %v150
  %v912 = vunpack.c.l.b16 %v151
  %v913 = vunpack.c.h.b16 %v151
  %v914 = vunpack.c.l.b16 %v152
  %v915 = vunpack.c.h.b16 %v152
  %v916 = vunpack.c.l.b16 %v153
  %v917 = vunpack.c.h.b16 %v153
  %v918 = vunpack.c.l.b16 %v154
  %v919 = vunpack.c.h.b16 %v154
  %v920 = vunpack.c.l.b16 %v155
  %v921 = vunpack.c.h.b16 %v155
  %v922 = vunpack.c.l.b16 %v156
  %v923 = vunpack.c.h.b16 %v156
  %v924 = vunpack.c.l.b16 %v157
  %v925 = vunpack.c.h.b16 %v157
  %v926 = vunpack.c.l.b16 %v158
  %v927 = vunpack.c.h.b16 %v158
  %v928 = vunpack.c.l.b16 %v159
  %v929 = vunpack.c.h.b16 %v159
  %v930 = vunpack.c.l.b16 %v160
  %v931 = vunpack.c.h.b16 %v160
  %v932 = vunpack.c.l.b16 %v161
  %v933 = vunpack.c.h.b16 %v161
  %v934 = vunpack.c.l.b16 %v162
  %v935 = vunpack.c.h.b16 %v162
  %v936 = vunpack.c.l.b16 %v163
  %v937 = vunpack.c.h.b16 %v163
  %v938 = vunpack.c.l.b16 %v164
  %v939 = vunpack.c.h.b16 %v164
  %v940 = vunpack.c.l.b16 %v165
  %v941 = vunpack.c.h.b16 %v165
  %v942 = vunpack.c.l.b16 %v166
  %v943 = vunpack.c.h.b16 %v166
  %v944 = vunpack.c.l.b16 %v167
  %v945 = vunpack.c.h.b16 %v167
  %v946 = vunpack.c.l.b16 %v168
  %v947 = vunpack.c.h.b16 %v168
  %v948 = vunpack.c.l.b16 %v169
  %v949 = vunpack.c.h.b16 %v169
  %v950 = vunpack.c.l.b16 %v170
  %v951 = vunpack.c.h.b16 %v170
  %v952 = vunpack.c.l.b16 %v171
  %v953 = vunpack.c.h.b16 %v171
  %v954 = vunpack.c.l.b16 %v172
  %v955 = vunpack.c.h.b16 %v172
  %v956 = vunpack.c.l.b16 %v173
  %v957 = vunpack.c.h.b16 %v173
  %v958 = vunpack.c.l.b16 %v174
  %v959 = vunpack.c.h.b16 %v174
  %v960 = vunpack.c.l.b16 %v175
  %v961 = vunpack.c.h.b16 %v175
  %v962 = vunpack.c.l.b16 %v176
  %v963 = vunpack.c.h.b16 %v176
  %v964 = vunpack.c.l.b16 %v177
  %v965 = vunpack.c.h.b16 %v177
  %v966 = vunpack.c.l.b16 %v178
  %v967 = vunpack.c.h.b16 %v178
  %v968 = vunpack.c.l.b16 %v179
  %v969 = vunpack.c.h.b16 %v179
  %v970 = vunpack.c.l.b16 %v180
  %v971 = vunpack.c.h.b16 %v180
  %v972 = vunpack.c.l.b16 %v181
  %v973 = vunpack.c.h.b16 %v181
  %v974 = vunpack.c.l.b16 %v182
  %v975 = vunpack.c.h.b16 %v182
  %v976 = vunpack.c.l.b16 %v183
  %v977 = vunpack.c.h.b16 %v183
  %v978 = vunpack.c.l.b16 %v184
  %v979 = vunpack.c.h.b16 %v184
  %v980 = vunpack.c.l.b16 %v185
  %v981 = vunpack.c.h.b16 %v185
  %v982 = vunpack.c.l.b16 %v186
  %v983 = vunpack.c.h.b16 %v186
  %v984 = vunpack.c.l.b16 %v187
  %v985 = vunpack.c.h.b16 %v187
  %v986 = vunpack.c.l.b16 %v188
  %v987 = vunpack.c.h.b16 %v188
  %v988 = vunpack.c.l.b16 %v189
  %v989 = vunpack.c.h.b16 %v189
  %v990 = vunpack.c.l.b16 %v190
  %v991 = vunpack.c.h.b16 %v190
  %v992 = vunpack.c.l.b16 %v191
  %v993 = vunpack.c.h.b16 %v191
  %v994 = vunpack.c.l.b16 %v192
  %v995 = vunpack.c.h.b16 %v192
  %v996 = vunpack.c.l.b16 %v193
  %v997 = vunpack.c.h.b16 %v193
  %v998 = vunpack.c.l.b16 %v194
  %v999 = vunpack.c.h.b16 %v194
  %v1000 = vunpack.c.l.b16 %v195
  %v1001 = vunpack.c.h.b16 %v195
  %v1002 = vunpack.c.l.b16 %v196
  %v1003 = vunpack.c.h.b16 %v196
  %v1004 = vunpack.c.l.b16 %v197
  %v1005 = vunpack.c.h.b16 %v197
  %v1006 = vunpack.c.l.b16 %v198
  %v1007 = vunpack.c.h.b16 %v198
  %v1008 = vunpack.c.l.b16 %v199
  %v1009 = vunpack.c.h.b16 %v199
  %v1010 = vunpack.c.l.b16 %v200
  %v1011 = vunpack.c.h.b16 %v200
  %v1012 = vunpack.c.l.b16 %v201
  %v1013 = vunpack.c.h.b16 %v201
  %v1014 = vunpack.c.l.b16 %v202
  %v1015 = vunpack.c.h.b16 %v202
  %v1016 = vunpack.c.l.b16 %v203
  %v1017 = vunpack.c.h.b16 %v203
  %v1018 = vunpack.c.l.b16 %v204
  %v1019 = vunpack.c.h.b16 %v204
  %v1020 = vunpack.c.l.b16 %v205
  %v1021 = vunpack.c.h.b16 %v205
  %v1022 = vunpack.c.l.b16 %v206
  %v1023 = vunpack.c.h.b16 %v206
  %v1024 = vunpack.c.l.b16 %v207
  %v1025 = vunpack.c.h.b16 %v207
  %v1026 = vunpack.c.l.b16 %v208
  %v1027 = vunpack.c.h.b16 %v208
  %v1028 = vunpack.c.l.b16 %v209
  %v1029 = vunpack.c.h.b16 %v209
  %v1030 = vunpack.c.l.b16 %v210
  %v1031 = vunpack.c.h.b16 %v210
  %v1032 = vunpack.c.l.b16 %v211
  %v1033 = vunpack.c.h.b16 %v211
  %v1034 = vunpack.c.l.b16 %v212
  %v1035 = vunpack.c.h.b16 %v212
  %v1036 = vunpack.c.l.b16 %v213
  %v1037 = vunpack.c.h.b16 %v213
  %v1038 = vunpack.c.l.b16 %v214
  %v1039 = vunpack.c.h.b16 %v214
  %v1040 = vunpack.c.l.b16 %v215
  %v1041 = vunpack.c.h.b16 %v215
  %v1042 = vunpack.c.l.b16 %v216
  %v1043 = vunpack.c.h.b16 %v216
  %v1044 = vunpack.c.l.b16 %v217
  %v1045 = vunpack.c.h.b16 %v217
  %v1046 = vunpack.c.l.b16 %v218
  %v1047 = vunpack.c.h.b16 %v218
  %v1048 = vunpack.c.l.b16 %v219
  %v1049 = vunpack.c.h.b16 %v219
  %v1050 = vunpack.c.l.b16 %v220
  %v1051 = vunpack.c.h.b16 %v220
  %v1052 = vunpack.c.l.b16 %v221
  %v1053 = vunpack.c.h.b16 %v221
  %v1054 = vunpack.c.l.b16 %v222
  %v1055 = vunpack.c.h.b16 %v222
  %v1056 = vunpack.c.l.b16 %v223
  %v1057 = vunpack.c.h.b16 %v223
  %v1058 = vunpack.c.l.b16 %v224
  %v1059 = vunpack.c.h.b16 %v224
  %v1060 = vunpack.c.l.b16 %v225
  %v1061 = vunpack.c.h.b16 %v225
  %v1062 = vunpack.c.l.b16 %v226
  %v1063 = vunpack.c.h.b16 %v226
  %v1064 = vunpack.c.l.b16 %v227
  %v1065 = vunpack.c.h.b16 %v227
  %v1066 = vunpack.c.l.b16 %v228
  %v1067 = vunpack.c.h.b16 %v228
  %v1068 = vunpack.c.l.b16 %v229
  %v1069 = vunpack.c.h.b16 %v229
  %v1070 = vunpack.c.l.b16 %v230
  %v1071 = vunpack.c.h.b16 %v230
  %v1072 = vunpack.c.l.b16 %v231
  %v1073 = vunpack.c.h.b16 %v231
  %v1074 = vunpack.c.l.b16 %v232
  %v1075 = vunpack.c.h.b16 %v232
  %v1076 = vunpack.c.l.b16 %v233
  %v1077 = vunpack.c.h.b16 %v233
  %v1078 = vunpack.c.l.b16 %v234
  %v1079 = vunpack.c.h.b16 %v234
  %v1080 = vunpack.c.l.b16 %v235
  %v1081 = vunpack.c.h.b16 %v235
  %v1082 = vunpack.c.l.b16 %v236
  %v1083 = vunpack.c.h.b16 %v236
  %v1084 = vunpack.c.l.b16 %v237
  %v1085 = vunpack.c.h.b16 %v237
  %v1086 = vunpack.c.l.b16 %v238
  %v1087 = vunpack.c.h.b16 %v238
  %v1088 = vunpack.c.l.b16 %v239
  %v1089 = vunpack.c.h.b16 %v239
  %v1090 = vunpack.c.l.b16 %v240
  %v1091 = vunpack.c.h.b16 %v240
  %v1092 = vunpack.c.l.b16 %v241
  %v1093 = vunpack.c.h.b16 %v241
  %v1094 = vunpack.c.l.b16 %v242
  %v1095 = vunpack.c.h.b16 %v242
  %v1096 = vunpack.c.l.b16 %v243
  %v1097 = vunpack.c.h.b16 %v243
  %v1098 = vunpack.c.l.b16 %v244
  %v1099 = vunpack.c.h.b16 %v244
  %v1100 = vunpack.c.l.b16 %v245
  %v1101 = vunpack.c.h.b16 %v245
  %v1102 = vunpack.c.l.b16 %v246
  %v1103 = vunpack.c.h.b16 %v246
  %v1104 = vunpack.c.l.b16 %v247
  %v1105 = vunpack.c.h.b16 %v247
  %v1106 = vunpack.c.l.b16 %v248
  %v1107 = vunpack.c.h.b16 %v248
  %v1108 = vunpack.c.l.b16 %v249
  %v1109 = vunpack.c.h.b16 %v249
  %v1110 = vunpack.c.l.b16 %v250
  %v1111 = vunpack.c.h.b16 %v250
  %v1112 = vunpack.c.l.b16 %v251
  %v1113 = vunpack.c.h.b16 %v251
  %v1114 = vunpack.c.l.b16 %v252
  %v1115 = vunpack.c.h.b16 %v252
  %v1116 = vunpack.c.l.b16 %v253
  %v1117 = vunpack.c.h.b16 %v253
  %v1118 = vunpack.c.l.b16 %v254
  %v1119 = vunpack.c.h.b16 %v254
  %v1120 = vunpack.c.l.b16 %v255
  %v1121 = vunpack.c.h.b16 %v255
  %v1122 = vunpack.c.l.b16 %v256
  %v1123 = vunpack.c.h.b16 %v256
  %v1124 = vunpack.c.l.b16 %v257
  %v1125 = vunpack.c.h.b16 %v257
  %v1126 = vunpack.c.l.b16 %v258
  %v1127 = vunpack.c.h.b16 %v258
  %v1128 = vunpack.c.l.b16 %v259
  %v1129 = vunpack.c.h.b16 %v259
  %v1130 = vunpack.c.l.b16 %v260
  %v1131 = vunpack.c.h.b16 %v260
  %v1132 = vunpack.c.l.b16 %v261
  %v1133 = vunpack.c.h.b16 %v261
  %v1134 = vunpack.c.l.b16 %v262
  %v1135 = vunpack.c.h.b16 %v262
  %v1136 = vunpack.c.l.b16 %v263
  %v1137 = vunpack.c.h.b16 %v263
  %v1138 = vunpack.c.l.b16 %v264
  %v1139 = vunpack.c.h.b16 %v264
  %v1140 = vunpack.c.l.b16 %v265
  %v1141 = vunpack.c.h.b16 %v265
  %v1142 = vunpack.c.l.b16 %v266
  %v1143 = vunpack.c.h.b16 %v266
  %v1144 = vunpack.c.l.b16 %v267
  %v1145 = vunpack.c.h.b16 %v267
  %v1146 = vunpack.c.l.b16 %v268
  %v1147 = vunpack.c.h.b16 %v268
  %v1148 = vunpack.c.l.b16 %v269
  %v1149 = vunpack.c.h.b16 %v269
  %v1150 = vunpack.c.l.b16 %v270
  %v1151 = vunpack.c.h.b16 %v270
  %v1152 = vunpack.c.l.b16 %v271
  %v1153 = vunpack.c.h.b16 %v271
  %v1154 = vunpack.c.l.b16 %v272
  %v1155 = vunpack.c.h.b16 %v272
  %v1156 = vunpack.c.l.b16 %v273
  %v1157 = vunpack.c.h.b16 %v273
  %v1158 = vunpack.c.l.b16 %v274
  %v1159 = vunpack.c.h.b16 %v274
  %v1160 = vunpack.c.l.b16 %v275
  %v1161 = vunpack.c.h.b16 %v275
  %v1162 = vunpack.c.l.b16 %v276
  %v1163 = vunpack.c.h.b16 %v276
  %v1164 = vunpack.c.l.b16 %v277
  %v1165 = vunpack.c.h.b16 %v277
  %v1166 = vunpack.c.l.b16 %v278
  %v1167 = vunpack.c.h.b16 %v278
  %v1168 = vunpack.c.l.b16 %v279
  %v1169 = vunpack.c.h.b16 %v279
  %v1170 = vunpack.c.l.b16 %v280
  %v1171 = vunpack.c.h.b16 %v280
  %v1172 = vunpack.c.l.b16 %v281
  %v1173 = vunpack.c.h.b16 %v281
  %v1174 = vunpack.c.l.b16 %v282
  %v1175 = vunpack.c.h.b16 %v282
  %v1176 = vunpack.c.l.b16 %v283
  %v1177 = vunpack.c.h.b16 %v283
  %v1178 = vunpack.c.l.b16 %v284
  %v1179 = vunpack.c.h.b16 %v284
  %v1180 = vunpack.c.l.b16 %v285
  %v1181 = vunpack.c.h.b16 %v285
  %v1182 = vunpack.c.l.b16 %v286
  %v1183 = vunpack.c.h.b16 %v286
  %v1184 = vunpack.c.l.b16 %v287
  %v1185 = vunpack.c.h.b16 %v287
  %v1186 = vunpack.c.l.b16 %v288
  %v1187 = vunpack.c.h.b16 %v288
  %v1188 = vunpack.c.l.b16 %v289
  %v1189 = vunpack.c.h.b16 %v289
  %v1190 = vunpack.c.l.b16 %v290
  %v1191 = vunpack.c.h.b16 %v290
  %v1192 = vunpack.c.l.b16 %v291
  %v1193 = vunpack.c.h.b16 %v291
  %v1194 = vunpack.c.l.b16 %v292
  %v1195 = vunpack.c.h.b16 %v292
  %v1196 = vunpack.c.l.b16 %v293
  %v1197 = vunpack.c.h.b16 %v293
  %v1198 = vunpack.c.l.b16 %v294
  %v1199 = vunpack.c.h.b16 %v294
  %v1200 = vunpack.c.l.b16 %v295
  %v1201 = vunpack.c.h.b16 %v295
  %v1202 = vunpack.c.l.b16 %v296
  %v1203 = vunpack.c.h.b16 %v296
  %v1204 = vunpack.c.l.b16 %v297
  %v1205 = vunpack.c.h.b16 %v297
  %v1206 = vunpack.c.l.b16 %v298
  %v1207 = vunpack.c.h.b16 %v298
  %v1208 = vunpack.c.l.b16 %v299
  %v1209 = vunpack.c.h.b16 %v299
  %v1210 = vunpack.c.l.b16 %v300
  %v1211 = vunpack.c.h.b16 %v300
  %v1212 = vunpack.c.l.b16 %v301
  %v1213 = vunpack.c.h.b16 %v301
  %v1214 = vunpack.c.l.b16 %v302
  %v1215 = vunpack.c.h.b16 %v302
  %v1216 = vunpack.c.l.b16 %v303
  %v1217 = vunpack.c.h.b16 %v303
  %v1218 = vunpack.c.l.b16 %v304
  %v1219 = vunpack.c.h.b16 %v304
  %v1220 = vunpack.c.l.b16 %v305
  %v1221 = vunpack.c.h.b16 %v305
  %v1222 = vunpack.c.l.b16 %v306
  %v1223 = vunpack.c.h.b16 %v306
  %v1224 = vunpack.c.l.b16 %v307
  %v1225 = vunpack.c.h.b16 %v307
  %v1226 = vunpack.c.l.b16 %v308
  %v1227 = vunpack.c.h.b16 %v308
  %v1228 = vunpack.c.l.b16 %v309
  %v1229 = vunpack.c.h.b16 %v309
  %v1230 = vunpack.c.l.b16 %v310
  %v1231 = vunpack.c.h.b16 %v310
  %v1232 = vunpack.c.l.b16 %v311
  %v1233 = vunpack.c.h.b16 %v311
  %v1234 = vunpack.c.l.b16 %v312
  %v1235 = vunpack.c.h.b16 %v312
  %v1236 = vunpack.c.l.b16 %v313
  %v1237 = vunpack.c.h.b16 %v313
  %v1238 = vunpack.c.l.b16 %v314
  %v1239 = vunpack.c.h.b16 %v314
  %v1240 = vunpack.c.l.b16 %v315
  %v1241 = vunpack.c.h.b16 %v315
  %v1242 = vunpack.c.l.b16 %v316
  %v1243 = vunpack.c.h.b16 %v316
  %v1244 = vpack.c.b16 %v670, %v668
  %v1245 = vpack.c.b16 %v671, %v669
  %v1246 = vpack.c.b16 %v674, %v672
  %v1247 = vpack.c.b16 %v675, %v673
  %v1248 = vpack.c.b16 %v678, %v676
  %v1249 = vpack.c.b16 %v679, %v677
  %v1250 = vpack.c.b16 %v682, %v680
  %v1251 = vpack.c.b16 %v683, %v681
  %v1252 = vpack.c.b16 %v686, %v684
  %v1253 = vpack.c.b16 %v687, %v685
  %v1254 = vpack.c.b16 %v690, %v688
  %v1255 = vpack.c.b16 %v691, %v689
  %v1256 = vpack.c.b16 %v694, %v692
  %v1257 = vpack.c.b16 %v695, %v693
  %v1258 = vpack.c.b16 %v698, %v696
  %v1259 = vpack.c.b16 %v699, %v697
  %v1260 = vpack.c.b16 %v702, %v700
  %v1261 = vpack.c.b16 %v703, %v701
  %v1262 = vpack.c.b16 %v706, %v704
  %v1263 = vpack.c.b16 %v707, %v705
  %v1264 = vpack.c.b16 %v710, %v708
  %v1265 = vpack.c.b16 %v711, %v709
  %v1266 = vpack.c.b16 %v714, %v712
  %v1267 = vpack.c.b16 %v715, %v713
  %v1268 = vpack.c.b16 %v718, %v716
  %v1269 = vpack.c.b16 %v719, %v717
  %v1270 = vpack.c.b16 %v722, %v720
  %v1271 = vpack.c.b16 %v723, %v721
  %v1272 = vpack.c.b16 %v726, %v724
  %v1273 = vpack.c.b16 %v727, %v725
  %v1274 = vpack.c.b16 %v730, %v728
  %v1275 = vpack.c.b16 %v731, %v729
  %v1276 = vpack.c.b16 %v734, %v732
  %v1277 = vpack.c.b16 %v735, %v733
  %v1278 = vpack.c.b16 %v738, %v736
  %v1279 = vpack.c.b16 %v739, %v737
  %v1280 = vpack.c.b16 %v742, %v740
  %v1281 = vpack.c.b16 %v743, %v741
  %v1282 = vpack.c.b16 %v746, %v744
  %v1283 = vpack.c.b16 %v747, %v745
  %v1284 = vpack.c.b16 %v750, %v748
  %v1285 = vpack.c.b16 %v751, %v749
  %v1286 = vpack.c.b16 %v754, %v752
  %v1287 = vpack.c.b16 %v755, %v753
  %v1288 = vpack.c.b16 %v758, %v756
  %v1289 = vpack.c.b16 %v759, %v757
  %v1290 = vpack.c.b16 %v762, %v760
  %v1291 = vpack.c.b16 %v763, %v761
  %v1292 = vpack.c.b16 %v766, %v764
  %v1293 = vpack.c.b16 %v767, %v765
  %v1294 = vpack.c.b16 %v770, %v768
  %v1295 = vpack.c.b16 %v771, %v769
  %v1296 = vpack.c.b16 %v774, %v772
  %v1297 = vpack.c.b16 %v775, %v773
  %v1298 = vpack.c.b16 %v778, %v776
  %v1299 = vpack.c.b16 %v779, %v777
  %v1300 = vpack.c.b16 %v782, %v780
  %v1301 = vpack.c.b16 %v783, %v781
  %v1302 = vpack.c.b16 %v786, %v784
  %v1303 = vpack.c.b16 %v787, %v785
  %v1304 = vpack.c.b16 %v790, %v788
  %v1305 = vpack.c.b16 %v791, %v789
  %v1306 = vpack.c.b16 %v794, %v792
  %v1307 = vpack.c.b16 %v795, %v793
  %v1308 = vpack.c.b16 %v798, %v796
  %v1309 = vpack.c.b16 %v799, %v797
  %v1310 = vpack.c.b16 %v802, %v800
  %v1311 = vpack.c.b16 %v803, %v801
  %v1312 = vpack.c.b16 %v806, %v804
  %v1313 = vpack.c.b16 %v807, %v805
  %v1314 = vpack.c.b16 %v810, %v808
  %v1315 = vpack.c.b16 %v811, %v809
  %v1316 = vpack.c.b16 %v814, %v812
  %v1317 = vpack.c.b16 %v815, %v813
  %v1318 = vpack.c.b16 %v818, %v816
  %v1319 = vpack.c.b16 %v819, %v817
  %v1320 = vpack.c.b16 %v822, %v820
  %v1321 = vpack.c.b16 %v823, %v821
  %v1322 = vpack.c.b16 %v826, %v824
  %v1323 = vpack.c.b16 %v827, %v825
  %v1324 = vpack.c.b16 %v830, %v828
  %v1325 = vpack.c.b16 %v831, %v829
  %v1326 = vpack.c.b16 %v834, %v832
  %v1327 = vpack.c.b16 %v835, %v833
  %v1328 = vpack.c.b16 %v838, %v836
  %v1329 = vpack.c.b16 %v839, %v837
  %v1330 = vpack.c.b16 %v842, %v840
  %v1331 = vpack.c.b16 %v843, %v841
  %v1332 = vpack.c.b16 %v846, %v844
  %v1333 = vpack.c.b16 %v847, %v845
  %v1334 = vpack.c.b16 %v850, %v848
  %v1335 = vpack.c.b16 %v851, %v849
  %v1336 = vpack.c.b16 %v854, %v852
  %v1337 = vpack.c.b16 %v855, %v853
  %v1338 = vpack.c.b16 %v858, %v856
  %v1339 = vpack.c.b16 %v859, %v857
  %v1340 = vpack.c.b16 %v862, %v860
  %v1341 = vpack.c.b16 %v863, %v861
  %v1342 = vpack.c.b16 %v866, %v864
  %v1343 = vpack.c.b16 %v867, %v865
  %v1344 = vpack.c.b16 %v870, %v868
  %v1345 = vpack.c.b16 %v871, %v869
  %v1346 = vpack.c.b16 %v874, %v872
  %v1347 = vpack.c.b16 %v875, %v873
  %v1348 = vpack.c.b16 %v878, %v876
  %v1349 = vpack.c.b16 %v879, %v877
  %v1350 = vpack.c.b16 %v882, %v880
  %v1351 = vpack.c.b16 %v883, %v881
  %v1352 = vpack.c.b16 %v886, %v884
  %v1353 = vpack.c.b16 %v887, %v885
  %v1354 = vpack.c.b16 %v890, %v888
  %v1355 = vpack.c.b16 %v891, %v889
  %v1356 = vpack.c.b16 %v894, %v892
  %v1357 = vpack.c.b16 %v895, %v893
  %v1358 = vpack.c.b16 %v898, %v896
  %v1359 = vpack.c.b16 %v899, %v897
  %v1360 = vpack.c.b16 %v902, %v900
  %v1361 = vpack.c.b16 %v903, %v901
  %v1362 = vpack.c.b16 %v906, %v904
  %v1363 = vpack.c.b16 %v907, %v905
  %v1364 = vpack.c.b16 %v910, %v908
  %v1365 = vpack.c.b16 %v911, %v909
  %v1366 = vpack.c.b16 %v914, %v912
  %v1367 = vpack.c.b16 %v915, %v913
  %v1368 = vpack.c.b16 %v918, %v916
  %v1369 = vpack.c.b16 %v919, %v917
  %v1370 = vpack.c.b16 %v922, %v920
  %v1371 = vpack.c.b16 %v923, %v921
  %v1372 = vpack.c.b16 %v926, %v924
  %v1373 = vpack.c.b16 %v927, %v925
  %v1374 = vpack.c.b16 %v930, %v928
  %v1375 = vpack.c.b16 %v931, %v929
  %v1376 = vpack.c.b16 %v934, %v932
  %v1377 = vpack.c.b16 %v935, %v933
  %v1378 = vpack.c.b16 %v938, %v936
  %v1379 = vpack.c.b16 %v939, %v937
  %v1380 = vpack.c.b16 %v942, %v940
  %v1381 = vpack.c.b16 %v943, %v941
  %v1382 = vpack.c.b16 %v946, %v944
  %v1383 = vpack.c.b16 %v947, %v945
  %v1384 = vpack.c.b16 %v950, %v948
  %v1385 = vpack.c.b16 %v951, %v949
  %v1386 = vpack.c.b16 %v954, %v952
  %v1387 = vpack.c.b16 %v955, %v953
  %v1388 = vpack.c.b16 %v958, %v956
  %v1389 = vpack.c.b16 %v959, %v957
  %v1390 = vpack.c.b16 %v962, %v960
  %v1391 = vpack.c.b16 %v963, %v961
  %v1392 = vpack.c.b16 %v966, %v964
  %v1393 = vpack.c.b16 %v967, %v965
  %v1394 = vpack.c.b16 %v970, %v968
  %v1395 = vpack.c.b16 %v971, %v969
  %v1396 = vpack.c.b16 %v974, %v972
  %v1397 = vpack.c.b16 %v975, %v973
  %v1398 = vpack.c.b16 %v978, %v976
  %v1399 = vpack.c.b16 %v979, %v977
  %v1400 = vpack.c.b16 %v982, %v980
  %v1401 = vpack.c.b16 %v983, %v981
  %v1402 = vpack.c.b16 %v986, %v984
  %v1403 = vpack.c.b16 %v987, %v985
  %v1404 = vpack.c.b16 %v990, %v988
  %v1405 = vpack.c.b16 %v991, %v989
  %v1406 = vpack.c.b16 %v994, %v992
  %v1407 = vpack.c.b16 %v995, %v993
  %v1408 = vpack.c.b16 %v998, %v996
  %v1409 = vpack.c.b16 %v999, %v997
  %v1410 = vpack.c.b16 %v1002, %v1000
  %v1411 = vpack.c.b16 %v1003, %v1001
  %v1412 = vpack.c.b16 %v1006, %v1004
  %v1413 = vpack.c.b16 %v1007, %v1005
  %v1414 = vpack.c.b16 %v1010, %v1008
  %v1415 = vpack.c.b16 %v1011, %v1009
  %v1416 = vpack.c.b16 %v1014, %v1012
  %v1417 = vpack.c.b16 %v1015, %v1013
  %v1418 = vpack.c.b16 %v1018, %v1016
  %v1419 = vpack.c.b16 %v1019, %v1017
  %v1420 = vpack.c.b16 %v1022, %v1020
  %v1421 = vpack.c.b16 %v1023, %v1021
  %v1422 = vpack.c.b16 %v1026, %v1024
  %v1423 = vpack.c.b16 %v1027, %v1025
  %v1424 = vpack.c.b16 %v1030, %v1028
  %v1425 = vpack.c.b16 %v1031, %v1029
  %v1426 = vpack.c.b16 %v1034, %v1032
  %v1427 = vpack.c.b16 %v1035, %v1033
  %v1428 = vpack.c.b16 %v1038, %v1036
  %v1429 = vpack.c.b16 %v1039, %v1037
  %v1430 = vpack.c.b16 %v1042, %v1040
  %v1431 = vpack.c.b16 %v1043, %v1041
  %v1432 = vpack.c.b16 %v1046, %v1044
  %v1433 = vpack.c.b16 %v1047, %v1045
  %v1434 = vpack.c.b16 %v1050, %v1048
  %v1435 = vpack.c.b16 %v1051, %v1049
  %v1436 = vpack.c.b16 %v1054, %v1052
  %v1437 = vpack.c.b16 %v1055, %v1053
  %v1438 = vpack.c.b16 %v1058, %v1056
  %v1439 = vpack.c.b16 %v1059, %v1057
  %v1440 = vpack.c.b16 %v1062, %v1060
  %v1441 = vpack.c.b16 %v1063, %v1061
  %v1442 = vpack.c.b16 %v1066, %v1064
  %v1443 = vpack.c.b16 %v1067, %v1065
  %v1444 = vpack.c.b16 %v1070, %v1068
  %v1445 = vpack.c.b16 %v1071, %v1069
  %v1446 = vpack.c.b16 %v1074, %v1072
  %v1447 = vpack.c.b16 %v1075, %v1073
  %v1448 = vpack.c.b16 %v1078, %v1076
  %v1449 = vpack.c.b16 %v1079, %v1077
  %v1450 = vpack.c.b16 %v1082, %v1080
  %v1451 = vpack.c.b16 %v1083, %v1081
  %v1452 = vpack.c.b16 %v1086, %v1084
  %v1453 = vpack.c.b16 %v1087, %v1085
  %v1454 = vpack.c.b16 %v1090, %v1088
  %v1455 = vpack.c.b16 %v1091, %v1089
  %v1456 = vpack.c.b16 %v1094, %v1092
  %v1457 = vpack.c.b16 %v1095, %v1093
  %v1458 = vpack.c.b16 %v1098, %v1096
  %v1459 = vpack.c.b16 %v1099, %v1097
  %v1460 = vpack.c.b16 %v1102, %v1100
  %v1461 = vpack.c.b16 %v1103, %v1101
  %v1462 = vpack.c.b16 %v1106, %v1104
  %v1463 = vpack.c.b16 %v1107, %v1105
  %v1464 = vpack.c.b16 %v1110, %v1108
  %v1465 = vpack.c.b16 %v1111, %v1109
  %v1466 = vpack.c.b16 %v1114, %v1112
  %v1467 = vpack.c.b16 %v1115, %v1113
  %v1468 = vpack.c.b16 %v1118, %v1116
  %v1469 = vpack.c.b16 %v1119, %v1117
  %v1470 = vpack.c.b16 %v1122, %v1120
  %v1471 = vpack.c.b16 %v1123, %v1121
  %v1472 = vpack.c.b16 %v1126, %v1124
  %v1473 = vpack.c.b16 %v1127, %v1125
  %v1474 = vpack.c.b16 %v1130, %v1128
  %v1475 = vpack.c.b16 %v1131, %v1129
  %v1476 = vpack.c.b16 %v1134, %v1132
  %v1477 = vpack.c.b16 %v1135, %v1133
  %v1478 = vpack.c.b16 %v1138, %v1136
  %v1479 = vpack.c.b16 %v1139, %v1137
  %v1480 = vpack.c.b16 %v1142, %v1140
  %v1481 = vpack.c.b16 %v1143, %v1141
  %v1482 = vpack.c.b16 %v1146, %v1144
  %v1483 = vpack.c.b16 %v1147, %v1145
  %v1484 = vpack.c.b16 %v1150, %v1148
  %v1485 = vpack.c.b16 %v1151, %v1149
  %v1486 = vpack.c.b16 %v1154, %v1152
  %v1487 = vpack.c.b16 %v1155, %v1153
  %v1488 = vpack.c.b16 %v1158, %v1156
  %v1489 = vpack.c.b16 %v1159, %v1157
  %v1490 = vpack.c.b16 %v1162, %v1160
  %v1491 = vpack.c.b16 %v1163, %v1161
  %v1492 = vpack.c.b16 %v1166, %v1164
  %v1493 = vpack.c.b16 %v1167, %v1165
  %v1494 = vpack.c.b16 %v1170, %v1168
  %v1495 = vpack.c.b16 %v1171, %v1169
  %v1496 = vpack.c.b16 %v1174, %v1172
  %v1497 = vpack.c.b16 %v1175, %v1173
  %v1498 = vpack.c.b16 %v1178, %v1176
  %v1499 = vpack.c.b16 %v1179, %v1177
  %v1500 = vpack.c.b16 %v1182, %v1180
  %v1501 = vpack.c.b16 %v1183, %v1181
  %v1502 = vpack.c.b16 %v1186, %v1184
  %v1503 = vpack.c.b16 %v1187, %v1185
  %v1504 = vpack.c.b16 %v1190, %v1188
  %v1505 = vpack.c.b16 %v1191, %v1189
  %v1506 = vpack.c.b16 %v1194, %v1192
  %v1507 = vpack.c.b16 %v1195, %v1193
  %v1508 = vpack.c.b16 %v1198, %v1196
  %v1509 = vpack.c.b16 %v1199, %v1197
  %v1510 = vpack.c.b16 %v1202, %v1200
  %v1511 = vpack.c.b16 %v1203, %v1201
  %v1512 = vpack.c.b16 %v1206, %v1204
  %v1513 = vpack.c.b16 %v1207, %v1205
  %v1514 = vpack.c.b16 %v1210, %v1208
  %v1515 = vpack.c.b16 %v1211, %v1209
  %v1516 = vpack.c.b16 %v1214, %v1212
  %v1517 = vpack.c.b16 %v1215, %v1213
  %v1518 = vpack.c.b16 %v1218, %v1216
  %v1519 = vpack.c.b16 %v1219, %v1217
  %v1520 = vpack.c.b16 %v1222, %v1220
  %v1521 = vpack.c.b16 %v1223, %v1221
  %v1522 = vpack.c.b16 %v1226, %v1224
  %v1523 = vpack.c.b16 %v1227, %v1225
  %v1524 = vpack.c.b16 %v1230, %v1228
  %v1525 = vpack.c.b16 %v1231, %v1229
  %v1526 = vpack.c.b16 %v1234, %v1232
  %v1527 = vpack.c.b16 %v1235, %v1233
  %v1528 = vpack.c.b16 %v1238, %v1236
  %v1529 = vpack.c.b16 %v1239, %v1237
  %v1530 = vpack.c.b16 %v1242, %v1240
  %v1531 = vpack.c.b16 %v1243, %v1241
  %1820 = vmatprep.subr.bf16.mxu0 %v1245
  %1821 = vmatpush1.bf16.msra.mxu0 %v1244
  %1822 = vmatprep.subr.bf16.mxu0 %v1247
  %1823 = vmatpush1.bf16.msra.mxu0 %v1246
  %1824 = vmatprep.subr.bf16.mxu0 %v1249
  %1825 = vmatpush1.bf16.msra.mxu0 %v1248
  %1826 = vmatprep.subr.bf16.mxu0 %v1251
  %1827 = vmatpush1.bf16.msra.mxu0 %v1250
  %1828 = vmatprep.subr.bf16.mxu0 %v1253
  %1829 = vmatpush1.bf16.msra.mxu0 %v1252
  %1830 = vmatprep.subr.bf16.mxu0 %v1255
  %1831 = vmatpush1.bf16.msra.mxu0 %v1254
  %1832 = vmatprep.subr.bf16.mxu0 %v1257
  %1833 = vmatpush1.bf16.msra.mxu0 %v1256
  %1834 = vmatprep.subr.bf16.mxu0 %v1259
  %1835 = vmatpush1.bf16.msra.mxu0 %v1258
  %1836 = vmatprep.subr.bf16.mxu0 %v1261
  %1837 = vmatpush1.bf16.msra.mxu0 %v1260
  %1838 = vmatprep.subr.bf16.mxu0 %v1263
  %1839 = vmatpush1.bf16.msra.mxu0 %v1262
  %1840 = vmatprep.subr.bf16.mxu0 %v1265
  %1841 = vmatpush1.bf16.msra.mxu0 %v1264
  %1842 = vmatprep.subr.bf16.mxu0 %v1267
  %1843 = vmatpush1.bf16.msra.mxu0 %v1266
  %1844 = vmatprep.subr.bf16.mxu0 %v1269
  %1845 = vmatpush1.bf16.msra.mxu0 %v1268
  %1846 = vmatprep.subr.bf16.mxu0 %v1271
  %1847 = vmatpush1.bf16.msra.mxu0 %v1270
  %1848 = vmatprep.subr.bf16.mxu0 %v1273
  %1849 = vmatpush1.bf16.msra.mxu0 %v1272
  %1850 = vmatprep.subr.bf16.mxu0 %v1275
  %1851 = vmatpush1.bf16.msra.mxu0 %v1274
  %1852 = vmatprep.mubr.bf16.mxu0 %v345
  %1853 = vmatmul.mubr.bf16.gmra.mrb[0].mxu0 %v344
  %v1854 = vpop.f32.mrb[0].mxu0
  %v1855 = vadd.f32 0.0, %v1854
  %v1856 = vpop.f32.mrb[0].mxu0
  %v1857 = vadd.f32 0.0, %v1856
  %v1858 = vpop.f32.mrb[0].mxu0
  %v1859 = vpop.f32.mrb[0].mxu0
  %1860 = vdwg.mxu0
  %1861 = vmatprep.subr.bf16.mxu0 %v1277
  %1862 = vmatpush1.bf16.msra.mxu0 %v1276
  %1863 = vmatprep.subr.bf16.mxu0 %v1279
  %1864 = vmatpush1.bf16.msra.mxu0 %v1278
  %1865 = vmatprep.subr.bf16.mxu0 %v1281
  %1866 = vmatpush1.bf16.msra.mxu0 %v1280
  %1867 = vmatprep.subr.bf16.mxu0 %v1283
  %1868 = vmatpush1.bf16.msra.mxu0 %v1282
  %1869 = vmatprep.subr.bf16.mxu0 %v1285
  %1870 = vmatpush1.bf16.msra.mxu0 %v1284
  %1871 = vmatprep.subr.bf16.mxu0 %v1287
  %1872 = vmatpush1.bf16.msra.mxu0 %v1286
  %1873 = vmatprep.subr.bf16.mxu0 %v1289
  %1874 = vmatpush1.bf16.msra.mxu0 %v1288
  %1875 = vmatprep.subr.bf16.mxu0 %v1291
  %1876 = vmatpush1.bf16.msra.mxu0 %v1290
  %1877 = vmatprep.subr.bf16.mxu0 %v1293
  %1878 = vmatpush1.bf16.msra.mxu0 %v1292
  %1879 = vmatprep.subr.bf16.mxu0 %v1295
  %1880 = vmatpush1.bf16.msra.mxu0 %v1294
  %1881 = vmatprep.subr.bf16.mxu0 %v1297
  %1882 = vmatpush1.bf16.msra.mxu0 %v1296
  %1883 = vmatprep.subr.bf16.mxu0 %v1299
  %1884 = vmatpush1.bf16.msra.mxu0 %v1298
  %1885 = vmatprep.subr.bf16.mxu0 %v1301
  %1886 = vmatpush1.bf16.msra.mxu0 %v1300
  %1887 = vmatprep.subr.bf16.mxu0 %v1303
  %1888 = vmatpush1.bf16.msra.mxu0 %v1302
  %1889 = vmatprep.subr.bf16.mxu0 %v1305
  %1890 = vmatpush1.bf16.msra.mxu0 %v1304
  %1891 = vmatprep.subr.bf16.mxu0 %v1307
  %1892 = vmatpush1.bf16.msra.mxu0 %v1306
  %1893 = vmatprep.mubr.bf16.mxu0 %v347
  %1894 = vmatmul.mubr.bf16.gmra.mrb[0].mxu0 %v346
  %v1895 = vpop.f32.mrb[0].mxu0
  %v1896 = vadd.f32 %v1855, %v1895
  %v1897 = vpop.f32.mrb[0].mxu0
  %v1898 = vadd.f32 %v1857, %v1897
  %v1899 = vpop.f32.mrb[0].mxu0
  %v1900 = vpop.f32.mrb[0].mxu0
  %1901 = vdwg.mxu0
  %1902 = vmatprep.subr.bf16.mxu0 %v1309
  %1903 = vmatpush1.bf16.msra.mxu0 %v1308
  %1904 = vmatprep.subr.bf16.mxu0 %v1311
  %1905 = vmatpush1.bf16.msra.mxu0 %v1310
  %1906 = vmatprep.subr.bf16.mxu0 %v1313
  %1907 = vmatpush1.bf16.msra.mxu0 %v1312
  %1908 = vmatprep.subr.bf16.mxu0 %v1315
  %1909 = vmatpush1.bf16.msra.mxu0 %v1314
  %1910 = vmatprep.subr.bf16.mxu0 %v1317
  %1911 = vmatpush1.bf16.msra.mxu0 %v1316
  %1912 = vmatprep.subr.bf16.mxu0 %v1319
  %1913 = vmatpush1.bf16.msra.mxu0 %v1318
  %1914 = vmatprep.subr.bf16.mxu0 %v1321
  %1915 = vmatpush1.bf16.msra.mxu0 %v1320
  %1916 = vmatprep.subr.bf16.mxu0 %v1323
  %1917 = vmatpush1.bf16.msra.mxu0 %v1322
  %1918 = vmatprep.subr.bf16.mxu0 %v1325
  %1919 = vmatpush1.bf16.msra.mxu0 %v1324
  %1920 = vmatprep.subr.bf16.mxu0 %v1327
  %1921 = vmatpush1.bf16.msra.mxu0 %v1326
  %1922 = vmatprep.subr.bf16.mxu0 %v1329
  %1923 = vmatpush1.bf16.msra.mxu0 %v1328
  %1924 = vmatprep.subr.bf16.mxu0 %v1331
  %1925 = vmatpush1.bf16.msra.mxu0 %v1330
  %1926 = vmatprep.subr.bf16.mxu0 %v1333
  %1927 = vmatpush1.bf16.msra.mxu0 %v1332
  %1928 = vmatprep.subr.bf16.mxu0 %v1335
  %1929 = vmatpush1.bf16.msra.mxu0 %v1334
  %1930 = vmatprep.subr.bf16.mxu0 %v1337
  %1931 = vmatpush1.bf16.msra.mxu0 %v1336
  %1932 = vmatprep.subr.bf16.mxu0 %v1339
  %1933 = vmatpush1.bf16.msra.mxu0 %v1338
  %1934 = vmatprep.mubr.bf16.mxu0 %v349
  %1935 = vmatmul.mubr.bf16.gmra.mrb[0].mxu0 %v348
  %v1936 = vpop.f32.mrb[0].mxu0
  %v1937 = vadd.f32 %v1896, %v1936
  %v1938 = vpop.f32.mrb[0].mxu0
  %v1939 = vadd.f32 %v1898, %v1938
  %v1940 = vpop.f32.mrb[0].mxu0
  %v1941 = vpop.f32.mrb[0].mxu0
  %1942 = vdwg.mxu0
  %1943 = vmatprep.subr.bf16.mxu0 %v1341
  %1944 = vmatpush1.bf16.msra.mxu0 %v1340
  %1945 = vmatprep.subr.bf16.mxu0 %v1343
  %1946 = vmatpush1.bf16.msra.mxu0 %v1342
  %1947 = vmatprep.subr.bf16.mxu0 %v1345
  %1948 = vmatpush1.bf16.msra.mxu0 %v1344
  %1949 = vmatprep.subr.bf16.mxu0 %v1347
  %1950 = vmatpush1.bf16.msra.mxu0 %v1346
  %1951 = vmatprep.subr.bf16.mxu0 %v1349
  %1952 = vmatpush1.bf16.msra.mxu0 %v1348
  %1953 = vmatprep.subr.bf16.mxu0 %v1351
  %1954 = vmatpush1.bf16.msra.mxu0 %v1350
  %1955 = vmatprep.subr.bf16.mxu0 %v1353
  %1956 = vmatpush1.bf16.msra.mxu0 %v1352
  %1957 = vmatprep.subr.bf16.mxu0 %v1355
  %1958 = vmatpush1.bf16.msra.mxu0 %v1354
  %1959 = vmatprep.subr.bf16.mxu0 %v1357
  %1960 = vmatpush1.bf16.msra.mxu0 %v1356
  %1961 = vmatprep.subr.bf16.mxu0 %v1359
  %1962 = vmatpush1.bf16.msra.mxu0 %v1358
  %1963 = vmatprep.subr.bf16.mxu0 %v1361
  %1964 = vmatpush1.bf16.msra.mxu0 %v1360
  %1965 = vmatprep.subr.bf16.mxu0 %v1363
  %1966 = vmatpush1.bf16.msra.mxu0 %v1362
  %1967 = vmatprep.subr.bf16.mxu0 %v1365
  %1968 = vmatpush1.bf16.msra.mxu0 %v1364
  %1969 = vmatprep.subr.bf16.mxu0 %v1367
  %1970 = vmatpush1.bf16.msra.mxu0 %v1366
  %1971 = vmatprep.subr.bf16.mxu0 %v1369
  %1972 = vmatpush1.bf16.msra.mxu0 %v1368
  %1973 = vmatprep.subr.bf16.mxu0 %v1371
  %1974 = vmatpush1.bf16.msra.mxu0 %v1370
  %1975 = vmatprep.mubr.bf16.mxu0 %v351
  %1976 = vmatmul.mubr.bf16.gmra.mrb[0].mxu0 %v350
  %v1977 = vpop.f32.mrb[0].mxu0
  %v1978 = vadd.f32 %v1937, %v1977
  %v1979 = vpop.f32.mrb[0].mxu0
  %v1980 = vadd.f32 %v1939, %v1979
  %v1981 = vpop.f32.mrb[0].mxu0
  %v1982 = vpop.f32.mrb[0].mxu0
  %1983 = vdwg.mxu0
  %1984 = vmatprep.subr.bf16.mxu0 %v1373
  %1985 = vmatpush1.bf16.msra.mxu0 %v1372
  %1986 = vmatprep.subr.bf16.mxu0 %v1375
  %1987 = vmatpush1.bf16.msra.mxu0 %v1374
  %1988 = vmatprep.subr.bf16.mxu0 %v1377
  %1989 = vmatpush1.bf16.msra.mxu0 %v1376
  %1990 = vmatprep.subr.bf16.mxu0 %v1379
  %1991 = vmatpush1.bf16.msra.mxu0 %v1378
  %1992 = vmatprep.subr.bf16.mxu0 %v1381
  %1993 = vmatpush1.bf16.msra.mxu0 %v1380
  %1994 = vmatprep.subr.bf16.mxu0 %v1383
  %1995 = vmatpush1.bf16.msra.mxu0 %v1382
  %1996 = vmatprep.subr.bf16.mxu0 %v1385
  %1997 = vmatpush1.bf16.msra.mxu0 %v1384
  %1998 = vmatprep.subr.bf16.mxu0 %v1387
  %1999 = vmatpush1.bf16.msra.mxu0 %v1386
  %2000 = vmatprep.subr.bf16.mxu0 %v1389
  %2001 = vmatpush1.bf16.msra.mxu0 %v1388
  %2002 = vmatprep.subr.bf16.mxu0 %v1391
  %2003 = vmatpush1.bf16.msra.mxu0 %v1390
  %2004 = vmatprep.subr.bf16.mxu0 %v1393
  %2005 = vmatpush1.bf16.msra.mxu0 %v1392
  %2006 = vmatprep.subr.bf16.mxu0 %v1395
  %2007 = vmatpush1.bf16.msra.mxu0 %v1394
  %2008 = vmatprep.subr.bf16.mxu0 %v1397
  %2009 = vmatpush1.bf16.msra.mxu0 %v1396
  %2010 = vmatprep.subr.bf16.mxu0 %v1399
  %2011 = vmatpush1.bf16.msra.mxu0 %v1398
  %2012 = vmatprep.subr.bf16.mxu0 %v1401
  %2013 = vmatpush1.bf16.msra.mxu0 %v1400
  %2014 = vmatprep.subr.bf16.mxu0 %v1403
  %2015 = vmatpush1.bf16.msra.mxu0 %v1402
  %2016 = vmatprep.mubr.bf16.mxu0 %v353
  %2017 = vmatmul.mubr.bf16.gmra.mrb[0].mxu0 %v352
  %v2018 = vpop.f32.mrb[0].mxu0
  %v2019 = vadd.f32 %v1978, %v2018
  %v2020 = vpop.f32.mrb[0].mxu0
  %v2021 = vadd.f32 %v1980, %v2020
  %v2022 = vpop.f32.mrb[0].mxu0
  %v2023 = vpop.f32.mrb[0].mxu0
  %2024 = vdwg.mxu0
  %2025 = vmatprep.subr.bf16.mxu0 %v1405
  %2026 = vmatpush1.bf16.msra.mxu0 %v1404
  %2027 = vmatprep.subr.bf16.mxu0 %v1407
  %2028 = vmatpush1.bf16.msra.mxu0 %v1406
  %2029 = vmatprep.subr.bf16.mxu0 %v1409
  %2030 = vmatpush1.bf16.msra.mxu0 %v1408
  %2031 = vmatprep.subr.bf16.mxu0 %v1411
  %2032 = vmatpush1.bf16.msra.mxu0 %v1410
  %2033 = vmatprep.subr.bf16.mxu0 %v1413
  %2034 = vmatpush1.bf16.msra.mxu0 %v1412
  %2035 = vmatprep.subr.bf16.mxu0 %v1415
  %2036 = vmatpush1.bf16.msra.mxu0 %v1414
  %2037 = vmatprep.subr.bf16.mxu0 %v1417
  %2038 = vmatpush1.bf16.msra.mxu0 %v1416
  %2039 = vmatprep.subr.bf16.mxu0 %v1419
  %2040 = vmatpush1.bf16.msra.mxu0 %v1418
  %2041 = vmatprep.subr.bf16.mxu0 %v1421
  %2042 = vmatpush1.bf16.msra.mxu0 %v1420
  %2043 = vmatprep.subr.bf16.mxu0 %v1423
  %2044 = vmatpush1.bf16.msra.mxu0 %v1422
  %2045 = vmatprep.subr.bf16.mxu0 %v1425
  %2046 = vmatpush1.bf16.msra.mxu0 %v1424
  %2047 = vmatprep.subr.bf16.mxu0 %v1427
  %2048 = vmatpush1.bf16.msra.mxu0 %v1426
  %2049 = vmatprep.subr.bf16.mxu0 %v1429
  %2050 = vmatpush1.bf16.msra.mxu0 %v1428
  %2051 = vmatprep.subr.bf16.mxu0 %v1431
  %2052 = vmatpush1.bf16.msra.mxu0 %v1430
  %2053 = vmatprep.subr.bf16.mxu0 %v1433
  %2054 = vmatpush1.bf16.msra.mxu0 %v1432
  %2055 = vmatprep.subr.bf16.mxu0 %v1435
  %2056 = vmatpush1.bf16.msra.mxu0 %v1434
  %2057 = vmatprep.mubr.bf16.mxu0 %v355
  %2058 = vmatmul.mubr.bf16.gmra.mrb[0].mxu0 %v354
  %v2059 = vpop.f32.mrb[0].mxu0
  %v2060 = vadd.f32 %v2019, %v2059
  %v2061 = vpop.f32.mrb[0].mxu0
  %v2062 = vadd.f32 %v2021, %v2061
  %v2063 = vpop.f32.mrb[0].mxu0
  %v2064 = vpop.f32.mrb[0].mxu0
  %2065 = vdwg.mxu0
  %2066 = vmatprep.subr.bf16.mxu0 %v1437
  %2067 = vmatpush1.bf16.msra.mxu0 %v1436
  %2068 = vmatprep.subr.bf16.mxu0 %v1439
  %2069 = vmatpush1.bf16.msra.mxu0 %v1438
  %2070 = vmatprep.subr.bf16.mxu0 %v1441
  %2071 = vmatpush1.bf16.msra.mxu0 %v1440
  %2072 = vmatprep.subr.bf16.mxu0 %v1443
  %2073 = vmatpush1.bf16.msra.mxu0 %v1442
  %2074 = vmatprep.subr.bf16.mxu0 %v1445
  %2075 = vmatpush1.bf16.msra.mxu0 %v1444
  %2076 = vmatprep.subr.bf16.mxu0 %v1447
  %2077 = vmatpush1.bf16.msra.mxu0 %v1446
  %2078 = vmatprep.subr.bf16.mxu0 %v1449
  %2079 = vmatpush1.bf16.msra.mxu0 %v1448
  %2080 = vmatprep.subr.bf16.mxu0 %v1451
  %2081 = vmatpush1.bf16.msra.mxu0 %v1450
  %2082 = vmatprep.subr.bf16.mxu0 %v1453
  %2083 = vmatpush1.bf16.msra.mxu0 %v1452
  %2084 = vmatprep.subr.bf16.mxu0 %v1455
  %2085 = vmatpush1.bf16.msra.mxu0 %v1454
  %2086 = vmatprep.subr.bf16.mxu0 %v1457
  %2087 = vmatpush1.bf16.msra.mxu0 %v1456
  %2088 = vmatprep.subr.bf16.mxu0 %v1459
  %2089 = vmatpush1.bf16.msra.mxu0 %v1458
  %2090 = vmatprep.subr.bf16.mxu0 %v1461
  %2091 = vmatpush1.bf16.msra.mxu0 %v1460
  %2092 = vmatprep.subr.bf16.mxu0 %v1463
  %2093 = vmatpush1.bf16.msra.mxu0 %v1462
  %2094 = vmatprep.subr.bf16.mxu0 %v1465
  %2095 = vmatpush1.bf16.msra.mxu0 %v1464
  %2096 = vmatprep.subr.bf16.mxu0 %v1467
  %2097 = vmatpush1.bf16.msra.mxu0 %v1466
  %2098 = vmatprep.mubr.bf16.mxu0 %v357
  %2099 = vmatmul.mubr.bf16.gmra.mrb[0].mxu0 %v356
  %v2100 = vpop.f32.mrb[0].mxu0
  %v2101 = vadd.f32 %v2060, %v2100
  %v2102 = vpop.f32.mrb[0].mxu0
  %v2103 = vadd.f32 %v2062, %v2102
  %v2104 = vpop.f32.mrb[0].mxu0
  %v2105 = vpop.f32.mrb[0].mxu0
  %2106 = vdwg.mxu0
  %2107 = vmatprep.subr.bf16.mxu0 %v1469
  %2108 = vmatpush1.bf16.msra.mxu0 %v1468
  %2109 = vmatprep.subr.bf16.mxu0 %v1471
  %2110 = vmatpush1.bf16.msra.mxu0 %v1470
  %2111 = vmatprep.subr.bf16.mxu0 %v1473
  %2112 = vmatpush1.bf16.msra.mxu0 %v1472
  %2113 = vmatprep.subr.bf16.mxu0 %v1475
  %2114 = vmatpush1.bf16.msra.mxu0 %v1474
  %2115 = vmatprep.subr.bf16.mxu0 %v1477
  %2116 = vmatpush1.bf16.msra.mxu0 %v1476
  %2117 = vmatprep.subr.bf16.mxu0 %v1479
  %2118 = vmatpush1.bf16.msra.mxu0 %v1478
  %2119 = vmatprep.subr.bf16.mxu0 %v1481
  %2120 = vmatpush1.bf16.msra.mxu0 %v1480
  %2121 = vmatprep.subr.bf16.mxu0 %v1483
  %2122 = vmatpush1.bf16.msra.mxu0 %v1482
  %2123 = vmatprep.subr.bf16.mxu0 %v1485
  %2124 = vmatpush1.bf16.msra.mxu0 %v1484
  %2125 = vmatprep.subr.bf16.mxu0 %v1487
  %2126 = vmatpush1.bf16.msra.mxu0 %v1486
  %2127 = vmatprep.subr.bf16.mxu0 %v1489
  %2128 = vmatpush1.bf16.msra.mxu0 %v1488
  %2129 = vmatprep.subr.bf16.mxu0 %v1491
  %2130 = vmatpush1.bf16.msra.mxu0 %v1490
  %2131 = vmatprep.subr.bf16.mxu0 %v1493
  %2132 = vmatpush1.bf16.msra.mxu0 %v1492
  %2133 = vmatprep.subr.bf16.mxu0 %v1495
  %2134 = vmatpush1.bf16.msra.mxu0 %v1494
  %2135 = vmatprep.subr.bf16.mxu0 %v1497
  %2136 = vmatpush1.bf16.msra.mxu0 %v1496
  %2137 = vmatprep.subr.bf16.mxu0 %v1499
  %2138 = vmatpush1.bf16.msra.mxu0 %v1498
  %2139 = vmatprep.mubr.bf16.mxu0 %v359
  %2140 = vmatmul.mubr.bf16.gmra.mrb[0].mxu0 %v358
  %v2141 = vpop.f32.mrb[0].mxu0
  %v2142 = vadd.f32 %v2101, %v2141
  %v2143 = vpop.f32.mrb[0].mxu0
  %v2144 = vadd.f32 %v2103, %v2143
  %v2145 = vpop.f32.mrb[0].mxu0
  %v2146 = vpop.f32.mrb[0].mxu0
  %2147 = vdwg.mxu0
  %2148 = vmatprep.subr.bf16.mxu0 %v1501
  %2149 = vmatpush1.bf16.msra.mxu0 %v1500
  %2150 = vmatprep.subr.bf16.mxu0 %v1503
  %2151 = vmatpush1.bf16.msra.mxu0 %v1502
  %2152 = vmatprep.subr.bf16.mxu0 %v1505
  %2153 = vmatpush1.bf16.msra.mxu0 %v1504
  %2154 = vmatprep.subr.bf16.mxu0 %v1507
  %2155 = vmatpush1.bf16.msra.mxu0 %v1506
  %2156 = vmatprep.subr.bf16.mxu0 %v1509
  %2157 = vmatpush1.bf16.msra.mxu0 %v1508
  %2158 = vmatprep.subr.bf16.mxu0 %v1511
  %2159 = vmatpush1.bf16.msra.mxu0 %v1510
  %2160 = vmatprep.subr.bf16.mxu0 %v1513
  %2161 = vmatpush1.bf16.msra.mxu0 %v1512
  %2162 = vmatprep.subr.bf16.mxu0 %v1515
  %2163 = vmatpush1.bf16.msra.mxu0 %v1514
  %2164 = vmatprep.subr.bf16.mxu0 %v1517
  %2165 = vmatpush1.bf16.msra.mxu0 %v1516
  %2166 = vmatprep.subr.bf16.mxu0 %v1519
  %2167 = vmatpush1.bf16.msra.mxu0 %v1518
  %2168 = vmatprep.subr.bf16.mxu0 %v1521
  %2169 = vmatpush1.bf16.msra.mxu0 %v1520
  %2170 = vmatprep.subr.bf16.mxu0 %v1523
  %2171 = vmatpush1.bf16.msra.mxu0 %v1522
  %2172 = vmatprep.subr.bf16.mxu0 %v1525
  %2173 = vmatpush1.bf16.msra.mxu0 %v1524
  %2174 = vmatprep.subr.bf16.mxu0 %v1527
  %2175 = vmatpush1.bf16.msra.mxu0 %v1526
  %2176 = vmatprep.subr.bf16.mxu0 %v1529
  %2177 = vmatpush1.bf16.msra.mxu0 %v1528
  %2178 = vmatprep.subr.bf16.mxu0 %v1531
  %2179 = vmatpush1.bf16.msra.mxu0 %v1530
  %2180 = vmatprep.mubr.bf16.mxu0 %v361
  %2181 = vmatmul.mubr.bf16.gmra.mrb[0].mxu0 %v360
  %v2182 = vpop.f32.mrb[0].mxu0
  %v2183 = vadd.f32 %v2142, %v2182
  %v2184 = vpop.f32.mrb[0].mxu0
  %v2185 = vadd.f32 %v2144, %v2184
  %v2186 = vpop.f32.mrb[0].mxu0
  %v2187 = vpop.f32.mrb[0].mxu0
  %2188 = vdwg.mxu0
  %v2189 = vrot.slane %v2183, 4
  %v2190 = vadd.f32 %v2183, %v2189
  %v2191 = vrot.slane %v2190, 2
  %v2192 = vadd.f32 %v2190, %v2191
  %v2193 = vrot.slane %v2192, 1
  %v2194 = vadd.f32 %v2192, %v2193
  %v2195 = vrot.slane %v2185, 4
  %v2196 = vadd.f32 %v2185, %v2195
  %v2197 = vrot.slane %v2196, 2
  %v2198 = vadd.f32 %v2196, %v2197
  %v2199 = vrot.slane %v2198, 1
  %v2200 = vadd.f32 %v2198, %v2199
  %v2201 = vrcp.pop 8.0
  %v2202 = vmul.f32 %v2194, %v2201
  %v2203 = vmul.f32 %v2200, %v2201
  %v2204 = vsub.f32 %v2183, %v2202
  %v2205 = vsub.f32 %v2185, %v2203
  %v2206 = vmul.f32 %v2204, %v2204
  %v2207 = vmul.f32 %v2205, %v2205
  %v2208 = vrot.slane %v2206, 4
  %v2209 = vadd.f32 %v2206, %v2208
  %v2210 = vrot.slane %v2209, 2
  %v2211 = vadd.f32 %v2209, %v2210
  %v2212 = vrot.slane %v2211, 1
  %v2213 = vadd.f32 %v2211, %v2212
  %v2214 = vrot.slane %v2207, 4
  %v2215 = vadd.f32 %v2207, %v2214
  %v2216 = vrot.slane %v2215, 2
  %v2217 = vadd.f32 %v2215, %v2216
  %v2218 = vrot.slane %v2217, 1
  %v2219 = vadd.f32 %v2217, %v2218
  %v2220 = vmul.f32 %v2213, %v2201
  %v2221 = vmul.f32 %v2219, %v2201
  %v2222 = vld [vmem:[%s2] sm:$0x3]
  %v2223 = vadd.f32 %v2220, 1e-05
  %v2224 = vadd.f32 %v2221, 1e-05
  %v2225 = vrsqrt.pop %v2223
  %v2226 = vrsqrt.pop %v2224
  %v2229 = vcombine.low %v2225, %v2226
  %v2231 = vunpack.c.l.s4 1966171168
  %v2232 = vunpack.c.0.s8 %v2231
  %v2233 = vlaneseq
  %v2234 = vshrl.u32 %v2233, 7
  %v2235 = vsub.s32 %v2232, %v2234
  %v2236 = vrot.slane %v2229, %v2235
  %v2238 = vunpack.c.l.s4 1966171168
  %v2239 = vunpack.c.0.s8 %v2238
  %v2240 = vlaneseq
  %v2241 = vshrl.u32 %v2240, 7
  %v2242 = vsub.s32 %v2239, %v2241
  %v2243 = vrot.slane %v2236, %v2242
  %v2245 = vmul.f32 %v2222, %v2243
  %v2247 = vlaneseq
  %v2248 = vshrl.u32 %v2247, 7
  %v2249 = vsub.s32 0, %v2248
  %v2250 = vrot.slane %v2245, %v2249
  %v2251 = vlaneseq
  %v2252 = vshrl.u32 %v2251, 7
  %v2253 = vsub.s32 1, %v2252
  %v2254 = vrot.slane %v2245, %v2253
  %v2257 = vmul.f32 %v2204, %v2250
  %v2258 = vmul.f32 %v2205, %v2254
  %v2259 = vld [vmem:[%s3] sm:$0x3]
  %v2261 = vlaneseq
  %v2262 = vshrl.u32 %v2261, 7
  %v2263 = vsub.s32 0, %v2262
  %v2264 = vrot.slane %v2259, %v2263
  %v2265 = vlaneseq
  %v2266 = vshrl.u32 %v2265, 7
  %v2267 = vsub.s32 1, %v2266
  %v2268 = vrot.slane %v2259, %v2267
  %v2271 = vadd.f32 %v2257, %v2264
  %v2272 = vadd.f32 %v2258, %v2268
  %v2273 = vld [vmem:[%s4] sm:$0xff]
  %v2274 = vld [vmem:[%s4 + $0x8] sm:$0xff]
  %v2275 = vadd.f32 %v2271, %v2273
  %v2276 = vadd.f32 %v2272, %v2274
  %v2277 = vmax.f32 %v2275, 0.0
  %v2278 = vmax.f32 %v2276, 0.0
  %2279 = vst [vmem:[%s5] sm:$0xff] %v2277
  %2280 = vst [vmem:[%s5 + $0x8] sm:$0xff] %v2278
  // Predicated region
  $region22: #{resnet_comp_forward.19} parent=0 // pred_check
    _
  $region23: #{resnet_comp_forward.19} parent=0 // pred_check_branch
    %2282 = sbr.rel (0) target = $region25
  $region24: #{resnet_comp_forward.19} parent=0 // pred_region
    _
  $region25: #{resnet_comp_forward.19} parent=0 // pred_fallthru
    _
  // Predicated region
  $region26: #{resnet_comp_forward.19} parent=0 // pred_check
    _
  $region27: #{resnet_comp_forward.19} parent=0 // pred_check_branch
    %2284 = sbr.rel (0) target = $region29
  $region28: #{resnet_comp_forward.19} parent=0 // pred_region
    _
  $region29: #{resnet_comp_forward.19} parent=0 // pred_fallthru
    _

</llo_original>
